<compile_context>
chip_gen: v6e
topology: v6e:2x2x1
jax: 0.10.0
libtpu: 0.0.40
codegen_flags: <defaults>
</compile_context>

<pallas_src>
from functools import partial

import jax
import jax.numpy as jnp
from jax.experimental import pallas as pl
from jax.experimental.pallas import tpu as pltpu


# ----------------------------------------------------------------------------- in-kernel helpers

def _ln(x, g, b, eps=1e-5):
    x = x.astype(jnp.float32)
    mu = jnp.mean(x, axis=-1, keepdims=True)
    var = jnp.mean(jnp.square(x - mu), axis=-1, keepdims=True)
    y = (x - mu) * jax.lax.rsqrt(var + eps)
    return y * g.astype(jnp.float32) + b.astype(jnp.float32)


def _mm(a, b, mxu_dtype):
    return jnp.dot(a.astype(mxu_dtype), b.astype(mxu_dtype),
                   preferred_element_type=jnp.float32)


def _gelu(x):
    # TODO(synk): torch nn.GELU default is erf; tanh-approx used for a safe
    # EUP-friendly Mosaic lowering (small systematic drift).
    return jax.nn.gelu(x, approximate=True)


def _mha(q, k, v, num_heads, mask_row, mxu_dtype):
    """Multi-head attention on lane-dense (Lq, D)/(Lk, D) tiles.

    Returns (attn_out (Lq, D) f32, head-summed probs (Lq, Lk) f32)."""
    Lq, D = q.shape
    Dh = D // num_heads
    outs = []
    psum = None
    for h in range(num_heads):
        lo = h * Dh
        qh = q[:, lo:lo + Dh]
        kh = k[:, lo:lo + Dh]
        vh = v[:, lo:lo + Dh]
        s = jax.lax.dot_general(qh.astype(mxu_dtype), kh.astype(mxu_dtype),
                                (((1,), (1,)), ((), ())),
                                preferred_element_type=jnp.float32)
        if mask_row is not None:
            s = jnp.where(jnp.broadcast_to(mask_row > 0, s.shape), s, -1e30)
        s = s - jnp.max(s, axis=-1, keepdims=True)
        e = jnp.exp(s)
        p = e / jnp.sum(e, axis=-1, keepdims=True)
        psum = p if psum is None else psum + p
        outs.append(jnp.dot(p.astype(mxu_dtype), vh.astype(mxu_dtype),
                            preferred_element_type=jnp.float32))
    out = outs[0] if num_heads == 1 else jnp.concatenate(outs, axis=-1)
    return out, psum


# ----------------------------------------------------------------------------- fused kernels

def _input_path_kernel(x_ref, lat_emb_ref, wproj_ref, ln_g_ref, ln_b_ref,
                       w1_ref, b1_ref, w2_ref, b2_ref, out_ref, *, mxu_dtype):
    # latents = latents_emb + x @ Wp ; latents += FFN(LN(latents))
    px = _mm(x_ref[0].astype(jnp.float32), wproj_ref[...], mxu_dtype)       # (nx, D)
    lat = lat_emb_ref[...].astype(jnp.float32) + px                          # (L, D)
    h = _ln(lat, ln_g_ref[...], ln_b_ref[...])
    h = _gelu(_mm(h, w1_ref[...], mxu_dtype) + b1_ref[...].astype(jnp.float32))
    h = _mm(h, w2_ref[...], mxu_dtype) + b2_ref[...].astype(jnp.float32)
    out_ref[0] = (lat + h).astype(out_ref.dtype)


def _make_block_kernel(*, num_heads, scale, mxu_dtype, self_attn, has_mask,
                       has_ctx_norm, emit_map, emit_agg, has_out_norm):
    """Fused pre-norm transformer block (attention + FFN) for one batch element."""

    def kernel(*refs):
        it = iter(refs)
        lat_ref = next(it)
        ctx_ref = None if self_attn else next(it)
        cmap_ref = next(it) if emit_agg else None
        mask_ref = next(it) if has_mask else None
        n1g = next(it); n1b = next(it)
        if has_ctx_norm:
            cng = next(it); cnb = next(it)
        if self_attn:
            wqkv = next(it); bqkv = next(it)
        else:
            wq = next(it); bq = next(it); wkv = next(it); bkv = next(it)
        wo = next(it); bo = next(it)
        n2g = next(it); n2b = next(it)
        w1 = next(it); b1 = next(it); w2 = next(it); b2 = next(it)
        if has_out_norm:
            ong = next(it); onb = next(it)
        out_ref = next(it)
        map_ref = next(it) if emit_map else None
        agg_ref = next(it) if emit_agg else None

        x = lat_ref[0].astype(jnp.float32)                                   # (Lq, D)
        D = x.shape[-1]
        normed = _ln(x, n1g[...], n1b[...])

        if self_attn:
            # merged QKV projection: one MXU pass instead of three.
            qkv = _mm(normed, wqkv[...], mxu_dtype) + bqkv[...].astype(jnp.float32)
            q = qkv[:, :D] * scale
            k = qkv[:, D:2 * D]
            v = qkv[:, 2 * D:]
        else:
            ctx = ctx_ref[0].astype(jnp.float32)                             # (Lk, Cd)
            if has_ctx_norm:
                ctx = _ln(ctx, cng[...], cnb[...])
            q = (_mm(normed, wq[...], mxu_dtype) + bq[...].astype(jnp.float32)) * scale
            kv = _mm(ctx, wkv[...], mxu_dtype) + bkv[...].astype(jnp.float32)
            k = kv[:, :D]
            v = kv[:, D:]

        mrow = mask_ref[0].astype(jnp.float32) if has_mask else None         # (1, Lk)
        attn, psum = _mha(q, k, v, num_heads, mrow, mxu_dtype)

        attn = _mm(attn, wo[...], mxu_dtype) + bo[...].astype(jnp.float32)
        x = x + attn
        h = _ln(x, n2g[...], n2b[...])
        h = _gelu(_mm(h, w1[...], mxu_dtype) + b1[...].astype(jnp.float32))
        h = _mm(h, w2[...], mxu_dtype) + b2[...].astype(jnp.float32)
        x = x + h
        if has_out_norm:
            x = _ln(x, ong[...], onb[...])
        out_ref[0] = x.astype(out_ref.dtype)

        if emit_map:
            map_ref[0] = psum.astype(map_ref.dtype)                          # (Lq, Lk)
        if emit_agg:
            # sum_{h,q} (A_h @ C) == (sum_{h,q} A_h) @ C : O(L*S) instead of O(L^2*S)
            asum = jnp.sum(psum, axis=0, keepdims=True)                      # (1, Lk)
            agg_ref[0] = jnp.dot(asum, cmap_ref[0].astype(jnp.float32),
                                 preferred_element_type=jnp.float32).astype(agg_ref.dtype)

    return kernel


# ----------------------------------------------------------------------------- pallas wrappers

def _full_spec(w):
    return pl.BlockSpec(w.shape, lambda b, _nd=w.ndim: (0,) * _nd)


def input_path(x, params, *, mxu_dtype):
    x3 = x if x.ndim == 3 else x[:, None, :]
    B, nx, D = x3.shape
    L = params["latents"].shape[0]
    assert nx in (1, L), f"x projection rows {nx} incompatible with {L} latents"
    xff = params["x_ff"]
    weights = (params["latents"], params["x_proj_w"],
               params["x_ff_ln_g"], params["x_ff_ln_b"],
               xff["ffn_w1"], xff["ffn_b1"], xff["ffn_w2"], xff["ffn_b2"])
    return pl.pallas_call(
        partial(_input_path_kernel, mxu_dtype=mxu_dtype),
        out_shape=jax.ShapeDtypeStruct((B, L, D), x.dtype),
        grid=(B,),
        in_specs=[pl.BlockSpec((1, nx, D), lambda b: (b, 0, 0))]
                 + [_full_spec(w) for w in weights],
        out_specs=pl.BlockSpec((1, L, D), lambda b: (b, 0, 0)),
        compiler_params=pltpu.CompilerParams(dimension_semantics=("parallel",)),
    )(x3, *weights)


def fused_block(lat, ctx, cmap, mask, p, *, num_heads, emit_map, emit_agg,
                has_out_norm, mxu_dtype):
    B, L, D = lat.shape
    self_attn = ctx is None
    has_mask = mask is not None
    has_ctx_norm = "ctx_norm_g" in p
    Lk = L if self_attn else ctx.shape[1]
    assert D % num_heads == 0
    scale = 1.0 / float((D // num_heads) ** 0.5)

    inputs = [lat]
    in_specs = [pl.BlockSpec((1, L, D), lambda b: (b, 0, 0))]
    if not self_attn:
        Cd = ctx.shape[-1]
        inputs.append(ctx)
        in_specs.append(pl.BlockSpec((1, Lk, Cd), lambda b: (b, 0, 0)))
    if emit_agg:
        S = cmap.shape[-1]
        inputs.append(cmap)
        in_specs.append(pl.BlockSpec((1, L, S), lambda b: (b, 0, 0)))
    if has_mask:
        inputs.append(mask.reshape(B, 1, Lk))
        in_specs.append(pl.BlockSpec((1, 1, Lk), lambda b: (b, 0, 0)))

    def add_w(name):
        w = p[name]
        inputs.append(w)
        in_specs.append(_full_spec(w))

    add_w("n1_g"); add_w("n1_b")
    if has_ctx_norm:
        add_w("ctx_norm_g"); add_w("ctx_norm_b")
    if self_attn:
        add_w("w_qkv"); add_w("b_qkv")
    else:
        add_w("w_q"); add_w("b_q"); add_w("w_kv"); add_w("b_kv")
    add_w("w_o"); add_w("b_o")
    add_w("n2_g"); add_w("n2_b")
    add_w("ffn_w1"); add_w("ffn_b1"); add_w("ffn_w2"); add_w("ffn_b2")
    if has_out_norm:
        add_w("out_norm_g"); add_w("out_norm_b")

    out_shapes = [jax.ShapeDtypeStruct((B, L, D), lat.dtype)]
    out_specs = [pl.BlockSpec((1, L, D), lambda b: (b, 0, 0))]
    if emit_map:
        out_shapes.append(jax.ShapeDtypeStruct((B, L, Lk), jnp.float32))
        out_specs.append(pl.BlockSpec((1, L, Lk), lambda b: (b, 0, 0)))
    if emit_agg:
        S = cmap.shape[-1]
        out_shapes.append(jax.ShapeDtypeStruct((B, 1, S), jnp.float32))
        out_specs.append(pl.BlockSpec((1, 1, S), lambda b: (b, 0, 0)))

    kernel = _make_block_kernel(num_heads=num_heads, scale=scale, mxu_dtype=mxu_dtype,
                                self_attn=self_attn, has_mask=has_mask,
                                has_ctx_norm=has_ctx_norm, emit_map=emit_map,
                                emit_agg=emit_agg, has_out_norm=has_out_norm)
    outs = pl.pallas_call(
        kernel,
        out_shape=tuple(out_shapes),
        grid=(B,),
        in_specs=in_specs,
        out_specs=tuple(out_specs),
        compiler_params=pltpu.CompilerParams(dimension_semantics=("parallel",)),
    )(*inputs)
    if not isinstance(outs, (list, tuple)):
        outs = (outs,)
    return outs


# ----------------------------------------------------------------------------- model forward

def perceiver_forward(params, x, context, context_mask=None, *, num_heads,
                      mxu_dtype=jnp.float32):
    # mxu_dtype=jnp.bfloat16 is recommended for realistic model sizes on
    # v5e/v6e/v7x (f32 accumulation is kept); f32 default preserves reference numerics.
    B, S, _ = context.shape
    L, D = params["latents"].shape
    Q = params["queries"].shape[0]

    x_was_2d = (x is None) or (x.ndim == 2)
    if x is not None:
        latents = input_path(x, params, mxu_dtype=mxu_dtype)
    else:
        latents = jnp.broadcast_to(params["latents"][None], (B, L, D))

    # input cross-attention block (1 head, extra context norm, optional mask);
    # emits the (B, L, S) cross-attention map in f32.
    latents, cross_map = fused_block(latents, context, None, context_mask,
                                     params["in_cross"], num_heads=1,
                                     emit_map=True, emit_agg=False,
                                     has_out_norm=False, mxu_dtype=mxu_dtype)

    # latent self-attention blocks; each kernel also returns its composed
    # (head+query reduced) attention-to-context contribution.
    agg = jnp.zeros((B, S), jnp.float32)
    # TODO(synk): effective_latent_to_context_map is computed but never used or
    # returned by the reference module, so its running product is omitted here.
    for bp in params["self_blocks"]:
        latents, agg_c = fused_block(latents, None, cross_map, None, bp,
                                     num_heads=num_heads, emit_map=False,
                                     emit_agg=True, has_out_norm=False,
                                     mxu_dtype=mxu_dtype)
        agg = agg + agg_c[:, 0, :]

    # output cross-attention block (1 head) with the final output LayerNorm fused.
    queries = jnp.broadcast_to(params["queries"][None], (B, Q, D))
    p_out = {**params["out_cross"],
             "out_norm_g": params["out_norm_g"], "out_norm_b": params["out_norm_b"]}
    (y,) = fused_block(queries, latents, None, None, p_out, num_heads=1,
                       emit_map=False, emit_agg=False, has_out_norm=True,
                       mxu_dtype=mxu_dtype)

    if Q == 1 and x_was_2d and y.shape[1] == 1:
        y = y[:, 0, :]
    return y, agg.astype(context.dtype)


# ----------------------------------------------------------------------------- params

def init_params(key, model_dim, context_dim, num_latents, num_blocks, num_heads,
                num_queries, ffn_mult=4):
    keys = iter(jax.random.split(key, 1024))

    def nrm(shape, std=0.02):
        return jax.random.normal(next(keys), shape, jnp.float32) * std

    def zeros(shape):
        return jnp.zeros(shape, jnp.float32)

    def ones(shape):
        return jnp.ones(shape, jnp.float32)

    def ffn(dim):
        return {"ffn_w1": nrm((dim, ffn_mult * dim)), "ffn_b1": zeros((1, ffn_mult * dim)),
                "ffn_w2": nrm((ffn_mult * dim, dim)), "ffn_b2": zeros((1, dim))}

    def cross_block(model_d, ctx_d):
        p = {"n1_g": ones((1, model_d)), "n1_b": zeros((1, model_d)),
             "ctx_norm_g": ones((1, ctx_d)), "ctx_norm_b": zeros((1, ctx_d)),
             "w_q": nrm((model_d, model_d)), "b_q": zeros((1, model_d)),
             "w_kv": nrm((ctx_d, 2 * model_d)), "b_kv": zeros((1, 2 * model_d)),
             "w_o": nrm((model_d, model_d)), "b_o": zeros((1, model_d)),
             "n2_g": ones((1, model_d)), "n2_b": zeros((1, model_d))}
        p.update(ffn(model_d))
        return p

    def self_block(model_d):
        p = {"n1_g": ones((1, model_d)), "n1_b": zeros((1, model_d)),
             "w_qkv": nrm((model_d, 3 * model_d)), "b_qkv": zeros((1, 3 * model_d)),
             "w_o": nrm((model_d, model_d)), "b_o": zeros((1, model_d)),
             "n2_g": ones((1, model_d)), "n2_b": zeros((1, model_d))}
        p.update(ffn(model_d))
        return p

    return {
        "latents": nrm((num_latents, model_dim)),
        "queries": nrm((num_queries, model_dim)),
        "x_proj_w": nrm((model_dim, model_dim)),
        "x_ff_ln_g": ones((1, model_dim)), "x_ff_ln_b": zeros((1, model_dim)),
        "x_ff": ffn(model_dim),
        "in_cross": cross_block(model_dim, context_dim),
        "self_blocks": [self_block(model_dim) for _ in range(num_blocks)],
        "out_cross": cross_block(model_dim, model_dim),
        "out_norm_g": ones((1, model_dim)), "out_norm_b": zeros((1, model_dim)),
    }


# ----------------------------------------------------------------------------- main

if __name__ == "__main__":
    model_dim, context_dim = 32, 16
    num_latents, num_blocks, num_heads, num_queries = 8, 2, 8, 1
    B, S = 2, 16

    key = jax.random.PRNGKey(0)
    kp, kx, kc = jax.random.split(key, 3)

    params = init_params(kp, model_dim, context_dim, num_latents, num_blocks,
                         num_heads, num_queries)
    x = jax.random.normal(kx, (B, model_dim), jnp.float32)
    context = jax.random.normal(kc, (B, S, context_dim), jnp.float32)
    context_mask = jnp.concatenate(
        [jnp.ones((B, 12), jnp.float32), jnp.zeros((B, 4), jnp.float32)], axis=1)

    fwd = jax.jit(partial(perceiver_forward, num_heads=num_heads))
    y, agg = fwd(params, x, context, context_mask)
    jax.block_until_ready((y, agg))

    assert y.shape == (B, model_dim), y.shape
    assert agg.shape == (B, S), agg.shape
    assert bool(jnp.all(jnp.isfinite(y))) and bool(jnp.all(jnp.isfinite(agg)))
    print("KERNEL_OK")
</pallas_src>

<mosaic_0001>
module attributes {stable_mosaic.version = 11 : i64} {
  func.func @_input_path_kernel(%arg0: i32, %arg1: memref<1x1x32xf32, #tpu.memory_space<vmem>>, %arg2: memref<8x32xf32, #tpu.memory_space<vmem>>, %arg3: memref<32x32xf32, #tpu.memory_space<vmem>>, %arg4: memref<1x32xf32, #tpu.memory_space<vmem>>, %arg5: memref<1x32xf32, #tpu.memory_space<vmem>>, %arg6: memref<32x128xf32, #tpu.memory_space<vmem>>, %arg7: memref<1x128xf32, #tpu.memory_space<vmem>>, %arg8: memref<128x32xf32, #tpu.memory_space<vmem>>, %arg9: memref<1x32xf32, #tpu.memory_space<vmem>>, %arg10: memref<1x8x32xf32, #tpu.memory_space<vmem>>) attributes {dimension_semantics = [#tpu.dimension_semantics<parallel>], iteration_bounds = array<i64: 2>, scalar_prefetch = 0 : i64, scratch_operands = 0 : i64, tpu.core_type = #tpu.core_type<tc>, window_params = [{transform_indices = @transform_0, window_bounds = array<i64: 1, 1, 32>}, {pipeline_mode = #tpu.pipeline_mode<synchronous>, transform_indices = @transform_1, window_bounds = array<i64: 8, 32>}, {pipeline_mode = #tpu.pipeline_mode<synchronous>, transform_indices = @transform_2, window_bounds = array<i64: 32, 32>}, {pipeline_mode = #tpu.pipeline_mode<synchronous>, transform_indices = @transform_3, window_bounds = array<i64: 1, 32>}, {pipeline_mode = #tpu.pipeline_mode<synchronous>, transform_indices = @transform_4, window_bounds = array<i64: 1, 32>}, {pipeline_mode = #tpu.pipeline_mode<synchronous>, transform_indices = @transform_5, window_bounds = array<i64: 32, 128>}, {pipeline_mode = #tpu.pipeline_mode<synchronous>, transform_indices = @transform_6, window_bounds = array<i64: 1, 128>}, {pipeline_mode = #tpu.pipeline_mode<synchronous>, transform_indices = @transform_7, window_bounds = array<i64: 128, 32>}, {pipeline_mode = #tpu.pipeline_mode<synchronous>, transform_indices = @transform_8, window_bounds = array<i64: 1, 32>}, {transform_indices = @transform_9, window_bounds = array<i64: 1, 8, 32>}]} {
    %c0 = arith.constant 0 : index
    %c0_0 = arith.constant 0 : index
    %c0_1 = arith.constant 0 : index
    %0 = vector.load %arg1[%c0, %c0_0, %c0_1] : memref<1x1x32xf32, #tpu.memory_space<vmem>>, vector<1x1x32xf32>
    %1 = vector.shape_cast %0 : vector<1x1x32xf32> to vector<1x32xf32>
    %c0_2 = arith.constant 0 : index
    %c0_3 = arith.constant 0 : index
    %2 = vector.load %arg3[%c0_2, %c0_3] : memref<32x32xf32, #tpu.memory_space<vmem>>, vector<32x32xf32>
    %cst = arith.constant dense<0.000000e+00> : vector<1x32xf32>
    %3 = tpu.matmul %1, %2, %cst {dimension_numbers = #tpu.dot_dimension_numbers<[1], [0], [0], [1], [0, 0, 1, 1], [], []>} : vector<1x32xf32>, vector<32x32xf32>, vector<1x32xf32> -> vector<1x32xf32>
    %c0_4 = arith.constant 0 : index
    %c0_5 = arith.constant 0 : index
    %4 = vector.load %arg2[%c0_4, %c0_5] : memref<8x32xf32, #tpu.memory_space<vmem>>, vector<8x32xf32>
    %5 = vector.broadcast %3 : vector<1x32xf32> to vector<8x32xf32>
    %6 = arith.addf %4, %5 : vector<8x32xf32>
    %c0_6 = arith.constant 0 : index
    %c0_7 = arith.constant 0 : index
    %7 = vector.load %arg4[%c0_6, %c0_7] : memref<1x32xf32, #tpu.memory_space<vmem>>, vector<1x32xf32>
    %c0_8 = arith.constant 0 : index
    %c0_9 = arith.constant 0 : index
    %8 = vector.load %arg5[%c0_8, %c0_9] : memref<1x32xf32, #tpu.memory_space<vmem>>, vector<1x32xf32>
    %cst_10 = arith.constant dense<0.000000e+00> : vector<8xf32>
    %9 = vector.multi_reduction <add>, %6, %cst_10 [1] : vector<8x32xf32> to vector<8xf32>
    %10 = vector.shape_cast %9 : vector<8xf32> to vector<8x1xf32>
    %cst_11 = arith.constant 3.200000e+01 : f32
    %11 = vector.broadcast %cst_11 : f32 to vector<8x1xf32>
    %12 = arith.divf %10, %11 : vector<8x1xf32>
    %13 = vector.broadcast %12 : vector<8x1xf32> to vector<8x32xf32>
    %14 = arith.subf %6, %13 : vector<8x32xf32>
    %15 = arith.mulf %14, %14 : vector<8x32xf32>
    %cst_12 = arith.constant dense<0.000000e+00> : vector<8xf32>
    %16 = vector.multi_reduction <add>, %15, %cst_12 [1] : vector<8x32xf32> to vector<8xf32>
    %17 = vector.shape_cast %16 : vector<8xf32> to vector<8x1xf32>
    %cst_13 = arith.constant 3.200000e+01 : f32
    %18 = vector.broadcast %cst_13 : f32 to vector<8x1xf32>
    %19 = arith.divf %17, %18 : vector<8x1xf32>
    %20 = vector.broadcast %12 : vector<8x1xf32> to vector<8x32xf32>
    %21 = arith.subf %6, %20 : vector<8x32xf32>
    %cst_14 = arith.constant 9.99999974E-6 : f32
    %22 = vector.broadcast %cst_14 : f32 to vector<8x1xf32>
    %23 = arith.addf %19, %22 : vector<8x1xf32>
    %24 = math.rsqrt %23 : vector<8x1xf32>
    %25 = vector.broadcast %24 : vector<8x1xf32> to vector<8x32xf32>
    %26 = arith.mulf %21, %25 : vector<8x32xf32>
    %27 = vector.broadcast %7 : vector<1x32xf32> to vector<8x32xf32>
    %28 = arith.mulf %26, %27 : vector<8x32xf32>
    %29 = vector.broadcast %8 : vector<1x32xf32> to vector<8x32xf32>
    %30 = arith.addf %28, %29 : vector<8x32xf32>
    %c0_15 = arith.constant 0 : index
    %c0_16 = arith.constant 0 : index
    %31 = vector.load %arg6[%c0_15, %c0_16] : memref<32x128xf32, #tpu.memory_space<vmem>>, vector<32x128xf32>
    %cst_17 = arith.constant dense<0.000000e+00> : vector<8x128xf32>
    %32 = tpu.matmul %30, %31, %cst_17 {dimension_numbers = #tpu.dot_dimension_numbers<[1], [0], [0], [1], [0, 0, 1, 1], [], []>} : vector<8x32xf32>, vector<32x128xf32>, vector<8x128xf32> -> vector<8x128xf32>
    %c0_18 = arith.constant 0 : index
    %c0_19 = arith.constant 0 : index
    %33 = vector.load %arg7[%c0_18, %c0_19] : memref<1x128xf32, #tpu.memory_space<vmem>>, vector<1x128xf32>
    %34 = vector.broadcast %33 : vector<1x128xf32> to vector<8x128xf32>
    %35 = arith.addf %32, %34 : vector<8x128xf32>
    %36 = arith.mulf %35, %35 : vector<8x128xf32>
    %37 = arith.mulf %35, %36 : vector<8x128xf32>
    %cst_20 = arith.constant 4.471500e-02 : f32
    %38 = vector.broadcast %cst_20 : f32 to vector<8x128xf32>
    %39 = arith.mulf %38, %37 : vector<8x128xf32>
    %40 = arith.addf %35, %39 : vector<8x128xf32>
    %cst_21 = arith.constant 0.797884583 : f32
    %41 = vector.broadcast %cst_21 : f32 to vector<8x128xf32>
    %42 = arith.mulf %41, %40 : vector<8x128xf32>
    %43 = math.tanh %42 : vector<8x128xf32>
    %cst_22 = arith.constant 1.000000e+00 : f32
    %44 = vector.broadcast %cst_22 : f32 to vector<8x128xf32>
    %45 = arith.addf %44, %43 : vector<8x128xf32>
    %cst_23 = arith.constant 5.000000e-01 : f32
    %46 = vector.broadcast %cst_23 : f32 to vector<8x128xf32>
    %47 = arith.mulf %46, %45 : vector<8x128xf32>
    %48 = arith.mulf %35, %47 : vector<8x128xf32>
    %c0_24 = arith.constant 0 : index
    %c0_25 = arith.constant 0 : index
    %49 = vector.load %arg8[%c0_24, %c0_25] : memref<128x32xf32, #tpu.memory_space<vmem>>, vector<128x32xf32>
    %cst_26 = arith.constant dense<0.000000e+00> : vector<8x32xf32>
    %50 = tpu.matmul %48, %49, %cst_26 {dimension_numbers = #tpu.dot_dimension_numbers<[1], [0], [0], [1], [0, 0, 1, 1], [], []>} : vector<8x128xf32>, vector<128x32xf32>, vector<8x32xf32> -> vector<8x32xf32>
    %c0_27 = arith.constant 0 : index
    %c0_28 = arith.constant 0 : index
    %51 = vector.load %arg9[%c0_27, %c0_28] : memref<1x32xf32, #tpu.memory_space<vmem>>, vector<1x32xf32>
    %52 = vector.broadcast %51 : vector<1x32xf32> to vector<8x32xf32>
    %53 = arith.addf %50, %52 : vector<8x32xf32>
    %54 = arith.addf %6, %53 : vector<8x32xf32>
    %c0_29 = arith.constant 0 : index
    %c0_30 = arith.constant 0 : index
    %c0_31 = arith.constant 0 : index
    %55 = vector.load %arg10[%c0_29, %c0_30, %c0_31] : memref<1x8x32xf32, #tpu.memory_space<vmem>>, vector<1x8x32xf32>
    %56 = vector.shape_cast %55 : vector<1x8x32xf32> to vector<8x32xf32>
    %57 = vector.shape_cast %54 : vector<8x32xf32> to vector<1x8x32xf32>
    tpu.vector_store %arg10[%c0_29, %c0_30, %c0_31], %57 {strides = array<i32>} : memref<1x8x32xf32, #tpu.memory_space<vmem>>, vector<1x8x32xf32>,
    return
  }
  func.func @transform_0(%arg0: i32) -> (i32, i32, i32) {
    %c0_i32 = arith.constant 0 : i32
    %c0_i32_0 = arith.constant 0 : i32
    %c0_i32_1 = arith.constant 0 : i32
    return %arg0, %c0_i32, %c0_i32_0 : i32, i32, i32
  }
  func.func @transform_1(%arg0: i32) -> (i32, i32) {
    %c0_i32 = arith.constant 0 : i32
    %c0_i32_0 = arith.constant 0 : i32
    %c0_i32_1 = arith.constant 0 : i32
    return %c0_i32, %c0_i32_0 : i32, i32
  }
  func.func @transform_2(%arg0: i32) -> (i32, i32) {
    %c0_i32 = arith.constant 0 : i32
    %c0_i32_0 = arith.constant 0 : i32
    %c0_i32_1 = arith.constant 0 : i32
    return %c0_i32, %c0_i32_0 : i32, i32
  }
  func.func @transform_3(%arg0: i32) -> (i32, i32) {
    %c0_i32 = arith.constant 0 : i32
    %c0_i32_0 = arith.constant 0 : i32
    %c0_i32_1 = arith.constant 0 : i32
    return %c0_i32, %c0_i32_0 : i32, i32
  }
  func.func @transform_4(%arg0: i32) -> (i32, i32) {
    %c0_i32 = arith.constant 0 : i32
    %c0_i32_0 = arith.constant 0 : i32
    %c0_i32_1 = arith.constant 0 : i32
    return %c0_i32, %c0_i32_0 : i32, i32
  }
  func.func @transform_5(%arg0: i32) -> (i32, i32) {
    %c0_i32 = arith.constant 0 : i32
    %c0_i32_0 = arith.constant 0 : i32
    %c0_i32_1 = arith.constant 0 : i32
    return %c0_i32, %c0_i32_0 : i32, i32
  }
  func.func @transform_6(%arg0: i32) -> (i32, i32) {
    %c0_i32 = arith.constant 0 : i32
    %c0_i32_0 = arith.constant 0 : i32
    %c0_i32_1 = arith.constant 0 : i32
    return %c0_i32, %c0_i32_0 : i32, i32
  }
  func.func @transform_7(%arg0: i32) -> (i32, i32) {
    %c0_i32 = arith.constant 0 : i32
    %c0_i32_0 = arith.constant 0 : i32
    %c0_i32_1 = arith.constant 0 : i32
    return %c0_i32, %c0_i32_0 : i32, i32
  }
  func.func @transform_8(%arg0: i32) -> (i32, i32) {
    %c0_i32 = arith.constant 0 : i32
    %c0_i32_0 = arith.constant 0 : i32
    %c0_i32_1 = arith.constant 0 : i32
    return %c0_i32, %c0_i32_0 : i32, i32
  }
  func.func @transform_9(%arg0: i32) -> (i32, i32, i32) {
    %c0_i32 = arith.constant 0 : i32
    %c0_i32_0 = arith.constant 0 : i32
    %c0_i32_1 = arith.constant 0 : i32
    return %arg0, %c0_i32, %c0_i32_0 : i32, i32, i32
  }
}

module attributes {stable_mosaic.version = 11 : i64} {
  func.func @kernel(%arg0: i32, %arg1: memref<1x8x32xf32, #tpu.memory_space<vmem>>, %arg2: memref<1x16x16xf32, #tpu.memory_space<vmem>>, %arg3: memref<1x1x16xf32, #tpu.memory_space<vmem>>, %arg4: memref<1x32xf32, #tpu.memory_space<vmem>>, %arg5: memref<1x32xf32, #tpu.memory_space<vmem>>, %arg6: memref<1x16xf32, #tpu.memory_space<vmem>>, %arg7: memref<1x16xf32, #tpu.memory_space<vmem>>, %arg8: memref<32x32xf32, #tpu.memory_space<vmem>>, %arg9: memref<1x32xf32, #tpu.memory_space<vmem>>, %arg10: memref<16x64xf32, #tpu.memory_space<vmem>>, %arg11: memref<1x64xf32, #tpu.memory_space<vmem>>, %arg12: memref<32x32xf32, #tpu.memory_space<vmem>>, %arg13: memref<1x32xf32, #tpu.memory_space<vmem>>, %arg14: memref<1x32xf32, #tpu.memory_space<vmem>>, %arg15: memref<1x32xf32, #tpu.memory_space<vmem>>, %arg16: memref<32x128xf32, #tpu.memory_space<vmem>>, %arg17: memref<1x128xf32, #tpu.memory_space<vmem>>, %arg18: memref<128x32xf32, #tpu.memory_space<vmem>>, %arg19: memref<1x32xf32, #tpu.memory_space<vmem>>, %arg20: memref<1x8x32xf32, #tpu.memory_space<vmem>>, %arg21: memref<1x8x16xf32, #tpu.memory_space<vmem>>) attributes {dimension_semantics = [#tpu.dimension_semantics<parallel>], iteration_bounds = array<i64: 2>, scalar_prefetch = 0 : i64, scratch_operands = 0 : i64, tpu.core_type = #tpu.core_type<tc>, window_params = [{transform_indices = @transform_0, window_bounds = array<i64: 1, 8, 32>}, {transform_indices = @transform_1, window_bounds = array<i64: 1, 16, 16>}, {transform_indices = @transform_2, window_bounds = array<i64: 1, 1, 16>}, {pipeline_mode = #tpu.pipeline_mode<synchronous>, transform_indices = @transform_3, window_bounds = array<i64: 1, 32>}, {pipeline_mode = #tpu.pipeline_mode<synchronous>, transform_indices = @transform_4, window_bounds = array<i64: 1, 32>}, {pipeline_mode = #tpu.pipeline_mode<synchronous>, transform_indices = @transform_5, window_bounds = array<i64: 1, 16>}, {pipeline_mode = #tpu.pipeline_mode<synchronous>, transform_indices = @transform_6, window_bounds = array<i64: 1, 16>}, {pipeline_mode = #tpu.pipeline_mode<synchronous>, transform_indices = @transform_7, window_bounds = array<i64: 32, 32>}, {pipeline_mode = #tpu.pipeline_mode<synchronous>, transform_indices = @transform_8, window_bounds = array<i64: 1, 32>}, {pipeline_mode = #tpu.pipeline_mode<synchronous>, transform_indices = @transform_9, window_bounds = array<i64: 16, 64>}, {pipeline_mode = #tpu.pipeline_mode<synchronous>, transform_indices = @transform_10, window_bounds = array<i64: 1, 64>}, {pipeline_mode = #tpu.pipeline_mode<synchronous>, transform_indices = @transform_11, window_bounds = array<i64: 32, 32>}, {pipeline_mode = #tpu.pipeline_mode<synchronous>, transform_indices = @transform_12, window_bounds = array<i64: 1, 32>}, {pipeline_mode = #tpu.pipeline_mode<synchronous>, transform_indices = @transform_13, window_bounds = array<i64: 1, 32>}, {pipeline_mode = #tpu.pipeline_mode<synchronous>, transform_indices = @transform_14, window_bounds = array<i64: 1, 32>}, {pipeline_mode = #tpu.pipeline_mode<synchronous>, transform_indices = @transform_15, window_bounds = array<i64: 32, 128>}, {pipeline_mode = #tpu.pipeline_mode<synchronous>, transform_indices = @transform_16, window_bounds = array<i64: 1, 128>}, {pipeline_mode = #tpu.pipeline_mode<synchronous>, transform_indices = @transform_17, window_bounds = array<i64: 128, 32>}, {pipeline_mode = #tpu.pipeline_mode<synchronous>, transform_indices = @transform_18, window_bounds = array<i64: 1, 32>}, {transform_indices = @transform_19, window_bounds = array<i64: 1, 8, 32>}, {transform_indices = @transform_20, window_bounds = array<i64: 1, 8, 16>}]} {
    %c0 = arith.constant 0 : index
    %c0_0 = arith.constant 0 : index
    %c0_1 = arith.constant 0 : index
    %0 = vector.load %arg1[%c0, %c0_0, %c0_1] : memref<1x8x32xf32, #tpu.memory_space<vmem>>, vector<1x8x32xf32>
    %1 = vector.shape_cast %0 : vector<1x8x32xf32> to vector<8x32xf32>
    %c0_2 = arith.constant 0 : index
    %c0_3 = arith.constant 0 : index
    %2 = vector.load %arg4[%c0_2, %c0_3] : memref<1x32xf32, #tpu.memory_space<vmem>>, vector<1x32xf32>
    %c0_4 = arith.constant 0 : index
    %c0_5 = arith.constant 0 : index
    %3 = vector.load %arg5[%c0_4, %c0_5] : memref<1x32xf32, #tpu.memory_space<vmem>>, vector<1x32xf32>
    %cst = arith.constant dense<0.000000e+00> : vector<8xf32>
    %4 = vector.multi_reduction <add>, %1, %cst [1] : vector<8x32xf32> to vector<8xf32>
    %5 = vector.shape_cast %4 : vector<8xf32> to vector<8x1xf32>
    %cst_6 = arith.constant 3.200000e+01 : f32
    %6 = vector.broadcast %cst_6 : f32 to vector<8x1xf32>
    %7 = arith.divf %5, %6 : vector<8x1xf32>
    %8 = vector.broadcast %7 : vector<8x1xf32> to vector<8x32xf32>
    %9 = arith.subf %1, %8 : vector<8x32xf32>
    %10 = arith.mulf %9, %9 : vector<8x32xf32>
    %cst_7 = arith.constant dense<0.000000e+00> : vector<8xf32>
    %11 = vector.multi_reduction <add>, %10, %cst_7 [1] : vector<8x32xf32> to vector<8xf32>
    %12 = vector.shape_cast %11 : vector<8xf32> to vector<8x1xf32>
    %cst_8 = arith.constant 3.200000e+01 : f32
    %13 = vector.broadcast %cst_8 : f32 to vector<8x1xf32>
    %14 = arith.divf %12, %13 : vector<8x1xf32>
    %15 = vector.broadcast %7 : vector<8x1xf32> to vector<8x32xf32>
    %16 = arith.subf %1, %15 : vector<8x32xf32>
    %cst_9 = arith.constant 9.99999974E-6 : f32
    %17 = vector.broadcast %cst_9 : f32 to vector<8x1xf32>
    %18 = arith.addf %14, %17 : vector<8x1xf32>
    %19 = math.rsqrt %18 : vector<8x1xf32>
    %20 = vector.broadcast %19 : vector<8x1xf32> to vector<8x32xf32>
    %21 = arith.mulf %16, %20 : vector<8x32xf32>
    %22 = vector.broadcast %2 : vector<1x32xf32> to vector<8x32xf32>
    %23 = arith.mulf %21, %22 : vector<8x32xf32>
    %24 = vector.broadcast %3 : vector<1x32xf32> to vector<8x32xf32>
    %25 = arith.addf %23, %24 : vector<8x32xf32>
    %c0_10 = arith.constant 0 : index
    %c0_11 = arith.constant 0 : index
    %c0_12 = arith.constant 0 : index
    %26 = vector.load %arg2[%c0_10, %c0_11, %c0_12] : memref<1x16x16xf32, #tpu.memory_space<vmem>>, vector<1x16x16xf32>
    %27 = vector.shape_cast %26 : vector<1x16x16xf32> to vector<16x16xf32>
    %c0_13 = arith.constant 0 : index
    %c0_14 = arith.constant 0 : index
    %28 = vector.load %arg6[%c0_13, %c0_14] : memref<1x16xf32, #tpu.memory_space<vmem>>, vector<1x16xf32>
    %c0_15 = arith.constant 0 : index
    %c0_16 = arith.constant 0 : index
    %29 = vector.load %arg7[%c0_15, %c0_16] : memref<1x16xf32, #tpu.memory_space<vmem>>, vector<1x16xf32>
    %cst_17 = arith.constant dense<0.000000e+00> : vector<16xf32>
    %30 = vector.multi_reduction <add>, %27, %cst_17 [1] : vector<16x16xf32> to vector<16xf32>
    %31 = vector.shape_cast %30 : vector<16xf32> to vector<16x1xf32>
    %cst_18 = arith.constant 1.600000e+01 : f32
    %32 = vector.broadcast %cst_18 : f32 to vector<16x1xf32>
    %33 = arith.divf %31, %32 : vector<16x1xf32>
    %34 = vector.broadcast %33 : vector<16x1xf32> to vector<16x16xf32>
    %35 = arith.subf %27, %34 : vector<16x16xf32>
    %36 = arith.mulf %35, %35 : vector<16x16xf32>
    %cst_19 = arith.constant dense<0.000000e+00> : vector<16xf32>
    %37 = vector.multi_reduction <add>, %36, %cst_19 [1] : vector<16x16xf32> to vector<16xf32>
    %38 = vector.shape_cast %37 : vector<16xf32> to vector<16x1xf32>
    %cst_20 = arith.constant 1.600000e+01 : f32
    %39 = vector.broadcast %cst_20 : f32 to vector<16x1xf32>
    %40 = arith.divf %38, %39 : vector<16x1xf32>
    %41 = vector.broadcast %33 : vector<16x1xf32> to vector<16x16xf32>
    %42 = arith.subf %27, %41 : vector<16x16xf32>
    %cst_21 = arith.constant 9.99999974E-6 : f32
    %43 = vector.broadcast %cst_21 : f32 to vector<16x1xf32>
    %44 = arith.addf %40, %43 : vector<16x1xf32>
    %45 = math.rsqrt %44 : vector<16x1xf32>
    %46 = vector.broadcast %45 : vector<16x1xf32> to vector<16x16xf32>
    %47 = arith.mulf %42, %46 : vector<16x16xf32>
    %48 = vector.broadcast %28 : vector<1x16xf32> to vector<16x16xf32>
    %49 = arith.mulf %47, %48 : vector<16x16xf32>
    %50 = vector.broadcast %29 : vector<1x16xf32> to vector<16x16xf32>
    %51 = arith.addf %49, %50 : vector<16x16xf32>
    %c0_22 = arith.constant 0 : index
    %c0_23 = arith.constant 0 : index
    %52 = vector.load %arg8[%c0_22, %c0_23] : memref<32x32xf32, #tpu.memory_space<vmem>>, vector<32x32xf32>
    %cst_24 = arith.constant dense<0.000000e+00> : vector<8x32xf32>
    %53 = tpu.matmul %25, %52, %cst_24 {dimension_numbers = #tpu.dot_dimension_numbers<[1], [0], [0], [1], [0, 0, 1, 1], [], []>} : vector<8x32xf32>, vector<32x32xf32>, vector<8x32xf32> -> vector<8x32xf32>
    %c0_25 = arith.constant 0 : index
    %c0_26 = arith.constant 0 : index
    %54 = vector.load %arg9[%c0_25, %c0_26] : memref<1x32xf32, #tpu.memory_space<vmem>>, vector<1x32xf32>
    %55 = vector.broadcast %54 : vector<1x32xf32> to vector<8x32xf32>
    %56 = arith.addf %53, %55 : vector<8x32xf32>
    %cst_27 = arith.constant 0.176776692 : f32
    %57 = vector.broadcast %cst_27 : f32 to vector<8x32xf32>
    %58 = arith.mulf %56, %57 : vector<8x32xf32>
    %c0_28 = arith.constant 0 : index
    %c0_29 = arith.constant 0 : index
    %59 = vector.load %arg10[%c0_28, %c0_29] : memref<16x64xf32, #tpu.memory_space<vmem>>, vector<16x64xf32>
    %cst_30 = arith.constant dense<0.000000e+00> : vector<16x64xf32>
    %60 = tpu.matmul %51, %59, %cst_30 {dimension_numbers = #tpu.dot_dimension_numbers<[1], [0], [0], [1], [0, 0, 1, 1], [], []>} : vector<16x16xf32>, vector<16x64xf32>, vector<16x64xf32> -> vector<16x64xf32>
    %c0_31 = arith.constant 0 : index
    %c0_32 = arith.constant 0 : index
    %61 = vector.load %arg11[%c0_31, %c0_32] : memref<1x64xf32, #tpu.memory_space<vmem>>, vector<1x64xf32>
    %62 = vector.broadcast %61 : vector<1x64xf32> to vector<16x64xf32>
    %63 = arith.addf %60, %62 : vector<16x64xf32>
    %64 = vector.extract_strided_slice %63 {offsets = [0, 0], sizes = [16, 32], strides = [1, 1]} : vector<16x64xf32> to vector<16x32xf32>
    %65 = vector.extract_strided_slice %63 {offsets = [0, 32], sizes = [16, 32], strides = [1, 1]} : vector<16x64xf32> to vector<16x32xf32>
    %c0_33 = arith.constant 0 : index
    %c0_34 = arith.constant 0 : index
    %c0_35 = arith.constant 0 : index
    %66 = vector.load %arg3[%c0_33, %c0_34, %c0_35] : memref<1x1x16xf32, #tpu.memory_space<vmem>>, vector<1x1x16xf32>
    %67 = vector.shape_cast %66 : vector<1x1x16xf32> to vector<1x16xf32>
    %cst_36 = arith.constant dense<0.000000e+00> : vector<8x16xf32>
    %68 = tpu.matmul %58, %64, %cst_36 {dimension_numbers = #tpu.dot_dimension_numbers<[1], [1], [0], [0], [0, 0, 1, 0], [], []>} : vector<8x32xf32>, vector<16x32xf32>, vector<8x16xf32> -> vector<8x16xf32>
    %cst_37 = arith.constant 0.000000e+00 : f32
    %69 = vector.broadcast %cst_37 : f32 to vector<1x16xf32>
    %70 = arith.cmpf ogt, %67, %69 : vector<1x16xf32>
    %71 = vector.shape_cast %70 : vector<1x16xi1> to vector<1x16xi1>
    %72 = vector.broadcast %71 : vector<1x16xi1> to vector<8x16xi1>
    %cst_38 = arith.constant -1.000000e+30 : f32
    %73 = vector.broadcast %cst_38 : f32 to vector<8x16xf32>
    %74 = arith.select %72, %68, %73 : vector<8x16xi1>, vector<8x16xf32>
    %cst_39 = arith.constant dense<0xFF800000> : vector<8xf32>
    %75 = vector.multi_reduction <maximumf>, %74, %cst_39 [1] : vector<8x16xf32> to vector<8xf32>
    %76 = vector.shape_cast %75 : vector<8xf32> to vector<8x1xf32>
    %77 = vector.broadcast %76 : vector<8x1xf32> to vector<8x16xf32>
    %78 = arith.subf %74, %77 : vector<8x16xf32>
    %79 = math.exp %78 : vector<8x16xf32>
    %cst_40 = arith.constant dense<0.000000e+00> : vector<8xf32>
    %80 = vector.multi_reduction <add>, %79, %cst_40 [1] : vector<8x16xf32> to vector<8xf32>
    %81 = vector.shape_cast %80 : vector<8xf32> to vector<8x1xf32>
    %82 = vector.broadcast %81 : vector<8x1xf32> to vector<8x16xf32>
    %83 = arith.divf %79, %82 : vector<8x16xf32>
    %cst_41 = arith.constant dense<0.000000e+00> : vector<8x32xf32>
    %84 = tpu.matmul %83, %65, %cst_41 {dimension_numbers = #tpu.dot_dimension_numbers<[1], [0], [0], [1], [0, 0, 1, 1], [], []>} : vector<8x16xf32>, vector<16x32xf32>, vector<8x32xf32> -> vector<8x32xf32>
    %c0_42 = arith.constant 0 : index
    %c0_43 = arith.constant 0 : index
    %85 = vector.load %arg12[%c0_42, %c0_43] : memref<32x32xf32, #tpu.memory_space<vmem>>, vector<32x32xf32>
    %cst_44 = arith.constant dense<0.000000e+00> : vector<8x32xf32>
    %86 = tpu.matmul %84, %85, %cst_44 {dimension_numbers = #tpu.dot_dimension_numbers<[1], [0], [0], [1], [0, 0, 1, 1], [], []>} : vector<8x32xf32>, vector<32x32xf32>, vector<8x32xf32> -> vector<8x32xf32>
    %c0_45 = arith.constant 0 : index
    %c0_46 = arith.constant 0 : index
    %87 = vector.load %arg13[%c0_45, %c0_46] : memref<1x32xf32, #tpu.memory_space<vmem>>, vector<1x32xf32>
    %88 = vector.broadcast %87 : vector<1x32xf32> to vector<8x32xf32>
    %89 = arith.addf %86, %88 : vector<8x32xf32>
    %90 = arith.addf %1, %89 : vector<8x32xf32>
    %c0_47 = arith.constant 0 : index
    %c0_48 = arith.constant 0 : index
    %91 = vector.load %arg14[%c0_47, %c0_48] : memref<1x32xf32, #tpu.memory_space<vmem>>, vector<1x32xf32>
    %c0_49 = arith.constant 0 : index
    %c0_50 = arith.constant 0 : index
    %92 = vector.load %arg15[%c0_49, %c0_50] : memref<1x32xf32, #tpu.memory_space<vmem>>, vector<1x32xf32>
    %cst_51 = arith.constant dense<0.000000e+00> : vector<8xf32>
    %93 = vector.multi_reduction <add>, %90, %cst_51 [1] : vector<8x32xf32> to vector<8xf32>
    %94 = vector.shape_cast %93 : vector<8xf32> to vector<8x1xf32>
    %cst_52 = arith.constant 3.200000e+01 : f32
    %95 = vector.broadcast %cst_52 : f32 to vector<8x1xf32>
    %96 = arith.divf %94, %95 : vector<8x1xf32>
    %97 = vector.broadcast %96 : vector<8x1xf32> to vector<8x32xf32>
    %98 = arith.subf %90, %97 : vector<8x32xf32>
    %99 = arith.mulf %98, %98 : vector<8x32xf32>
    %cst_53 = arith.constant dense<0.000000e+00> : vector<8xf32>
    %100 = vector.multi_reduction <add>, %99, %cst_53 [1] : vector<8x32xf32> to vector<8xf32>
    %101 = vector.shape_cast %100 : vector<8xf32> to vector<8x1xf32>
    %cst_54 = arith.constant 3.200000e+01 : f32
    %102 = vector.broadcast %cst_54 : f32 to vector<8x1xf32>
    %103 = arith.divf %101, %102 : vector<8x1xf32>
    %104 = vector.broadcast %96 : vector<8x1xf32> to vector<8x32xf32>
    %105 = arith.subf %90, %104 : vector<8x32xf32>
    %cst_55 = arith.constant 9.99999974E-6 : f32
    %106 = vector.broadcast %cst_55 : f32 to vector<8x1xf32>
    %107 = arith.addf %103, %106 : vector<8x1xf32>
    %108 = math.rsqrt %107 : vector<8x1xf32>
    %109 = vector.broadcast %108 : vector<8x1xf32> to vector<8x32xf32>
    %110 = arith.mulf %105, %109 : vector<8x32xf32>
    %111 = vector.broadcast %91 : vector<1x32xf32> to vector<8x32xf32>
    %112 = arith.mulf %110, %111 : vector<8x32xf32>
    %113 = vector.broadcast %92 : vector<1x32xf32> to vector<8x32xf32>
    %114 = arith.addf %112, %113 : vector<8x32xf32>
    %c0_56 = arith.constant 0 : index
    %c0_57 = arith.constant 0 : index
    %115 = vector.load %arg16[%c0_56, %c0_57] : memref<32x128xf32, #tpu.memory_space<vmem>>, vector<32x128xf32>
    %cst_58 = arith.constant dense<0.000000e+00> : vector<8x128xf32>
    %116 = tpu.matmul %114, %115, %cst_58 {dimension_numbers = #tpu.dot_dimension_numbers<[1], [0], [0], [1], [0, 0, 1, 1], [], []>} : vector<8x32xf32>, vector<32x128xf32>, vector<8x128xf32> -> vector<8x128xf32>
    %c0_59 = arith.constant 0 : index
    %c0_60 = arith.constant 0 : index
    %117 = vector.load %arg17[%c0_59, %c0_60] : memref<1x128xf32, #tpu.memory_space<vmem>>, vector<1x128xf32>
    %118 = vector.broadcast %117 : vector<1x128xf32> to vector<8x128xf32>
    %119 = arith.addf %116, %118 : vector<8x128xf32>
    %120 = arith.mulf %119, %119 : vector<8x128xf32>
    %121 = arith.mulf %119, %120 : vector<8x128xf32>
    %cst_61 = arith.constant 4.471500e-02 : f32
    %122 = vector.broadcast %cst_61 : f32 to vector<8x128xf32>
    %123 = arith.mulf %122, %121 : vector<8x128xf32>
    %124 = arith.addf %119, %123 : vector<8x128xf32>
    %cst_62 = arith.constant 0.797884583 : f32
    %125 = vector.broadcast %cst_62 : f32 to vector<8x128xf32>
    %126 = arith.mulf %125, %124 : vector<8x128xf32>
    %127 = math.tanh %126 : vector<8x128xf32>
    %cst_63 = arith.constant 1.000000e+00 : f32
    %128 = vector.broadcast %cst_63 : f32 to vector<8x128xf32>
    %129 = arith.addf %128, %127 : vector<8x128xf32>
    %cst_64 = arith.constant 5.000000e-01 : f32
    %130 = vector.broadcast %cst_64 : f32 to vector<8x128xf32>
    %131 = arith.mulf %130, %129 : vector<8x128xf32>
    %132 = arith.mulf %119, %131 : vector<8x128xf32>
    %c0_65 = arith.constant 0 : index
    %c0_66 = arith.constant 0 : index
    %133 = vector.load %arg18[%c0_65, %c0_66] : memref<128x32xf32, #tpu.memory_space<vmem>>, vector<128x32xf32>
    %cst_67 = arith.constant dense<0.000000e+00> : vector<8x32xf32>
    %134 = tpu.matmul %132, %133, %cst_67 {dimension_numbers = #tpu.dot_dimension_numbers<[1], [0], [0], [1], [0, 0, 1, 1], [], []>} : vector<8x128xf32>, vector<128x32xf32>, vector<8x32xf32> -> vector<8x32xf32>
    %c0_68 = arith.constant 0 : index
    %c0_69 = arith.constant 0 : index
    %135 = vector.load %arg19[%c0_68, %c0_69] : memref<1x32xf32, #tpu.memory_space<vmem>>, vector<1x32xf32>
    %136 = vector.broadcast %135 : vector<1x32xf32> to vector<8x32xf32>
    %137 = arith.addf %134, %136 : vector<8x32xf32>
    %138 = arith.addf %90, %137 : vector<8x32xf32>
    %c0_70 = arith.constant 0 : index
    %c0_71 = arith.constant 0 : index
    %c0_72 = arith.constant 0 : index
    %139 = vector.load %arg20[%c0_70, %c0_71, %c0_72] : memref<1x8x32xf32, #tpu.memory_space<vmem>>, vector<1x8x32xf32>
    %140 = vector.shape_cast %139 : vector<1x8x32xf32> to vector<8x32xf32>
    %141 = vector.shape_cast %138 : vector<8x32xf32> to vector<1x8x32xf32>
    tpu.vector_store %arg20[%c0_70, %c0_71, %c0_72], %141 {strides = array<i32>} : memref<1x8x32xf32, #tpu.memory_space<vmem>>, vector<1x8x32xf32>,
    %c0_73 = arith.constant 0 : index
    %c0_74 = arith.constant 0 : index
    %c0_75 = arith.constant 0 : index
    %142 = vector.load %arg21[%c0_73, %c0_74, %c0_75] : memref<1x8x16xf32, #tpu.memory_space<vmem>>, vector<1x8x16xf32>
    %143 = vector.shape_cast %142 : vector<1x8x16xf32> to vector<8x16xf32>
    %144 = vector.shape_cast %83 : vector<8x16xf32> to vector<1x8x16xf32>
    tpu.vector_store %arg21[%c0_73, %c0_74, %c0_75], %144 {strides = array<i32>} : memref<1x8x16xf32, #tpu.memory_space<vmem>>, vector<1x8x16xf32>,
    return
  }
  func.func @transform_0(%arg0: i32) -> (i32, i32, i32) {
    %c0_i32 = arith.constant 0 : i32
    %c0_i32_0 = arith.constant 0 : i32
    %c0_i32_1 = arith.constant 0 : i32
    return %arg0, %c0_i32, %c0_i32_0 : i32, i32, i32
  }
  func.func @transform_1(%arg0: i32) -> (i32, i32, i32) {
    %c0_i32 = arith.constant 0 : i32
    %c0_i32_0 = arith.constant 0 : i32
    %c0_i32_1 = arith.constant 0 : i32
    return %arg0, %c0_i32, %c0_i32_0 : i32, i32, i32
  }
  func.func @transform_2(%arg0: i32) -> (i32, i32, i32) {
    %c0_i32 = arith.constant 0 : i32
    %c0_i32_0 = arith.constant 0 : i32
    %c0_i32_1 = arith.constant 0 : i32
    return %arg0, %c0_i32, %c0_i32_0 : i32, i32, i32
  }
  func.func @transform_3(%arg0: i32) -> (i32, i32) {
    %c0_i32 = arith.constant 0 : i32
    %c0_i32_0 = arith.constant 0 : i32
    %c0_i32_1 = arith.constant 0 : i32
    return %c0_i32, %c0_i32_0 : i32, i32
  }
  func.func @transform_4(%arg0: i32) -> (i32, i32) {
    %c0_i32 = arith.constant 0 : i32
    %c0_i32_0 = arith.constant 0 : i32
    %c0_i32_1 = arith.constant 0 : i32
    return %c0_i32, %c0_i32_0 : i32, i32
  }
  func.func @transform_5(%arg0: i32) -> (i32, i32) {
    %c0_i32 = arith.constant 0 : i32
    %c0_i32_0 = arith.constant 0 : i32
    %c0_i32_1 = arith.constant 0 : i32
    return %c0_i32, %c0_i32_0 : i32, i32
  }
  func.func @transform_6(%arg0: i32) -> (i32, i32) {
    %c0_i32 = arith.constant 0 : i32
    %c0_i32_0 = arith.constant 0 : i32
    %c0_i32_1 = arith.constant 0 : i32
    return %c0_i32, %c0_i32_0 : i32, i32
  }
  func.func @transform_7(%arg0: i32) -> (i32, i32) {
    %c0_i32 = arith.constant 0 : i32
    %c0_i32_0 = arith.constant 0 : i32
    %c0_i32_1 = arith.constant 0 : i32
    return %c0_i32, %c0_i32_0 : i32, i32
  }
  func.func @transform_8(%arg0: i32) -> (i32, i32) {
    %c0_i32 = arith.constant 0 : i32
    %c0_i32_0 = arith.constant 0 : i32
    %c0_i32_1 = arith.constant 0 : i32
    return %c0_i32, %c0_i32_0 : i32, i32
  }
  func.func @transform_9(%arg0: i32) -> (i32, i32) {
    %c0_i32 = arith.constant 0 : i32
    %c0_i32_0 = arith.constant 0 : i32
    %c0_i32_1 = arith.constant 0 : i32
    return %c0_i32, %c0_i32_0 : i32, i32
  }
  func.func @transform_10(%arg0: i32) -> (i32, i32) {
    %c0_i32 = arith.constant 0 : i32
    %c0_i32_0 = arith.constant 0 : i32
    %c0_i32_1 = arith.constant 0 : i32
    return %c0_i32, %c0_i32_0 : i32, i32
  }
  func.func @transform_11(%arg0: i32) -> (i32, i32) {
    %c0_i32 = arith.constant 0 : i32
    %c0_i32_0 = arith.constant 0 : i32
    %c0_i32_1 = arith.constant 0 : i32
    return %c0_i32, %c0_i32_0 : i32, i32
  }
  func.func @transform_12(%arg0: i32) -> (i32, i32) {
    %c0_i32 = arith.constant 0 : i32
    %c0_i32_0 = arith.constant 0 : i32
    %c0_i32_1 = arith.constant 0 : i32
    return %c0_i32, %c0_i32_0 : i32, i32
  }
  func.func @transform_13(%arg0: i32) -> (i32, i32) {
    %c0_i32 = arith.constant 0 : i32
    %c0_i32_0 = arith.constant 0 : i32
    %c0_i32_1 = arith.constant 0 : i32
    return %c0_i32, %c0_i32_0 : i32, i32
  }
  func.func @transform_14(%arg0: i32) -> (i32, i32) {
    %c0_i32 = arith.constant 0 : i32
    %c0_i32_0 = arith.constant 0 : i32
    %c0_i32_1 = arith.constant 0 : i32
    return %c0_i32, %c0_i32_0 : i32, i32
  }
  func.func @transform_15(%arg0: i32) -> (i32, i32) {
    %c0_i32 = arith.constant 0 : i32
    %c0_i32_0 = arith.constant 0 : i32
    %c0_i32_1 = arith.constant 0 : i32
    return %c0_i32, %c0_i32_0 : i32, i32
  }
  func.func @transform_16(%arg0: i32) -> (i32, i32) {
    %c0_i32 = arith.constant 0 : i32
    %c0_i32_0 = arith.constant 0 : i32
    %c0_i32_1 = arith.constant 0 : i32
    return %c0_i32, %c0_i32_0 : i32, i32
  }
  func.func @transform_17(%arg0: i32) -> (i32, i32) {
    %c0_i32 = arith.constant 0 : i32
    %c0_i32_0 = arith.constant 0 : i32
    %c0_i32_1 = arith.constant 0 : i32
    return %c0_i32, %c0_i32_0 : i32, i32
  }
  func.func @transform_18(%arg0: i32) -> (i32, i32) {
    %c0_i32 = arith.constant 0 : i32
    %c0_i32_0 = arith.constant 0 : i32
    %c0_i32_1 = arith.constant 0 : i32
    return %c0_i32, %c0_i32_0 : i32, i32
  }
  func.func @transform_19(%arg0: i32) -> (i32, i32, i32) {
    %c0_i32 = arith.constant 0 : i32
    %c0_i32_0 = arith.constant 0 : i32
    %c0_i32_1 = arith.constant 0 : i32
    return %arg0, %c0_i32, %c0_i32_0 : i32, i32, i32
  }
  func.func @transform_20(%arg0: i32) -> (i32, i32, i32) {
    %c0_i32 = arith.constant 0 : i32
    %c0_i32_0 = arith.constant 0 : i32
    %c0_i32_1 = arith.constant 0 : i32
    return %arg0, %c0_i32, %c0_i32_0 : i32, i32, i32
  }
}

module attributes {stable_mosaic.version = 11 : i64} {
  func.func @kernel(%arg0: i32, %arg1: memref<1x8x32xf32, #tpu.memory_space<vmem>>, %arg2: memref<1x8x16xf32, #tpu.memory_space<vmem>>, %arg3: memref<1x32xf32, #tpu.memory_space<vmem>>, %arg4: memref<1x32xf32, #tpu.memory_space<vmem>>, %arg5: memref<32x96xf32, #tpu.memory_space<vmem>>, %arg6: memref<1x96xf32, #tpu.memory_space<vmem>>, %arg7: memref<32x32xf32, #tpu.memory_space<vmem>>, %arg8: memref<1x32xf32, #tpu.memory_space<vmem>>, %arg9: memref<1x32xf32, #tpu.memory_space<vmem>>, %arg10: memref<1x32xf32, #tpu.memory_space<vmem>>, %arg11: memref<32x128xf32, #tpu.memory_space<vmem>>, %arg12: memref<1x128xf32, #tpu.memory_space<vmem>>, %arg13: memref<128x32xf32, #tpu.memory_space<vmem>>, %arg14: memref<1x32xf32, #tpu.memory_space<vmem>>, %arg15: memref<1x8x32xf32, #tpu.memory_space<vmem>>, %arg16: memref<1x1x16xf32, #tpu.memory_space<vmem>>) attributes {dimension_semantics = [#tpu.dimension_semantics<parallel>], iteration_bounds = array<i64: 2>, scalar_prefetch = 0 : i64, scratch_operands = 0 : i64, tpu.core_type = #tpu.core_type<tc>, window_params = [{transform_indices = @transform_0, window_bounds = array<i64: 1, 8, 32>}, {transform_indices = @transform_1, window_bounds = array<i64: 1, 8, 16>}, {pipeline_mode = #tpu.pipeline_mode<synchronous>, transform_indices = @transform_2, window_bounds = array<i64: 1, 32>}, {pipeline_mode = #tpu.pipeline_mode<synchronous>, transform_indices = @transform_3, window_bounds = array<i64: 1, 32>}, {pipeline_mode = #tpu.pipeline_mode<synchronous>, transform_indices = @transform_4, window_bounds = array<i64: 32, 96>}, {pipeline_mode = #tpu.pipeline_mode<synchronous>, transform_indices = @transform_5, window_bounds = array<i64: 1, 96>}, {pipeline_mode = #tpu.pipeline_mode<synchronous>, transform_indices = @transform_6, window_bounds = array<i64: 32, 32>}, {pipeline_mode = #tpu.pipeline_mode<synchronous>, transform_indices = @transform_7, window_bounds = array<i64: 1, 32>}, {pipeline_mode = #tpu.pipeline_mode<synchronous>, transform_indices = @transform_8, window_bounds = array<i64: 1, 32>}, {pipeline_mode = #tpu.pipeline_mode<synchronous>, transform_indices = @transform_9, window_bounds = array<i64: 1, 32>}, {pipeline_mode = #tpu.pipeline_mode<synchronous>, transform_indices = @transform_10, window_bounds = array<i64: 32, 128>}, {pipeline_mode = #tpu.pipeline_mode<synchronous>, transform_indices = @transform_11, window_bounds = array<i64: 1, 128>}, {pipeline_mode = #tpu.pipeline_mode<synchronous>, transform_indices = @transform_12, window_bounds = array<i64: 128, 32>}, {pipeline_mode = #tpu.pipeline_mode<synchronous>, transform_indices = @transform_13, window_bounds = array<i64: 1, 32>}, {transform_indices = @transform_14, window_bounds = array<i64: 1, 8, 32>}, {transform_indices = @transform_15, window_bounds = array<i64: 1, 1, 16>}]} {
    %c0 = arith.constant 0 : index
    %c0_0 = arith.constant 0 : index
    %c0_1 = arith.constant 0 : index
    %0 = vector.load %arg1[%c0, %c0_0, %c0_1] : memref<1x8x32xf32, #tpu.memory_space<vmem>>, vector<1x8x32xf32>
    %1 = vector.shape_cast %0 : vector<1x8x32xf32> to vector<8x32xf32>
    %c0_2 = arith.constant 0 : index
    %c0_3 = arith.constant 0 : index
    %2 = vector.load %arg3[%c0_2, %c0_3] : memref<1x32xf32, #tpu.memory_space<vmem>>, vector<1x32xf32>
    %c0_4 = arith.constant 0 : index
    %c0_5 = arith.constant 0 : index
    %3 = vector.load %arg4[%c0_4, %c0_5] : memref<1x32xf32, #tpu.memory_space<vmem>>, vector<1x32xf32>
    %cst = arith.constant dense<0.000000e+00> : vector<8xf32>
    %4 = vector.multi_reduction <add>, %1, %cst [1] : vector<8x32xf32> to vector<8xf32>
    %5 = vector.shape_cast %4 : vector<8xf32> to vector<8x1xf32>
    %cst_6 = arith.constant 3.200000e+01 : f32
    %6 = vector.broadcast %cst_6 : f32 to vector<8x1xf32>
    %7 = arith.divf %5, %6 : vector<8x1xf32>
    %8 = vector.broadcast %7 : vector<8x1xf32> to vector<8x32xf32>
    %9 = arith.subf %1, %8 : vector<8x32xf32>
    %10 = arith.mulf %9, %9 : vector<8x32xf32>
    %cst_7 = arith.constant dense<0.000000e+00> : vector<8xf32>
    %11 = vector.multi_reduction <add>, %10, %cst_7 [1] : vector<8x32xf32> to vector<8xf32>
    %12 = vector.shape_cast %11 : vector<8xf32> to vector<8x1xf32>
    %cst_8 = arith.constant 3.200000e+01 : f32
    %13 = vector.broadcast %cst_8 : f32 to vector<8x1xf32>
    %14 = arith.divf %12, %13 : vector<8x1xf32>
    %15 = vector.broadcast %7 : vector<8x1xf32> to vector<8x32xf32>
    %16 = arith.subf %1, %15 : vector<8x32xf32>
    %cst_9 = arith.constant 9.99999974E-6 : f32
    %17 = vector.broadcast %cst_9 : f32 to vector<8x1xf32>
    %18 = arith.addf %14, %17 : vector<8x1xf32>
    %19 = math.rsqrt %18 : vector<8x1xf32>
    %20 = vector.broadcast %19 : vector<8x1xf32> to vector<8x32xf32>
    %21 = arith.mulf %16, %20 : vector<8x32xf32>
    %22 = vector.broadcast %2 : vector<1x32xf32> to vector<8x32xf32>
    %23 = arith.mulf %21, %22 : vector<8x32xf32>
    %24 = vector.broadcast %3 : vector<1x32xf32> to vector<8x32xf32>
    %25 = arith.addf %23, %24 : vector<8x32xf32>
    %c0_10 = arith.constant 0 : index
    %c0_11 = arith.constant 0 : index
    %26 = vector.load %arg5[%c0_10, %c0_11] : memref<32x96xf32, #tpu.memory_space<vmem>>, vector<32x96xf32>
    %cst_12 = arith.constant dense<0.000000e+00> : vector<8x96xf32>
    %27 = tpu.matmul %25, %26, %cst_12 {dimension_numbers = #tpu.dot_dimension_numbers<[1], [0], [0], [1], [0, 0, 1, 1], [], []>} : vector<8x32xf32>, vector<32x96xf32>, vector<8x96xf32> -> vector<8x96xf32>
    %c0_13 = arith.constant 0 : index
    %c0_14 = arith.constant 0 : index
    %28 = vector.load %arg6[%c0_13, %c0_14] : memref<1x96xf32, #tpu.memory_space<vmem>>, vector<1x96xf32>
    %29 = vector.broadcast %28 : vector<1x96xf32> to vector<8x96xf32>
    %30 = arith.addf %27, %29 : vector<8x96xf32>
    %31 = vector.extract_strided_slice %30 {offsets = [0, 0], sizes = [8, 32], strides = [1, 1]} : vector<8x96xf32> to vector<8x32xf32>
    %cst_15 = arith.constant 5.000000e-01 : f32
    %32 = vector.broadcast %cst_15 : f32 to vector<8x32xf32>
    %33 = arith.mulf %31, %32 : vector<8x32xf32>
    %34 = vector.extract_strided_slice %30 {offsets = [0, 32], sizes = [8, 32], strides = [1, 1]} : vector<8x96xf32> to vector<8x32xf32>
    %35 = vector.extract_strided_slice %30 {offsets = [0, 64], sizes = [8, 32], strides = [1, 1]} : vector<8x96xf32> to vector<8x32xf32>
    %36 = vector.extract_strided_slice %33 {offsets = [0, 0], sizes = [8, 4], strides = [1, 1]} : vector<8x32xf32> to vector<8x4xf32>
    %37 = vector.extract_strided_slice %34 {offsets = [0, 0], sizes = [8, 4], strides = [1, 1]} : vector<8x32xf32> to vector<8x4xf32>
    %38 = vector.extract_strided_slice %35 {offsets = [0, 0], sizes = [8, 4], strides = [1, 1]} : vector<8x32xf32> to vector<8x4xf32>
    %cst_16 = arith.constant dense<0.000000e+00> : vector<8x8xf32>
    %39 = tpu.matmul %36, %37, %cst_16 {dimension_numbers = #tpu.dot_dimension_numbers<[1], [1], [0], [0], [0, 0, 1, 0], [], []>} : vector<8x4xf32>, vector<8x4xf32>, vector<8x8xf32> -> vector<8x8xf32>
    %cst_17 = arith.constant dense<0xFF800000> : vector<8xf32>
    %40 = vector.multi_reduction <maximumf>, %39, %cst_17 [1] : vector<8x8xf32> to vector<8xf32>
    %41 = vector.shape_cast %40 : vector<8xf32> to vector<8x1xf32>
    %42 = vector.broadcast %41 : vector<8x1xf32> to vector<8x8xf32>
    %43 = arith.subf %39, %42 : vector<8x8xf32>
    %44 = math.exp %43 : vector<8x8xf32>
    %cst_18 = arith.constant dense<0.000000e+00> : vector<8xf32>
    %45 = vector.multi_reduction <add>, %44, %cst_18 [1] : vector<8x8xf32> to vector<8xf32>
    %46 = vector.shape_cast %45 : vector<8xf32> to vector<8x1xf32>
    %47 = vector.broadcast %46 : vector<8x1xf32> to vector<8x8xf32>
    %48 = arith.divf %44, %47 : vector<8x8xf32>
    %cst_19 = arith.constant dense<0.000000e+00> : vector<8x4xf32>
    %49 = tpu.matmul %48, %38, %cst_19 {dimension_numbers = #tpu.dot_dimension_numbers<[1], [0], [0], [1], [0, 0, 1, 1], [], []>} : vector<8x8xf32>, vector<8x4xf32>, vector<8x4xf32> -> vector<8x4xf32>
    %50 = vector.extract_strided_slice %33 {offsets = [0, 4], sizes = [8, 4], strides = [1, 1]} : vector<8x32xf32> to vector<8x4xf32>
    %51 = vector.extract_strided_slice %34 {offsets = [0, 4], sizes = [8, 4], strides = [1, 1]} : vector<8x32xf32> to vector<8x4xf32>
    %52 = vector.extract_strided_slice %35 {offsets = [0, 4], sizes = [8, 4], strides = [1, 1]} : vector<8x32xf32> to vector<8x4xf32>
    %cst_20 = arith.constant dense<0.000000e+00> : vector<8x8xf32>
    %53 = tpu.matmul %50, %51, %cst_20 {dimension_numbers = #tpu.dot_dimension_numbers<[1], [1], [0], [0], [0, 0, 1, 0], [], []>} : vector<8x4xf32>, vector<8x4xf32>, vector<8x8xf32> -> vector<8x8xf32>
    %cst_21 = arith.constant dense<0xFF800000> : vector<8xf32>
    %54 = vector.multi_reduction <maximumf>, %53, %cst_21 [1] : vector<8x8xf32> to vector<8xf32>
    %55 = vector.shape_cast %54 : vector<8xf32> to vector<8x1xf32>
    %56 = vector.broadcast %55 : vector<8x1xf32> to vector<8x8xf32>
    %57 = arith.subf %53, %56 : vector<8x8xf32>
    %58 = math.exp %57 : vector<8x8xf32>
    %cst_22 = arith.constant dense<0.000000e+00> : vector<8xf32>
    %59 = vector.multi_reduction <add>, %58, %cst_22 [1] : vector<8x8xf32> to vector<8xf32>
    %60 = vector.shape_cast %59 : vector<8xf32> to vector<8x1xf32>
    %61 = vector.broadcast %60 : vector<8x1xf32> to vector<8x8xf32>
    %62 = arith.divf %58, %61 : vector<8x8xf32>
    %63 = arith.addf %48, %62 : vector<8x8xf32>
    %cst_23 = arith.constant dense<0.000000e+00> : vector<8x4xf32>
    %64 = tpu.matmul %62, %52, %cst_23 {dimension_numbers = #tpu.dot_dimension_numbers<[1], [0], [0], [1], [0, 0, 1, 1], [], []>} : vector<8x8xf32>, vector<8x4xf32>, vector<8x4xf32> -> vector<8x4xf32>
    %65 = vector.extract_strided_slice %33 {offsets = [0, 8], sizes = [8, 4], strides = [1, 1]} : vector<8x32xf32> to vector<8x4xf32>
    %66 = vector.extract_strided_slice %34 {offsets = [0, 8], sizes = [8, 4], strides = [1, 1]} : vector<8x32xf32> to vector<8x4xf32>
    %67 = vector.extract_strided_slice %35 {offsets = [0, 8], sizes = [8, 4], strides = [1, 1]} : vector<8x32xf32> to vector<8x4xf32>
    %cst_24 = arith.constant dense<0.000000e+00> : vector<8x8xf32>
    %68 = tpu.matmul %65, %66, %cst_24 {dimension_numbers = #tpu.dot_dimension_numbers<[1], [1], [0], [0], [0, 0, 1, 0], [], []>} : vector<8x4xf32>, vector<8x4xf32>, vector<8x8xf32> -> vector<8x8xf32>
    %cst_25 = arith.constant dense<0xFF800000> : vector<8xf32>
    %69 = vector.multi_reduction <maximumf>, %68, %cst_25 [1] : vector<8x8xf32> to vector<8xf32>
    %70 = vector.shape_cast %69 : vector<8xf32> to vector<8x1xf32>
    %71 = vector.broadcast %70 : vector<8x1xf32> to vector<8x8xf32>
    %72 = arith.subf %68, %71 : vector<8x8xf32>
    %73 = math.exp %72 : vector<8x8xf32>
    %cst_26 = arith.constant dense<0.000000e+00> : vector<8xf32>
    %74 = vector.multi_reduction <add>, %73, %cst_26 [1] : vector<8x8xf32> to vector<8xf32>
    %75 = vector.shape_cast %74 : vector<8xf32> to vector<8x1xf32>
    %76 = vector.broadcast %75 : vector<8x1xf32> to vector<8x8xf32>
    %77 = arith.divf %73, %76 : vector<8x8xf32>
    %78 = arith.addf %63, %77 : vector<8x8xf32>
    %cst_27 = arith.constant dense<0.000000e+00> : vector<8x4xf32>
    %79 = tpu.matmul %77, %67, %cst_27 {dimension_numbers = #tpu.dot_dimension_numbers<[1], [0], [0], [1], [0, 0, 1, 1], [], []>} : vector<8x8xf32>, vector<8x4xf32>, vector<8x4xf32> -> vector<8x4xf32>
    %80 = vector.extract_strided_slice %33 {offsets = [0, 12], sizes = [8, 4], strides = [1, 1]} : vector<8x32xf32> to vector<8x4xf32>
    %81 = vector.extract_strided_slice %34 {offsets = [0, 12], sizes = [8, 4], strides = [1, 1]} : vector<8x32xf32> to vector<8x4xf32>
    %82 = vector.extract_strided_slice %35 {offsets = [0, 12], sizes = [8, 4], strides = [1, 1]} : vector<8x32xf32> to vector<8x4xf32>
    %cst_28 = arith.constant dense<0.000000e+00> : vector<8x8xf32>
    %83 = tpu.matmul %80, %81, %cst_28 {dimension_numbers = #tpu.dot_dimension_numbers<[1], [1], [0], [0], [0, 0, 1, 0], [], []>} : vector<8x4xf32>, vector<8x4xf32>, vector<8x8xf32> -> vector<8x8xf32>
    %cst_29 = arith.constant dense<0xFF800000> : vector<8xf32>
    %84 = vector.multi_reduction <maximumf>, %83, %cst_29 [1] : vector<8x8xf32> to vector<8xf32>
    %85 = vector.shape_cast %84 : vector<8xf32> to vector<8x1xf32>
    %86 = vector.broadcast %85 : vector<8x1xf32> to vector<8x8xf32>
    %87 = arith.subf %83, %86 : vector<8x8xf32>
    %88 = math.exp %87 : vector<8x8xf32>
    %cst_30 = arith.constant dense<0.000000e+00> : vector<8xf32>
    %89 = vector.multi_reduction <add>, %88, %cst_30 [1] : vector<8x8xf32> to vector<8xf32>
    %90 = vector.shape_cast %89 : vector<8xf32> to vector<8x1xf32>
    %91 = vector.broadcast %90 : vector<8x1xf32> to vector<8x8xf32>
    %92 = arith.divf %88, %91 : vector<8x8xf32>
    %93 = arith.addf %78, %92 : vector<8x8xf32>
    %cst_31 = arith.constant dense<0.000000e+00> : vector<8x4xf32>
    %94 = tpu.matmul %92, %82, %cst_31 {dimension_numbers = #tpu.dot_dimension_numbers<[1], [0], [0], [1], [0, 0, 1, 1], [], []>} : vector<8x8xf32>, vector<8x4xf32>, vector<8x4xf32> -> vector<8x4xf32>
    %95 = vector.extract_strided_slice %33 {offsets = [0, 16], sizes = [8, 4], strides = [1, 1]} : vector<8x32xf32> to vector<8x4xf32>
    %96 = vector.extract_strided_slice %34 {offsets = [0, 16], sizes = [8, 4], strides = [1, 1]} : vector<8x32xf32> to vector<8x4xf32>
    %97 = vector.extract_strided_slice %35 {offsets = [0, 16], sizes = [8, 4], strides = [1, 1]} : vector<8x32xf32> to vector<8x4xf32>
    %cst_32 = arith.constant dense<0.000000e+00> : vector<8x8xf32>
    %98 = tpu.matmul %95, %96, %cst_32 {dimension_numbers = #tpu.dot_dimension_numbers<[1], [1], [0], [0], [0, 0, 1, 0], [], []>} : vector<8x4xf32>, vector<8x4xf32>, vector<8x8xf32> -> vector<8x8xf32>
    %cst_33 = arith.constant dense<0xFF800000> : vector<8xf32>
    %99 = vector.multi_reduction <maximumf>, %98, %cst_33 [1] : vector<8x8xf32> to vector<8xf32>
    %100 = vector.shape_cast %99 : vector<8xf32> to vector<8x1xf32>
    %101 = vector.broadcast %100 : vector<8x1xf32> to vector<8x8xf32>
    %102 = arith.subf %98, %101 : vector<8x8xf32>
    %103 = math.exp %102 : vector<8x8xf32>
    %cst_34 = arith.constant dense<0.000000e+00> : vector<8xf32>
    %104 = vector.multi_reduction <add>, %103, %cst_34 [1] : vector<8x8xf32> to vector<8xf32>
    %105 = vector.shape_cast %104 : vector<8xf32> to vector<8x1xf32>
    %106 = vector.broadcast %105 : vector<8x1xf32> to vector<8x8xf32>
    %107 = arith.divf %103, %106 : vector<8x8xf32>
    %108 = arith.addf %93, %107 : vector<8x8xf32>
    %cst_35 = arith.constant dense<0.000000e+00> : vector<8x4xf32>
    %109 = tpu.matmul %107, %97, %cst_35 {dimension_numbers = #tpu.dot_dimension_numbers<[1], [0], [0], [1], [0, 0, 1, 1], [], []>} : vector<8x8xf32>, vector<8x4xf32>, vector<8x4xf32> -> vector<8x4xf32>
    %110 = vector.extract_strided_slice %33 {offsets = [0, 20], sizes = [8, 4], strides = [1, 1]} : vector<8x32xf32> to vector<8x4xf32>
    %111 = vector.extract_strided_slice %34 {offsets = [0, 20], sizes = [8, 4], strides = [1, 1]} : vector<8x32xf32> to vector<8x4xf32>
    %112 = vector.extract_strided_slice %35 {offsets = [0, 20], sizes = [8, 4], strides = [1, 1]} : vector<8x32xf32> to vector<8x4xf32>
    %cst_36 = arith.constant dense<0.000000e+00> : vector<8x8xf32>
    %113 = tpu.matmul %110, %111, %cst_36 {dimension_numbers = #tpu.dot_dimension_numbers<[1], [1], [0], [0], [0, 0, 1, 0], [], []>} : vector<8x4xf32>, vector<8x4xf32>, vector<8x8xf32> -> vector<8x8xf32>
    %cst_37 = arith.constant dense<0xFF800000> : vector<8xf32>
    %114 = vector.multi_reduction <maximumf>, %113, %cst_37 [1] : vector<8x8xf32> to vector<8xf32>
    %115 = vector.shape_cast %114 : vector<8xf32> to vector<8x1xf32>
    %116 = vector.broadcast %115 : vector<8x1xf32> to vector<8x8xf32>
    %117 = arith.subf %113, %116 : vector<8x8xf32>
    %118 = math.exp %117 : vector<8x8xf32>
    %cst_38 = arith.constant dense<0.000000e+00> : vector<8xf32>
    %119 = vector.multi_reduction <add>, %118, %cst_38 [1] : vector<8x8xf32> to vector<8xf32>
    %120 = vector.shape_cast %119 : vector<8xf32> to vector<8x1xf32>
    %121 = vector.broadcast %120 : vector<8x1xf32> to vector<8x8xf32>
    %122 = arith.divf %118, %121 : vector<8x8xf32>
    %123 = arith.addf %108, %122 : vector<8x8xf32>
    %cst_39 = arith.constant dense<0.000000e+00> : vector<8x4xf32>
    %124 = tpu.matmul %122, %112, %cst_39 {dimension_numbers = #tpu.dot_dimension_numbers<[1], [0], [0], [1], [0, 0, 1, 1], [], []>} : vector<8x8xf32>, vector<8x4xf32>, vector<8x4xf32> -> vector<8x4xf32>
    %125 = vector.extract_strided_slice %33 {offsets = [0, 24], sizes = [8, 4], strides = [1, 1]} : vector<8x32xf32> to vector<8x4xf32>
    %126 = vector.extract_strided_slice %34 {offsets = [0, 24], sizes = [8, 4], strides = [1, 1]} : vector<8x32xf32> to vector<8x4xf32>
    %127 = vector.extract_strided_slice %35 {offsets = [0, 24], sizes = [8, 4], strides = [1, 1]} : vector<8x32xf32> to vector<8x4xf32>
    %cst_40 = arith.constant dense<0.000000e+00> : vector<8x8xf32>
    %128 = tpu.matmul %125, %126, %cst_40 {dimension_numbers = #tpu.dot_dimension_numbers<[1], [1], [0], [0], [0, 0, 1, 0], [], []>} : vector<8x4xf32>, vector<8x4xf32>, vector<8x8xf32> -> vector<8x8xf32>
    %cst_41 = arith.constant dense<0xFF800000> : vector<8xf32>
    %129 = vector.multi_reduction <maximumf>, %128, %cst_41 [1] : vector<8x8xf32> to vector<8xf32>
    %130 = vector.shape_cast %129 : vector<8xf32> to vector<8x1xf32>
    %131 = vector.broadcast %130 : vector<8x1xf32> to vector<8x8xf32>
    %132 = arith.subf %128, %131 : vector<8x8xf32>
    %133 = math.exp %132 : vector<8x8xf32>
    %cst_42 = arith.constant dense<0.000000e+00> : vector<8xf32>
    %134 = vector.multi_reduction <add>, %133, %cst_42 [1] : vector<8x8xf32> to vector<8xf32>
    %135 = vector.shape_cast %134 : vector<8xf32> to vector<8x1xf32>
    %136 = vector.broadcast %135 : vector<8x1xf32> to vector<8x8xf32>
    %137 = arith.divf %133, %136 : vector<8x8xf32>
    %138 = arith.addf %123, %137 : vector<8x8xf32>
    %cst_43 = arith.constant dense<0.000000e+00> : vector<8x4xf32>
    %139 = tpu.matmul %137, %127, %cst_43 {dimension_numbers = #tpu.dot_dimension_numbers<[1], [0], [0], [1], [0, 0, 1, 1], [], []>} : vector<8x8xf32>, vector<8x4xf32>, vector<8x4xf32> -> vector<8x4xf32>
    %140 = vector.extract_strided_slice %33 {offsets = [0, 28], sizes = [8, 4], strides = [1, 1]} : vector<8x32xf32> to vector<8x4xf32>
    %141 = vector.extract_strided_slice %34 {offsets = [0, 28], sizes = [8, 4], strides = [1, 1]} : vector<8x32xf32> to vector<8x4xf32>
    %142 = vector.extract_strided_slice %35 {offsets = [0, 28], sizes = [8, 4], strides = [1, 1]} : vector<8x32xf32> to vector<8x4xf32>
    %cst_44 = arith.constant dense<0.000000e+00> : vector<8x8xf32>
    %143 = tpu.matmul %140, %141, %cst_44 {dimension_numbers = #tpu.dot_dimension_numbers<[1], [1], [0], [0], [0, 0, 1, 0], [], []>} : vector<8x4xf32>, vector<8x4xf32>, vector<8x8xf32> -> vector<8x8xf32>
    %cst_45 = arith.constant dense<0xFF800000> : vector<8xf32>
    %144 = vector.multi_reduction <maximumf>, %143, %cst_45 [1] : vector<8x8xf32> to vector<8xf32>
    %145 = vector.shape_cast %144 : vector<8xf32> to vector<8x1xf32>
    %146 = vector.broadcast %145 : vector<8x1xf32> to vector<8x8xf32>
    %147 = arith.subf %143, %146 : vector<8x8xf32>
    %148 = math.exp %147 : vector<8x8xf32>
    %cst_46 = arith.constant dense<0.000000e+00> : vector<8xf32>
    %149 = vector.multi_reduction <add>, %148, %cst_46 [1] : vector<8x8xf32> to vector<8xf32>
    %150 = vector.shape_cast %149 : vector<8xf32> to vector<8x1xf32>
    %151 = vector.broadcast %150 : vector<8x1xf32> to vector<8x8xf32>
    %152 = arith.divf %148, %151 : vector<8x8xf32>
    %153 = arith.addf %138, %152 : vector<8x8xf32>
    %cst_47 = arith.constant dense<0.000000e+00> : vector<8x4xf32>
    %154 = tpu.matmul %152, %142, %cst_47 {dimension_numbers = #tpu.dot_dimension_numbers<[1], [0], [0], [1], [0, 0, 1, 1], [], []>} : vector<8x8xf32>, vector<8x4xf32>, vector<8x4xf32> -> vector<8x4xf32>
    %155 = tpu.concatenate %49, %64, %79, %94, %109, %124, %139, %154 in 1 : vector<8x4xf32>, vector<8x4xf32>, vector<8x4xf32>, vector<8x4xf32>, vector<8x4xf32>, vector<8x4xf32>, vector<8x4xf32>, vector<8x4xf32> -> vector<8x32xf32>
    %c0_48 = arith.constant 0 : index
    %c0_49 = arith.constant 0 : index
    %156 = vector.load %arg7[%c0_48, %c0_49] : memref<32x32xf32, #tpu.memory_space<vmem>>, vector<32x32xf32>
    %cst_50 = arith.constant dense<0.000000e+00> : vector<8x32xf32>
    %157 = tpu.matmul %155, %156, %cst_50 {dimension_numbers = #tpu.dot_dimension_numbers<[1], [0], [0], [1], [0, 0, 1, 1], [], []>} : vector<8x32xf32>, vector<32x32xf32>, vector<8x32xf32> -> vector<8x32xf32>
    %c0_51 = arith.constant 0 : index
    %c0_52 = arith.constant 0 : index
    %158 = vector.load %arg8[%c0_51, %c0_52] : memref<1x32xf32, #tpu.memory_space<vmem>>, vector<1x32xf32>
    %159 = vector.broadcast %158 : vector<1x32xf32> to vector<8x32xf32>
    %160 = arith.addf %157, %159 : vector<8x32xf32>
    %161 = arith.addf %1, %160 : vector<8x32xf32>
    %c0_53 = arith.constant 0 : index
    %c0_54 = arith.constant 0 : index
    %162 = vector.load %arg9[%c0_53, %c0_54] : memref<1x32xf32, #tpu.memory_space<vmem>>, vector<1x32xf32>
    %c0_55 = arith.constant 0 : index
    %c0_56 = arith.constant 0 : index
    %163 = vector.load %arg10[%c0_55, %c0_56] : memref<1x32xf32, #tpu.memory_space<vmem>>, vector<1x32xf32>
    %cst_57 = arith.constant dense<0.000000e+00> : vector<8xf32>
    %164 = vector.multi_reduction <add>, %161, %cst_57 [1] : vector<8x32xf32> to vector<8xf32>
    %165 = vector.shape_cast %164 : vector<8xf32> to vector<8x1xf32>
    %cst_58 = arith.constant 3.200000e+01 : f32
    %166 = vector.broadcast %cst_58 : f32 to vector<8x1xf32>
    %167 = arith.divf %165, %166 : vector<8x1xf32>
    %168 = vector.broadcast %167 : vector<8x1xf32> to vector<8x32xf32>
    %169 = arith.subf %161, %168 : vector<8x32xf32>
    %170 = arith.mulf %169, %169 : vector<8x32xf32>
    %cst_59 = arith.constant dense<0.000000e+00> : vector<8xf32>
    %171 = vector.multi_reduction <add>, %170, %cst_59 [1] : vector<8x32xf32> to vector<8xf32>
    %172 = vector.shape_cast %171 : vector<8xf32> to vector<8x1xf32>
    %cst_60 = arith.constant 3.200000e+01 : f32
    %173 = vector.broadcast %cst_60 : f32 to vector<8x1xf32>
    %174 = arith.divf %172, %173 : vector<8x1xf32>
    %175 = vector.broadcast %167 : vector<8x1xf32> to vector<8x32xf32>
    %176 = arith.subf %161, %175 : vector<8x32xf32>
    %cst_61 = arith.constant 9.99999974E-6 : f32
    %177 = vector.broadcast %cst_61 : f32 to vector<8x1xf32>
    %178 = arith.addf %174, %177 : vector<8x1xf32>
    %179 = math.rsqrt %178 : vector<8x1xf32>
    %180 = vector.broadcast %179 : vector<8x1xf32> to vector<8x32xf32>
    %181 = arith.mulf %176, %180 : vector<8x32xf32>
    %182 = vector.broadcast %162 : vector<1x32xf32> to vector<8x32xf32>
    %183 = arith.mulf %181, %182 : vector<8x32xf32>
    %184 = vector.broadcast %163 : vector<1x32xf32> to vector<8x32xf32>
    %185 = arith.addf %183, %184 : vector<8x32xf32>
    %c0_62 = arith.constant 0 : index
    %c0_63 = arith.constant 0 : index
    %186 = vector.load %arg11[%c0_62, %c0_63] : memref<32x128xf32, #tpu.memory_space<vmem>>, vector<32x128xf32>
    %cst_64 = arith.constant dense<0.000000e+00> : vector<8x128xf32>
    %187 = tpu.matmul %185, %186, %cst_64 {dimension_numbers = #tpu.dot_dimension_numbers<[1], [0], [0], [1], [0, 0, 1, 1], [], []>} : vector<8x32xf32>, vector<32x128xf32>, vector<8x128xf32> -> vector<8x128xf32>
    %c0_65 = arith.constant 0 : index
    %c0_66 = arith.constant 0 : index
    %188 = vector.load %arg12[%c0_65, %c0_66] : memref<1x128xf32, #tpu.memory_space<vmem>>, vector<1x128xf32>
    %189 = vector.broadcast %188 : vector<1x128xf32> to vector<8x128xf32>
    %190 = arith.addf %187, %189 : vector<8x128xf32>
    %191 = arith.mulf %190, %190 : vector<8x128xf32>
    %192 = arith.mulf %190, %191 : vector<8x128xf32>
    %cst_67 = arith.constant 4.471500e-02 : f32
    %193 = vector.broadcast %cst_67 : f32 to vector<8x128xf32>
    %194 = arith.mulf %193, %192 : vector<8x128xf32>
    %195 = arith.addf %190, %194 : vector<8x128xf32>
    %cst_68 = arith.constant 0.797884583 : f32
    %196 = vector.broadcast %cst_68 : f32 to vector<8x128xf32>
    %197 = arith.mulf %196, %195 : vector<8x128xf32>
    %198 = math.tanh %197 : vector<8x128xf32>
    %cst_69 = arith.constant 1.000000e+00 : f32
    %199 = vector.broadcast %cst_69 : f32 to vector<8x128xf32>
    %200 = arith.addf %199, %198 : vector<8x128xf32>
    %cst_70 = arith.constant 5.000000e-01 : f32
    %201 = vector.broadcast %cst_70 : f32 to vector<8x128xf32>
    %202 = arith.mulf %201, %200 : vector<8x128xf32>
    %203 = arith.mulf %190, %202 : vector<8x128xf32>
    %c0_71 = arith.constant 0 : index
    %c0_72 = arith.constant 0 : index
    %204 = vector.load %arg13[%c0_71, %c0_72] : memref<128x32xf32, #tpu.memory_space<vmem>>, vector<128x32xf32>
    %cst_73 = arith.constant dense<0.000000e+00> : vector<8x32xf32>
    %205 = tpu.matmul %203, %204, %cst_73 {dimension_numbers = #tpu.dot_dimension_numbers<[1], [0], [0], [1], [0, 0, 1, 1], [], []>} : vector<8x128xf32>, vector<128x32xf32>, vector<8x32xf32> -> vector<8x32xf32>
    %c0_74 = arith.constant 0 : index
    %c0_75 = arith.constant 0 : index
    %206 = vector.load %arg14[%c0_74, %c0_75] : memref<1x32xf32, #tpu.memory_space<vmem>>, vector<1x32xf32>
    %207 = vector.broadcast %206 : vector<1x32xf32> to vector<8x32xf32>
    %208 = arith.addf %205, %207 : vector<8x32xf32>
    %209 = arith.addf %161, %208 : vector<8x32xf32>
    %c0_76 = arith.constant 0 : index
    %c0_77 = arith.constant 0 : index
    %c0_78 = arith.constant 0 : index
    %210 = vector.load %arg15[%c0_76, %c0_77, %c0_78] : memref<1x8x32xf32, #tpu.memory_space<vmem>>, vector<1x8x32xf32>
    %211 = vector.shape_cast %210 : vector<1x8x32xf32> to vector<8x32xf32>
    %212 = vector.shape_cast %209 : vector<8x32xf32> to vector<1x8x32xf32>
    tpu.vector_store %arg15[%c0_76, %c0_77, %c0_78], %212 {strides = array<i32>} : memref<1x8x32xf32, #tpu.memory_space<vmem>>, vector<1x8x32xf32>,
    %cst_79 = arith.constant dense<0.000000e+00> : vector<8xf32>
    %213 = vector.multi_reduction <add>, %153, %cst_79 [0] : vector<8x8xf32> to vector<8xf32>
    %214 = vector.shape_cast %213 : vector<8xf32> to vector<1x8xf32>
    %c0_80 = arith.constant 0 : index
    %c0_81 = arith.constant 0 : index
    %c0_82 = arith.constant 0 : index
    %215 = vector.load %arg2[%c0_80, %c0_81, %c0_82] : memref<1x8x16xf32, #tpu.memory_space<vmem>>, vector<1x8x16xf32>
    %216 = vector.shape_cast %215 : vector<1x8x16xf32> to vector<8x16xf32>
    %cst_83 = arith.constant dense<0.000000e+00> : vector<1x16xf32>
    %217 = tpu.matmul %214, %216, %cst_83 {dimension_numbers = #tpu.dot_dimension_numbers<[1], [0], [0], [1], [0, 0, 1, 1], [], []>} : vector<1x8xf32>, vector<8x16xf32>, vector<1x16xf32> -> vector<1x16xf32>
    %c0_84 = arith.constant 0 : index
    %c0_85 = arith.constant 0 : index
    %c0_86 = arith.constant 0 : index
    %218 = vector.load %arg16[%c0_84, %c0_85, %c0_86] : memref<1x1x16xf32, #tpu.memory_space<vmem>>, vector<1x1x16xf32>
    %219 = vector.shape_cast %218 : vector<1x1x16xf32> to vector<1x16xf32>
    %220 = vector.shape_cast %217 : vector<1x16xf32> to vector<1x1x16xf32>
    tpu.vector_store %arg16[%c0_84, %c0_85, %c0_86], %220 {strides = array<i32>} : memref<1x1x16xf32, #tpu.memory_space<vmem>>, vector<1x1x16xf32>,
    return
  }
  func.func @transform_0(%arg0: i32) -> (i32, i32, i32) {
    %c0_i32 = arith.constant 0 : i32
    %c0_i32_0 = arith.constant 0 : i32
    %c0_i32_1 = arith.constant 0 : i32
    return %arg0, %c0_i32, %c0_i32_0 : i32, i32, i32
  }
  func.func @transform_1(%arg0: i32) -> (i32, i32, i32) {
    %c0_i32 = arith.constant 0 : i32
    %c0_i32_0 = arith.constant 0 : i32
    %c0_i32_1 = arith.constant 0 : i32
    return %arg0, %c0_i32, %c0_i32_0 : i32, i32, i32
  }
  func.func @transform_2(%arg0: i32) -> (i32, i32) {
    %c0_i32 = arith.constant 0 : i32
    %c0_i32_0 = arith.constant 0 : i32
    %c0_i32_1 = arith.constant 0 : i32
    return %c0_i32, %c0_i32_0 : i32, i32
  }
  func.func @transform_3(%arg0: i32) -> (i32, i32) {
    %c0_i32 = arith.constant 0 : i32
    %c0_i32_0 = arith.constant 0 : i32
    %c0_i32_1 = arith.constant 0 : i32
    return %c0_i32, %c0_i32_0 : i32, i32
  }
  func.func @transform_4(%arg0: i32) -> (i32, i32) {
    %c0_i32 = arith.constant 0 : i32
    %c0_i32_0 = arith.constant 0 : i32
    %c0_i32_1 = arith.constant 0 : i32
    return %c0_i32, %c0_i32_0 : i32, i32
  }
  func.func @transform_5(%arg0: i32) -> (i32, i32) {
    %c0_i32 = arith.constant 0 : i32
    %c0_i32_0 = arith.constant 0 : i32
    %c0_i32_1 = arith.constant 0 : i32
    return %c0_i32, %c0_i32_0 : i32, i32
  }
  func.func @transform_6(%arg0: i32) -> (i32, i32) {
    %c0_i32 = arith.constant 0 : i32
    %c0_i32_0 = arith.constant 0 : i32
    %c0_i32_1 = arith.constant 0 : i32
    return %c0_i32, %c0_i32_0 : i32, i32
  }
  func.func @transform_7(%arg0: i32) -> (i32, i32) {
    %c0_i32 = arith.constant 0 : i32
    %c0_i32_0 = arith.constant 0 : i32
    %c0_i32_1 = arith.constant 0 : i32
    return %c0_i32, %c0_i32_0 : i32, i32
  }
  func.func @transform_8(%arg0: i32) -> (i32, i32) {
    %c0_i32 = arith.constant 0 : i32
    %c0_i32_0 = arith.constant 0 : i32
    %c0_i32_1 = arith.constant 0 : i32
    return %c0_i32, %c0_i32_0 : i32, i32
  }
  func.func @transform_9(%arg0: i32) -> (i32, i32) {
    %c0_i32 = arith.constant 0 : i32
    %c0_i32_0 = arith.constant 0 : i32
    %c0_i32_1 = arith.constant 0 : i32
    return %c0_i32, %c0_i32_0 : i32, i32
  }
  func.func @transform_10(%arg0: i32) -> (i32, i32) {
    %c0_i32 = arith.constant 0 : i32
    %c0_i32_0 = arith.constant 0 : i32
    %c0_i32_1 = arith.constant 0 : i32
    return %c0_i32, %c0_i32_0 : i32, i32
  }
  func.func @transform_11(%arg0: i32) -> (i32, i32) {
    %c0_i32 = arith.constant 0 : i32
    %c0_i32_0 = arith.constant 0 : i32
    %c0_i32_1 = arith.constant 0 : i32
    return %c0_i32, %c0_i32_0 : i32, i32
  }
  func.func @transform_12(%arg0: i32) -> (i32, i32) {
    %c0_i32 = arith.constant 0 : i32
    %c0_i32_0 = arith.constant 0 : i32
    %c0_i32_1 = arith.constant 0 : i32
    return %c0_i32, %c0_i32_0 : i32, i32
  }
  func.func @transform_13(%arg0: i32) -> (i32, i32) {
    %c0_i32 = arith.constant 0 : i32
    %c0_i32_0 = arith.constant 0 : i32
    %c0_i32_1 = arith.constant 0 : i32
    return %c0_i32, %c0_i32_0 : i32, i32
  }
  func.func @transform_14(%arg0: i32) -> (i32, i32, i32) {
    %c0_i32 = arith.constant 0 : i32
    %c0_i32_0 = arith.constant 0 : i32
    %c0_i32_1 = arith.constant 0 : i32
    return %arg0, %c0_i32, %c0_i32_0 : i32, i32, i32
  }
  func.func @transform_15(%arg0: i32) -> (i32, i32, i32) {
    %c0_i32 = arith.constant 0 : i32
    %c0_i32_0 = arith.constant 0 : i32
    %c0_i32_1 = arith.constant 0 : i32
    return %arg0, %c0_i32, %c0_i32_0 : i32, i32, i32
  }
}

module attributes {stable_mosaic.version = 11 : i64} {
  func.func @kernel(%arg0: i32, %arg1: memref<1x1x32xf32, #tpu.memory_space<vmem>>, %arg2: memref<1x8x32xf32, #tpu.memory_space<vmem>>, %arg3: memref<1x32xf32, #tpu.memory_space<vmem>>, %arg4: memref<1x32xf32, #tpu.memory_space<vmem>>, %arg5: memref<1x32xf32, #tpu.memory_space<vmem>>, %arg6: memref<1x32xf32, #tpu.memory_space<vmem>>, %arg7: memref<32x32xf32, #tpu.memory_space<vmem>>, %arg8: memref<1x32xf32, #tpu.memory_space<vmem>>, %arg9: memref<32x64xf32, #tpu.memory_space<vmem>>, %arg10: memref<1x64xf32, #tpu.memory_space<vmem>>, %arg11: memref<32x32xf32, #tpu.memory_space<vmem>>, %arg12: memref<1x32xf32, #tpu.memory_space<vmem>>, %arg13: memref<1x32xf32, #tpu.memory_space<vmem>>, %arg14: memref<1x32xf32, #tpu.memory_space<vmem>>, %arg15: memref<32x128xf32, #tpu.memory_space<vmem>>, %arg16: memref<1x128xf32, #tpu.memory_space<vmem>>, %arg17: memref<128x32xf32, #tpu.memory_space<vmem>>, %arg18: memref<1x32xf32, #tpu.memory_space<vmem>>, %arg19: memref<1x32xf32, #tpu.memory_space<vmem>>, %arg20: memref<1x32xf32, #tpu.memory_space<vmem>>, %arg21: memref<1x1x32xf32, #tpu.memory_space<vmem>>) attributes {dimension_semantics = [#tpu.dimension_semantics<parallel>], iteration_bounds = array<i64: 2>, scalar_prefetch = 0 : i64, scratch_operands = 0 : i64, tpu.core_type = #tpu.core_type<tc>, window_params = [{transform_indices = @transform_0, window_bounds = array<i64: 1, 1, 32>}, {transform_indices = @transform_1, window_bounds = array<i64: 1, 8, 32>}, {pipeline_mode = #tpu.pipeline_mode<synchronous>, transform_indices = @transform_2, window_bounds = array<i64: 1, 32>}, {pipeline_mode = #tpu.pipeline_mode<synchronous>, transform_indices = @transform_3, window_bounds = array<i64: 1, 32>}, {pipeline_mode = #tpu.pipeline_mode<synchronous>, transform_indices = @transform_4, window_bounds = array<i64: 1, 32>}, {pipeline_mode = #tpu.pipeline_mode<synchronous>, transform_indices = @transform_5, window_bounds = array<i64: 1, 32>}, {pipeline_mode = #tpu.pipeline_mode<synchronous>, transform_indices = @transform_6, window_bounds = array<i64: 32, 32>}, {pipeline_mode = #tpu.pipeline_mode<synchronous>, transform_indices = @transform_7, window_bounds = array<i64: 1, 32>}, {pipeline_mode = #tpu.pipeline_mode<synchronous>, transform_indices = @transform_8, window_bounds = array<i64: 32, 64>}, {pipeline_mode = #tpu.pipeline_mode<synchronous>, transform_indices = @transform_9, window_bounds = array<i64: 1, 64>}, {pipeline_mode = #tpu.pipeline_mode<synchronous>, transform_indices = @transform_10, window_bounds = array<i64: 32, 32>}, {pipeline_mode = #tpu.pipeline_mode<synchronous>, transform_indices = @transform_11, window_bounds = array<i64: 1, 32>}, {pipeline_mode = #tpu.pipeline_mode<synchronous>, transform_indices = @transform_12, window_bounds = array<i64: 1, 32>}, {pipeline_mode = #tpu.pipeline_mode<synchronous>, transform_indices = @transform_13, window_bounds = array<i64: 1, 32>}, {pipeline_mode = #tpu.pipeline_mode<synchronous>, transform_indices = @transform_14, window_bounds = array<i64: 32, 128>}, {pipeline_mode = #tpu.pipeline_mode<synchronous>, transform_indices = @transform_15, window_bounds = array<i64: 1, 128>}, {pipeline_mode = #tpu.pipeline_mode<synchronous>, transform_indices = @transform_16, window_bounds = array<i64: 128, 32>}, {pipeline_mode = #tpu.pipeline_mode<synchronous>, transform_indices = @transform_17, window_bounds = array<i64: 1, 32>}, {pipeline_mode = #tpu.pipeline_mode<synchronous>, transform_indices = @transform_18, window_bounds = array<i64: 1, 32>}, {pipeline_mode = #tpu.pipeline_mode<synchronous>, transform_indices = @transform_19, window_bounds = array<i64: 1, 32>}, {transform_indices = @transform_20, window_bounds = array<i64: 1, 1, 32>}]} {
    %c0 = arith.constant 0 : index
    %c0_0 = arith.constant 0 : index
    %c0_1 = arith.constant 0 : index
    %0 = vector.load %arg1[%c0, %c0_0, %c0_1] : memref<1x1x32xf32, #tpu.memory_space<vmem>>, vector<1x1x32xf32>
    %1 = vector.shape_cast %0 : vector<1x1x32xf32> to vector<1x32xf32>
    %c0_2 = arith.constant 0 : index
    %c0_3 = arith.constant 0 : index
    %2 = vector.load %arg3[%c0_2, %c0_3] : memref<1x32xf32, #tpu.memory_space<vmem>>, vector<1x32xf32>
    %c0_4 = arith.constant 0 : index
    %c0_5 = arith.constant 0 : index
    %3 = vector.load %arg4[%c0_4, %c0_5] : memref<1x32xf32, #tpu.memory_space<vmem>>, vector<1x32xf32>
    %cst = arith.constant dense<0.000000e+00> : vector<1xf32>
    %4 = vector.multi_reduction <add>, %1, %cst [1] : vector<1x32xf32> to vector<1xf32>
    %5 = vector.shape_cast %4 : vector<1xf32> to vector<1x1xf32>
    %cst_6 = arith.constant 3.200000e+01 : f32
    %6 = vector.broadcast %cst_6 : f32 to vector<1x1xf32>
    %7 = arith.divf %5, %6 : vector<1x1xf32>
    %8 = vector.broadcast %7 : vector<1x1xf32> to vector<1x32xf32>
    %9 = arith.subf %1, %8 : vector<1x32xf32>
    %10 = arith.mulf %9, %9 : vector<1x32xf32>
    %cst_7 = arith.constant dense<0.000000e+00> : vector<1xf32>
    %11 = vector.multi_reduction <add>, %10, %cst_7 [1] : vector<1x32xf32> to vector<1xf32>
    %12 = vector.shape_cast %11 : vector<1xf32> to vector<1x1xf32>
    %cst_8 = arith.constant 3.200000e+01 : f32
    %13 = vector.broadcast %cst_8 : f32 to vector<1x1xf32>
    %14 = arith.divf %12, %13 : vector<1x1xf32>
    %15 = vector.broadcast %7 : vector<1x1xf32> to vector<1x32xf32>
    %16 = arith.subf %1, %15 : vector<1x32xf32>
    %cst_9 = arith.constant 9.99999974E-6 : f32
    %17 = vector.broadcast %cst_9 : f32 to vector<1x1xf32>
    %18 = arith.addf %14, %17 : vector<1x1xf32>
    %19 = math.rsqrt %18 : vector<1x1xf32>
    %20 = vector.broadcast %19 : vector<1x1xf32> to vector<1x32xf32>
    %21 = arith.mulf %16, %20 : vector<1x32xf32>
    %22 = arith.mulf %21, %2 : vector<1x32xf32>
    %23 = arith.addf %22, %3 : vector<1x32xf32>
    %c0_10 = arith.constant 0 : index
    %c0_11 = arith.constant 0 : index
    %c0_12 = arith.constant 0 : index
    %24 = vector.load %arg2[%c0_10, %c0_11, %c0_12] : memref<1x8x32xf32, #tpu.memory_space<vmem>>, vector<1x8x32xf32>
    %25 = vector.shape_cast %24 : vector<1x8x32xf32> to vector<8x32xf32>
    %c0_13 = arith.constant 0 : index
    %c0_14 = arith.constant 0 : index
    %26 = vector.load %arg5[%c0_13, %c0_14] : memref<1x32xf32, #tpu.memory_space<vmem>>, vector<1x32xf32>
    %c0_15 = arith.constant 0 : index
    %c0_16 = arith.constant 0 : index
    %27 = vector.load %arg6[%c0_15, %c0_16] : memref<1x32xf32, #tpu.memory_space<vmem>>, vector<1x32xf32>
    %cst_17 = arith.constant dense<0.000000e+00> : vector<8xf32>
    %28 = vector.multi_reduction <add>, %25, %cst_17 [1] : vector<8x32xf32> to vector<8xf32>
    %29 = vector.shape_cast %28 : vector<8xf32> to vector<8x1xf32>
    %cst_18 = arith.constant 3.200000e+01 : f32
    %30 = vector.broadcast %cst_18 : f32 to vector<8x1xf32>
    %31 = arith.divf %29, %30 : vector<8x1xf32>
    %32 = vector.broadcast %31 : vector<8x1xf32> to vector<8x32xf32>
    %33 = arith.subf %25, %32 : vector<8x32xf32>
    %34 = arith.mulf %33, %33 : vector<8x32xf32>
    %cst_19 = arith.constant dense<0.000000e+00> : vector<8xf32>
    %35 = vector.multi_reduction <add>, %34, %cst_19 [1] : vector<8x32xf32> to vector<8xf32>
    %36 = vector.shape_cast %35 : vector<8xf32> to vector<8x1xf32>
    %cst_20 = arith.constant 3.200000e+01 : f32
    %37 = vector.broadcast %cst_20 : f32 to vector<8x1xf32>
    %38 = arith.divf %36, %37 : vector<8x1xf32>
    %39 = vector.broadcast %31 : vector<8x1xf32> to vector<8x32xf32>
    %40 = arith.subf %25, %39 : vector<8x32xf32>
    %cst_21 = arith.constant 9.99999974E-6 : f32
    %41 = vector.broadcast %cst_21 : f32 to vector<8x1xf32>
    %42 = arith.addf %38, %41 : vector<8x1xf32>
    %43 = math.rsqrt %42 : vector<8x1xf32>
    %44 = vector.broadcast %43 : vector<8x1xf32> to vector<8x32xf32>
    %45 = arith.mulf %40, %44 : vector<8x32xf32>
    %46 = vector.broadcast %26 : vector<1x32xf32> to vector<8x32xf32>
    %47 = arith.mulf %45, %46 : vector<8x32xf32>
    %48 = vector.broadcast %27 : vector<1x32xf32> to vector<8x32xf32>
    %49 = arith.addf %47, %48 : vector<8x32xf32>
    %c0_22 = arith.constant 0 : index
    %c0_23 = arith.constant 0 : index
    %50 = vector.load %arg7[%c0_22, %c0_23] : memref<32x32xf32, #tpu.memory_space<vmem>>, vector<32x32xf32>
    %cst_24 = arith.constant dense<0.000000e+00> : vector<1x32xf32>
    %51 = tpu.matmul %23, %50, %cst_24 {dimension_numbers = #tpu.dot_dimension_numbers<[1], [0], [0], [1], [0, 0, 1, 1], [], []>} : vector<1x32xf32>, vector<32x32xf32>, vector<1x32xf32> -> vector<1x32xf32>
    %c0_25 = arith.constant 0 : index
    %c0_26 = arith.constant 0 : index
    %52 = vector.load %arg8[%c0_25, %c0_26] : memref<1x32xf32, #tpu.memory_space<vmem>>, vector<1x32xf32>
    %53 = arith.addf %51, %52 : vector<1x32xf32>
    %cst_27 = arith.constant 0.176776692 : f32
    %54 = vector.broadcast %cst_27 : f32 to vector<1x32xf32>
    %55 = arith.mulf %53, %54 : vector<1x32xf32>
    %c0_28 = arith.constant 0 : index
    %c0_29 = arith.constant 0 : index
    %56 = vector.load %arg9[%c0_28, %c0_29] : memref<32x64xf32, #tpu.memory_space<vmem>>, vector<32x64xf32>
    %cst_30 = arith.constant dense<0.000000e+00> : vector<8x64xf32>
    %57 = tpu.matmul %49, %56, %cst_30 {dimension_numbers = #tpu.dot_dimension_numbers<[1], [0], [0], [1], [0, 0, 1, 1], [], []>} : vector<8x32xf32>, vector<32x64xf32>, vector<8x64xf32> -> vector<8x64xf32>
    %c0_31 = arith.constant 0 : index
    %c0_32 = arith.constant 0 : index
    %58 = vector.load %arg10[%c0_31, %c0_32] : memref<1x64xf32, #tpu.memory_space<vmem>>, vector<1x64xf32>
    %59 = vector.broadcast %58 : vector<1x64xf32> to vector<8x64xf32>
    %60 = arith.addf %57, %59 : vector<8x64xf32>
    %61 = vector.extract_strided_slice %60 {offsets = [0, 0], sizes = [8, 32], strides = [1, 1]} : vector<8x64xf32> to vector<8x32xf32>
    %62 = vector.extract_strided_slice %60 {offsets = [0, 32], sizes = [8, 32], strides = [1, 1]} : vector<8x64xf32> to vector<8x32xf32>
    %cst_33 = arith.constant dense<0.000000e+00> : vector<1x8xf32>
    %63 = tpu.matmul %55, %61, %cst_33 {dimension_numbers = #tpu.dot_dimension_numbers<[1], [1], [0], [0], [0, 0, 1, 0], [], []>} : vector<1x32xf32>, vector<8x32xf32>, vector<1x8xf32> -> vector<1x8xf32>
    %cst_34 = arith.constant dense<0xFF800000> : vector<1xf32>
    %64 = vector.multi_reduction <maximumf>, %63, %cst_34 [1] : vector<1x8xf32> to vector<1xf32>
    %65 = vector.shape_cast %64 : vector<1xf32> to vector<1x1xf32>
    %66 = vector.broadcast %65 : vector<1x1xf32> to vector<1x8xf32>
    %67 = arith.subf %63, %66 : vector<1x8xf32>
    %68 = math.exp %67 : vector<1x8xf32>
    %cst_35 = arith.constant dense<0.000000e+00> : vector<1xf32>
    %69 = vector.multi_reduction <add>, %68, %cst_35 [1] : vector<1x8xf32> to vector<1xf32>
    %70 = vector.shape_cast %69 : vector<1xf32> to vector<1x1xf32>
    %71 = vector.broadcast %70 : vector<1x1xf32> to vector<1x8xf32>
    %72 = arith.divf %68, %71 : vector<1x8xf32>
    %cst_36 = arith.constant dense<0.000000e+00> : vector<1x32xf32>
    %73 = tpu.matmul %72, %62, %cst_36 {dimension_numbers = #tpu.dot_dimension_numbers<[1], [0], [0], [1], [0, 0, 1, 1], [], []>} : vector<1x8xf32>, vector<8x32xf32>, vector<1x32xf32> -> vector<1x32xf32>
    %c0_37 = arith.constant 0 : index
    %c0_38 = arith.constant 0 : index
    %74 = vector.load %arg11[%c0_37, %c0_38] : memref<32x32xf32, #tpu.memory_space<vmem>>, vector<32x32xf32>
    %cst_39 = arith.constant dense<0.000000e+00> : vector<1x32xf32>
    %75 = tpu.matmul %73, %74, %cst_39 {dimension_numbers = #tpu.dot_dimension_numbers<[1], [0], [0], [1], [0, 0, 1, 1], [], []>} : vector<1x32xf32>, vector<32x32xf32>, vector<1x32xf32> -> vector<1x32xf32>
    %c0_40 = arith.constant 0 : index
    %c0_41 = arith.constant 0 : index
    %76 = vector.load %arg12[%c0_40, %c0_41] : memref<1x32xf32, #tpu.memory_space<vmem>>, vector<1x32xf32>
    %77 = arith.addf %75, %76 : vector<1x32xf32>
    %78 = arith.addf %1, %77 : vector<1x32xf32>
    %c0_42 = arith.constant 0 : index
    %c0_43 = arith.constant 0 : index
    %79 = vector.load %arg13[%c0_42, %c0_43] : memref<1x32xf32, #tpu.memory_space<vmem>>, vector<1x32xf32>
    %c0_44 = arith.constant 0 : index
    %c0_45 = arith.constant 0 : index
    %80 = vector.load %arg14[%c0_44, %c0_45] : memref<1x32xf32, #tpu.memory_space<vmem>>, vector<1x32xf32>
    %cst_46 = arith.constant dense<0.000000e+00> : vector<1xf32>
    %81 = vector.multi_reduction <add>, %78, %cst_46 [1] : vector<1x32xf32> to vector<1xf32>
    %82 = vector.shape_cast %81 : vector<1xf32> to vector<1x1xf32>
    %cst_47 = arith.constant 3.200000e+01 : f32
    %83 = vector.broadcast %cst_47 : f32 to vector<1x1xf32>
    %84 = arith.divf %82, %83 : vector<1x1xf32>
    %85 = vector.broadcast %84 : vector<1x1xf32> to vector<1x32xf32>
    %86 = arith.subf %78, %85 : vector<1x32xf32>
    %87 = arith.mulf %86, %86 : vector<1x32xf32>
    %cst_48 = arith.constant dense<0.000000e+00> : vector<1xf32>
    %88 = vector.multi_reduction <add>, %87, %cst_48 [1] : vector<1x32xf32> to vector<1xf32>
    %89 = vector.shape_cast %88 : vector<1xf32> to vector<1x1xf32>
    %cst_49 = arith.constant 3.200000e+01 : f32
    %90 = vector.broadcast %cst_49 : f32 to vector<1x1xf32>
    %91 = arith.divf %89, %90 : vector<1x1xf32>
    %92 = vector.broadcast %84 : vector<1x1xf32> to vector<1x32xf32>
    %93 = arith.subf %78, %92 : vector<1x32xf32>
    %cst_50 = arith.constant 9.99999974E-6 : f32
    %94 = vector.broadcast %cst_50 : f32 to vector<1x1xf32>
    %95 = arith.addf %91, %94 : vector<1x1xf32>
    %96 = math.rsqrt %95 : vector<1x1xf32>
    %97 = vector.broadcast %96 : vector<1x1xf32> to vector<1x32xf32>
    %98 = arith.mulf %93, %97 : vector<1x32xf32>
    %99 = arith.mulf %98, %79 : vector<1x32xf32>
    %100 = arith.addf %99, %80 : vector<1x32xf32>
    %c0_51 = arith.constant 0 : index
    %c0_52 = arith.constant 0 : index
    %101 = vector.load %arg15[%c0_51, %c0_52] : memref<32x128xf32, #tpu.memory_space<vmem>>, vector<32x128xf32>
    %cst_53 = arith.constant dense<0.000000e+00> : vector<1x128xf32>
    %102 = tpu.matmul %100, %101, %cst_53 {dimension_numbers = #tpu.dot_dimension_numbers<[1], [0], [0], [1], [0, 0, 1, 1], [], []>} : vector<1x32xf32>, vector<32x128xf32>, vector<1x128xf32> -> vector<1x128xf32>
    %c0_54 = arith.constant 0 : index
    %c0_55 = arith.constant 0 : index
    %103 = vector.load %arg16[%c0_54, %c0_55] : memref<1x128xf32, #tpu.memory_space<vmem>>, vector<1x128xf32>
    %104 = arith.addf %102, %103 : vector<1x128xf32>
    %105 = arith.mulf %104, %104 : vector<1x128xf32>
    %106 = arith.mulf %104, %105 : vector<1x128xf32>
    %cst_56 = arith.constant 4.471500e-02 : f32
    %107 = vector.broadcast %cst_56 : f32 to vector<1x128xf32>
    %108 = arith.mulf %107, %106 : vector<1x128xf32>
    %109 = arith.addf %104, %108 : vector<1x128xf32>
    %cst_57 = arith.constant 0.797884583 : f32
    %110 = vector.broadcast %cst_57 : f32 to vector<1x128xf32>
    %111 = arith.mulf %110, %109 : vector<1x128xf32>
    %112 = math.tanh %111 : vector<1x128xf32>
    %cst_58 = arith.constant 1.000000e+00 : f32
    %113 = vector.broadcast %cst_58 : f32 to vector<1x128xf32>
    %114 = arith.addf %113, %112 : vector<1x128xf32>
    %cst_59 = arith.constant 5.000000e-01 : f32
    %115 = vector.broadcast %cst_59 : f32 to vector<1x128xf32>
    %116 = arith.mulf %115, %114 : vector<1x128xf32>
    %117 = arith.mulf %104, %116 : vector<1x128xf32>
    %c0_60 = arith.constant 0 : index
    %c0_61 = arith.constant 0 : index
    %118 = vector.load %arg17[%c0_60, %c0_61] : memref<128x32xf32, #tpu.memory_space<vmem>>, vector<128x32xf32>
    %cst_62 = arith.constant dense<0.000000e+00> : vector<1x32xf32>
    %119 = tpu.matmul %117, %118, %cst_62 {dimension_numbers = #tpu.dot_dimension_numbers<[1], [0], [0], [1], [0, 0, 1, 1], [], []>} : vector<1x128xf32>, vector<128x32xf32>, vector<1x32xf32> -> vector<1x32xf32>
    %c0_63 = arith.constant 0 : index
    %c0_64 = arith.constant 0 : index
    %120 = vector.load %arg18[%c0_63, %c0_64] : memref<1x32xf32, #tpu.memory_space<vmem>>, vector<1x32xf32>
    %121 = arith.addf %119, %120 : vector<1x32xf32>
    %122 = arith.addf %78, %121 : vector<1x32xf32>
    %c0_65 = arith.constant 0 : index
    %c0_66 = arith.constant 0 : index
    %123 = vector.load %arg19[%c0_65, %c0_66] : memref<1x32xf32, #tpu.memory_space<vmem>>, vector<1x32xf32>
    %c0_67 = arith.constant 0 : index
    %c0_68 = arith.constant 0 : index
    %124 = vector.load %arg20[%c0_67, %c0_68] : memref<1x32xf32, #tpu.memory_space<vmem>>, vector<1x32xf32>
    %cst_69 = arith.constant dense<0.000000e+00> : vector<1xf32>
    %125 = vector.multi_reduction <add>, %122, %cst_69 [1] : vector<1x32xf32> to vector<1xf32>
    %126 = vector.shape_cast %125 : vector<1xf32> to vector<1x1xf32>
    %cst_70 = arith.constant 3.200000e+01 : f32
    %127 = vector.broadcast %cst_70 : f32 to vector<1x1xf32>
    %128 = arith.divf %126, %127 : vector<1x1xf32>
    %129 = vector.broadcast %128 : vector<1x1xf32> to vector<1x32xf32>
    %130 = arith.subf %122, %129 : vector<1x32xf32>
    %131 = arith.mulf %130, %130 : vector<1x32xf32>
    %cst_71 = arith.constant dense<0.000000e+00> : vector<1xf32>
    %132 = vector.multi_reduction <add>, %131, %cst_71 [1] : vector<1x32xf32> to vector<1xf32>
    %133 = vector.shape_cast %132 : vector<1xf32> to vector<1x1xf32>
    %cst_72 = arith.constant 3.200000e+01 : f32
    %134 = vector.broadcast %cst_72 : f32 to vector<1x1xf32>
    %135 = arith.divf %133, %134 : vector<1x1xf32>
    %136 = vector.broadcast %128 : vector<1x1xf32> to vector<1x32xf32>
    %137 = arith.subf %122, %136 : vector<1x32xf32>
    %cst_73 = arith.constant 9.99999974E-6 : f32
    %138 = vector.broadcast %cst_73 : f32 to vector<1x1xf32>
    %139 = arith.addf %135, %138 : vector<1x1xf32>
    %140 = math.rsqrt %139 : vector<1x1xf32>
    %141 = vector.broadcast %140 : vector<1x1xf32> to vector<1x32xf32>
    %142 = arith.mulf %137, %141 : vector<1x32xf32>
    %143 = arith.mulf %142, %123 : vector<1x32xf32>
    %144 = arith.addf %143, %124 : vector<1x32xf32>
    %c0_74 = arith.constant 0 : index
    %c0_75 = arith.constant 0 : index
    %c0_76 = arith.constant 0 : index
    %145 = vector.load %arg21[%c0_74, %c0_75, %c0_76] : memref<1x1x32xf32, #tpu.memory_space<vmem>>, vector<1x1x32xf32>
    %146 = vector.shape_cast %145 : vector<1x1x32xf32> to vector<1x32xf32>
    %147 = vector.shape_cast %144 : vector<1x32xf32> to vector<1x1x32xf32>
    tpu.vector_store %arg21[%c0_74, %c0_75, %c0_76], %147 {strides = array<i32>} : memref<1x1x32xf32, #tpu.memory_space<vmem>>, vector<1x1x32xf32>,
    return
  }
  func.func @transform_0(%arg0: i32) -> (i32, i32, i32) {
    %c0_i32 = arith.constant 0 : i32
    %c0_i32_0 = arith.constant 0 : i32
    %c0_i32_1 = arith.constant 0 : i32
    return %arg0, %c0_i32, %c0_i32_0 : i32, i32, i32
  }
  func.func @transform_1(%arg0: i32) -> (i32, i32, i32) {
    %c0_i32 = arith.constant 0 : i32
    %c0_i32_0 = arith.constant 0 : i32
    %c0_i32_1 = arith.constant 0 : i32
    return %arg0, %c0_i32, %c0_i32_0 : i32, i32, i32
  }
  func.func @transform_2(%arg0: i32) -> (i32, i32) {
    %c0_i32 = arith.constant 0 : i32
    %c0_i32_0 = arith.constant 0 : i32
    %c0_i32_1 = arith.constant 0 : i32
    return %c0_i32, %c0_i32_0 : i32, i32
  }
  func.func @transform_3(%arg0: i32) -> (i32, i32) {
    %c0_i32 = arith.constant 0 : i32
    %c0_i32_0 = arith.constant 0 : i32
    %c0_i32_1 = arith.constant 0 : i32
    return %c0_i32, %c0_i32_0 : i32, i32
  }
  func.func @transform_4(%arg0: i32) -> (i32, i32) {
    %c0_i32 = arith.constant 0 : i32
    %c0_i32_0 = arith.constant 0 : i32
    %c0_i32_1 = arith.constant 0 : i32
    return %c0_i32, %c0_i32_0 : i32, i32
  }
  func.func @transform_5(%arg0: i32) -> (i32, i32) {
    %c0_i32 = arith.constant 0 : i32
    %c0_i32_0 = arith.constant 0 : i32
    %c0_i32_1 = arith.constant 0 : i32
    return %c0_i32, %c0_i32_0 : i32, i32
  }
  func.func @transform_6(%arg0: i32) -> (i32, i32) {
    %c0_i32 = arith.constant 0 : i32
    %c0_i32_0 = arith.constant 0 : i32
    %c0_i32_1 = arith.constant 0 : i32
    return %c0_i32, %c0_i32_0 : i32, i32
  }
  func.func @transform_7(%arg0: i32) -> (i32, i32) {
    %c0_i32 = arith.constant 0 : i32
    %c0_i32_0 = arith.constant 0 : i32
    %c0_i32_1 = arith.constant 0 : i32
    return %c0_i32, %c0_i32_0 : i32, i32
  }
  func.func @transform_8(%arg0: i32) -> (i32, i32) {
    %c0_i32 = arith.constant 0 : i32
    %c0_i32_0 = arith.constant 0 : i32
    %c0_i32_1 = arith.constant 0 : i32
    return %c0_i32, %c0_i32_0 : i32, i32
  }
  func.func @transform_9(%arg0: i32) -> (i32, i32) {
    %c0_i32 = arith.constant 0 : i32
    %c0_i32_0 = arith.constant 0 : i32
    %c0_i32_1 = arith.constant 0 : i32
    return %c0_i32, %c0_i32_0 : i32, i32
  }
  func.func @transform_10(%arg0: i32) -> (i32, i32) {
    %c0_i32 = arith.constant 0 : i32
    %c0_i32_0 = arith.constant 0 : i32
    %c0_i32_1 = arith.constant 0 : i32
    return %c0_i32, %c0_i32_0 : i32, i32
  }
  func.func @transform_11(%arg0: i32) -> (i32, i32) {
    %c0_i32 = arith.constant 0 : i32
    %c0_i32_0 = arith.constant 0 : i32
    %c0_i32_1 = arith.constant 0 : i32
    return %c0_i32, %c0_i32_0 : i32, i32
  }
  func.func @transform_12(%arg0: i32) -> (i32, i32) {
    %c0_i32 = arith.constant 0 : i32
    %c0_i32_0 = arith.constant 0 : i32
    %c0_i32_1 = arith.constant 0 : i32
    return %c0_i32, %c0_i32_0 : i32, i32
  }
  func.func @transform_13(%arg0: i32) -> (i32, i32) {
    %c0_i32 = arith.constant 0 : i32
    %c0_i32_0 = arith.constant 0 : i32
    %c0_i32_1 = arith.constant 0 : i32
    return %c0_i32, %c0_i32_0 : i32, i32
  }
  func.func @transform_14(%arg0: i32) -> (i32, i32) {
    %c0_i32 = arith.constant 0 : i32
    %c0_i32_0 = arith.constant 0 : i32
    %c0_i32_1 = arith.constant 0 : i32
    return %c0_i32, %c0_i32_0 : i32, i32
  }
  func.func @transform_15(%arg0: i32) -> (i32, i32) {
    %c0_i32 = arith.constant 0 : i32
    %c0_i32_0 = arith.constant 0 : i32
    %c0_i32_1 = arith.constant 0 : i32
    return %c0_i32, %c0_i32_0 : i32, i32
  }
  func.func @transform_16(%arg0: i32) -> (i32, i32) {
    %c0_i32 = arith.constant 0 : i32
    %c0_i32_0 = arith.constant 0 : i32
    %c0_i32_1 = arith.constant 0 : i32
    return %c0_i32, %c0_i32_0 : i32, i32
  }
  func.func @transform_17(%arg0: i32) -> (i32, i32) {
    %c0_i32 = arith.constant 0 : i32
    %c0_i32_0 = arith.constant 0 : i32
    %c0_i32_1 = arith.constant 0 : i32
    return %c0_i32, %c0_i32_0 : i32, i32
  }
  func.func @transform_18(%arg0: i32) -> (i32, i32) {
    %c0_i32 = arith.constant 0 : i32
    %c0_i32_0 = arith.constant 0 : i32
    %c0_i32_1 = arith.constant 0 : i32
    return %c0_i32, %c0_i32_0 : i32, i32
  }
  func.func @transform_19(%arg0: i32) -> (i32, i32) {
    %c0_i32 = arith.constant 0 : i32
    %c0_i32_0 = arith.constant 0 : i32
    %c0_i32_1 = arith.constant 0 : i32
    return %c0_i32, %c0_i32_0 : i32, i32
  }
  func.func @transform_20(%arg0: i32) -> (i32, i32, i32) {
    %c0_i32 = arith.constant 0 : i32
    %c0_i32_0 = arith.constant 0 : i32
    %c0_i32_1 = arith.constant 0 : i32
    return %arg0, %c0_i32, %c0_i32_0 : i32, i32, i32
  }
}

</mosaic_0001>

<llo_original>
// kernel: perceiver_forward.5
$region0: #{perceiver_forward.5}
  #allocation0 [shape = 'u32[]', space=smem, size = 0x4, offset = 0x4, fixed_abs, tag = 'smem constant byte address 0x4 - core index']
  #allocation1 [shape = 'u32[144,128]{1,0:T(1,128)}', space=vmem, size = 0x12000, scoped, tag = 'internal scratch']
  %s0 = inlined_call_operand.vmem [shape: f32[2,1,32], index: 0, kind: input, shape index: {}]
  %s1 = inlined_call_operand.vmem [shape: f32[8,32], index: 1, kind: input, shape index: {}]
  %s2 = inlined_call_operand.vmem [shape: f32[32,32], index: 2, kind: input, shape index: {}]
  %s3 = inlined_call_operand.vmem [shape: f32[1,32], index: 3, kind: input, shape index: {}]
  %s4 = inlined_call_operand.vmem [shape: f32[1,32], index: 4, kind: input, shape index: {}]
  %s5 = inlined_call_operand.vmem [shape: f32[32,128], index: 5, kind: input, shape index: {}]
  %s6 = inlined_call_operand.vmem [shape: f32[1,128], index: 6, kind: input, shape index: {}]
  %s7 = inlined_call_operand.vmem [shape: f32[128,32], index: 7, kind: input, shape index: {}]
  %s8 = inlined_call_operand.vmem [shape: f32[1,32], index: 8, kind: input, shape index: {}]
  %s9 = inlined_call_operand.vmem [shape: f32[2,8,32], index: 9, kind: output, shape index: {}]
  %s10 = sld [smem:[#allocation0]]
  $region69: #{perceiver_forward.5} parent=0
    _
  %s12 = ssub.s32 1, %s10
  %s13 = scalar_select 0, %s12, %s10
  loop: start=0, step=1, limit=4
  $region2: #{perceiver_forward.5} parent=0 // loop_pre_header
    _
  $region3: #{perceiver_forward.5} parent=0 // loop_header
    %s15 = sphi 0, %s19
    %p16 = scmp.ge.s32.totalorder %s15, 4
    %s25 = sphi 0, %s27
    %s28 = sphi 0, %s25
    %s29 = sphi 0, %s28
    %s45 = sphi 0, %s29
    %s49 = sphi 0, %s49
    %s51 = sphi 0, %s49
    %s52 = sphi 0, %s51
    %s66 = sphi 0, %s52
    %s70 = sphi 0, %s70
    %s72 = sphi 0, %s70
    %s73 = sphi 0, %s72
    %s87 = sphi 0, %s73
    %s91 = sphi 0, %s91
    %s93 = sphi 0, %s91
    %s94 = sphi 0, %s93
    %s108 = sphi 0, %s94
    %s112 = sphi 0, %s112
    %s114 = sphi 0, %s112
    %s115 = sphi 0, %s114
    %s129 = sphi 0, %s115
    %s133 = sphi 0, %s133
    %s135 = sphi 0, %s133
    %s136 = sphi 0, %s135
    %s150 = sphi 0, %s136
    %s154 = sphi 0, %s154
    %s156 = sphi 0, %s154
    %s157 = sphi 0, %s156
    %s171 = sphi 0, %s157
    %s175 = sphi 0, %s175
    %s177 = sphi 0, %s175
    %s178 = sphi 0, %s177
    %s192 = sphi 0, %s178
    %s196 = sphi 0, %s196
    %s198 = sphi 0, %s196
    %s199 = sphi 0, %s198
    %s213 = sphi 0, %s199
    %s219 = sphi 0, %s221
    %s222 = sphi 0, %s219
    %s223 = sphi 0, %s222
    %s239 = sphi 0, %s223
  $region4: #{perceiver_forward.5} parent=0 // loop_header_branch
    %18 = sbr.rel (%p16) target = $region8
  $region5: #{perceiver_forward.5} parent=0 // loop_body
    %s20 = ssub.s32 %s15, 1
    %s21 = ssub.s32 %s15, 2
    %s22 = sadd.s32 %s15, 1
    %s23 = ssub.s32 %s15, %s22
    %p24 = scmp.eq.s32.totalorder %s23, 0
    %s26 = sadd.s32 %s25, 1
    %s27 = scalar_select %p24, %s25, %s26
    %p30 = pneg %p24
    %p31 = scmp.eq.s32.totalorder %s15, 1
    %p32 = por %p30, %p31
    %p33 = scmp.ne.s32.totalorder %s25, %s28
    %p34 = scmp.eq.s32.totalorder %s15, 0
    %p35 = por %p33, %p34
    %p36 = scmp.ne.s32.totalorder %s25, %s28
    %p37 = scmp.eq.s32.totalorder %s20, 1
    %p38 = por %p36, %p37
    %p39 = scmp.ne.s32.totalorder %s28, %s29
    %p40 = scmp.eq.s32.totalorder %s20, 0
    %p41 = por %p39, %p40
    %p42 = scmp.ne.s32.totalorder %s28, %s29
    %p43 = scmp.eq.s32.totalorder %s21, 1
    %p44 = por %p42, %p43
    %p46 = scmp.ne.s32.totalorder %s29, %s45
    %p47 = scmp.eq.s32.totalorder %s21, 0
    %p48 = por %p46, %p47
    %s50 = sadd.s32 %s49, 1
    %p53 = scmp.eq.s32.totalorder %s15, 1
    %p54 = scmp.ne.s32.totalorder %s49, %s51
    %p55 = scmp.eq.s32.totalorder %s15, 0
    %p56 = por %p54, %p55
    %p57 = scmp.ne.s32.totalorder %s49, %s51
    %p58 = scmp.eq.s32.totalorder %s20, 1
    %p59 = por %p57, %p58
    %p60 = scmp.ne.s32.totalorder %s51, %s52
    %p61 = scmp.eq.s32.totalorder %s20, 0
    %p62 = por %p60, %p61
    %p63 = scmp.ne.s32.totalorder %s51, %s52
    %p64 = scmp.eq.s32.totalorder %s21, 1
    %p65 = por %p63, %p64
    %p67 = scmp.ne.s32.totalorder %s52, %s66
    %p68 = scmp.eq.s32.totalorder %s21, 0
    %p69 = por %p67, %p68
    %s71 = sadd.s32 %s70, 1
    %p74 = scmp.eq.s32.totalorder %s15, 1
    %p75 = scmp.ne.s32.totalorder %s70, %s72
    %p76 = scmp.eq.s32.totalorder %s15, 0
    %p77 = por %p75, %p76
    %p78 = scmp.ne.s32.totalorder %s70, %s72
    %p79 = scmp.eq.s32.totalorder %s20, 1
    %p80 = por %p78, %p79
    %p81 = scmp.ne.s32.totalorder %s72, %s73
    %p82 = scmp.eq.s32.totalorder %s20, 0
    %p83 = por %p81, %p82
    %p84 = scmp.ne.s32.totalorder %s72, %s73
    %p85 = scmp.eq.s32.totalorder %s21, 1
    %p86 = por %p84, %p85
    %p88 = scmp.ne.s32.totalorder %s73, %s87
    %p89 = scmp.eq.s32.totalorder %s21, 0
    %p90 = por %p88, %p89
    %s92 = sadd.s32 %s91, 1
    %p95 = scmp.eq.s32.totalorder %s15, 1
    %p96 = scmp.ne.s32.totalorder %s91, %s93
    %p97 = scmp.eq.s32.totalorder %s15, 0
    %p98 = por %p96, %p97
    %p99 = scmp.ne.s32.totalorder %s91, %s93
    %p100 = scmp.eq.s32.totalorder %s20, 1
    %p101 = por %p99, %p100
    %p102 = scmp.ne.s32.totalorder %s93, %s94
    %p103 = scmp.eq.s32.totalorder %s20, 0
    %p104 = por %p102, %p103
    %p105 = scmp.ne.s32.totalorder %s93, %s94
    %p106 = scmp.eq.s32.totalorder %s21, 1
    %p107 = por %p105, %p106
    %p109 = scmp.ne.s32.totalorder %s94, %s108
    %p110 = scmp.eq.s32.totalorder %s21, 0
    %p111 = por %p109, %p110
    %s113 = sadd.s32 %s112, 1
    %p116 = scmp.eq.s32.totalorder %s15, 1
    %p117 = scmp.ne.s32.totalorder %s112, %s114
    %p118 = scmp.eq.s32.totalorder %s15, 0
    %p119 = por %p117, %p118
    %p120 = scmp.ne.s32.totalorder %s112, %s114
    %p121 = scmp.eq.s32.totalorder %s20, 1
    %p122 = por %p120, %p121
    %p123 = scmp.ne.s32.totalorder %s114, %s115
    %p124 = scmp.eq.s32.totalorder %s20, 0
    %p125 = por %p123, %p124
    %p126 = scmp.ne.s32.totalorder %s114, %s115
    %p127 = scmp.eq.s32.totalorder %s21, 1
    %p128 = por %p126, %p127
    %p130 = scmp.ne.s32.totalorder %s115, %s129
    %p131 = scmp.eq.s32.totalorder %s21, 0
    %p132 = por %p130, %p131
    %s134 = sadd.s32 %s133, 1
    %p137 = scmp.eq.s32.totalorder %s15, 1
    %p138 = scmp.ne.s32.totalorder %s133, %s135
    %p139 = scmp.eq.s32.totalorder %s15, 0
    %p140 = por %p138, %p139
    %p141 = scmp.ne.s32.totalorder %s133, %s135
    %p142 = scmp.eq.s32.totalorder %s20, 1
    %p143 = por %p141, %p142
    %p144 = scmp.ne.s32.totalorder %s135, %s136
    %p145 = scmp.eq.s32.totalorder %s20, 0
    %p146 = por %p144, %p145
    %p147 = scmp.ne.s32.totalorder %s135, %s136
    %p148 = scmp.eq.s32.totalorder %s21, 1
    %p149 = por %p147, %p148
    %p151 = scmp.ne.s32.totalorder %s136, %s150
    %p152 = scmp.eq.s32.totalorder %s21, 0
    %p153 = por %p151, %p152
    %s155 = sadd.s32 %s154, 1
    %p158 = scmp.eq.s32.totalorder %s15, 1
    %p159 = scmp.ne.s32.totalorder %s154, %s156
    %p160 = scmp.eq.s32.totalorder %s15, 0
    %p161 = por %p159, %p160
    %p162 = scmp.ne.s32.totalorder %s154, %s156
    %p163 = scmp.eq.s32.totalorder %s20, 1
    %p164 = por %p162, %p163
    %p165 = scmp.ne.s32.totalorder %s156, %s157
    %p166 = scmp.eq.s32.totalorder %s20, 0
    %p167 = por %p165, %p166
    %p168 = scmp.ne.s32.totalorder %s156, %s157
    %p169 = scmp.eq.s32.totalorder %s21, 1
    %p170 = por %p168, %p169
    %p172 = scmp.ne.s32.totalorder %s157, %s171
    %p173 = scmp.eq.s32.totalorder %s21, 0
    %p174 = por %p172, %p173
    %s176 = sadd.s32 %s175, 1
    %p179 = scmp.eq.s32.totalorder %s15, 1
    %p180 = scmp.ne.s32.totalorder %s175, %s177
    %p181 = scmp.eq.s32.totalorder %s15, 0
    %p182 = por %p180, %p181
    %p183 = scmp.ne.s32.totalorder %s175, %s177
    %p184 = scmp.eq.s32.totalorder %s20, 1
    %p185 = por %p183, %p184
    %p186 = scmp.ne.s32.totalorder %s177, %s178
    %p187 = scmp.eq.s32.totalorder %s20, 0
    %p188 = por %p186, %p187
    %p189 = scmp.ne.s32.totalorder %s177, %s178
    %p190 = scmp.eq.s32.totalorder %s21, 1
    %p191 = por %p189, %p190
    %p193 = scmp.ne.s32.totalorder %s178, %s192
    %p194 = scmp.eq.s32.totalorder %s21, 0
    %p195 = por %p193, %p194
    %s197 = sadd.s32 %s196, 1
    %p200 = scmp.eq.s32.totalorder %s15, 1
    %p201 = scmp.ne.s32.totalorder %s196, %s198
    %p202 = scmp.eq.s32.totalorder %s15, 0
    %p203 = por %p201, %p202
    %p204 = scmp.ne.s32.totalorder %s196, %s198
    %p205 = scmp.eq.s32.totalorder %s20, 1
    %p206 = por %p204, %p205
    %p207 = scmp.ne.s32.totalorder %s198, %s199
    %p208 = scmp.eq.s32.totalorder %s20, 0
    %p209 = por %p207, %p208
    %p210 = scmp.ne.s32.totalorder %s198, %s199
    %p211 = scmp.eq.s32.totalorder %s21, 1
    %p212 = por %p210, %p211
    %p214 = scmp.ne.s32.totalorder %s199, %s213
    %p215 = scmp.eq.s32.totalorder %s21, 0
    %p216 = por %p214, %p215
    %s217 = ssub.s32 %s15, %s22
    %p218 = scmp.eq.s32.totalorder %s217, 0
    %s220 = sadd.s32 %s219, 1
    %s221 = scalar_select %p218, %s219, %s220
    %p224 = pneg %p218
    %p225 = scmp.eq.s32.totalorder %s15, 1
    %p226 = por %p224, %p225
    %p227 = scmp.ne.s32.totalorder %s219, %s222
    %p228 = scmp.eq.s32.totalorder %s15, 0
    %p229 = por %p227, %p228
    %p230 = scmp.ne.s32.totalorder %s219, %s222
    %p231 = scmp.eq.s32.totalorder %s20, 1
    %p232 = por %p230, %p231
    %p233 = scmp.ne.s32.totalorder %s222, %s223
    %p234 = scmp.eq.s32.totalorder %s20, 0
    %p235 = por %p233, %p234
    %p236 = scmp.ne.s32.totalorder %s222, %s223
    %p237 = scmp.eq.s32.totalorder %s21, 1
    %p238 = por %p236, %p237
    %p240 = scmp.ne.s32.totalorder %s223, %s239
    %p241 = scmp.eq.s32.totalorder %s21, 0
    %p242 = por %p240, %p241
    %p243 = scmp.le.s32.totalorder 1, %s15
    %p244 = scmp.lt.s32.totalorder %s15, 3
    %p245 = pnand %p243, %p244
    %p246 = pneg %p245
    // Predicated region
    $region9: #{perceiver_forward.5} parent=5 // pred_check
      _
    $region10: #{perceiver_forward.5} parent=5 // pred_check_branch
      %248 = sbr.rel (%p245) target = $region12
    $region11: #{perceiver_forward.5} parent=5 // pred_region
      %s249 = ssub.s32 %s15, 1
      // Predicated region
      $region13: #{perceiver_forward.5} parent=11 // pred_check
        %p250 = pneg %p62
      $region14: #{perceiver_forward.5} parent=11 // pred_check_branch
        %252 = sbr.rel (%p250) target = $region16
      $region15: #{perceiver_forward.5} parent=11 // pred_region
        _
      $region16: #{perceiver_forward.5} parent=11 // pred_fallthru
        _
      // Predicated region
      $region17: #{perceiver_forward.5} parent=11 // pred_check
        %p253 = pneg %p83
      $region18: #{perceiver_forward.5} parent=11 // pred_check_branch
        %255 = sbr.rel (%p253) target = $region20
      $region19: #{perceiver_forward.5} parent=11 // pred_region
        _
      $region20: #{perceiver_forward.5} parent=11 // pred_fallthru
        _
      // Predicated region
      $region21: #{perceiver_forward.5} parent=11 // pred_check
        %p256 = pneg %p104
      $region22: #{perceiver_forward.5} parent=11 // pred_check_branch
        %258 = sbr.rel (%p256) target = $region24
      $region23: #{perceiver_forward.5} parent=11 // pred_region
        _
      $region24: #{perceiver_forward.5} parent=11 // pred_fallthru
        _
      // Predicated region
      $region25: #{perceiver_forward.5} parent=11 // pred_check
        %p259 = pneg %p125
      $region26: #{perceiver_forward.5} parent=11 // pred_check_branch
        %261 = sbr.rel (%p259) target = $region28
      $region27: #{perceiver_forward.5} parent=11 // pred_region
        _
      $region28: #{perceiver_forward.5} parent=11 // pred_fallthru
        _
      // Predicated region
      $region29: #{perceiver_forward.5} parent=11 // pred_check
        %p262 = pneg %p146
      $region30: #{perceiver_forward.5} parent=11 // pred_check_branch
        %264 = sbr.rel (%p262) target = $region32
      $region31: #{perceiver_forward.5} parent=11 // pred_region
        _
      $region32: #{perceiver_forward.5} parent=11 // pred_fallthru
        _
      // Predicated region
      $region33: #{perceiver_forward.5} parent=11 // pred_check
        %p265 = pneg %p167
      $region34: #{perceiver_forward.5} parent=11 // pred_check_branch
        %267 = sbr.rel (%p265) target = $region36
      $region35: #{perceiver_forward.5} parent=11 // pred_region
        _
      $region36: #{perceiver_forward.5} parent=11 // pred_fallthru
        _
      // Predicated region
      $region37: #{perceiver_forward.5} parent=11 // pred_check
        %p268 = pneg %p188
      $region38: #{perceiver_forward.5} parent=11 // pred_check_branch
        %270 = sbr.rel (%p268) target = $region40
      $region39: #{perceiver_forward.5} parent=11 // pred_region
        _
      $region40: #{perceiver_forward.5} parent=11 // pred_fallthru
        _
      // Predicated region
      $region41: #{perceiver_forward.5} parent=11 // pred_check
        %p271 = pneg %p209
      $region42: #{perceiver_forward.5} parent=11 // pred_check_branch
        %273 = sbr.rel (%p271) target = $region44
      $region43: #{perceiver_forward.5} parent=11 // pred_region
        _
      $region44: #{perceiver_forward.5} parent=11 // pred_fallthru
        _
    $region12: #{perceiver_forward.5} parent=5 // pred_fallthru
      _
    %p274 = scmp.lt.s32.totalorder %s15, 2
    // Predicated region
    $region45: #{perceiver_forward.5} parent=5 // pred_check
      %p275 = pneg %p274
    $region46: #{perceiver_forward.5} parent=5 // pred_check_branch
      %277 = sbr.rel (%p275) target = $region48
    $region47: #{perceiver_forward.5} parent=5 // pred_region
      // Predicated region
      $region49: #{perceiver_forward.5} parent=47 // pred_check
        %p278 = pneg %p35
      $region50: #{perceiver_forward.5} parent=47 // pred_check_branch
        %280 = sbr.rel (%p278) target = $region52
      $region51: #{perceiver_forward.5} parent=47 // pred_region
        %p281 = scmp.lt.s32.totalorder %s15, 1
        %s282 = scalar_select %p281, %s15, 1
        %s283 = scalar_lea.vmem %s0, %s282
      $region52: #{perceiver_forward.5} parent=47 // pred_fallthru
        _
    $region48: #{perceiver_forward.5} parent=5 // pred_fallthru
      _
    %p284 = scmp.le.s32.totalorder 1, %s15
    %p285 = scmp.lt.s32.totalorder %s15, 3
    %p286 = pnand %p284, %p285
    %p287 = pneg %p286
    // Predicated region
    $region53: #{perceiver_forward.5} parent=5 // pred_check
      _
    $region54: #{perceiver_forward.5} parent=5 // pred_check_branch
      %289 = sbr.rel (%p286) target = $region56
    $region55: #{perceiver_forward.5} parent=5 // pred_region
      %s290 = ssub.s32 %s15, 1
      %p291 = scmp.lt.s32.totalorder %s20, 1
      %s292 = scalar_select %p291, %s20, 1
      %s293 = scalar_lea.vmem %s0, %s292
      %p294 = pneg %p41
      %p295 = pneg %p38
      %p296 = pneg %p62
      %p297 = pneg %p59
      %p298 = pneg %p83
      %p299 = pneg %p80
      %p300 = pneg %p104
      %p301 = pneg %p101
      %p302 = pneg %p125
      %p303 = pneg %p122
      %p304 = pneg %p146
      %p305 = pneg %p143
      %p306 = pneg %p167
      %p307 = pneg %p164
      %p308 = pneg %p188
      %p309 = pneg %p185
      %p310 = pneg %p209
      %p311 = pneg %p206
      %p312 = pneg %p235
      %p313 = pneg %p232
      %p314 = scmp.lt.s32.totalorder %s20, 1
      %s315 = scalar_select %p314, %s20, 1
      %s316 = smul.addr %s315, 8
      %s317 = scalar_lea.vmem %s9, %s316
      %p318 = scmp.lt.s32.totalorder %s20, 1
      %s319 = scalar_select %p318, %s20, 1
      %s320 = scalar_lea.vmem %s0, %s319
      %p321 = scmp.lt.s32.totalorder %s20, 1
      %s322 = scalar_select %p321, %s20, 1
      %s323 = smul.addr %s322, 8
      %s324 = scalar_lea.vmem %s9, %s323
      %v325 = vld [vmem:[%s320] sm:$0x1]
      %v326 = vld [vmem:[%s2] sm:$0xff]
      %v327 = vld [vmem:[%s2 + $0x8] sm:$0xff]
      %v328 = vld [vmem:[%s2 + $0x10] sm:$0xff]
      %v329 = vld [vmem:[%s2 + $0x18] sm:$0xff]
      %vm330 = vcmask 261120
      %v332 = vsel %vm330, %v325, 0
      %334 = vmatprep.subr.mxu0 0.0
      %335 = vmatpush1.msra.mxu0 0.0
      %336 = vmatprep.subr.mxu0 0.0
      %337 = vmatpush1.msra.mxu0 0.0
      %338 = vmatprep.subr.mxu0 0.0
      %339 = vmatpush1.msra.mxu0 0.0
      %340 = vmatprep.subr.mxu0 0.0
      %341 = vmatpush1.msra.mxu0 0.0
      %342 = vmatprep.subr.mxu0 0.0
      %343 = vmatpush1.msra.mxu0 0.0
      %344 = vmatprep.subr.mxu0 0.0
      %345 = vmatpush1.msra.mxu0 0.0
      %346 = vmatprep.subr.mxu0 0.0
      %347 = vmatpush1.msra.mxu0 0.0
      %348 = vmatprep.subr.mxu0 0.0
      %349 = vmatpush1.msra.mxu0 0.0
      %350 = vmatprep.subr.mxu0 0.0
      %351 = vmatpush1.msra.mxu0 0.0
      %352 = vmatprep.subr.mxu0 0.0
      %353 = vmatpush1.msra.mxu0 0.0
      %354 = vmatprep.subr.mxu0 0.0
      %355 = vmatpush1.msra.mxu0 0.0
      %356 = vmatprep.subr.mxu0 0.0
      %357 = vmatpush1.msra.mxu0 0.0
      %358 = vmatprep.subr.mxu0 0.0
      %359 = vmatpush1.msra.mxu0 %v329
      %360 = vmatprep.subr.mxu0 0.0
      %361 = vmatpush1.msra.mxu0 %v328
      %362 = vmatprep.subr.mxu0 0.0
      %363 = vmatpush1.msra.mxu0 %v327
      %364 = vmatprep.subr.mxu0 0.0
      %365 = vmatpush1.msra.mxu0 %v326
      %366 = vmatprep.subr.mxu0 0.0
      %367 = vmatpush2.msra.mxu0 0.0
      %368 = vmatprep.subr.mxu0 0.0
      %369 = vmatpush2.msra.mxu0 0.0
      %370 = vmatprep.subr.mxu0 0.0
      %371 = vmatpush2.msra.mxu0 0.0
      %372 = vmatprep.subr.mxu0 0.0
      %373 = vmatpush2.msra.mxu0 0.0
      %374 = vmatprep.subr.mxu0 0.0
      %375 = vmatpush2.msra.mxu0 0.0
      %376 = vmatprep.subr.mxu0 0.0
      %377 = vmatpush2.msra.mxu0 0.0
      %378 = vmatprep.subr.mxu0 0.0
      %379 = vmatpush2.msra.mxu0 0.0
      %380 = vmatprep.subr.mxu0 0.0
      %381 = vmatpush2.msra.mxu0 0.0
      %382 = vmatprep.subr.mxu0 0.0
      %383 = vmatpush2.msra.mxu0 0.0
      %384 = vmatprep.subr.mxu0 0.0
      %385 = vmatpush2.msra.mxu0 0.0
      %386 = vmatprep.subr.mxu0 0.0
      %387 = vmatpush2.msra.mxu0 0.0
      %388 = vmatprep.subr.mxu0 0.0
      %389 = vmatpush2.msra.mxu0 0.0
      %390 = vmatprep.subr.mxu0 0.0
      %391 = vmatpush2.msra.mxu0 0.0
      %392 = vmatprep.subr.mxu0 0.0
      %393 = vmatpush2.msra.mxu0 0.0
      %394 = vmatprep.subr.mxu0 0.0
      %395 = vmatpush2.msra.mxu0 0.0
      %396 = vmatprep.subr.mxu0 0.0
      %397 = vmatpush2.msra.mxu0 0.0
      %398 = vmatprep.mubr.f32.mxu0 0.0
      %399 = vmatmul.mubr.f32.gmra.mxu0 %v332
      %v400 = vpop.f32.mrf.mxu0
      %v401 = vadd.f32 0.0, %v400
      %v402 = vpop.f32.mrf.mxu0
      %403 = vdwg.mxu0
      %v404 = vld [vmem:[%s1] sm:$0xff]
      %v405 = vlaneseq
      %v406 = vshrl.u32 %v405, 7
      %v407 = vsub.s32 0, %v406
      %v408 = vrot.slane %v401, %v407
      %v409 = vadd.f32 %v404, %v408
      %v410 = vld [vmem:[%s3] sm:$0x1]
      %v411 = vld [vmem:[%s4] sm:$0x1]
      %v412 = vsel %vm330, %v409, 0.0
      %413 = vadd.xlane.f32.xlu0 %v412
      %v414 = vpop.xlane.xlu0 %413
      %v415 = vrcp.pop 32.0
      %v416 = vmul.f32 %v414, %v415
      %v417 = vsub.f32 %v409, %v416
      %v418 = vmul.f32 %v417, %v417
      %v419 = vsel %vm330, %v418, 0.0
      %420 = vadd.xlane.f32.xlu0 %v419
      %v421 = vpop.xlane.xlu0 %420
      %v422 = vmul.f32 %v421, %v415
      %v423 = vadd.f32 %v422, 1e-05
      %v424 = vrsqrt.pop %v423
      %v425 = vmul.f32 %v417, %v424
      %v427 = vlaneseq
      %v428 = vshrl.u32 %v427, 7
      %v429 = vsub.s32 0, %v428
      %v430 = vrot.slane %v410, %v429
      %v432 = vmul.f32 %v425, %v430
      %v434 = vlaneseq
      %v435 = vshrl.u32 %v434, 7
      %v436 = vsub.s32 0, %v435
      %v437 = vrot.slane %v411, %v436
      %v439 = vadd.f32 %v432, %v437
      %v440 = vld [vmem:[%s5] sm:$0xff]
      %v441 = vld [vmem:[%s5 + $0x8] sm:$0xff]
      %v442 = vld [vmem:[%s5 + $0x10] sm:$0xff]
      %v443 = vld [vmem:[%s5 + $0x18] sm:$0xff]
      %v444 = vld [vmem:[%s6] sm:$0x1]
      %v446 = vlaneseq
      %v447 = vshrl.u32 %v446, 7
      %v448 = vsub.s32 0, %v447
      %v449 = vrot.slane %v444, %v448
      %v452 = vsel %vm330, %v439, 0
      %454 = vmatprep.subr.mxu0 0.0
      %455 = vmatpush1.msra.mxu0 0.0
      %456 = vmatprep.subr.mxu0 0.0
      %457 = vmatpush1.msra.mxu0 0.0
      %458 = vmatprep.subr.mxu0 0.0
      %459 = vmatpush1.msra.mxu0 0.0
      %460 = vmatprep.subr.mxu0 0.0
      %461 = vmatpush1.msra.mxu0 0.0
      %462 = vmatprep.subr.mxu0 0.0
      %463 = vmatpush1.msra.mxu0 0.0
      %464 = vmatprep.subr.mxu0 0.0
      %465 = vmatpush1.msra.mxu0 0.0
      %466 = vmatprep.subr.mxu0 0.0
      %467 = vmatpush1.msra.mxu0 0.0
      %468 = vmatprep.subr.mxu0 0.0
      %469 = vmatpush1.msra.mxu0 0.0
      %470 = vmatprep.subr.mxu0 0.0
      %471 = vmatpush1.msra.mxu0 0.0
      %472 = vmatprep.subr.mxu0 0.0
      %473 = vmatpush1.msra.mxu0 0.0
      %474 = vmatprep.subr.mxu0 0.0
      %475 = vmatpush1.msra.mxu0 0.0
      %476 = vmatprep.subr.mxu0 0.0
      %477 = vmatpush1.msra.mxu0 0.0
      %478 = vmatprep.subr.mxu0 0.0
      %479 = vmatpush1.msra.mxu0 %v443
      %480 = vmatprep.subr.mxu0 0.0
      %481 = vmatpush1.msra.mxu0 %v442
      %482 = vmatprep.subr.mxu0 0.0
      %483 = vmatpush1.msra.mxu0 %v441
      %484 = vmatprep.subr.mxu0 0.0
      %485 = vmatpush1.msra.mxu0 %v440
      %486 = vmatprep.subr.mxu0 0.0
      %487 = vmatpush2.msra.mxu0 0.0
      %488 = vmatprep.subr.mxu0 0.0
      %489 = vmatpush2.msra.mxu0 0.0
      %490 = vmatprep.subr.mxu0 0.0
      %491 = vmatpush2.msra.mxu0 0.0
      %492 = vmatprep.subr.mxu0 0.0
      %493 = vmatpush2.msra.mxu0 0.0
      %494 = vmatprep.subr.mxu0 0.0
      %495 = vmatpush2.msra.mxu0 0.0
      %496 = vmatprep.subr.mxu0 0.0
      %497 = vmatpush2.msra.mxu0 0.0
      %498 = vmatprep.subr.mxu0 0.0
      %499 = vmatpush2.msra.mxu0 0.0
      %500 = vmatprep.subr.mxu0 0.0
      %501 = vmatpush2.msra.mxu0 0.0
      %502 = vmatprep.subr.mxu0 0.0
      %503 = vmatpush2.msra.mxu0 0.0
      %504 = vmatprep.subr.mxu0 0.0
      %505 = vmatpush2.msra.mxu0 0.0
      %506 = vmatprep.subr.mxu0 0.0
      %507 = vmatpush2.msra.mxu0 0.0
      %508 = vmatprep.subr.mxu0 0.0
      %509 = vmatpush2.msra.mxu0 0.0
      %510 = vmatprep.subr.mxu0 0.0
      %511 = vmatpush2.msra.mxu0 0.0
      %512 = vmatprep.subr.mxu0 0.0
      %513 = vmatpush2.msra.mxu0 0.0
      %514 = vmatprep.subr.mxu0 0.0
      %515 = vmatpush2.msra.mxu0 0.0
      %516 = vmatprep.subr.mxu0 0.0
      %517 = vmatpush2.msra.mxu0 0.0
      %518 = vmatprep.mubr.f32.mxu0 0.0
      %519 = vmatmul.mubr.f32.gmra.mxu0 %v452
      %v520 = vpop.f32.mrf.mxu0
      %v521 = vadd.f32 %v449, %v520
      %v522 = vpop.f32.mrf.mxu0
      %523 = vdwg.mxu0
      %v524 = vmul.f32 %v521, %v521
      %v525 = vmul.f32 %v521, %v524
      %v526 = vmul.f32 %v525, 0.044715
      %v527 = vadd.f32 %v521, %v526
      %v528 = vmul.f32 %v527, 0.7978846
      %v529 = vtanh.pop %v528
      %v530 = vadd.f32 %v529, 1.0
      %v531 = vmul.f32 %v530, 0.5
      %v532 = vmul.f32 %v521, %v531
      %v533 = vld [vmem:[%s7] sm:$0xff]
      %v534 = vld [vmem:[%s7 + $0x8] sm:$0xff]
      %v535 = vld [vmem:[%s7 + $0x10] sm:$0xff]
      %v536 = vld [vmem:[%s7 + $0x18] sm:$0xff]
      %v537 = vld [vmem:[%s7 + $0x20] sm:$0xff]
      %v538 = vld [vmem:[%s7 + $0x28] sm:$0xff]
      %v539 = vld [vmem:[%s7 + $0x30] sm:$0xff]
      %v540 = vld [vmem:[%s7 + $0x38] sm:$0xff]
      %v541 = vld [vmem:[%s7 + $0x40] sm:$0xff]
      %v542 = vld [vmem:[%s7 + $0x48] sm:$0xff]
      %v543 = vld [vmem:[%s7 + $0x50] sm:$0xff]
      %v544 = vld [vmem:[%s7 + $0x58] sm:$0xff]
      %v545 = vld [vmem:[%s7 + $0x60] sm:$0xff]
      %v546 = vld [vmem:[%s7 + $0x68] sm:$0xff]
      %v547 = vld [vmem:[%s7 + $0x70] sm:$0xff]
      %v548 = vld [vmem:[%s7 + $0x78] sm:$0xff]
      %v549 = vld [vmem:[%s8] sm:$0x1]
      %v551 = vlaneseq
      %v552 = vshrl.u32 %v551, 7
      %v553 = vsub.s32 0, %v552
      %v554 = vrot.slane %v549, %v553
      %556 = vmatprep.subr.mxu0 0.0
      %557 = vmatpush1.msra.mxu0 %v548
      %558 = vmatprep.subr.mxu0 0.0
      %559 = vmatpush1.msra.mxu0 %v547
      %560 = vmatprep.subr.mxu0 0.0
      %561 = vmatpush1.msra.mxu0 %v546
      %562 = vmatprep.subr.mxu0 0.0
      %563 = vmatpush1.msra.mxu0 %v545
      %564 = vmatprep.subr.mxu0 0.0
      %565 = vmatpush1.msra.mxu0 %v544
      %566 = vmatprep.subr.mxu0 0.0
      %567 = vmatpush1.msra.mxu0 %v543
      %568 = vmatprep.subr.mxu0 0.0
      %569 = vmatpush1.msra.mxu0 %v542
      %570 = vmatprep.subr.mxu0 0.0
      %571 = vmatpush1.msra.mxu0 %v541
      %572 = vmatprep.subr.mxu0 0.0
      %573 = vmatpush1.msra.mxu0 %v540
      %574 = vmatprep.subr.mxu0 0.0
      %575 = vmatpush1.msra.mxu0 %v539
      %576 = vmatprep.subr.mxu0 0.0
      %577 = vmatpush1.msra.mxu0 %v538
      %578 = vmatprep.subr.mxu0 0.0
      %579 = vmatpush1.msra.mxu0 %v537
      %580 = vmatprep.subr.mxu0 0.0
      %581 = vmatpush1.msra.mxu0 %v536
      %582 = vmatprep.subr.mxu0 0.0
      %583 = vmatpush1.msra.mxu0 %v535
      %584 = vmatprep.subr.mxu0 0.0
      %585 = vmatpush1.msra.mxu0 %v534
      %586 = vmatprep.subr.mxu0 0.0
      %587 = vmatpush1.msra.mxu0 %v533
      %588 = vmatprep.subr.mxu0 0.0
      %589 = vmatpush2.msra.mxu0 0.0
      %590 = vmatprep.subr.mxu0 0.0
      %591 = vmatpush2.msra.mxu0 0.0
      %592 = vmatprep.subr.mxu0 0.0
      %593 = vmatpush2.msra.mxu0 0.0
      %594 = vmatprep.subr.mxu0 0.0
      %595 = vmatpush2.msra.mxu0 0.0
      %596 = vmatprep.subr.mxu0 0.0
      %597 = vmatpush2.msra.mxu0 0.0
      %598 = vmatprep.subr.mxu0 0.0
      %599 = vmatpush2.msra.mxu0 0.0
      %600 = vmatprep.subr.mxu0 0.0
      %601 = vmatpush2.msra.mxu0 0.0
      %602 = vmatprep.subr.mxu0 0.0
      %603 = vmatpush2.msra.mxu0 0.0
      %604 = vmatprep.subr.mxu0 0.0
      %605 = vmatpush2.msra.mxu0 0.0
      %606 = vmatprep.subr.mxu0 0.0
      %607 = vmatpush2.msra.mxu0 0.0
      %608 = vmatprep.subr.mxu0 0.0
      %609 = vmatpush2.msra.mxu0 0.0
      %610 = vmatprep.subr.mxu0 0.0
      %611 = vmatpush2.msra.mxu0 0.0
      %612 = vmatprep.subr.mxu0 0.0
      %613 = vmatpush2.msra.mxu0 0.0
      %614 = vmatprep.subr.mxu0 0.0
      %615 = vmatpush2.msra.mxu0 0.0
      %616 = vmatprep.subr.mxu0 0.0
      %617 = vmatpush2.msra.mxu0 0.0
      %618 = vmatprep.subr.mxu0 0.0
      %619 = vmatpush2.msra.mxu0 0.0
      %620 = vmatprep.mubr.f32.mxu0 0.0
      %621 = vmatmul.mubr.f32.gmra.mxu0 %v532
      %v622 = vpop.f32.mrf.mxu0
      %v623 = vadd.f32 %v554, %v622
      %v624 = vpop.f32.mrf.mxu0
      %625 = vdwg.mxu0
      %v626 = vadd.f32 %v409, %v623
      %627 = vst.msk [vmem:[%s324] sm:$0xff] %vm330, %v626
      %p628 = scmp.lt.s32.totalorder %s20, 1
      %s629 = scalar_select %p628, %s20, 1
      %s630 = smul.addr %s629, 8
      %s631 = scalar_lea.vmem %s9, %s630
      // Predicated region
      $region57: #{perceiver_forward.5} parent=55 // pred_check
        %p632 = pneg %p232
      $region58: #{perceiver_forward.5} parent=55 // pred_check_branch
        %634 = sbr.rel (%p632) target = $region60
      $region59: #{perceiver_forward.5} parent=55 // pred_region
        _
      $region60: #{perceiver_forward.5} parent=55 // pred_fallthru
        _
    $region56: #{perceiver_forward.5} parent=5 // pred_fallthru
      _
    %p635 = scmp.le.s32.totalorder 2, %s15
    // Predicated region
    $region61: #{perceiver_forward.5} parent=5 // pred_check
      %p636 = pneg %p635
    $region62: #{perceiver_forward.5} parent=5 // pred_check_branch
      %638 = sbr.rel (%p636) target = $region64
    $region63: #{perceiver_forward.5} parent=5 // pred_region
      %s639 = ssub.s32 %s15, 2
      // Predicated region
      $region65: #{perceiver_forward.5} parent=63 // pred_check
        %p640 = pneg %p238
      $region66: #{perceiver_forward.5} parent=63 // pred_check_branch
        %642 = sbr.rel (%p640) target = $region68
      $region67: #{perceiver_forward.5} parent=63 // pred_region
        %p643 = scmp.lt.s32.totalorder %s21, 1
        %s644 = scalar_select %p643, %s21, 1
        %s645 = smul.addr %s644, 8
        %s646 = scalar_lea.vmem %s9, %s645
      $region68: #{perceiver_forward.5} parent=63 // pred_fallthru
        _
    $region64: #{perceiver_forward.5} parent=5 // pred_fallthru
      _
  $region6: #{perceiver_forward.5} parent=0 // loop_footer
    %s19 = sadd.s32 1, %s15
  $region7: #{perceiver_forward.5} parent=0 // loop_footer_branch
    %14 = sbr.rel target = $region3
  $region8: #{perceiver_forward.5} parent=0 // loop_exit
    _

// kernel: perceiver_forward.6
$region0: #{perceiver_forward.6}
  #allocation0 [shape = 'u32[]', space=smem, size = 0x4, offset = 0x4, fixed_abs, tag = 'smem constant byte address 0x4 - core index']
  #allocation1 [shape = 'u32[144,128]{1,0:T(1,128)}', space=vmem, size = 0x12000, scoped, tag = 'internal scratch']
  %s0 = inlined_call_operand.vmem [shape: f32[2,8,32], index: 0, kind: input, shape index: {}]
  %s1 = inlined_call_operand.vmem [shape: f32[2,16,16], index: 1, kind: input, shape index: {}]
  %s2 = inlined_call_operand.vmem [shape: f32[2,1,16], index: 2, kind: input, shape index: {}]
  %s3 = inlined_call_operand.vmem [shape: f32[1,32], index: 3, kind: input, shape index: {}]
  %s4 = inlined_call_operand.vmem [shape: f32[1,32], index: 4, kind: input, shape index: {}]
  %s5 = inlined_call_operand.vmem [shape: f32[1,16], index: 5, kind: input, shape index: {}]
  %s6 = inlined_call_operand.vmem [shape: f32[1,16], index: 6, kind: input, shape index: {}]
  %s7 = inlined_call_operand.vmem [shape: f32[32,32], index: 7, kind: input, shape index: {}]
  %s8 = inlined_call_operand.vmem [shape: f32[1,32], index: 8, kind: input, shape index: {}]
  %s9 = inlined_call_operand.vmem [shape: f32[16,64], index: 9, kind: input, shape index: {}]
  %s10 = inlined_call_operand.vmem [shape: f32[1,64], index: 10, kind: input, shape index: {}]
  %s11 = inlined_call_operand.vmem [shape: f32[32,32], index: 11, kind: input, shape index: {}]
  %s12 = inlined_call_operand.vmem [shape: f32[1,32], index: 12, kind: input, shape index: {}]
  %s13 = inlined_call_operand.vmem [shape: f32[1,32], index: 13, kind: input, shape index: {}]
  %s14 = inlined_call_operand.vmem [shape: f32[1,32], index: 14, kind: input, shape index: {}]
  %s15 = inlined_call_operand.vmem [shape: f32[32,128], index: 15, kind: input, shape index: {}]
  %s16 = inlined_call_operand.vmem [shape: f32[1,128], index: 16, kind: input, shape index: {}]
  %s17 = inlined_call_operand.vmem [shape: f32[128,32], index: 17, kind: input, shape index: {}]
  %s18 = inlined_call_operand.vmem [shape: f32[1,32], index: 18, kind: input, shape index: {}]
  %s19 = inlined_call_operand.vmem [shape: f32[2,8,32], index: 19, kind: output, shape index: {0}]
  %s20 = inlined_call_operand.vmem [shape: f32[2,8,16], index: 20, kind: output, shape index: {1}]
  %21 = xla_tuple %s19, %s20
  %s22 = sld [smem:[#allocation0]]
  $region117: #{perceiver_forward.6} parent=0
    _
  %s24 = ssub.s32 1, %s22
  %s25 = scalar_select 0, %s24, %s22
  loop: start=0, step=1, limit=4
  $region2: #{perceiver_forward.6} parent=0 // loop_pre_header
    _
  $region3: #{perceiver_forward.6} parent=0 // loop_header
    %s27 = sphi 0, %s31
    %p28 = scmp.ge.s32.totalorder %s27, 4
    %s37 = sphi 0, %s39
    %s40 = sphi 0, %s37
    %s41 = sphi 0, %s40
    %s57 = sphi 0, %s41
    %s63 = sphi 0, %s65
    %s66 = sphi 0, %s63
    %s67 = sphi 0, %s66
    %s83 = sphi 0, %s67
    %s89 = sphi 0, %s91
    %s92 = sphi 0, %s89
    %s93 = sphi 0, %s92
    %s109 = sphi 0, %s93
    %s113 = sphi 0, %s113
    %s115 = sphi 0, %s113
    %s116 = sphi 0, %s115
    %s130 = sphi 0, %s116
    %s134 = sphi 0, %s134
    %s136 = sphi 0, %s134
    %s137 = sphi 0, %s136
    %s151 = sphi 0, %s137
    %s155 = sphi 0, %s155
    %s157 = sphi 0, %s155
    %s158 = sphi 0, %s157
    %s172 = sphi 0, %s158
    %s176 = sphi 0, %s176
    %s178 = sphi 0, %s176
    %s179 = sphi 0, %s178
    %s193 = sphi 0, %s179
    %s197 = sphi 0, %s197
    %s199 = sphi 0, %s197
    %s200 = sphi 0, %s199
    %s214 = sphi 0, %s200
    %s218 = sphi 0, %s218
    %s220 = sphi 0, %s218
    %s221 = sphi 0, %s220
    %s235 = sphi 0, %s221
    %s239 = sphi 0, %s239
    %s241 = sphi 0, %s239
    %s242 = sphi 0, %s241
    %s256 = sphi 0, %s242
    %s260 = sphi 0, %s260
    %s262 = sphi 0, %s260
    %s263 = sphi 0, %s262
    %s277 = sphi 0, %s263
    %s281 = sphi 0, %s281
    %s283 = sphi 0, %s281
    %s284 = sphi 0, %s283
    %s298 = sphi 0, %s284
    %s302 = sphi 0, %s302
    %s304 = sphi 0, %s302
    %s305 = sphi 0, %s304
    %s319 = sphi 0, %s305
    %s323 = sphi 0, %s323
    %s325 = sphi 0, %s323
    %s326 = sphi 0, %s325
    %s340 = sphi 0, %s326
    %s344 = sphi 0, %s344
    %s346 = sphi 0, %s344
    %s347 = sphi 0, %s346
    %s361 = sphi 0, %s347
    %s365 = sphi 0, %s365
    %s367 = sphi 0, %s365
    %s368 = sphi 0, %s367
    %s382 = sphi 0, %s368
    %s386 = sphi 0, %s386
    %s388 = sphi 0, %s386
    %s389 = sphi 0, %s388
    %s403 = sphi 0, %s389
    %s407 = sphi 0, %s407
    %s409 = sphi 0, %s407
    %s410 = sphi 0, %s409
    %s424 = sphi 0, %s410
    %s428 = sphi 0, %s428
    %s430 = sphi 0, %s428
    %s431 = sphi 0, %s430
    %s445 = sphi 0, %s431
    %s451 = sphi 0, %s453
    %s454 = sphi 0, %s451
    %s455 = sphi 0, %s454
    %s471 = sphi 0, %s455
    %s477 = sphi 0, %s479
    %s480 = sphi 0, %s477
    %s481 = sphi 0, %s480
    %s497 = sphi 0, %s481
  $region4: #{perceiver_forward.6} parent=0 // loop_header_branch
    %30 = sbr.rel (%p28) target = $region8
  $region5: #{perceiver_forward.6} parent=0 // loop_body
    %s32 = ssub.s32 %s27, 1
    %s33 = ssub.s32 %s27, 2
    %s34 = sadd.s32 %s27, 1
    %s35 = ssub.s32 %s27, %s34
    %p36 = scmp.eq.s32.totalorder %s35, 0
    %s38 = sadd.s32 %s37, 1
    %s39 = scalar_select %p36, %s37, %s38
    %p42 = pneg %p36
    %p43 = scmp.eq.s32.totalorder %s27, 1
    %p44 = por %p42, %p43
    %p45 = scmp.ne.s32.totalorder %s37, %s40
    %p46 = scmp.eq.s32.totalorder %s27, 0
    %p47 = por %p45, %p46
    %p48 = scmp.ne.s32.totalorder %s37, %s40
    %p49 = scmp.eq.s32.totalorder %s32, 1
    %p50 = por %p48, %p49
    %p51 = scmp.ne.s32.totalorder %s40, %s41
    %p52 = scmp.eq.s32.totalorder %s32, 0
    %p53 = por %p51, %p52
    %p54 = scmp.ne.s32.totalorder %s40, %s41
    %p55 = scmp.eq.s32.totalorder %s33, 1
    %p56 = por %p54, %p55
    %p58 = scmp.ne.s32.totalorder %s41, %s57
    %p59 = scmp.eq.s32.totalorder %s33, 0
    %p60 = por %p58, %p59
    %s61 = ssub.s32 %s27, %s34
    %p62 = scmp.eq.s32.totalorder %s61, 0
    %s64 = sadd.s32 %s63, 1
    %s65 = scalar_select %p62, %s63, %s64
    %p68 = pneg %p62
    %p69 = scmp.eq.s32.totalorder %s27, 1
    %p70 = por %p68, %p69
    %p71 = scmp.ne.s32.totalorder %s63, %s66
    %p72 = scmp.eq.s32.totalorder %s27, 0
    %p73 = por %p71, %p72
    %p74 = scmp.ne.s32.totalorder %s63, %s66
    %p75 = scmp.eq.s32.totalorder %s32, 1
    %p76 = por %p74, %p75
    %p77 = scmp.ne.s32.totalorder %s66, %s67
    %p78 = scmp.eq.s32.totalorder %s32, 0
    %p79 = por %p77, %p78
    %p80 = scmp.ne.s32.totalorder %s66, %s67
    %p81 = scmp.eq.s32.totalorder %s33, 1
    %p82 = por %p80, %p81
    %p84 = scmp.ne.s32.totalorder %s67, %s83
    %p85 = scmp.eq.s32.totalorder %s33, 0
    %p86 = por %p84, %p85
    %s87 = ssub.s32 %s27, %s34
    %p88 = scmp.eq.s32.totalorder %s87, 0
    %s90 = sadd.s32 %s89, 1
    %s91 = scalar_select %p88, %s89, %s90
    %p94 = pneg %p88
    %p95 = scmp.eq.s32.totalorder %s27, 1
    %p96 = por %p94, %p95
    %p97 = scmp.ne.s32.totalorder %s89, %s92
    %p98 = scmp.eq.s32.totalorder %s27, 0
    %p99 = por %p97, %p98
    %p100 = scmp.ne.s32.totalorder %s89, %s92
    %p101 = scmp.eq.s32.totalorder %s32, 1
    %p102 = por %p100, %p101
    %p103 = scmp.ne.s32.totalorder %s92, %s93
    %p104 = scmp.eq.s32.totalorder %s32, 0
    %p105 = por %p103, %p104
    %p106 = scmp.ne.s32.totalorder %s92, %s93
    %p107 = scmp.eq.s32.totalorder %s33, 1
    %p108 = por %p106, %p107
    %p110 = scmp.ne.s32.totalorder %s93, %s109
    %p111 = scmp.eq.s32.totalorder %s33, 0
    %p112 = por %p110, %p111
    %s114 = sadd.s32 %s113, 1
    %p117 = scmp.eq.s32.totalorder %s27, 1
    %p118 = scmp.ne.s32.totalorder %s113, %s115
    %p119 = scmp.eq.s32.totalorder %s27, 0
    %p120 = por %p118, %p119
    %p121 = scmp.ne.s32.totalorder %s113, %s115
    %p122 = scmp.eq.s32.totalorder %s32, 1
    %p123 = por %p121, %p122
    %p124 = scmp.ne.s32.totalorder %s115, %s116
    %p125 = scmp.eq.s32.totalorder %s32, 0
    %p126 = por %p124, %p125
    %p127 = scmp.ne.s32.totalorder %s115, %s116
    %p128 = scmp.eq.s32.totalorder %s33, 1
    %p129 = por %p127, %p128
    %p131 = scmp.ne.s32.totalorder %s116, %s130
    %p132 = scmp.eq.s32.totalorder %s33, 0
    %p133 = por %p131, %p132
    %s135 = sadd.s32 %s134, 1
    %p138 = scmp.eq.s32.totalorder %s27, 1
    %p139 = scmp.ne.s32.totalorder %s134, %s136
    %p140 = scmp.eq.s32.totalorder %s27, 0
    %p141 = por %p139, %p140
    %p142 = scmp.ne.s32.totalorder %s134, %s136
    %p143 = scmp.eq.s32.totalorder %s32, 1
    %p144 = por %p142, %p143
    %p145 = scmp.ne.s32.totalorder %s136, %s137
    %p146 = scmp.eq.s32.totalorder %s32, 0
    %p147 = por %p145, %p146
    %p148 = scmp.ne.s32.totalorder %s136, %s137
    %p149 = scmp.eq.s32.totalorder %s33, 1
    %p150 = por %p148, %p149
    %p152 = scmp.ne.s32.totalorder %s137, %s151
    %p153 = scmp.eq.s32.totalorder %s33, 0
    %p154 = por %p152, %p153
    %s156 = sadd.s32 %s155, 1
    %p159 = scmp.eq.s32.totalorder %s27, 1
    %p160 = scmp.ne.s32.totalorder %s155, %s157
    %p161 = scmp.eq.s32.totalorder %s27, 0
    %p162 = por %p160, %p161
    %p163 = scmp.ne.s32.totalorder %s155, %s157
    %p164 = scmp.eq.s32.totalorder %s32, 1
    %p165 = por %p163, %p164
    %p166 = scmp.ne.s32.totalorder %s157, %s158
    %p167 = scmp.eq.s32.totalorder %s32, 0
    %p168 = por %p166, %p167
    %p169 = scmp.ne.s32.totalorder %s157, %s158
    %p170 = scmp.eq.s32.totalorder %s33, 1
    %p171 = por %p169, %p170
    %p173 = scmp.ne.s32.totalorder %s158, %s172
    %p174 = scmp.eq.s32.totalorder %s33, 0
    %p175 = por %p173, %p174
    %s177 = sadd.s32 %s176, 1
    %p180 = scmp.eq.s32.totalorder %s27, 1
    %p181 = scmp.ne.s32.totalorder %s176, %s178
    %p182 = scmp.eq.s32.totalorder %s27, 0
    %p183 = por %p181, %p182
    %p184 = scmp.ne.s32.totalorder %s176, %s178
    %p185 = scmp.eq.s32.totalorder %s32, 1
    %p186 = por %p184, %p185
    %p187 = scmp.ne.s32.totalorder %s178, %s179
    %p188 = scmp.eq.s32.totalorder %s32, 0
    %p189 = por %p187, %p188
    %p190 = scmp.ne.s32.totalorder %s178, %s179
    %p191 = scmp.eq.s32.totalorder %s33, 1
    %p192 = por %p190, %p191
    %p194 = scmp.ne.s32.totalorder %s179, %s193
    %p195 = scmp.eq.s32.totalorder %s33, 0
    %p196 = por %p194, %p195
    %s198 = sadd.s32 %s197, 1
    %p201 = scmp.eq.s32.totalorder %s27, 1
    %p202 = scmp.ne.s32.totalorder %s197, %s199
    %p203 = scmp.eq.s32.totalorder %s27, 0
    %p204 = por %p202, %p203
    %p205 = scmp.ne.s32.totalorder %s197, %s199
    %p206 = scmp.eq.s32.totalorder %s32, 1
    %p207 = por %p205, %p206
    %p208 = scmp.ne.s32.totalorder %s199, %s200
    %p209 = scmp.eq.s32.totalorder %s32, 0
    %p210 = por %p208, %p209
    %p211 = scmp.ne.s32.totalorder %s199, %s200
    %p212 = scmp.eq.s32.totalorder %s33, 1
    %p213 = por %p211, %p212
    %p215 = scmp.ne.s32.totalorder %s200, %s214
    %p216 = scmp.eq.s32.totalorder %s33, 0
    %p217 = por %p215, %p216
    %s219 = sadd.s32 %s218, 1
    %p222 = scmp.eq.s32.totalorder %s27, 1
    %p223 = scmp.ne.s32.totalorder %s218, %s220
    %p224 = scmp.eq.s32.totalorder %s27, 0
    %p225 = por %p223, %p224
    %p226 = scmp.ne.s32.totalorder %s218, %s220
    %p227 = scmp.eq.s32.totalorder %s32, 1
    %p228 = por %p226, %p227
    %p229 = scmp.ne.s32.totalorder %s220, %s221
    %p230 = scmp.eq.s32.totalorder %s32, 0
    %p231 = por %p229, %p230
    %p232 = scmp.ne.s32.totalorder %s220, %s221
    %p233 = scmp.eq.s32.totalorder %s33, 1
    %p234 = por %p232, %p233
    %p236 = scmp.ne.s32.totalorder %s221, %s235
    %p237 = scmp.eq.s32.totalorder %s33, 0
    %p238 = por %p236, %p237
    %s240 = sadd.s32 %s239, 1
    %p243 = scmp.eq.s32.totalorder %s27, 1
    %p244 = scmp.ne.s32.totalorder %s239, %s241
    %p245 = scmp.eq.s32.totalorder %s27, 0
    %p246 = por %p244, %p245
    %p247 = scmp.ne.s32.totalorder %s239, %s241
    %p248 = scmp.eq.s32.totalorder %s32, 1
    %p249 = por %p247, %p248
    %p250 = scmp.ne.s32.totalorder %s241, %s242
    %p251 = scmp.eq.s32.totalorder %s32, 0
    %p252 = por %p250, %p251
    %p253 = scmp.ne.s32.totalorder %s241, %s242
    %p254 = scmp.eq.s32.totalorder %s33, 1
    %p255 = por %p253, %p254
    %p257 = scmp.ne.s32.totalorder %s242, %s256
    %p258 = scmp.eq.s32.totalorder %s33, 0
    %p259 = por %p257, %p258
    %s261 = sadd.s32 %s260, 1
    %p264 = scmp.eq.s32.totalorder %s27, 1
    %p265 = scmp.ne.s32.totalorder %s260, %s262
    %p266 = scmp.eq.s32.totalorder %s27, 0
    %p267 = por %p265, %p266
    %p268 = scmp.ne.s32.totalorder %s260, %s262
    %p269 = scmp.eq.s32.totalorder %s32, 1
    %p270 = por %p268, %p269
    %p271 = scmp.ne.s32.totalorder %s262, %s263
    %p272 = scmp.eq.s32.totalorder %s32, 0
    %p273 = por %p271, %p272
    %p274 = scmp.ne.s32.totalorder %s262, %s263
    %p275 = scmp.eq.s32.totalorder %s33, 1
    %p276 = por %p274, %p275
    %p278 = scmp.ne.s32.totalorder %s263, %s277
    %p279 = scmp.eq.s32.totalorder %s33, 0
    %p280 = por %p278, %p279
    %s282 = sadd.s32 %s281, 1
    %p285 = scmp.eq.s32.totalorder %s27, 1
    %p286 = scmp.ne.s32.totalorder %s281, %s283
    %p287 = scmp.eq.s32.totalorder %s27, 0
    %p288 = por %p286, %p287
    %p289 = scmp.ne.s32.totalorder %s281, %s283
    %p290 = scmp.eq.s32.totalorder %s32, 1
    %p291 = por %p289, %p290
    %p292 = scmp.ne.s32.totalorder %s283, %s284
    %p293 = scmp.eq.s32.totalorder %s32, 0
    %p294 = por %p292, %p293
    %p295 = scmp.ne.s32.totalorder %s283, %s284
    %p296 = scmp.eq.s32.totalorder %s33, 1
    %p297 = por %p295, %p296
    %p299 = scmp.ne.s32.totalorder %s284, %s298
    %p300 = scmp.eq.s32.totalorder %s33, 0
    %p301 = por %p299, %p300
    %s303 = sadd.s32 %s302, 1
    %p306 = scmp.eq.s32.totalorder %s27, 1
    %p307 = scmp.ne.s32.totalorder %s302, %s304
    %p308 = scmp.eq.s32.totalorder %s27, 0
    %p309 = por %p307, %p308
    %p310 = scmp.ne.s32.totalorder %s302, %s304
    %p311 = scmp.eq.s32.totalorder %s32, 1
    %p312 = por %p310, %p311
    %p313 = scmp.ne.s32.totalorder %s304, %s305
    %p314 = scmp.eq.s32.totalorder %s32, 0
    %p315 = por %p313, %p314
    %p316 = scmp.ne.s32.totalorder %s304, %s305
    %p317 = scmp.eq.s32.totalorder %s33, 1
    %p318 = por %p316, %p317
    %p320 = scmp.ne.s32.totalorder %s305, %s319
    %p321 = scmp.eq.s32.totalorder %s33, 0
    %p322 = por %p320, %p321
    %s324 = sadd.s32 %s323, 1
    %p327 = scmp.eq.s32.totalorder %s27, 1
    %p328 = scmp.ne.s32.totalorder %s323, %s325
    %p329 = scmp.eq.s32.totalorder %s27, 0
    %p330 = por %p328, %p329
    %p331 = scmp.ne.s32.totalorder %s323, %s325
    %p332 = scmp.eq.s32.totalorder %s32, 1
    %p333 = por %p331, %p332
    %p334 = scmp.ne.s32.totalorder %s325, %s326
    %p335 = scmp.eq.s32.totalorder %s32, 0
    %p336 = por %p334, %p335
    %p337 = scmp.ne.s32.totalorder %s325, %s326
    %p338 = scmp.eq.s32.totalorder %s33, 1
    %p339 = por %p337, %p338
    %p341 = scmp.ne.s32.totalorder %s326, %s340
    %p342 = scmp.eq.s32.totalorder %s33, 0
    %p343 = por %p341, %p342
    %s345 = sadd.s32 %s344, 1
    %p348 = scmp.eq.s32.totalorder %s27, 1
    %p349 = scmp.ne.s32.totalorder %s344, %s346
    %p350 = scmp.eq.s32.totalorder %s27, 0
    %p351 = por %p349, %p350
    %p352 = scmp.ne.s32.totalorder %s344, %s346
    %p353 = scmp.eq.s32.totalorder %s32, 1
    %p354 = por %p352, %p353
    %p355 = scmp.ne.s32.totalorder %s346, %s347
    %p356 = scmp.eq.s32.totalorder %s32, 0
    %p357 = por %p355, %p356
    %p358 = scmp.ne.s32.totalorder %s346, %s347
    %p359 = scmp.eq.s32.totalorder %s33, 1
    %p360 = por %p358, %p359
    %p362 = scmp.ne.s32.totalorder %s347, %s361
    %p363 = scmp.eq.s32.totalorder %s33, 0
    %p364 = por %p362, %p363
    %s366 = sadd.s32 %s365, 1
    %p369 = scmp.eq.s32.totalorder %s27, 1
    %p370 = scmp.ne.s32.totalorder %s365, %s367
    %p371 = scmp.eq.s32.totalorder %s27, 0
    %p372 = por %p370, %p371
    %p373 = scmp.ne.s32.totalorder %s365, %s367
    %p374 = scmp.eq.s32.totalorder %s32, 1
    %p375 = por %p373, %p374
    %p376 = scmp.ne.s32.totalorder %s367, %s368
    %p377 = scmp.eq.s32.totalorder %s32, 0
    %p378 = por %p376, %p377
    %p379 = scmp.ne.s32.totalorder %s367, %s368
    %p380 = scmp.eq.s32.totalorder %s33, 1
    %p381 = por %p379, %p380
    %p383 = scmp.ne.s32.totalorder %s368, %s382
    %p384 = scmp.eq.s32.totalorder %s33, 0
    %p385 = por %p383, %p384
    %s387 = sadd.s32 %s386, 1
    %p390 = scmp.eq.s32.totalorder %s27, 1
    %p391 = scmp.ne.s32.totalorder %s386, %s388
    %p392 = scmp.eq.s32.totalorder %s27, 0
    %p393 = por %p391, %p392
    %p394 = scmp.ne.s32.totalorder %s386, %s388
    %p395 = scmp.eq.s32.totalorder %s32, 1
    %p396 = por %p394, %p395
    %p397 = scmp.ne.s32.totalorder %s388, %s389
    %p398 = scmp.eq.s32.totalorder %s32, 0
    %p399 = por %p397, %p398
    %p400 = scmp.ne.s32.totalorder %s388, %s389
    %p401 = scmp.eq.s32.totalorder %s33, 1
    %p402 = por %p400, %p401
    %p404 = scmp.ne.s32.totalorder %s389, %s403
    %p405 = scmp.eq.s32.totalorder %s33, 0
    %p406 = por %p404, %p405
    %s408 = sadd.s32 %s407, 1
    %p411 = scmp.eq.s32.totalorder %s27, 1
    %p412 = scmp.ne.s32.totalorder %s407, %s409
    %p413 = scmp.eq.s32.totalorder %s27, 0
    %p414 = por %p412, %p413
    %p415 = scmp.ne.s32.totalorder %s407, %s409
    %p416 = scmp.eq.s32.totalorder %s32, 1
    %p417 = por %p415, %p416
    %p418 = scmp.ne.s32.totalorder %s409, %s410
    %p419 = scmp.eq.s32.totalorder %s32, 0
    %p420 = por %p418, %p419
    %p421 = scmp.ne.s32.totalorder %s409, %s410
    %p422 = scmp.eq.s32.totalorder %s33, 1
    %p423 = por %p421, %p422
    %p425 = scmp.ne.s32.totalorder %s410, %s424
    %p426 = scmp.eq.s32.totalorder %s33, 0
    %p427 = por %p425, %p426
    %s429 = sadd.s32 %s428, 1
    %p432 = scmp.eq.s32.totalorder %s27, 1
    %p433 = scmp.ne.s32.totalorder %s428, %s430
    %p434 = scmp.eq.s32.totalorder %s27, 0
    %p435 = por %p433, %p434
    %p436 = scmp.ne.s32.totalorder %s428, %s430
    %p437 = scmp.eq.s32.totalorder %s32, 1
    %p438 = por %p436, %p437
    %p439 = scmp.ne.s32.totalorder %s430, %s431
    %p440 = scmp.eq.s32.totalorder %s32, 0
    %p441 = por %p439, %p440
    %p442 = scmp.ne.s32.totalorder %s430, %s431
    %p443 = scmp.eq.s32.totalorder %s33, 1
    %p444 = por %p442, %p443
    %p446 = scmp.ne.s32.totalorder %s431, %s445
    %p447 = scmp.eq.s32.totalorder %s33, 0
    %p448 = por %p446, %p447
    %s449 = ssub.s32 %s27, %s34
    %p450 = scmp.eq.s32.totalorder %s449, 0
    %s452 = sadd.s32 %s451, 1
    %s453 = scalar_select %p450, %s451, %s452
    %p456 = pneg %p450
    %p457 = scmp.eq.s32.totalorder %s27, 1
    %p458 = por %p456, %p457
    %p459 = scmp.ne.s32.totalorder %s451, %s454
    %p460 = scmp.eq.s32.totalorder %s27, 0
    %p461 = por %p459, %p460
    %p462 = scmp.ne.s32.totalorder %s451, %s454
    %p463 = scmp.eq.s32.totalorder %s32, 1
    %p464 = por %p462, %p463
    %p465 = scmp.ne.s32.totalorder %s454, %s455
    %p466 = scmp.eq.s32.totalorder %s32, 0
    %p467 = por %p465, %p466
    %p468 = scmp.ne.s32.totalorder %s454, %s455
    %p469 = scmp.eq.s32.totalorder %s33, 1
    %p470 = por %p468, %p469
    %p472 = scmp.ne.s32.totalorder %s455, %s471
    %p473 = scmp.eq.s32.totalorder %s33, 0
    %p474 = por %p472, %p473
    %s475 = ssub.s32 %s27, %s34
    %p476 = scmp.eq.s32.totalorder %s475, 0
    %s478 = sadd.s32 %s477, 1
    %s479 = scalar_select %p476, %s477, %s478
    %p482 = pneg %p476
    %p483 = scmp.eq.s32.totalorder %s27, 1
    %p484 = por %p482, %p483
    %p485 = scmp.ne.s32.totalorder %s477, %s480
    %p486 = scmp.eq.s32.totalorder %s27, 0
    %p487 = por %p485, %p486
    %p488 = scmp.ne.s32.totalorder %s477, %s480
    %p489 = scmp.eq.s32.totalorder %s32, 1
    %p490 = por %p488, %p489
    %p491 = scmp.ne.s32.totalorder %s480, %s481
    %p492 = scmp.eq.s32.totalorder %s32, 0
    %p493 = por %p491, %p492
    %p494 = scmp.ne.s32.totalorder %s480, %s481
    %p495 = scmp.eq.s32.totalorder %s33, 1
    %p496 = por %p494, %p495
    %p498 = scmp.ne.s32.totalorder %s481, %s497
    %p499 = scmp.eq.s32.totalorder %s33, 0
    %p500 = por %p498, %p499
    %p501 = scmp.le.s32.totalorder 1, %s27
    %p502 = scmp.lt.s32.totalorder %s27, 3
    %p503 = pnand %p501, %p502
    %p504 = pneg %p503
    // Predicated region
    $region9: #{perceiver_forward.6} parent=5 // pred_check
      _
    $region10: #{perceiver_forward.6} parent=5 // pred_check_branch
      %506 = sbr.rel (%p503) target = $region12
    $region11: #{perceiver_forward.6} parent=5 // pred_region
      %s507 = ssub.s32 %s27, 1
      // Predicated region
      $region13: #{perceiver_forward.6} parent=11 // pred_check
        %p508 = pneg %p126
      $region14: #{perceiver_forward.6} parent=11 // pred_check_branch
        %510 = sbr.rel (%p508) target = $region16
      $region15: #{perceiver_forward.6} parent=11 // pred_region
        _
      $region16: #{perceiver_forward.6} parent=11 // pred_fallthru
        _
      // Predicated region
      $region17: #{perceiver_forward.6} parent=11 // pred_check
        %p511 = pneg %p147
      $region18: #{perceiver_forward.6} parent=11 // pred_check_branch
        %513 = sbr.rel (%p511) target = $region20
      $region19: #{perceiver_forward.6} parent=11 // pred_region
        _
      $region20: #{perceiver_forward.6} parent=11 // pred_fallthru
        _
      // Predicated region
      $region21: #{perceiver_forward.6} parent=11 // pred_check
        %p514 = pneg %p168
      $region22: #{perceiver_forward.6} parent=11 // pred_check_branch
        %516 = sbr.rel (%p514) target = $region24
      $region23: #{perceiver_forward.6} parent=11 // pred_region
        _
      $region24: #{perceiver_forward.6} parent=11 // pred_fallthru
        _
      // Predicated region
      $region25: #{perceiver_forward.6} parent=11 // pred_check
        %p517 = pneg %p189
      $region26: #{perceiver_forward.6} parent=11 // pred_check_branch
        %519 = sbr.rel (%p517) target = $region28
      $region27: #{perceiver_forward.6} parent=11 // pred_region
        _
      $region28: #{perceiver_forward.6} parent=11 // pred_fallthru
        _
      // Predicated region
      $region29: #{perceiver_forward.6} parent=11 // pred_check
        %p520 = pneg %p210
      $region30: #{perceiver_forward.6} parent=11 // pred_check_branch
        %522 = sbr.rel (%p520) target = $region32
      $region31: #{perceiver_forward.6} parent=11 // pred_region
        _
      $region32: #{perceiver_forward.6} parent=11 // pred_fallthru
        _
      // Predicated region
      $region33: #{perceiver_forward.6} parent=11 // pred_check
        %p523 = pneg %p231
      $region34: #{perceiver_forward.6} parent=11 // pred_check_branch
        %525 = sbr.rel (%p523) target = $region36
      $region35: #{perceiver_forward.6} parent=11 // pred_region
        _
      $region36: #{perceiver_forward.6} parent=11 // pred_fallthru
        _
      // Predicated region
      $region37: #{perceiver_forward.6} parent=11 // pred_check
        %p526 = pneg %p252
      $region38: #{perceiver_forward.6} parent=11 // pred_check_branch
        %528 = sbr.rel (%p526) target = $region40
      $region39: #{perceiver_forward.6} parent=11 // pred_region
        _
      $region40: #{perceiver_forward.6} parent=11 // pred_fallthru
        _
      // Predicated region
      $region41: #{perceiver_forward.6} parent=11 // pred_check
        %p529 = pneg %p273
      $region42: #{perceiver_forward.6} parent=11 // pred_check_branch
        %531 = sbr.rel (%p529) target = $region44
      $region43: #{perceiver_forward.6} parent=11 // pred_region
        _
      $region44: #{perceiver_forward.6} parent=11 // pred_fallthru
        _
      // Predicated region
      $region45: #{perceiver_forward.6} parent=11 // pred_check
        %p532 = pneg %p294
      $region46: #{perceiver_forward.6} parent=11 // pred_check_branch
        %534 = sbr.rel (%p532) target = $region48
      $region47: #{perceiver_forward.6} parent=11 // pred_region
        _
      $region48: #{perceiver_forward.6} parent=11 // pred_fallthru
        _
      // Predicated region
      $region49: #{perceiver_forward.6} parent=11 // pred_check
        %p535 = pneg %p315
      $region50: #{perceiver_forward.6} parent=11 // pred_check_branch
        %537 = sbr.rel (%p535) target = $region52
      $region51: #{perceiver_forward.6} parent=11 // pred_region
        _
      $region52: #{perceiver_forward.6} parent=11 // pred_fallthru
        _
      // Predicated region
      $region53: #{perceiver_forward.6} parent=11 // pred_check
        %p538 = pneg %p336
      $region54: #{perceiver_forward.6} parent=11 // pred_check_branch
        %540 = sbr.rel (%p538) target = $region56
      $region55: #{perceiver_forward.6} parent=11 // pred_region
        _
      $region56: #{perceiver_forward.6} parent=11 // pred_fallthru
        _
      // Predicated region
      $region57: #{perceiver_forward.6} parent=11 // pred_check
        %p541 = pneg %p357
      $region58: #{perceiver_forward.6} parent=11 // pred_check_branch
        %543 = sbr.rel (%p541) target = $region60
      $region59: #{perceiver_forward.6} parent=11 // pred_region
        _
      $region60: #{perceiver_forward.6} parent=11 // pred_fallthru
        _
      // Predicated region
      $region61: #{perceiver_forward.6} parent=11 // pred_check
        %p544 = pneg %p378
      $region62: #{perceiver_forward.6} parent=11 // pred_check_branch
        %546 = sbr.rel (%p544) target = $region64
      $region63: #{perceiver_forward.6} parent=11 // pred_region
        _
      $region64: #{perceiver_forward.6} parent=11 // pred_fallthru
        _
      // Predicated region
      $region65: #{perceiver_forward.6} parent=11 // pred_check
        %p547 = pneg %p399
      $region66: #{perceiver_forward.6} parent=11 // pred_check_branch
        %549 = sbr.rel (%p547) target = $region68
      $region67: #{perceiver_forward.6} parent=11 // pred_region
        _
      $region68: #{perceiver_forward.6} parent=11 // pred_fallthru
        _
      // Predicated region
      $region69: #{perceiver_forward.6} parent=11 // pred_check
        %p550 = pneg %p420
      $region70: #{perceiver_forward.6} parent=11 // pred_check_branch
        %552 = sbr.rel (%p550) target = $region72
      $region71: #{perceiver_forward.6} parent=11 // pred_region
        _
      $region72: #{perceiver_forward.6} parent=11 // pred_fallthru
        _
      // Predicated region
      $region73: #{perceiver_forward.6} parent=11 // pred_check
        %p553 = pneg %p441
      $region74: #{perceiver_forward.6} parent=11 // pred_check_branch
        %555 = sbr.rel (%p553) target = $region76
      $region75: #{perceiver_forward.6} parent=11 // pred_region
        _
      $region76: #{perceiver_forward.6} parent=11 // pred_fallthru
        _
    $region12: #{perceiver_forward.6} parent=5 // pred_fallthru
      _
    %p556 = scmp.lt.s32.totalorder %s27, 2
    // Predicated region
    $region77: #{perceiver_forward.6} parent=5 // pred_check
      %p557 = pneg %p556
    $region78: #{perceiver_forward.6} parent=5 // pred_check_branch
      %559 = sbr.rel (%p557) target = $region80
    $region79: #{perceiver_forward.6} parent=5 // pred_region
      // Predicated region
      $region81: #{perceiver_forward.6} parent=79 // pred_check
        %p560 = pneg %p47
      $region82: #{perceiver_forward.6} parent=79 // pred_check_branch
        %562 = sbr.rel (%p560) target = $region84
      $region83: #{perceiver_forward.6} parent=79 // pred_region
        %p563 = scmp.lt.s32.totalorder %s27, 1
        %s564 = scalar_select %p563, %s27, 1
        %s565 = smul.addr %s564, 8
        %s566 = scalar_lea.vmem %s0, %s565
      $region84: #{perceiver_forward.6} parent=79 // pred_fallthru
        _
      // Predicated region
      $region85: #{perceiver_forward.6} parent=79 // pred_check
        %p567 = pneg %p73
      $region86: #{perceiver_forward.6} parent=79 // pred_check_branch
        %569 = sbr.rel (%p567) target = $region88
      $region87: #{perceiver_forward.6} parent=79 // pred_region
        %p570 = scmp.lt.s32.totalorder %s27, 1
        %s571 = scalar_select %p570, %s27, 1
        %s572 = smul.addr %s571, 2
        %s573 = smul.addr %s572, 8
        %s574 = scalar_lea.vmem %s1, %s573
      $region88: #{perceiver_forward.6} parent=79 // pred_fallthru
        _
      // Predicated region
      $region89: #{perceiver_forward.6} parent=79 // pred_check
        %p575 = pneg %p99
      $region90: #{perceiver_forward.6} parent=79 // pred_check_branch
        %577 = sbr.rel (%p575) target = $region92
      $region91: #{perceiver_forward.6} parent=79 // pred_region
        %p578 = scmp.lt.s32.totalorder %s27, 1
        %s579 = scalar_select %p578, %s27, 1
        %s580 = scalar_lea.vmem %s2, %s579
      $region92: #{perceiver_forward.6} parent=79 // pred_fallthru
        _
    $region80: #{perceiver_forward.6} parent=5 // pred_fallthru
      _
    %p581 = scmp.le.s32.totalorder 1, %s27
    %p582 = scmp.lt.s32.totalorder %s27, 3
    %p583 = pnand %p581, %p582
    %p584 = pneg %p583
    // Predicated region
    $region93: #{perceiver_forward.6} parent=5 // pred_check
      _
    $region94: #{perceiver_forward.6} parent=5 // pred_check_branch
      %586 = sbr.rel (%p583) target = $region96
    $region95: #{perceiver_forward.6} parent=5 // pred_region
      %s587 = ssub.s32 %s27, 1
      %p588 = scmp.lt.s32.totalorder %s32, 1
      %s589 = scalar_select %p588, %s32, 1
      %s590 = smul.addr %s589, 8
      %s591 = scalar_lea.vmem %s0, %s590
      %p592 = pneg %p53
      %p593 = pneg %p50
      %p594 = scmp.lt.s32.totalorder %s32, 1
      %s595 = scalar_select %p594, %s32, 1
      %s596 = smul.addr %s595, 2
      %s597 = smul.addr %s596, 8
      %s598 = scalar_lea.vmem %s1, %s597
      %p599 = pneg %p79
      %p600 = pneg %p76
      %p601 = scmp.lt.s32.totalorder %s32, 1
      %s602 = scalar_select %p601, %s32, 1
      %s603 = scalar_lea.vmem %s2, %s602
      %p604 = pneg %p105
      %p605 = pneg %p102
      %p606 = pneg %p126
      %p607 = pneg %p123
      %p608 = pneg %p147
      %p609 = pneg %p144
      %p610 = pneg %p168
      %p611 = pneg %p165
      %p612 = pneg %p189
      %p613 = pneg %p186
      %p614 = pneg %p210
      %p615 = pneg %p207
      %p616 = pneg %p231
      %p617 = pneg %p228
      %p618 = pneg %p252
      %p619 = pneg %p249
      %p620 = pneg %p273
      %p621 = pneg %p270
      %p622 = pneg %p294
      %p623 = pneg %p291
      %p624 = pneg %p315
      %p625 = pneg %p312
      %p626 = pneg %p336
      %p627 = pneg %p333
      %p628 = pneg %p357
      %p629 = pneg %p354
      %p630 = pneg %p378
      %p631 = pneg %p375
      %p632 = pneg %p399
      %p633 = pneg %p396
      %p634 = pneg %p420
      %p635 = pneg %p417
      %p636 = pneg %p441
      %p637 = pneg %p438
      %p638 = pneg %p467
      %p639 = pneg %p464
      %p640 = scmp.lt.s32.totalorder %s32, 1
      %s641 = scalar_select %p640, %s32, 1
      %s642 = smul.addr %s641, 8
      %s643 = scalar_lea.vmem %s19, %s642
      %p644 = pneg %p493
      %p645 = pneg %p490
      %p646 = scmp.lt.s32.totalorder %s32, 1
      %s647 = scalar_select %p646, %s32, 1
      %s648 = smul.addr %s647, 8
      %s649 = scalar_lea.vmem %s20, %s648
      %p650 = scmp.lt.s32.totalorder %s32, 1
      %s651 = scalar_select %p650, %s32, 1
      %s652 = smul.addr %s651, 8
      %s653 = scalar_lea.vmem %s0, %s652
      %p654 = scmp.lt.s32.totalorder %s32, 1
      %s655 = scalar_select %p654, %s32, 1
      %s656 = smul.addr %s655, 2
      %s657 = smul.addr %s656, 8
      %s658 = scalar_lea.vmem %s1, %s657
      %p659 = scmp.lt.s32.totalorder %s32, 1
      %s660 = scalar_select %p659, %s32, 1
      %s661 = scalar_lea.vmem %s2, %s660
      %p662 = scmp.lt.s32.totalorder %s32, 1
      %s663 = scalar_select %p662, %s32, 1
      %s664 = smul.addr %s663, 8
      %s665 = scalar_lea.vmem %s19, %s664
      %p666 = scmp.lt.s32.totalorder %s32, 1
      %s667 = scalar_select %p666, %s32, 1
      %s668 = smul.addr %s667, 8
      %s669 = scalar_lea.vmem %s20, %s668
      %v670 = vld [vmem:[%s653] sm:$0xff]
      %v671 = vld [vmem:[%s3] sm:$0x1]
      %v672 = vld [vmem:[%s4] sm:$0x1]
      %vm673 = vcmask 261120
      %v674 = vsel %vm673, %v670, 0.0
      %675 = vadd.xlane.f32.xlu0 %v674
      %v676 = vpop.xlane.xlu0 %675
      %v677 = vrcp.pop 32.0
      %v678 = vmul.f32 %v676, %v677
      %v679 = vsub.f32 %v670, %v678
      %v680 = vmul.f32 %v679, %v679
      %v681 = vsel %vm673, %v680, 0.0
      %682 = vadd.xlane.f32.xlu0 %v681
      %v683 = vpop.xlane.xlu0 %682
      %v684 = vmul.f32 %v683, %v677
      %v685 = vadd.f32 %v684, 1e-05
      %v686 = vrsqrt.pop %v685
      %v687 = vmul.f32 %v679, %v686
      %v689 = vlaneseq
      %v690 = vshrl.u32 %v689, 7
      %v691 = vsub.s32 0, %v690
      %v692 = vrot.slane %v671, %v691
      %v694 = vmul.f32 %v687, %v692
      %v696 = vlaneseq
      %v697 = vshrl.u32 %v696, 7
      %v698 = vsub.s32 0, %v697
      %v699 = vrot.slane %v672, %v698
      %v701 = vadd.f32 %v694, %v699
      %v702 = vld [vmem:[%s658] sm:$0xff]
      %v703 = vld [vmem:[%s658 + $0x8] sm:$0xff]
      %v704 = vld [vmem:[%s5] sm:$0x1]
      %v705 = vld [vmem:[%s6] sm:$0x1]
      %vm706 = vcmask 130048
      %v707 = vsel %vm706, %v702, 0.0
      %708 = vadd.xlane.f32.xlu0 %v707
      %v709 = vpop.xlane.xlu0 %708
      %v710 = vsel %vm706, %v703, 0.0
      %711 = vadd.xlane.f32.xlu0 %v710
      %v712 = vpop.xlane.xlu0 %711
      %v713 = vrcp.pop 16.0
      %v714 = vmul.f32 %v709, %v713
      %v715 = vmul.f32 %v712, %v713
      %v716 = vsub.f32 %v702, %v714
      %v717 = vsub.f32 %v703, %v715
      %v718 = vmul.f32 %v716, %v716
      %v719 = vmul.f32 %v717, %v717
      %v720 = vsel %vm706, %v718, 0.0
      %721 = vadd.xlane.f32.xlu0 %v720
      %v722 = vpop.xlane.xlu0 %721
      %v723 = vsel %vm706, %v719, 0.0
      %724 = vadd.xlane.f32.xlu0 %v723
      %v725 = vpop.xlane.xlu0 %724
      %v726 = vmul.f32 %v722, %v713
      %v727 = vmul.f32 %v725, %v713
      %v728 = vadd.f32 %v726, 1e-05
      %v729 = vadd.f32 %v727, 1e-05
      %v730 = vrsqrt.pop %v728
      %v731 = vrsqrt.pop %v729
      %v732 = vmul.f32 %v716, %v730
      %v733 = vmul.f32 %v717, %v731
      %v735 = vlaneseq
      %v736 = vshrl.u32 %v735, 7
      %v737 = vsub.s32 0, %v736
      %v738 = vrot.slane %v704, %v737
      %v740 = vmul.f32 %v732, %v738
      %v741 = vmul.f32 %v733, %v738
      %v743 = vlaneseq
      %v744 = vshrl.u32 %v743, 7
      %v745 = vsub.s32 0, %v744
      %v746 = vrot.slane %v705, %v745
      %v748 = vadd.f32 %v740, %v746
      %v749 = vadd.f32 %v741, %v746
      %v750 = vld [vmem:[%s7] sm:$0xff]
      %v751 = vld [vmem:[%s7 + $0x8] sm:$0xff]
      %v752 = vld [vmem:[%s7 + $0x10] sm:$0xff]
      %v753 = vld [vmem:[%s7 + $0x18] sm:$0xff]
      %v754 = vld [vmem:[%s8] sm:$0x1]
      %v756 = vlaneseq
      %v757 = vshrl.u32 %v756, 7
      %v758 = vsub.s32 0, %v757
      %v759 = vrot.slane %v754, %v758
      %v762 = vsel %vm673, %v701, 0
      %764 = vmatprep.subr.mxu0 0.0
      %765 = vmatpush1.msra.mxu0 0.0
      %766 = vmatprep.subr.mxu0 0.0
      %767 = vmatpush1.msra.mxu0 0.0
      %768 = vmatprep.subr.mxu0 0.0
      %769 = vmatpush1.msra.mxu0 0.0
      %770 = vmatprep.subr.mxu0 0.0
      %771 = vmatpush1.msra.mxu0 0.0
      %772 = vmatprep.subr.mxu0 0.0
      %773 = vmatpush1.msra.mxu0 0.0
      %774 = vmatprep.subr.mxu0 0.0
      %775 = vmatpush1.msra.mxu0 0.0
      %776 = vmatprep.subr.mxu0 0.0
      %777 = vmatpush1.msra.mxu0 0.0
      %778 = vmatprep.subr.mxu0 0.0
      %779 = vmatpush1.msra.mxu0 0.0
      %780 = vmatprep.subr.mxu0 0.0
      %781 = vmatpush1.msra.mxu0 0.0
      %782 = vmatprep.subr.mxu0 0.0
      %783 = vmatpush1.msra.mxu0 0.0
      %784 = vmatprep.subr.mxu0 0.0
      %785 = vmatpush1.msra.mxu0 0.0
      %786 = vmatprep.subr.mxu0 0.0
      %787 = vmatpush1.msra.mxu0 0.0
      %788 = vmatprep.subr.mxu0 0.0
      %789 = vmatpush1.msra.mxu0 %v753
      %790 = vmatprep.subr.mxu0 0.0
      %791 = vmatpush1.msra.mxu0 %v752
      %792 = vmatprep.subr.mxu0 0.0
      %793 = vmatpush1.msra.mxu0 %v751
      %794 = vmatprep.subr.mxu0 0.0
      %795 = vmatpush1.msra.mxu0 %v750
      %796 = vmatprep.subr.mxu0 0.0
      %797 = vmatpush2.msra.mxu0 0.0
      %798 = vmatprep.subr.mxu0 0.0
      %799 = vmatpush2.msra.mxu0 0.0
      %800 = vmatprep.subr.mxu0 0.0
      %801 = vmatpush2.msra.mxu0 0.0
      %802 = vmatprep.subr.mxu0 0.0
      %803 = vmatpush2.msra.mxu0 0.0
      %804 = vmatprep.subr.mxu0 0.0
      %805 = vmatpush2.msra.mxu0 0.0
      %806 = vmatprep.subr.mxu0 0.0
      %807 = vmatpush2.msra.mxu0 0.0
      %808 = vmatprep.subr.mxu0 0.0
      %809 = vmatpush2.msra.mxu0 0.0
      %810 = vmatprep.subr.mxu0 0.0
      %811 = vmatpush2.msra.mxu0 0.0
      %812 = vmatprep.subr.mxu0 0.0
      %813 = vmatpush2.msra.mxu0 0.0
      %814 = vmatprep.subr.mxu0 0.0
      %815 = vmatpush2.msra.mxu0 0.0
      %816 = vmatprep.subr.mxu0 0.0
      %817 = vmatpush2.msra.mxu0 0.0
      %818 = vmatprep.subr.mxu0 0.0
      %819 = vmatpush2.msra.mxu0 0.0
      %820 = vmatprep.subr.mxu0 0.0
      %821 = vmatpush2.msra.mxu0 0.0
      %822 = vmatprep.subr.mxu0 0.0
      %823 = vmatpush2.msra.mxu0 0.0
      %824 = vmatprep.subr.mxu0 0.0
      %825 = vmatpush2.msra.mxu0 0.0
      %826 = vmatprep.subr.mxu0 0.0
      %827 = vmatpush2.msra.mxu0 0.0
      %828 = vmatprep.mubr.f32.mxu0 0.0
      %829 = vmatmul.mubr.f32.gmra.mxu0 %v762
      %v830 = vpop.f32.mrf.mxu0
      %v831 = vadd.f32 %v759, %v830
      %v832 = vpop.f32.mrf.mxu0
      %833 = vdwg.mxu0
      %v834 = vmul.f32 %v831, 0.17677669
      %v835 = vld [vmem:[%s9] sm:$0xff]
      %v836 = vld [vmem:[%s9 + $0x8] sm:$0xff]
      %v837 = vld [vmem:[%s10] sm:$0x1]
      %v839 = vlaneseq
      %v840 = vshrl.u32 %v839, 7
      %v841 = vsub.s32 0, %v840
      %v842 = vrot.slane %v837, %v841
      %v845 = vsel %vm706, %v748, 0
      %v848 = vsel %vm706, %v749, 0
      %850 = vmatprep.subr.mxu0 0.0
      %851 = vmatpush1.msra.mxu0 0.0
      %852 = vmatprep.subr.mxu0 0.0
      %853 = vmatpush1.msra.mxu0 0.0
      %854 = vmatprep.subr.mxu0 0.0
      %855 = vmatpush1.msra.mxu0 0.0
      %856 = vmatprep.subr.mxu0 0.0
      %857 = vmatpush1.msra.mxu0 0.0
      %858 = vmatprep.subr.mxu0 0.0
      %859 = vmatpush1.msra.mxu0 0.0
      %860 = vmatprep.subr.mxu0 0.0
      %861 = vmatpush1.msra.mxu0 0.0
      %862 = vmatprep.subr.mxu0 0.0
      %863 = vmatpush1.msra.mxu0 0.0
      %864 = vmatprep.subr.mxu0 0.0
      %865 = vmatpush1.msra.mxu0 0.0
      %866 = vmatprep.subr.mxu0 0.0
      %867 = vmatpush1.msra.mxu0 0.0
      %868 = vmatprep.subr.mxu0 0.0
      %869 = vmatpush1.msra.mxu0 0.0
      %870 = vmatprep.subr.mxu0 0.0
      %871 = vmatpush1.msra.mxu0 0.0
      %872 = vmatprep.subr.mxu0 0.0
      %873 = vmatpush1.msra.mxu0 0.0
      %874 = vmatprep.subr.mxu0 0.0
      %875 = vmatpush1.msra.mxu0 0.0
      %876 = vmatprep.subr.mxu0 0.0
      %877 = vmatpush1.msra.mxu0 0.0
      %878 = vmatprep.subr.mxu0 0.0
      %879 = vmatpush1.msra.mxu0 %v836
      %880 = vmatprep.subr.mxu0 0.0
      %881 = vmatpush1.msra.mxu0 %v835
      %882 = vmatprep.subr.mxu0 0.0
      %883 = vmatpush2.msra.mxu0 0.0
      %884 = vmatprep.subr.mxu0 0.0
      %885 = vmatpush2.msra.mxu0 0.0
      %886 = vmatprep.subr.mxu0 0.0
      %887 = vmatpush2.msra.mxu0 0.0
      %888 = vmatprep.subr.mxu0 0.0
      %889 = vmatpush2.msra.mxu0 0.0
      %890 = vmatprep.subr.mxu0 0.0
      %891 = vmatpush2.msra.mxu0 0.0
      %892 = vmatprep.subr.mxu0 0.0
      %893 = vmatpush2.msra.mxu0 0.0
      %894 = vmatprep.subr.mxu0 0.0
      %895 = vmatpush2.msra.mxu0 0.0
      %896 = vmatprep.subr.mxu0 0.0
      %897 = vmatpush2.msra.mxu0 0.0
      %898 = vmatprep.subr.mxu0 0.0
      %899 = vmatpush2.msra.mxu0 0.0
      %900 = vmatprep.subr.mxu0 0.0
      %901 = vmatpush2.msra.mxu0 0.0
      %902 = vmatprep.subr.mxu0 0.0
      %903 = vmatpush2.msra.mxu0 0.0
      %904 = vmatprep.subr.mxu0 0.0
      %905 = vmatpush2.msra.mxu0 0.0
      %906 = vmatprep.subr.mxu0 0.0
      %907 = vmatpush2.msra.mxu0 0.0
      %908 = vmatprep.subr.mxu0 0.0
      %909 = vmatpush2.msra.mxu0 0.0
      %910 = vmatprep.subr.mxu0 0.0
      %911 = vmatpush2.msra.mxu0 0.0
      %912 = vmatprep.subr.mxu0 0.0
      %913 = vmatpush2.msra.mxu0 0.0
      %914 = vmatprep.mubr.f32.mxu0 0.0
      %915 = vmatmul.mubr.f32.gmra.mxu0 %v845
      %v916 = vpop.f32.mrf.mxu0
      %v917 = vadd.f32 %v842, %v916
      %v918 = vpop.f32.mrf.mxu0
      %919 = vmatprep.mubr.f32.mxu0 0.0
      %920 = vmatmul.mubr.f32.gmra.mxu0 %v848
      %v921 = vpop.f32.mrf.mxu0
      %v922 = vadd.f32 %v842, %v921
      %v923 = vpop.f32.mrf.mxu0
      %924 = vdwg.mxu0
      %v925 = vld [vmem:[%s661] sm:$0x1]
      %v927 = vsel %vm673, %v834, 0
      %v930 = vsel %vm673, %v917, 0
      %v933 = vsel %vm673, %v922, 0
      %935 = vmatprep.subr.mxu0 0.0
      %936 = vmatpush1.xpose.msra.mxu0 0.0
      %937 = vmatprep.subr.mxu0 0.0
      %938 = vmatpush1.xpose.msra.mxu0 0.0
      %939 = vmatprep.subr.mxu0 0.0
      %940 = vmatpush1.xpose.msra.mxu0 0.0
      %941 = vmatprep.subr.mxu0 0.0
      %942 = vmatpush1.xpose.msra.mxu0 0.0
      %943 = vmatprep.subr.mxu0 0.0
      %944 = vmatpush1.xpose.msra.mxu0 0.0
      %945 = vmatprep.subr.mxu0 0.0
      %946 = vmatpush1.xpose.msra.mxu0 0.0
      %947 = vmatprep.subr.mxu0 0.0
      %948 = vmatpush1.xpose.msra.mxu0 0.0
      %949 = vmatprep.subr.mxu0 0.0
      %950 = vmatpush1.xpose.msra.mxu0 0.0
      %951 = vmatprep.subr.mxu0 0.0
      %952 = vmatpush1.xpose.msra.mxu0 0.0
      %953 = vmatprep.subr.mxu0 0.0
      %954 = vmatpush1.xpose.msra.mxu0 0.0
      %955 = vmatprep.subr.mxu0 0.0
      %956 = vmatpush1.xpose.msra.mxu0 0.0
      %957 = vmatprep.subr.mxu0 0.0
      %958 = vmatpush1.xpose.msra.mxu0 0.0
      %959 = vmatprep.subr.mxu0 0.0
      %960 = vmatpush1.xpose.msra.mxu0 0.0
      %961 = vmatprep.subr.mxu0 0.0
      %962 = vmatpush1.xpose.msra.mxu0 0.0
      %963 = vmatprep.subr.mxu0 0.0
      %964 = vmatpush1.xpose.msra.mxu0 %v933
      %965 = vmatprep.subr.mxu0 0.0
      %966 = vmatpush1.xpose.msra.mxu0 %v930
      %967 = vmatprep.subr.mxu0 0.0
      %968 = vmatpush2.xpose.msra.mxu0 0.0
      %969 = vmatprep.subr.mxu0 0.0
      %970 = vmatpush2.xpose.msra.mxu0 0.0
      %971 = vmatprep.subr.mxu0 0.0
      %972 = vmatpush2.xpose.msra.mxu0 0.0
      %973 = vmatprep.subr.mxu0 0.0
      %974 = vmatpush2.xpose.msra.mxu0 0.0
      %975 = vmatprep.subr.mxu0 0.0
      %976 = vmatpush2.xpose.msra.mxu0 0.0
      %977 = vmatprep.subr.mxu0 0.0
      %978 = vmatpush2.xpose.msra.mxu0 0.0
      %979 = vmatprep.subr.mxu0 0.0
      %980 = vmatpush2.xpose.msra.mxu0 0.0
      %981 = vmatprep.subr.mxu0 0.0
      %982 = vmatpush2.xpose.msra.mxu0 0.0
      %983 = vmatprep.subr.mxu0 0.0
      %984 = vmatpush2.xpose.msra.mxu0 0.0
      %985 = vmatprep.subr.mxu0 0.0
      %986 = vmatpush2.xpose.msra.mxu0 0.0
      %987 = vmatprep.subr.mxu0 0.0
      %988 = vmatpush2.xpose.msra.mxu0 0.0
      %989 = vmatprep.subr.mxu0 0.0
      %990 = vmatpush2.xpose.msra.mxu0 0.0
      %991 = vmatprep.subr.mxu0 0.0
      %992 = vmatpush2.xpose.msra.mxu0 0.0
      %993 = vmatprep.subr.mxu0 0.0
      %994 = vmatpush2.xpose.msra.mxu0 0.0
      %995 = vmatprep.subr.mxu0 0.0
      %996 = vmatpush2.xpose.msra.mxu0 0.0
      %997 = vmatprep.subr.mxu0 0.0
      %998 = vmatpush2.xpose.msra.mxu0 0.0
      %999 = vmatprep.mubr.f32.mxu0 0.0
      %1000 = vmatmul.mubr.f32.gmra.mxu0 %v927
      %v1001 = vpop.f32.mrf.mxu0
      %v1002 = vadd.f32 0.0, %v1001
      %v1003 = vpop.f32.mrf.mxu0
      %1004 = vdwg.mxu0
      %vm1005 = vcmp.gt.f32.partialorder %v925, 0.0
      %v1006 = vsel %vm1005, 1, 0
      %v1007 = vlaneseq
      %v1008 = vshrl.u32 %v1007, 7
      %v1009 = vsub.s32 0, %v1008
      %v1010 = vrot.slane %v1006, %v1009
      %vm1011 = vcmp.eq.s32.totalorder %v1010, 1
      %v1012 = vsel %vm1011, %v1002, -1e+30
      %v1013 = vsel %vm706, %v1012, -inf
      %1014 = vmax.xlane.f32.xlu0 %v1013
      %v1015 = vpop.xlane.xlu0 %1014
      %v1016 = vsub.f32 %v1012, %v1015
      %v1017 = vmul.f32 %v1016, 1.442695
      %v1018 = vpow.pop %v1017
      %v1019 = vsel %vm706, %v1018, 0.0
      %1020 = vadd.xlane.f32.xlu0 %v1019
      %v1021 = vpop.xlane.xlu0 %1020
      %v1022 = vrcp.pop %v1021
      %v1023 = vmul.f32 %v1018, %v1022
      %1024 = vrot.lane.b32.xlu0 %v917, 96
      %v1025 = vpop.permute.xlu0 %1024
      %1026 = vrot.lane.b32.xlu0 %v922, 96
      %v1027 = vpop.permute.xlu0 %1026
      %v1031 = vsel %vm706, %v1023, 0
      %1033 = vmatprep.subr.mxu0 0.0
      %1034 = vmatpush1.msra.mxu0 0.0
      %1035 = vmatprep.subr.mxu0 0.0
      %1036 = vmatpush1.msra.mxu0 0.0
      %1037 = vmatprep.subr.mxu0 0.0
      %1038 = vmatpush1.msra.mxu0 0.0
      %1039 = vmatprep.subr.mxu0 0.0
      %1040 = vmatpush1.msra.mxu0 0.0
      %1041 = vmatprep.subr.mxu0 0.0
      %1042 = vmatpush1.msra.mxu0 0.0
      %1043 = vmatprep.subr.mxu0 0.0
      %1044 = vmatpush1.msra.mxu0 0.0
      %1045 = vmatprep.subr.mxu0 0.0
      %1046 = vmatpush1.msra.mxu0 0.0
      %1047 = vmatprep.subr.mxu0 0.0
      %1048 = vmatpush1.msra.mxu0 0.0
      %1049 = vmatprep.subr.mxu0 0.0
      %1050 = vmatpush1.msra.mxu0 0.0
      %1051 = vmatprep.subr.mxu0 0.0
      %1052 = vmatpush1.msra.mxu0 0.0
      %1053 = vmatprep.subr.mxu0 0.0
      %1054 = vmatpush1.msra.mxu0 0.0
      %1055 = vmatprep.subr.mxu0 0.0
      %1056 = vmatpush1.msra.mxu0 0.0
      %1057 = vmatprep.subr.mxu0 0.0
      %1058 = vmatpush1.msra.mxu0 0.0
      %1059 = vmatprep.subr.mxu0 0.0
      %1060 = vmatpush1.msra.mxu0 0.0
      %1061 = vmatprep.subr.mxu0 0.0
      %1062 = vmatpush1.msra.mxu0 %v1027
      %1063 = vmatprep.subr.mxu0 0.0
      %1064 = vmatpush1.msra.mxu0 %v1025
      %1065 = vmatprep.subr.mxu0 0.0
      %1066 = vmatpush2.msra.mxu0 0.0
      %1067 = vmatprep.subr.mxu0 0.0
      %1068 = vmatpush2.msra.mxu0 0.0
      %1069 = vmatprep.subr.mxu0 0.0
      %1070 = vmatpush2.msra.mxu0 0.0
      %1071 = vmatprep.subr.mxu0 0.0
      %1072 = vmatpush2.msra.mxu0 0.0
      %1073 = vmatprep.subr.mxu0 0.0
      %1074 = vmatpush2.msra.mxu0 0.0
      %1075 = vmatprep.subr.mxu0 0.0
      %1076 = vmatpush2.msra.mxu0 0.0
      %1077 = vmatprep.subr.mxu0 0.0
      %1078 = vmatpush2.msra.mxu0 0.0
      %1079 = vmatprep.subr.mxu0 0.0
      %1080 = vmatpush2.msra.mxu0 0.0
      %1081 = vmatprep.subr.mxu0 0.0
      %1082 = vmatpush2.msra.mxu0 0.0
      %1083 = vmatprep.subr.mxu0 0.0
      %1084 = vmatpush2.msra.mxu0 0.0
      %1085 = vmatprep.subr.mxu0 0.0
      %1086 = vmatpush2.msra.mxu0 0.0
      %1087 = vmatprep.subr.mxu0 0.0
      %1088 = vmatpush2.msra.mxu0 0.0
      %1089 = vmatprep.subr.mxu0 0.0
      %1090 = vmatpush2.msra.mxu0 0.0
      %1091 = vmatprep.subr.mxu0 0.0
      %1092 = vmatpush2.msra.mxu0 0.0
      %1093 = vmatprep.subr.mxu0 0.0
      %1094 = vmatpush2.msra.mxu0 0.0
      %1095 = vmatprep.subr.mxu0 0.0
      %1096 = vmatpush2.msra.mxu0 0.0
      %1097 = vmatprep.mubr.f32.mxu0 0.0
      %1098 = vmatmul.mubr.f32.gmra.mxu0 %v1031
      %v1099 = vpop.f32.mrf.mxu0
      %v1100 = vadd.f32 0.0, %v1099
      %v1101 = vpop.f32.mrf.mxu0
      %1102 = vdwg.mxu0
      %v1103 = vld [vmem:[%s11] sm:$0xff]
      %v1104 = vld [vmem:[%s11 + $0x8] sm:$0xff]
      %v1105 = vld [vmem:[%s11 + $0x10] sm:$0xff]
      %v1106 = vld [vmem:[%s11 + $0x18] sm:$0xff]
      %v1107 = vld [vmem:[%s12] sm:$0x1]
      %v1109 = vlaneseq
      %v1110 = vshrl.u32 %v1109, 7
      %v1111 = vsub.s32 0, %v1110
      %v1112 = vrot.slane %v1107, %v1111
      %v1115 = vsel %vm673, %v1100, 0
      %1117 = vmatprep.subr.mxu0 0.0
      %1118 = vmatpush1.msra.mxu0 0.0
      %1119 = vmatprep.subr.mxu0 0.0
      %1120 = vmatpush1.msra.mxu0 0.0
      %1121 = vmatprep.subr.mxu0 0.0
      %1122 = vmatpush1.msra.mxu0 0.0
      %1123 = vmatprep.subr.mxu0 0.0
      %1124 = vmatpush1.msra.mxu0 0.0
      %1125 = vmatprep.subr.mxu0 0.0
      %1126 = vmatpush1.msra.mxu0 0.0
      %1127 = vmatprep.subr.mxu0 0.0
      %1128 = vmatpush1.msra.mxu0 0.0
      %1129 = vmatprep.subr.mxu0 0.0
      %1130 = vmatpush1.msra.mxu0 0.0
      %1131 = vmatprep.subr.mxu0 0.0
      %1132 = vmatpush1.msra.mxu0 0.0
      %1133 = vmatprep.subr.mxu0 0.0
      %1134 = vmatpush1.msra.mxu0 0.0
      %1135 = vmatprep.subr.mxu0 0.0
      %1136 = vmatpush1.msra.mxu0 0.0
      %1137 = vmatprep.subr.mxu0 0.0
      %1138 = vmatpush1.msra.mxu0 0.0
      %1139 = vmatprep.subr.mxu0 0.0
      %1140 = vmatpush1.msra.mxu0 0.0
      %1141 = vmatprep.subr.mxu0 0.0
      %1142 = vmatpush1.msra.mxu0 %v1106
      %1143 = vmatprep.subr.mxu0 0.0
      %1144 = vmatpush1.msra.mxu0 %v1105
      %1145 = vmatprep.subr.mxu0 0.0
      %1146 = vmatpush1.msra.mxu0 %v1104
      %1147 = vmatprep.subr.mxu0 0.0
      %1148 = vmatpush1.msra.mxu0 %v1103
      %1149 = vmatprep.subr.mxu0 0.0
      %1150 = vmatpush2.msra.mxu0 0.0
      %1151 = vmatprep.subr.mxu0 0.0
      %1152 = vmatpush2.msra.mxu0 0.0
      %1153 = vmatprep.subr.mxu0 0.0
      %1154 = vmatpush2.msra.mxu0 0.0
      %1155 = vmatprep.subr.mxu0 0.0
      %1156 = vmatpush2.msra.mxu0 0.0
      %1157 = vmatprep.subr.mxu0 0.0
      %1158 = vmatpush2.msra.mxu0 0.0
      %1159 = vmatprep.subr.mxu0 0.0
      %1160 = vmatpush2.msra.mxu0 0.0
      %1161 = vmatprep.subr.mxu0 0.0
      %1162 = vmatpush2.msra.mxu0 0.0
      %1163 = vmatprep.subr.mxu0 0.0
      %1164 = vmatpush2.msra.mxu0 0.0
      %1165 = vmatprep.subr.mxu0 0.0
      %1166 = vmatpush2.msra.mxu0 0.0
      %1167 = vmatprep.subr.mxu0 0.0
      %1168 = vmatpush2.msra.mxu0 0.0
      %1169 = vmatprep.subr.mxu0 0.0
      %1170 = vmatpush2.msra.mxu0 0.0
      %1171 = vmatprep.subr.mxu0 0.0
      %1172 = vmatpush2.msra.mxu0 0.0
      %1173 = vmatprep.subr.mxu0 0.0
      %1174 = vmatpush2.msra.mxu0 0.0
      %1175 = vmatprep.subr.mxu0 0.0
      %1176 = vmatpush2.msra.mxu0 0.0
      %1177 = vmatprep.subr.mxu0 0.0
      %1178 = vmatpush2.msra.mxu0 0.0
      %1179 = vmatprep.subr.mxu0 0.0
      %1180 = vmatpush2.msra.mxu0 0.0
      %1181 = vmatprep.mubr.f32.mxu0 0.0
      %1182 = vmatmul.mubr.f32.gmra.mxu0 %v1115
      %v1183 = vpop.f32.mrf.mxu0
      %v1184 = vadd.f32 %v1112, %v1183
      %v1185 = vpop.f32.mrf.mxu0
      %1186 = vdwg.mxu0
      %v1187 = vadd.f32 %v670, %v1184
      %v1188 = vld [vmem:[%s13] sm:$0x1]
      %v1189 = vld [vmem:[%s14] sm:$0x1]
      %v1190 = vsel %vm673, %v1187, 0.0
      %1191 = vadd.xlane.f32.xlu0 %v1190
      %v1192 = vpop.xlane.xlu0 %1191
      %v1193 = vmul.f32 %v1192, %v677
      %v1194 = vsub.f32 %v1187, %v1193
      %v1195 = vmul.f32 %v1194, %v1194
      %v1196 = vsel %vm673, %v1195, 0.0
      %1197 = vadd.xlane.f32.xlu0 %v1196
      %v1198 = vpop.xlane.xlu0 %1197
      %v1199 = vmul.f32 %v1198, %v677
      %v1200 = vadd.f32 %v1199, 1e-05
      %v1201 = vrsqrt.pop %v1200
      %v1202 = vmul.f32 %v1194, %v1201
      %v1204 = vlaneseq
      %v1205 = vshrl.u32 %v1204, 7
      %v1206 = vsub.s32 0, %v1205
      %v1207 = vrot.slane %v1188, %v1206
      %v1209 = vmul.f32 %v1202, %v1207
      %v1211 = vlaneseq
      %v1212 = vshrl.u32 %v1211, 7
      %v1213 = vsub.s32 0, %v1212
      %v1214 = vrot.slane %v1189, %v1213
      %v1216 = vadd.f32 %v1209, %v1214
      %v1217 = vld [vmem:[%s15] sm:$0xff]
      %v1218 = vld [vmem:[%s15 + $0x8] sm:$0xff]
      %v1219 = vld [vmem:[%s15 + $0x10] sm:$0xff]
      %v1220 = vld [vmem:[%s15 + $0x18] sm:$0xff]
      %v1221 = vld [vmem:[%s16] sm:$0x1]
      %v1223 = vlaneseq
      %v1224 = vshrl.u32 %v1223, 7
      %v1225 = vsub.s32 0, %v1224
      %v1226 = vrot.slane %v1221, %v1225
      %v1229 = vsel %vm673, %v1216, 0
      %1231 = vmatprep.subr.mxu0 0.0
      %1232 = vmatpush1.msra.mxu0 0.0
      %1233 = vmatprep.subr.mxu0 0.0
      %1234 = vmatpush1.msra.mxu0 0.0
      %1235 = vmatprep.subr.mxu0 0.0
      %1236 = vmatpush1.msra.mxu0 0.0
      %1237 = vmatprep.subr.mxu0 0.0
      %1238 = vmatpush1.msra.mxu0 0.0
      %1239 = vmatprep.subr.mxu0 0.0
      %1240 = vmatpush1.msra.mxu0 0.0
      %1241 = vmatprep.subr.mxu0 0.0
      %1242 = vmatpush1.msra.mxu0 0.0
      %1243 = vmatprep.subr.mxu0 0.0
      %1244 = vmatpush1.msra.mxu0 0.0
      %1245 = vmatprep.subr.mxu0 0.0
      %1246 = vmatpush1.msra.mxu0 0.0
      %1247 = vmatprep.subr.mxu0 0.0
      %1248 = vmatpush1.msra.mxu0 0.0
      %1249 = vmatprep.subr.mxu0 0.0
      %1250 = vmatpush1.msra.mxu0 0.0
      %1251 = vmatprep.subr.mxu0 0.0
      %1252 = vmatpush1.msra.mxu0 0.0
      %1253 = vmatprep.subr.mxu0 0.0
      %1254 = vmatpush1.msra.mxu0 0.0
      %1255 = vmatprep.subr.mxu0 0.0
      %1256 = vmatpush1.msra.mxu0 %v1220
      %1257 = vmatprep.subr.mxu0 0.0
      %1258 = vmatpush1.msra.mxu0 %v1219
      %1259 = vmatprep.subr.mxu0 0.0
      %1260 = vmatpush1.msra.mxu0 %v1218
      %1261 = vmatprep.subr.mxu0 0.0
      %1262 = vmatpush1.msra.mxu0 %v1217
      %1263 = vmatprep.subr.mxu0 0.0
      %1264 = vmatpush2.msra.mxu0 0.0
      %1265 = vmatprep.subr.mxu0 0.0
      %1266 = vmatpush2.msra.mxu0 0.0
      %1267 = vmatprep.subr.mxu0 0.0
      %1268 = vmatpush2.msra.mxu0 0.0
      %1269 = vmatprep.subr.mxu0 0.0
      %1270 = vmatpush2.msra.mxu0 0.0
      %1271 = vmatprep.subr.mxu0 0.0
      %1272 = vmatpush2.msra.mxu0 0.0
      %1273 = vmatprep.subr.mxu0 0.0
      %1274 = vmatpush2.msra.mxu0 0.0
      %1275 = vmatprep.subr.mxu0 0.0
      %1276 = vmatpush2.msra.mxu0 0.0
      %1277 = vmatprep.subr.mxu0 0.0
      %1278 = vmatpush2.msra.mxu0 0.0
      %1279 = vmatprep.subr.mxu0 0.0
      %1280 = vmatpush2.msra.mxu0 0.0
      %1281 = vmatprep.subr.mxu0 0.0
      %1282 = vmatpush2.msra.mxu0 0.0
      %1283 = vmatprep.subr.mxu0 0.0
      %1284 = vmatpush2.msra.mxu0 0.0
      %1285 = vmatprep.subr.mxu0 0.0
      %1286 = vmatpush2.msra.mxu0 0.0
      %1287 = vmatprep.subr.mxu0 0.0
      %1288 = vmatpush2.msra.mxu0 0.0
      %1289 = vmatprep.subr.mxu0 0.0
      %1290 = vmatpush2.msra.mxu0 0.0
      %1291 = vmatprep.subr.mxu0 0.0
      %1292 = vmatpush2.msra.mxu0 0.0
      %1293 = vmatprep.subr.mxu0 0.0
      %1294 = vmatpush2.msra.mxu0 0.0
      %1295 = vmatprep.mubr.f32.mxu0 0.0
      %1296 = vmatmul.mubr.f32.gmra.mxu0 %v1229
      %v1297 = vpop.f32.mrf.mxu0
      %v1298 = vadd.f32 %v1226, %v1297
      %v1299 = vpop.f32.mrf.mxu0
      %1300 = vdwg.mxu0
      %v1301 = vmul.f32 %v1298, %v1298
      %v1302 = vmul.f32 %v1298, %v1301
      %v1303 = vmul.f32 %v1302, 0.044715
      %v1304 = vadd.f32 %v1298, %v1303
      %v1305 = vmul.f32 %v1304, 0.7978846
      %v1306 = vtanh.pop %v1305
      %v1307 = vadd.f32 %v1306, 1.0
      %v1308 = vmul.f32 %v1307, 0.5
      %v1309 = vmul.f32 %v1298, %v1308
      %v1310 = vld [vmem:[%s17] sm:$0xff]
      %v1311 = vld [vmem:[%s17 + $0x8] sm:$0xff]
      %v1312 = vld [vmem:[%s17 + $0x10] sm:$0xff]
      %v1313 = vld [vmem:[%s17 + $0x18] sm:$0xff]
      %v1314 = vld [vmem:[%s17 + $0x20] sm:$0xff]
      %v1315 = vld [vmem:[%s17 + $0x28] sm:$0xff]
      %v1316 = vld [vmem:[%s17 + $0x30] sm:$0xff]
      %v1317 = vld [vmem:[%s17 + $0x38] sm:$0xff]
      %v1318 = vld [vmem:[%s17 + $0x40] sm:$0xff]
      %v1319 = vld [vmem:[%s17 + $0x48] sm:$0xff]
      %v1320 = vld [vmem:[%s17 + $0x50] sm:$0xff]
      %v1321 = vld [vmem:[%s17 + $0x58] sm:$0xff]
      %v1322 = vld [vmem:[%s17 + $0x60] sm:$0xff]
      %v1323 = vld [vmem:[%s17 + $0x68] sm:$0xff]
      %v1324 = vld [vmem:[%s17 + $0x70] sm:$0xff]
      %v1325 = vld [vmem:[%s17 + $0x78] sm:$0xff]
      %v1326 = vld [vmem:[%s18] sm:$0x1]
      %v1328 = vlaneseq
      %v1329 = vshrl.u32 %v1328, 7
      %v1330 = vsub.s32 0, %v1329
      %v1331 = vrot.slane %v1326, %v1330
      %1333 = vmatprep.subr.mxu0 0.0
      %1334 = vmatpush1.msra.mxu0 %v1325
      %1335 = vmatprep.subr.mxu0 0.0
      %1336 = vmatpush1.msra.mxu0 %v1324
      %1337 = vmatprep.subr.mxu0 0.0
      %1338 = vmatpush1.msra.mxu0 %v1323
      %1339 = vmatprep.subr.mxu0 0.0
      %1340 = vmatpush1.msra.mxu0 %v1322
      %1341 = vmatprep.subr.mxu0 0.0
      %1342 = vmatpush1.msra.mxu0 %v1321
      %1343 = vmatprep.subr.mxu0 0.0
      %1344 = vmatpush1.msra.mxu0 %v1320
      %1345 = vmatprep.subr.mxu0 0.0
      %1346 = vmatpush1.msra.mxu0 %v1319
      %1347 = vmatprep.subr.mxu0 0.0
      %1348 = vmatpush1.msra.mxu0 %v1318
      %1349 = vmatprep.subr.mxu0 0.0
      %1350 = vmatpush1.msra.mxu0 %v1317
      %1351 = vmatprep.subr.mxu0 0.0
      %1352 = vmatpush1.msra.mxu0 %v1316
      %1353 = vmatprep.subr.mxu0 0.0
      %1354 = vmatpush1.msra.mxu0 %v1315
      %1355 = vmatprep.subr.mxu0 0.0
      %1356 = vmatpush1.msra.mxu0 %v1314
      %1357 = vmatprep.subr.mxu0 0.0
      %1358 = vmatpush1.msra.mxu0 %v1313
      %1359 = vmatprep.subr.mxu0 0.0
      %1360 = vmatpush1.msra.mxu0 %v1312
      %1361 = vmatprep.subr.mxu0 0.0
      %1362 = vmatpush1.msra.mxu0 %v1311
      %1363 = vmatprep.subr.mxu0 0.0
      %1364 = vmatpush1.msra.mxu0 %v1310
      %1365 = vmatprep.subr.mxu0 0.0
      %1366 = vmatpush2.msra.mxu0 0.0
      %1367 = vmatprep.subr.mxu0 0.0
      %1368 = vmatpush2.msra.mxu0 0.0
      %1369 = vmatprep.subr.mxu0 0.0
      %1370 = vmatpush2.msra.mxu0 0.0
      %1371 = vmatprep.subr.mxu0 0.0
      %1372 = vmatpush2.msra.mxu0 0.0
      %1373 = vmatprep.subr.mxu0 0.0
      %1374 = vmatpush2.msra.mxu0 0.0
      %1375 = vmatprep.subr.mxu0 0.0
      %1376 = vmatpush2.msra.mxu0 0.0
      %1377 = vmatprep.subr.mxu0 0.0
      %1378 = vmatpush2.msra.mxu0 0.0
      %1379 = vmatprep.subr.mxu0 0.0
      %1380 = vmatpush2.msra.mxu0 0.0
      %1381 = vmatprep.subr.mxu0 0.0
      %1382 = vmatpush2.msra.mxu0 0.0
      %1383 = vmatprep.subr.mxu0 0.0
      %1384 = vmatpush2.msra.mxu0 0.0
      %1385 = vmatprep.subr.mxu0 0.0
      %1386 = vmatpush2.msra.mxu0 0.0
      %1387 = vmatprep.subr.mxu0 0.0
      %1388 = vmatpush2.msra.mxu0 0.0
      %1389 = vmatprep.subr.mxu0 0.0
      %1390 = vmatpush2.msra.mxu0 0.0
      %1391 = vmatprep.subr.mxu0 0.0
      %1392 = vmatpush2.msra.mxu0 0.0
      %1393 = vmatprep.subr.mxu0 0.0
      %1394 = vmatpush2.msra.mxu0 0.0
      %1395 = vmatprep.subr.mxu0 0.0
      %1396 = vmatpush2.msra.mxu0 0.0
      %1397 = vmatprep.mubr.f32.mxu0 0.0
      %1398 = vmatmul.mubr.f32.gmra.mxu0 %v1309
      %v1399 = vpop.f32.mrf.mxu0
      %v1400 = vadd.f32 %v1331, %v1399
      %v1401 = vpop.f32.mrf.mxu0
      %1402 = vdwg.mxu0
      %v1403 = vadd.f32 %v1187, %v1400
      %1404 = vst.msk [vmem:[%s665] sm:$0xff] %vm673, %v1403
      %1405 = vst.msk [vmem:[%s669] sm:$0xff] %vm706, %v1023
      %p1406 = scmp.lt.s32.totalorder %s32, 1
      %s1407 = scalar_select %p1406, %s32, 1
      %s1408 = smul.addr %s1407, 8
      %s1409 = scalar_lea.vmem %s19, %s1408
      %p1410 = scmp.lt.s32.totalorder %s32, 1
      %s1411 = scalar_select %p1410, %s32, 1
      %s1412 = smul.addr %s1411, 8
      %s1413 = scalar_lea.vmem %s20, %s1412
      // Predicated region
      $region97: #{perceiver_forward.6} parent=95 // pred_check
        %p1414 = pneg %p464
      $region98: #{perceiver_forward.6} parent=95 // pred_check_branch
        %1416 = sbr.rel (%p1414) target = $region100
      $region99: #{perceiver_forward.6} parent=95 // pred_region
        _
      $region100: #{perceiver_forward.6} parent=95 // pred_fallthru
        _
      // Predicated region
      $region101: #{perceiver_forward.6} parent=95 // pred_check
        %p1417 = pneg %p490
      $region102: #{perceiver_forward.6} parent=95 // pred_check_branch
        %1419 = sbr.rel (%p1417) target = $region104
      $region103: #{perceiver_forward.6} parent=95 // pred_region
        _
      $region104: #{perceiver_forward.6} parent=95 // pred_fallthru
        _
    $region96: #{perceiver_forward.6} parent=5 // pred_fallthru
      _
    %p1420 = scmp.le.s32.totalorder 2, %s27
    // Predicated region
    $region105: #{perceiver_forward.6} parent=5 // pred_check
      %p1421 = pneg %p1420
    $region106: #{perceiver_forward.6} parent=5 // pred_check_branch
      %1423 = sbr.rel (%p1421) target = $region108
    $region107: #{perceiver_forward.6} parent=5 // pred_region
      %s1424 = ssub.s32 %s27, 2
      // Predicated region
      $region109: #{perceiver_forward.6} parent=107 // pred_check
        %p1425 = pneg %p470
      $region110: #{perceiver_forward.6} parent=107 // pred_check_branch
        %1427 = sbr.rel (%p1425) target = $region112
      $region111: #{perceiver_forward.6} parent=107 // pred_region
        %p1428 = scmp.lt.s32.totalorder %s33, 1
        %s1429 = scalar_select %p1428, %s33, 1
        %s1430 = smul.addr %s1429, 8
        %s1431 = scalar_lea.vmem %s19, %s1430
      $region112: #{perceiver_forward.6} parent=107 // pred_fallthru
        _
      // Predicated region
      $region113: #{perceiver_forward.6} parent=107 // pred_check
        %p1432 = pneg %p496
      $region114: #{perceiver_forward.6} parent=107 // pred_check_branch
        %1434 = sbr.rel (%p1432) target = $region116
      $region115: #{perceiver_forward.6} parent=107 // pred_region
        %p1435 = scmp.lt.s32.totalorder %s33, 1
        %s1436 = scalar_select %p1435, %s33, 1
        %s1437 = smul.addr %s1436, 8
        %s1438 = scalar_lea.vmem %s20, %s1437
      $region116: #{perceiver_forward.6} parent=107 // pred_fallthru
        _
    $region108: #{perceiver_forward.6} parent=5 // pred_fallthru
      _
  $region6: #{perceiver_forward.6} parent=0 // loop_footer
    %s31 = sadd.s32 1, %s27
  $region7: #{perceiver_forward.6} parent=0 // loop_footer_branch
    %26 = sbr.rel target = $region3
  $region8: #{perceiver_forward.6} parent=0 // loop_exit
    _

// kernel: perceiver_forward.7
$region0: #{perceiver_forward.7}
  #allocation0 [shape = 'u32[]', space=smem, size = 0x4, offset = 0x4, fixed_abs, tag = 'smem constant byte address 0x4 - core index']
  #allocation1 [shape = 'u32[144,128]{1,0:T(1,128)}', space=vmem, size = 0x12000, scoped, tag = 'internal scratch']
  %s0 = inlined_call_operand.vmem [shape: f32[2,8,32], index: 0, kind: input, shape index: {}]
  %s1 = inlined_call_operand.vmem [shape: f32[2,8,16], index: 1, kind: input, shape index: {}]
  %s2 = inlined_call_operand.vmem [shape: f32[1,32], index: 2, kind: input, shape index: {}]
  %s3 = inlined_call_operand.vmem [shape: f32[1,32], index: 3, kind: input, shape index: {}]
  %s4 = inlined_call_operand.vmem [shape: f32[32,96], index: 4, kind: input, shape index: {}]
  %s5 = inlined_call_operand.vmem [shape: f32[1,96], index: 5, kind: input, shape index: {}]
  %s6 = inlined_call_operand.vmem [shape: f32[32,32], index: 6, kind: input, shape index: {}]
  %s7 = inlined_call_operand.vmem [shape: f32[1,32], index: 7, kind: input, shape index: {}]
  %s8 = inlined_call_operand.vmem [shape: f32[1,32], index: 8, kind: input, shape index: {}]
  %s9 = inlined_call_operand.vmem [shape: f32[1,32], index: 9, kind: input, shape index: {}]
  %s10 = inlined_call_operand.vmem [shape: f32[32,128], index: 10, kind: input, shape index: {}]
  %s11 = inlined_call_operand.vmem [shape: f32[1,128], index: 11, kind: input, shape index: {}]
  %s12 = inlined_call_operand.vmem [shape: f32[128,32], index: 12, kind: input, shape index: {}]
  %s13 = inlined_call_operand.vmem [shape: f32[1,32], index: 13, kind: input, shape index: {}]
  %s14 = inlined_call_operand.vmem [shape: f32[2,8,32], index: 14, kind: output, shape index: {0}]
  %s15 = inlined_call_operand.vmem [shape: f32[2,1,16], index: 15, kind: output, shape index: {1}]
  %16 = xla_tuple %s14, %s15
  %s17 = sld [smem:[#allocation0]]
  $region97: #{perceiver_forward.7} parent=0
    _
  %s19 = ssub.s32 1, %s17
  %s20 = scalar_select 0, %s19, %s17
  loop: start=0, step=1, limit=4
  $region2: #{perceiver_forward.7} parent=0 // loop_pre_header
    _
  $region3: #{perceiver_forward.7} parent=0 // loop_header
    %s22 = sphi 0, %s26
    %p23 = scmp.ge.s32.totalorder %s22, 4
    %s32 = sphi 0, %s34
    %s35 = sphi 0, %s32
    %s36 = sphi 0, %s35
    %s52 = sphi 0, %s36
    %s58 = sphi 0, %s60
    %s61 = sphi 0, %s58
    %s62 = sphi 0, %s61
    %s78 = sphi 0, %s62
    %s82 = sphi 0, %s82
    %s84 = sphi 0, %s82
    %s85 = sphi 0, %s84
    %s99 = sphi 0, %s85
    %s103 = sphi 0, %s103
    %s105 = sphi 0, %s103
    %s106 = sphi 0, %s105
    %s120 = sphi 0, %s106
    %s124 = sphi 0, %s124
    %s126 = sphi 0, %s124
    %s127 = sphi 0, %s126
    %s141 = sphi 0, %s127
    %s145 = sphi 0, %s145
    %s147 = sphi 0, %s145
    %s148 = sphi 0, %s147
    %s162 = sphi 0, %s148
    %s166 = sphi 0, %s166
    %s168 = sphi 0, %s166
    %s169 = sphi 0, %s168
    %s183 = sphi 0, %s169
    %s187 = sphi 0, %s187
    %s189 = sphi 0, %s187
    %s190 = sphi 0, %s189
    %s204 = sphi 0, %s190
    %s208 = sphi 0, %s208
    %s210 = sphi 0, %s208
    %s211 = sphi 0, %s210
    %s225 = sphi 0, %s211
    %s229 = sphi 0, %s229
    %s231 = sphi 0, %s229
    %s232 = sphi 0, %s231
    %s246 = sphi 0, %s232
    %s250 = sphi 0, %s250
    %s252 = sphi 0, %s250
    %s253 = sphi 0, %s252
    %s267 = sphi 0, %s253
    %s271 = sphi 0, %s271
    %s273 = sphi 0, %s271
    %s274 = sphi 0, %s273
    %s288 = sphi 0, %s274
    %s292 = sphi 0, %s292
    %s294 = sphi 0, %s292
    %s295 = sphi 0, %s294
    %s309 = sphi 0, %s295
    %s313 = sphi 0, %s313
    %s315 = sphi 0, %s313
    %s316 = sphi 0, %s315
    %s330 = sphi 0, %s316
    %s336 = sphi 0, %s338
    %s339 = sphi 0, %s336
    %s340 = sphi 0, %s339
    %s356 = sphi 0, %s340
    %s362 = sphi 0, %s364
    %s365 = sphi 0, %s362
    %s366 = sphi 0, %s365
    %s382 = sphi 0, %s366
  $region4: #{perceiver_forward.7} parent=0 // loop_header_branch
    %25 = sbr.rel (%p23) target = $region8
  $region5: #{perceiver_forward.7} parent=0 // loop_body
    %s27 = ssub.s32 %s22, 1
    %s28 = ssub.s32 %s22, 2
    %s29 = sadd.s32 %s22, 1
    %s30 = ssub.s32 %s22, %s29
    %p31 = scmp.eq.s32.totalorder %s30, 0
    %s33 = sadd.s32 %s32, 1
    %s34 = scalar_select %p31, %s32, %s33
    %p37 = pneg %p31
    %p38 = scmp.eq.s32.totalorder %s22, 1
    %p39 = por %p37, %p38
    %p40 = scmp.ne.s32.totalorder %s32, %s35
    %p41 = scmp.eq.s32.totalorder %s22, 0
    %p42 = por %p40, %p41
    %p43 = scmp.ne.s32.totalorder %s32, %s35
    %p44 = scmp.eq.s32.totalorder %s27, 1
    %p45 = por %p43, %p44
    %p46 = scmp.ne.s32.totalorder %s35, %s36
    %p47 = scmp.eq.s32.totalorder %s27, 0
    %p48 = por %p46, %p47
    %p49 = scmp.ne.s32.totalorder %s35, %s36
    %p50 = scmp.eq.s32.totalorder %s28, 1
    %p51 = por %p49, %p50
    %p53 = scmp.ne.s32.totalorder %s36, %s52
    %p54 = scmp.eq.s32.totalorder %s28, 0
    %p55 = por %p53, %p54
    %s56 = ssub.s32 %s22, %s29
    %p57 = scmp.eq.s32.totalorder %s56, 0
    %s59 = sadd.s32 %s58, 1
    %s60 = scalar_select %p57, %s58, %s59
    %p63 = pneg %p57
    %p64 = scmp.eq.s32.totalorder %s22, 1
    %p65 = por %p63, %p64
    %p66 = scmp.ne.s32.totalorder %s58, %s61
    %p67 = scmp.eq.s32.totalorder %s22, 0
    %p68 = por %p66, %p67
    %p69 = scmp.ne.s32.totalorder %s58, %s61
    %p70 = scmp.eq.s32.totalorder %s27, 1
    %p71 = por %p69, %p70
    %p72 = scmp.ne.s32.totalorder %s61, %s62
    %p73 = scmp.eq.s32.totalorder %s27, 0
    %p74 = por %p72, %p73
    %p75 = scmp.ne.s32.totalorder %s61, %s62
    %p76 = scmp.eq.s32.totalorder %s28, 1
    %p77 = por %p75, %p76
    %p79 = scmp.ne.s32.totalorder %s62, %s78
    %p80 = scmp.eq.s32.totalorder %s28, 0
    %p81 = por %p79, %p80
    %s83 = sadd.s32 %s82, 1
    %p86 = scmp.eq.s32.totalorder %s22, 1
    %p87 = scmp.ne.s32.totalorder %s82, %s84
    %p88 = scmp.eq.s32.totalorder %s22, 0
    %p89 = por %p87, %p88
    %p90 = scmp.ne.s32.totalorder %s82, %s84
    %p91 = scmp.eq.s32.totalorder %s27, 1
    %p92 = por %p90, %p91
    %p93 = scmp.ne.s32.totalorder %s84, %s85
    %p94 = scmp.eq.s32.totalorder %s27, 0
    %p95 = por %p93, %p94
    %p96 = scmp.ne.s32.totalorder %s84, %s85
    %p97 = scmp.eq.s32.totalorder %s28, 1
    %p98 = por %p96, %p97
    %p100 = scmp.ne.s32.totalorder %s85, %s99
    %p101 = scmp.eq.s32.totalorder %s28, 0
    %p102 = por %p100, %p101
    %s104 = sadd.s32 %s103, 1
    %p107 = scmp.eq.s32.totalorder %s22, 1
    %p108 = scmp.ne.s32.totalorder %s103, %s105
    %p109 = scmp.eq.s32.totalorder %s22, 0
    %p110 = por %p108, %p109
    %p111 = scmp.ne.s32.totalorder %s103, %s105
    %p112 = scmp.eq.s32.totalorder %s27, 1
    %p113 = por %p111, %p112
    %p114 = scmp.ne.s32.totalorder %s105, %s106
    %p115 = scmp.eq.s32.totalorder %s27, 0
    %p116 = por %p114, %p115
    %p117 = scmp.ne.s32.totalorder %s105, %s106
    %p118 = scmp.eq.s32.totalorder %s28, 1
    %p119 = por %p117, %p118
    %p121 = scmp.ne.s32.totalorder %s106, %s120
    %p122 = scmp.eq.s32.totalorder %s28, 0
    %p123 = por %p121, %p122
    %s125 = sadd.s32 %s124, 1
    %p128 = scmp.eq.s32.totalorder %s22, 1
    %p129 = scmp.ne.s32.totalorder %s124, %s126
    %p130 = scmp.eq.s32.totalorder %s22, 0
    %p131 = por %p129, %p130
    %p132 = scmp.ne.s32.totalorder %s124, %s126
    %p133 = scmp.eq.s32.totalorder %s27, 1
    %p134 = por %p132, %p133
    %p135 = scmp.ne.s32.totalorder %s126, %s127
    %p136 = scmp.eq.s32.totalorder %s27, 0
    %p137 = por %p135, %p136
    %p138 = scmp.ne.s32.totalorder %s126, %s127
    %p139 = scmp.eq.s32.totalorder %s28, 1
    %p140 = por %p138, %p139
    %p142 = scmp.ne.s32.totalorder %s127, %s141
    %p143 = scmp.eq.s32.totalorder %s28, 0
    %p144 = por %p142, %p143
    %s146 = sadd.s32 %s145, 1
    %p149 = scmp.eq.s32.totalorder %s22, 1
    %p150 = scmp.ne.s32.totalorder %s145, %s147
    %p151 = scmp.eq.s32.totalorder %s22, 0
    %p152 = por %p150, %p151
    %p153 = scmp.ne.s32.totalorder %s145, %s147
    %p154 = scmp.eq.s32.totalorder %s27, 1
    %p155 = por %p153, %p154
    %p156 = scmp.ne.s32.totalorder %s147, %s148
    %p157 = scmp.eq.s32.totalorder %s27, 0
    %p158 = por %p156, %p157
    %p159 = scmp.ne.s32.totalorder %s147, %s148
    %p160 = scmp.eq.s32.totalorder %s28, 1
    %p161 = por %p159, %p160
    %p163 = scmp.ne.s32.totalorder %s148, %s162
    %p164 = scmp.eq.s32.totalorder %s28, 0
    %p165 = por %p163, %p164
    %s167 = sadd.s32 %s166, 1
    %p170 = scmp.eq.s32.totalorder %s22, 1
    %p171 = scmp.ne.s32.totalorder %s166, %s168
    %p172 = scmp.eq.s32.totalorder %s22, 0
    %p173 = por %p171, %p172
    %p174 = scmp.ne.s32.totalorder %s166, %s168
    %p175 = scmp.eq.s32.totalorder %s27, 1
    %p176 = por %p174, %p175
    %p177 = scmp.ne.s32.totalorder %s168, %s169
    %p178 = scmp.eq.s32.totalorder %s27, 0
    %p179 = por %p177, %p178
    %p180 = scmp.ne.s32.totalorder %s168, %s169
    %p181 = scmp.eq.s32.totalorder %s28, 1
    %p182 = por %p180, %p181
    %p184 = scmp.ne.s32.totalorder %s169, %s183
    %p185 = scmp.eq.s32.totalorder %s28, 0
    %p186 = por %p184, %p185
    %s188 = sadd.s32 %s187, 1
    %p191 = scmp.eq.s32.totalorder %s22, 1
    %p192 = scmp.ne.s32.totalorder %s187, %s189
    %p193 = scmp.eq.s32.totalorder %s22, 0
    %p194 = por %p192, %p193
    %p195 = scmp.ne.s32.totalorder %s187, %s189
    %p196 = scmp.eq.s32.totalorder %s27, 1
    %p197 = por %p195, %p196
    %p198 = scmp.ne.s32.totalorder %s189, %s190
    %p199 = scmp.eq.s32.totalorder %s27, 0
    %p200 = por %p198, %p199
    %p201 = scmp.ne.s32.totalorder %s189, %s190
    %p202 = scmp.eq.s32.totalorder %s28, 1
    %p203 = por %p201, %p202
    %p205 = scmp.ne.s32.totalorder %s190, %s204
    %p206 = scmp.eq.s32.totalorder %s28, 0
    %p207 = por %p205, %p206
    %s209 = sadd.s32 %s208, 1
    %p212 = scmp.eq.s32.totalorder %s22, 1
    %p213 = scmp.ne.s32.totalorder %s208, %s210
    %p214 = scmp.eq.s32.totalorder %s22, 0
    %p215 = por %p213, %p214
    %p216 = scmp.ne.s32.totalorder %s208, %s210
    %p217 = scmp.eq.s32.totalorder %s27, 1
    %p218 = por %p216, %p217
    %p219 = scmp.ne.s32.totalorder %s210, %s211
    %p220 = scmp.eq.s32.totalorder %s27, 0
    %p221 = por %p219, %p220
    %p222 = scmp.ne.s32.totalorder %s210, %s211
    %p223 = scmp.eq.s32.totalorder %s28, 1
    %p224 = por %p222, %p223
    %p226 = scmp.ne.s32.totalorder %s211, %s225
    %p227 = scmp.eq.s32.totalorder %s28, 0
    %p228 = por %p226, %p227
    %s230 = sadd.s32 %s229, 1
    %p233 = scmp.eq.s32.totalorder %s22, 1
    %p234 = scmp.ne.s32.totalorder %s229, %s231
    %p235 = scmp.eq.s32.totalorder %s22, 0
    %p236 = por %p234, %p235
    %p237 = scmp.ne.s32.totalorder %s229, %s231
    %p238 = scmp.eq.s32.totalorder %s27, 1
    %p239 = por %p237, %p238
    %p240 = scmp.ne.s32.totalorder %s231, %s232
    %p241 = scmp.eq.s32.totalorder %s27, 0
    %p242 = por %p240, %p241
    %p243 = scmp.ne.s32.totalorder %s231, %s232
    %p244 = scmp.eq.s32.totalorder %s28, 1
    %p245 = por %p243, %p244
    %p247 = scmp.ne.s32.totalorder %s232, %s246
    %p248 = scmp.eq.s32.totalorder %s28, 0
    %p249 = por %p247, %p248
    %s251 = sadd.s32 %s250, 1
    %p254 = scmp.eq.s32.totalorder %s22, 1
    %p255 = scmp.ne.s32.totalorder %s250, %s252
    %p256 = scmp.eq.s32.totalorder %s22, 0
    %p257 = por %p255, %p256
    %p258 = scmp.ne.s32.totalorder %s250, %s252
    %p259 = scmp.eq.s32.totalorder %s27, 1
    %p260 = por %p258, %p259
    %p261 = scmp.ne.s32.totalorder %s252, %s253
    %p262 = scmp.eq.s32.totalorder %s27, 0
    %p263 = por %p261, %p262
    %p264 = scmp.ne.s32.totalorder %s252, %s253
    %p265 = scmp.eq.s32.totalorder %s28, 1
    %p266 = por %p264, %p265
    %p268 = scmp.ne.s32.totalorder %s253, %s267
    %p269 = scmp.eq.s32.totalorder %s28, 0
    %p270 = por %p268, %p269
    %s272 = sadd.s32 %s271, 1
    %p275 = scmp.eq.s32.totalorder %s22, 1
    %p276 = scmp.ne.s32.totalorder %s271, %s273
    %p277 = scmp.eq.s32.totalorder %s22, 0
    %p278 = por %p276, %p277
    %p279 = scmp.ne.s32.totalorder %s271, %s273
    %p280 = scmp.eq.s32.totalorder %s27, 1
    %p281 = por %p279, %p280
    %p282 = scmp.ne.s32.totalorder %s273, %s274
    %p283 = scmp.eq.s32.totalorder %s27, 0
    %p284 = por %p282, %p283
    %p285 = scmp.ne.s32.totalorder %s273, %s274
    %p286 = scmp.eq.s32.totalorder %s28, 1
    %p287 = por %p285, %p286
    %p289 = scmp.ne.s32.totalorder %s274, %s288
    %p290 = scmp.eq.s32.totalorder %s28, 0
    %p291 = por %p289, %p290
    %s293 = sadd.s32 %s292, 1
    %p296 = scmp.eq.s32.totalorder %s22, 1
    %p297 = scmp.ne.s32.totalorder %s292, %s294
    %p298 = scmp.eq.s32.totalorder %s22, 0
    %p299 = por %p297, %p298
    %p300 = scmp.ne.s32.totalorder %s292, %s294
    %p301 = scmp.eq.s32.totalorder %s27, 1
    %p302 = por %p300, %p301
    %p303 = scmp.ne.s32.totalorder %s294, %s295
    %p304 = scmp.eq.s32.totalorder %s27, 0
    %p305 = por %p303, %p304
    %p306 = scmp.ne.s32.totalorder %s294, %s295
    %p307 = scmp.eq.s32.totalorder %s28, 1
    %p308 = por %p306, %p307
    %p310 = scmp.ne.s32.totalorder %s295, %s309
    %p311 = scmp.eq.s32.totalorder %s28, 0
    %p312 = por %p310, %p311
    %s314 = sadd.s32 %s313, 1
    %p317 = scmp.eq.s32.totalorder %s22, 1
    %p318 = scmp.ne.s32.totalorder %s313, %s315
    %p319 = scmp.eq.s32.totalorder %s22, 0
    %p320 = por %p318, %p319
    %p321 = scmp.ne.s32.totalorder %s313, %s315
    %p322 = scmp.eq.s32.totalorder %s27, 1
    %p323 = por %p321, %p322
    %p324 = scmp.ne.s32.totalorder %s315, %s316
    %p325 = scmp.eq.s32.totalorder %s27, 0
    %p326 = por %p324, %p325
    %p327 = scmp.ne.s32.totalorder %s315, %s316
    %p328 = scmp.eq.s32.totalorder %s28, 1
    %p329 = por %p327, %p328
    %p331 = scmp.ne.s32.totalorder %s316, %s330
    %p332 = scmp.eq.s32.totalorder %s28, 0
    %p333 = por %p331, %p332
    %s334 = ssub.s32 %s22, %s29
    %p335 = scmp.eq.s32.totalorder %s334, 0
    %s337 = sadd.s32 %s336, 1
    %s338 = scalar_select %p335, %s336, %s337
    %p341 = pneg %p335
    %p342 = scmp.eq.s32.totalorder %s22, 1
    %p343 = por %p341, %p342
    %p344 = scmp.ne.s32.totalorder %s336, %s339
    %p345 = scmp.eq.s32.totalorder %s22, 0
    %p346 = por %p344, %p345
    %p347 = scmp.ne.s32.totalorder %s336, %s339
    %p348 = scmp.eq.s32.totalorder %s27, 1
    %p349 = por %p347, %p348
    %p350 = scmp.ne.s32.totalorder %s339, %s340
    %p351 = scmp.eq.s32.totalorder %s27, 0
    %p352 = por %p350, %p351
    %p353 = scmp.ne.s32.totalorder %s339, %s340
    %p354 = scmp.eq.s32.totalorder %s28, 1
    %p355 = por %p353, %p354
    %p357 = scmp.ne.s32.totalorder %s340, %s356
    %p358 = scmp.eq.s32.totalorder %s28, 0
    %p359 = por %p357, %p358
    %s360 = ssub.s32 %s22, %s29
    %p361 = scmp.eq.s32.totalorder %s360, 0
    %s363 = sadd.s32 %s362, 1
    %s364 = scalar_select %p361, %s362, %s363
    %p367 = pneg %p361
    %p368 = scmp.eq.s32.totalorder %s22, 1
    %p369 = por %p367, %p368
    %p370 = scmp.ne.s32.totalorder %s362, %s365
    %p371 = scmp.eq.s32.totalorder %s22, 0
    %p372 = por %p370, %p371
    %p373 = scmp.ne.s32.totalorder %s362, %s365
    %p374 = scmp.eq.s32.totalorder %s27, 1
    %p375 = por %p373, %p374
    %p376 = scmp.ne.s32.totalorder %s365, %s366
    %p377 = scmp.eq.s32.totalorder %s27, 0
    %p378 = por %p376, %p377
    %p379 = scmp.ne.s32.totalorder %s365, %s366
    %p380 = scmp.eq.s32.totalorder %s28, 1
    %p381 = por %p379, %p380
    %p383 = scmp.ne.s32.totalorder %s366, %s382
    %p384 = scmp.eq.s32.totalorder %s28, 0
    %p385 = por %p383, %p384
    %p386 = scmp.le.s32.totalorder 1, %s22
    %p387 = scmp.lt.s32.totalorder %s22, 3
    %p388 = pnand %p386, %p387
    %p389 = pneg %p388
    // Predicated region
    $region9: #{perceiver_forward.7} parent=5 // pred_check
      _
    $region10: #{perceiver_forward.7} parent=5 // pred_check_branch
      %391 = sbr.rel (%p388) target = $region12
    $region11: #{perceiver_forward.7} parent=5 // pred_region
      %s392 = ssub.s32 %s22, 1
      // Predicated region
      $region13: #{perceiver_forward.7} parent=11 // pred_check
        %p393 = pneg %p95
      $region14: #{perceiver_forward.7} parent=11 // pred_check_branch
        %395 = sbr.rel (%p393) target = $region16
      $region15: #{perceiver_forward.7} parent=11 // pred_region
        _
      $region16: #{perceiver_forward.7} parent=11 // pred_fallthru
        _
      // Predicated region
      $region17: #{perceiver_forward.7} parent=11 // pred_check
        %p396 = pneg %p116
      $region18: #{perceiver_forward.7} parent=11 // pred_check_branch
        %398 = sbr.rel (%p396) target = $region20
      $region19: #{perceiver_forward.7} parent=11 // pred_region
        _
      $region20: #{perceiver_forward.7} parent=11 // pred_fallthru
        _
      // Predicated region
      $region21: #{perceiver_forward.7} parent=11 // pred_check
        %p399 = pneg %p137
      $region22: #{perceiver_forward.7} parent=11 // pred_check_branch
        %401 = sbr.rel (%p399) target = $region24
      $region23: #{perceiver_forward.7} parent=11 // pred_region
        _
      $region24: #{perceiver_forward.7} parent=11 // pred_fallthru
        _
      // Predicated region
      $region25: #{perceiver_forward.7} parent=11 // pred_check
        %p402 = pneg %p158
      $region26: #{perceiver_forward.7} parent=11 // pred_check_branch
        %404 = sbr.rel (%p402) target = $region28
      $region27: #{perceiver_forward.7} parent=11 // pred_region
        _
      $region28: #{perceiver_forward.7} parent=11 // pred_fallthru
        _
      // Predicated region
      $region29: #{perceiver_forward.7} parent=11 // pred_check
        %p405 = pneg %p179
      $region30: #{perceiver_forward.7} parent=11 // pred_check_branch
        %407 = sbr.rel (%p405) target = $region32
      $region31: #{perceiver_forward.7} parent=11 // pred_region
        _
      $region32: #{perceiver_forward.7} parent=11 // pred_fallthru
        _
      // Predicated region
      $region33: #{perceiver_forward.7} parent=11 // pred_check
        %p408 = pneg %p200
      $region34: #{perceiver_forward.7} parent=11 // pred_check_branch
        %410 = sbr.rel (%p408) target = $region36
      $region35: #{perceiver_forward.7} parent=11 // pred_region
        _
      $region36: #{perceiver_forward.7} parent=11 // pred_fallthru
        _
      // Predicated region
      $region37: #{perceiver_forward.7} parent=11 // pred_check
        %p411 = pneg %p221
      $region38: #{perceiver_forward.7} parent=11 // pred_check_branch
        %413 = sbr.rel (%p411) target = $region40
      $region39: #{perceiver_forward.7} parent=11 // pred_region
        _
      $region40: #{perceiver_forward.7} parent=11 // pred_fallthru
        _
      // Predicated region
      $region41: #{perceiver_forward.7} parent=11 // pred_check
        %p414 = pneg %p242
      $region42: #{perceiver_forward.7} parent=11 // pred_check_branch
        %416 = sbr.rel (%p414) target = $region44
      $region43: #{perceiver_forward.7} parent=11 // pred_region
        _
      $region44: #{perceiver_forward.7} parent=11 // pred_fallthru
        _
      // Predicated region
      $region45: #{perceiver_forward.7} parent=11 // pred_check
        %p417 = pneg %p263
      $region46: #{perceiver_forward.7} parent=11 // pred_check_branch
        %419 = sbr.rel (%p417) target = $region48
      $region47: #{perceiver_forward.7} parent=11 // pred_region
        _
      $region48: #{perceiver_forward.7} parent=11 // pred_fallthru
        _
      // Predicated region
      $region49: #{perceiver_forward.7} parent=11 // pred_check
        %p420 = pneg %p284
      $region50: #{perceiver_forward.7} parent=11 // pred_check_branch
        %422 = sbr.rel (%p420) target = $region52
      $region51: #{perceiver_forward.7} parent=11 // pred_region
        _
      $region52: #{perceiver_forward.7} parent=11 // pred_fallthru
        _
      // Predicated region
      $region53: #{perceiver_forward.7} parent=11 // pred_check
        %p423 = pneg %p305
      $region54: #{perceiver_forward.7} parent=11 // pred_check_branch
        %425 = sbr.rel (%p423) target = $region56
      $region55: #{perceiver_forward.7} parent=11 // pred_region
        _
      $region56: #{perceiver_forward.7} parent=11 // pred_fallthru
        _
      // Predicated region
      $region57: #{perceiver_forward.7} parent=11 // pred_check
        %p426 = pneg %p326
      $region58: #{perceiver_forward.7} parent=11 // pred_check_branch
        %428 = sbr.rel (%p426) target = $region60
      $region59: #{perceiver_forward.7} parent=11 // pred_region
        _
      $region60: #{perceiver_forward.7} parent=11 // pred_fallthru
        _
    $region12: #{perceiver_forward.7} parent=5 // pred_fallthru
      _
    %p429 = scmp.lt.s32.totalorder %s22, 2
    // Predicated region
    $region61: #{perceiver_forward.7} parent=5 // pred_check
      %p430 = pneg %p429
    $region62: #{perceiver_forward.7} parent=5 // pred_check_branch
      %432 = sbr.rel (%p430) target = $region64
    $region63: #{perceiver_forward.7} parent=5 // pred_region
      // Predicated region
      $region65: #{perceiver_forward.7} parent=63 // pred_check
        %p433 = pneg %p42
      $region66: #{perceiver_forward.7} parent=63 // pred_check_branch
        %435 = sbr.rel (%p433) target = $region68
      $region67: #{perceiver_forward.7} parent=63 // pred_region
        %p436 = scmp.lt.s32.totalorder %s22, 1
        %s437 = scalar_select %p436, %s22, 1
        %s438 = smul.addr %s437, 8
        %s439 = scalar_lea.vmem %s0, %s438
      $region68: #{perceiver_forward.7} parent=63 // pred_fallthru
        _
      // Predicated region
      $region69: #{perceiver_forward.7} parent=63 // pred_check
        %p440 = pneg %p68
      $region70: #{perceiver_forward.7} parent=63 // pred_check_branch
        %442 = sbr.rel (%p440) target = $region72
      $region71: #{perceiver_forward.7} parent=63 // pred_region
        %p443 = scmp.lt.s32.totalorder %s22, 1
        %s444 = scalar_select %p443, %s22, 1
        %s445 = smul.addr %s444, 8
        %s446 = scalar_lea.vmem %s1, %s445
      $region72: #{perceiver_forward.7} parent=63 // pred_fallthru
        _
    $region64: #{perceiver_forward.7} parent=5 // pred_fallthru
      _
    %p447 = scmp.le.s32.totalorder 1, %s22
    %p448 = scmp.lt.s32.totalorder %s22, 3
    %p449 = pnand %p447, %p448
    %p450 = pneg %p449
    // Predicated region
    $region73: #{perceiver_forward.7} parent=5 // pred_check
      _
    $region74: #{perceiver_forward.7} parent=5 // pred_check_branch
      %452 = sbr.rel (%p449) target = $region76
    $region75: #{perceiver_forward.7} parent=5 // pred_region
      %s453 = ssub.s32 %s22, 1
      %p454 = scmp.lt.s32.totalorder %s27, 1
      %s455 = scalar_select %p454, %s27, 1
      %s456 = smul.addr %s455, 8
      %s457 = scalar_lea.vmem %s0, %s456
      %p458 = pneg %p48
      %p459 = pneg %p45
      %p460 = scmp.lt.s32.totalorder %s27, 1
      %s461 = scalar_select %p460, %s27, 1
      %s462 = smul.addr %s461, 8
      %s463 = scalar_lea.vmem %s1, %s462
      %p464 = pneg %p74
      %p465 = pneg %p71
      %p466 = pneg %p95
      %p467 = pneg %p92
      %p468 = pneg %p116
      %p469 = pneg %p113
      %p470 = pneg %p137
      %p471 = pneg %p134
      %p472 = pneg %p158
      %p473 = pneg %p155
      %p474 = pneg %p179
      %p475 = pneg %p176
      %p476 = pneg %p200
      %p477 = pneg %p197
      %p478 = pneg %p221
      %p479 = pneg %p218
      %p480 = pneg %p242
      %p481 = pneg %p239
      %p482 = pneg %p263
      %p483 = pneg %p260
      %p484 = pneg %p284
      %p485 = pneg %p281
      %p486 = pneg %p305
      %p487 = pneg %p302
      %p488 = pneg %p326
      %p489 = pneg %p323
      %p490 = pneg %p352
      %p491 = pneg %p349
      %p492 = scmp.lt.s32.totalorder %s27, 1
      %s493 = scalar_select %p492, %s27, 1
      %s494 = smul.addr %s493, 8
      %s495 = scalar_lea.vmem %s14, %s494
      %p496 = pneg %p378
      %p497 = pneg %p375
      %p498 = scmp.lt.s32.totalorder %s27, 1
      %s499 = scalar_select %p498, %s27, 1
      %s500 = scalar_lea.vmem %s15, %s499
      %p501 = scmp.lt.s32.totalorder %s27, 1
      %s502 = scalar_select %p501, %s27, 1
      %s503 = smul.addr %s502, 8
      %s504 = scalar_lea.vmem %s0, %s503
      %p505 = scmp.lt.s32.totalorder %s27, 1
      %s506 = scalar_select %p505, %s27, 1
      %s507 = smul.addr %s506, 8
      %s508 = scalar_lea.vmem %s1, %s507
      %p509 = scmp.lt.s32.totalorder %s27, 1
      %s510 = scalar_select %p509, %s27, 1
      %s511 = smul.addr %s510, 8
      %s512 = scalar_lea.vmem %s14, %s511
      %p513 = scmp.lt.s32.totalorder %s27, 1
      %s514 = scalar_select %p513, %s27, 1
      %s515 = scalar_lea.vmem %s15, %s514
      %v516 = vld [vmem:[%s504] sm:$0xff]
      %v517 = vld [vmem:[%s2] sm:$0x1]
      %v518 = vld [vmem:[%s3] sm:$0x1]
      %vm519 = vcmask 261120
      %v520 = vsel %vm519, %v516, 0.0
      %521 = vadd.xlane.f32.xlu0 %v520
      %v522 = vpop.xlane.xlu0 %521
      %v523 = vrcp.pop 32.0
      %v524 = vmul.f32 %v522, %v523
      %v525 = vsub.f32 %v516, %v524
      %v526 = vmul.f32 %v525, %v525
      %v527 = vsel %vm519, %v526, 0.0
      %528 = vadd.xlane.f32.xlu0 %v527
      %v529 = vpop.xlane.xlu0 %528
      %v530 = vmul.f32 %v529, %v523
      %v531 = vadd.f32 %v530, 1e-05
      %v532 = vrsqrt.pop %v531
      %v533 = vmul.f32 %v525, %v532
      %v535 = vlaneseq
      %v536 = vshrl.u32 %v535, 7
      %v537 = vsub.s32 0, %v536
      %v538 = vrot.slane %v517, %v537
      %v540 = vmul.f32 %v533, %v538
      %v542 = vlaneseq
      %v543 = vshrl.u32 %v542, 7
      %v544 = vsub.s32 0, %v543
      %v545 = vrot.slane %v518, %v544
      %v547 = vadd.f32 %v540, %v545
      %v548 = vld [vmem:[%s4] sm:$0xff]
      %v549 = vld [vmem:[%s4 + $0x8] sm:$0xff]
      %v550 = vld [vmem:[%s4 + $0x10] sm:$0xff]
      %v551 = vld [vmem:[%s4 + $0x18] sm:$0xff]
      %v552 = vld [vmem:[%s5] sm:$0x1]
      %v554 = vlaneseq
      %v555 = vshrl.u32 %v554, 7
      %v556 = vsub.s32 0, %v555
      %v557 = vrot.slane %v552, %v556
      %v560 = vsel %vm519, %v547, 0
      %562 = vmatprep.subr.mxu0 0.0
      %563 = vmatpush1.msra.mxu0 0.0
      %564 = vmatprep.subr.mxu0 0.0
      %565 = vmatpush1.msra.mxu0 0.0
      %566 = vmatprep.subr.mxu0 0.0
      %567 = vmatpush1.msra.mxu0 0.0
      %568 = vmatprep.subr.mxu0 0.0
      %569 = vmatpush1.msra.mxu0 0.0
      %570 = vmatprep.subr.mxu0 0.0
      %571 = vmatpush1.msra.mxu0 0.0
      %572 = vmatprep.subr.mxu0 0.0
      %573 = vmatpush1.msra.mxu0 0.0
      %574 = vmatprep.subr.mxu0 0.0
      %575 = vmatpush1.msra.mxu0 0.0
      %576 = vmatprep.subr.mxu0 0.0
      %577 = vmatpush1.msra.mxu0 0.0
      %578 = vmatprep.subr.mxu0 0.0
      %579 = vmatpush1.msra.mxu0 0.0
      %580 = vmatprep.subr.mxu0 0.0
      %581 = vmatpush1.msra.mxu0 0.0
      %582 = vmatprep.subr.mxu0 0.0
      %583 = vmatpush1.msra.mxu0 0.0
      %584 = vmatprep.subr.mxu0 0.0
      %585 = vmatpush1.msra.mxu0 0.0
      %586 = vmatprep.subr.mxu0 0.0
      %587 = vmatpush1.msra.mxu0 %v551
      %588 = vmatprep.subr.mxu0 0.0
      %589 = vmatpush1.msra.mxu0 %v550
      %590 = vmatprep.subr.mxu0 0.0
      %591 = vmatpush1.msra.mxu0 %v549
      %592 = vmatprep.subr.mxu0 0.0
      %593 = vmatpush1.msra.mxu0 %v548
      %594 = vmatprep.subr.mxu0 0.0
      %595 = vmatpush2.msra.mxu0 0.0
      %596 = vmatprep.subr.mxu0 0.0
      %597 = vmatpush2.msra.mxu0 0.0
      %598 = vmatprep.subr.mxu0 0.0
      %599 = vmatpush2.msra.mxu0 0.0
      %600 = vmatprep.subr.mxu0 0.0
      %601 = vmatpush2.msra.mxu0 0.0
      %602 = vmatprep.subr.mxu0 0.0
      %603 = vmatpush2.msra.mxu0 0.0
      %604 = vmatprep.subr.mxu0 0.0
      %605 = vmatpush2.msra.mxu0 0.0
      %606 = vmatprep.subr.mxu0 0.0
      %607 = vmatpush2.msra.mxu0 0.0
      %608 = vmatprep.subr.mxu0 0.0
      %609 = vmatpush2.msra.mxu0 0.0
      %610 = vmatprep.subr.mxu0 0.0
      %611 = vmatpush2.msra.mxu0 0.0
      %612 = vmatprep.subr.mxu0 0.0
      %613 = vmatpush2.msra.mxu0 0.0
      %614 = vmatprep.subr.mxu0 0.0
      %615 = vmatpush2.msra.mxu0 0.0
      %616 = vmatprep.subr.mxu0 0.0
      %617 = vmatpush2.msra.mxu0 0.0
      %618 = vmatprep.subr.mxu0 0.0
      %619 = vmatpush2.msra.mxu0 0.0
      %620 = vmatprep.subr.mxu0 0.0
      %621 = vmatpush2.msra.mxu0 0.0
      %622 = vmatprep.subr.mxu0 0.0
      %623 = vmatpush2.msra.mxu0 0.0
      %624 = vmatprep.subr.mxu0 0.0
      %625 = vmatpush2.msra.mxu0 0.0
      %626 = vmatprep.mubr.f32.mxu0 0.0
      %627 = vmatmul.mubr.f32.gmra.mxu0 %v560
      %v628 = vpop.f32.mrf.mxu0
      %v629 = vadd.f32 %v557, %v628
      %v630 = vpop.f32.mrf.mxu0
      %631 = vdwg.mxu0
      %v632 = vmul.f32 %v629, 0.5
      %634 = vrot.lane.b32.xlu0 %v629, 96
      %v635 = vpop.permute.xlu0 %634
      %vm636 = vcmask 31744
      %v638 = vsel %vm636, %v632, 0
      %v640 = vsel %vm636, %v635, 0
      %642 = vmatprep.subr.mxu0 0.0
      %643 = vmatpush1.xpose.msra.mxu0 0.0
      %644 = vmatprep.subr.mxu0 0.0
      %645 = vmatpush1.xpose.msra.mxu0 0.0
      %646 = vmatprep.subr.mxu0 0.0
      %647 = vmatpush1.xpose.msra.mxu0 0.0
      %648 = vmatprep.subr.mxu0 0.0
      %649 = vmatpush1.xpose.msra.mxu0 0.0
      %650 = vmatprep.subr.mxu0 0.0
      %651 = vmatpush1.xpose.msra.mxu0 0.0
      %652 = vmatprep.subr.mxu0 0.0
      %653 = vmatpush1.xpose.msra.mxu0 0.0
      %654 = vmatprep.subr.mxu0 0.0
      %655 = vmatpush1.xpose.msra.mxu0 0.0
      %656 = vmatprep.subr.mxu0 0.0
      %657 = vmatpush1.xpose.msra.mxu0 0.0
      %658 = vmatprep.subr.mxu0 0.0
      %659 = vmatpush1.xpose.msra.mxu0 0.0
      %660 = vmatprep.subr.mxu0 0.0
      %661 = vmatpush1.xpose.msra.mxu0 0.0
      %662 = vmatprep.subr.mxu0 0.0
      %663 = vmatpush1.xpose.msra.mxu0 0.0
      %664 = vmatprep.subr.mxu0 0.0
      %665 = vmatpush1.xpose.msra.mxu0 0.0
      %666 = vmatprep.subr.mxu0 0.0
      %667 = vmatpush1.xpose.msra.mxu0 0.0
      %668 = vmatprep.subr.mxu0 0.0
      %669 = vmatpush1.xpose.msra.mxu0 0.0
      %670 = vmatprep.subr.mxu0 0.0
      %671 = vmatpush1.xpose.msra.mxu0 0.0
      %672 = vmatprep.subr.mxu0 0.0
      %673 = vmatpush1.xpose.msra.mxu0 %v640
      %674 = vmatprep.subr.mxu0 0.0
      %675 = vmatpush2.xpose.msra.mxu0 0.0
      %676 = vmatprep.subr.mxu0 0.0
      %677 = vmatpush2.xpose.msra.mxu0 0.0
      %678 = vmatprep.subr.mxu0 0.0
      %679 = vmatpush2.xpose.msra.mxu0 0.0
      %680 = vmatprep.subr.mxu0 0.0
      %681 = vmatpush2.xpose.msra.mxu0 0.0
      %682 = vmatprep.subr.mxu0 0.0
      %683 = vmatpush2.xpose.msra.mxu0 0.0
      %684 = vmatprep.subr.mxu0 0.0
      %685 = vmatpush2.xpose.msra.mxu0 0.0
      %686 = vmatprep.subr.mxu0 0.0
      %687 = vmatpush2.xpose.msra.mxu0 0.0
      %688 = vmatprep.subr.mxu0 0.0
      %689 = vmatpush2.xpose.msra.mxu0 0.0
      %690 = vmatprep.subr.mxu0 0.0
      %691 = vmatpush2.xpose.msra.mxu0 0.0
      %692 = vmatprep.subr.mxu0 0.0
      %693 = vmatpush2.xpose.msra.mxu0 0.0
      %694 = vmatprep.subr.mxu0 0.0
      %695 = vmatpush2.xpose.msra.mxu0 0.0
      %696 = vmatprep.subr.mxu0 0.0
      %697 = vmatpush2.xpose.msra.mxu0 0.0
      %698 = vmatprep.subr.mxu0 0.0
      %699 = vmatpush2.xpose.msra.mxu0 0.0
      %700 = vmatprep.subr.mxu0 0.0
      %701 = vmatpush2.xpose.msra.mxu0 0.0
      %702 = vmatprep.subr.mxu0 0.0
      %703 = vmatpush2.xpose.msra.mxu0 0.0
      %704 = vmatprep.subr.mxu0 0.0
      %705 = vmatpush2.xpose.msra.mxu0 0.0
      %706 = vmatprep.mubr.f32.mxu0 0.0
      %707 = vmatmul.mubr.f32.gmra.mxu0 %v638
      %v708 = vpop.f32.mrf.mxu0
      %v709 = vadd.f32 0.0, %v708
      %v710 = vpop.f32.mrf.mxu0
      %711 = vdwg.mxu0
      %vm712 = vcmask 64512
      %v713 = vsel %vm712, %v709, -inf
      %714 = vmax.xlane.f32.xlu0 %v713
      %v715 = vpop.xlane.xlu0 %714
      %v716 = vsub.f32 %v709, %v715
      %v717 = vmul.f32 %v716, 1.442695
      %v718 = vpow.pop %v717
      %v719 = vsel %vm712, %v718, 0.0
      %720 = vadd.xlane.f32.xlu0 %v719
      %v721 = vpop.xlane.xlu0 %720
      %v722 = vrcp.pop %v721
      %v723 = vmul.f32 %v718, %v722
      %724 = vrot.lane.b32.xlu0 %v629, 64
      %v725 = vpop.permute.xlu0 %724
      %v728 = vsel %vm712, %v723, 0
      %730 = vmatprep.subr.mxu0 0.0
      %731 = vmatpush1.msra.mxu0 0.0
      %732 = vmatprep.subr.mxu0 0.0
      %733 = vmatpush1.msra.mxu0 0.0
      %734 = vmatprep.subr.mxu0 0.0
      %735 = vmatpush1.msra.mxu0 0.0
      %736 = vmatprep.subr.mxu0 0.0
      %737 = vmatpush1.msra.mxu0 0.0
      %738 = vmatprep.subr.mxu0 0.0
      %739 = vmatpush1.msra.mxu0 0.0
      %740 = vmatprep.subr.mxu0 0.0
      %741 = vmatpush1.msra.mxu0 0.0
      %742 = vmatprep.subr.mxu0 0.0
      %743 = vmatpush1.msra.mxu0 0.0
      %744 = vmatprep.subr.mxu0 0.0
      %745 = vmatpush1.msra.mxu0 0.0
      %746 = vmatprep.subr.mxu0 0.0
      %747 = vmatpush1.msra.mxu0 0.0
      %748 = vmatprep.subr.mxu0 0.0
      %749 = vmatpush1.msra.mxu0 0.0
      %750 = vmatprep.subr.mxu0 0.0
      %751 = vmatpush1.msra.mxu0 0.0
      %752 = vmatprep.subr.mxu0 0.0
      %753 = vmatpush1.msra.mxu0 0.0
      %754 = vmatprep.subr.mxu0 0.0
      %755 = vmatpush1.msra.mxu0 0.0
      %756 = vmatprep.subr.mxu0 0.0
      %757 = vmatpush1.msra.mxu0 0.0
      %758 = vmatprep.subr.mxu0 0.0
      %759 = vmatpush1.msra.mxu0 0.0
      %760 = vmatprep.subr.mxu0 0.0
      %761 = vmatpush1.msra.mxu0 %v725
      %762 = vmatprep.subr.mxu0 0.0
      %763 = vmatpush2.msra.mxu0 0.0
      %764 = vmatprep.subr.mxu0 0.0
      %765 = vmatpush2.msra.mxu0 0.0
      %766 = vmatprep.subr.mxu0 0.0
      %767 = vmatpush2.msra.mxu0 0.0
      %768 = vmatprep.subr.mxu0 0.0
      %769 = vmatpush2.msra.mxu0 0.0
      %770 = vmatprep.subr.mxu0 0.0
      %771 = vmatpush2.msra.mxu0 0.0
      %772 = vmatprep.subr.mxu0 0.0
      %773 = vmatpush2.msra.mxu0 0.0
      %774 = vmatprep.subr.mxu0 0.0
      %775 = vmatpush2.msra.mxu0 0.0
      %776 = vmatprep.subr.mxu0 0.0
      %777 = vmatpush2.msra.mxu0 0.0
      %778 = vmatprep.subr.mxu0 0.0
      %779 = vmatpush2.msra.mxu0 0.0
      %780 = vmatprep.subr.mxu0 0.0
      %781 = vmatpush2.msra.mxu0 0.0
      %782 = vmatprep.subr.mxu0 0.0
      %783 = vmatpush2.msra.mxu0 0.0
      %784 = vmatprep.subr.mxu0 0.0
      %785 = vmatpush2.msra.mxu0 0.0
      %786 = vmatprep.subr.mxu0 0.0
      %787 = vmatpush2.msra.mxu0 0.0
      %788 = vmatprep.subr.mxu0 0.0
      %789 = vmatpush2.msra.mxu0 0.0
      %790 = vmatprep.subr.mxu0 0.0
      %791 = vmatpush2.msra.mxu0 0.0
      %792 = vmatprep.subr.mxu0 0.0
      %793 = vmatpush2.msra.mxu0 0.0
      %794 = vmatprep.mubr.f32.mxu0 0.0
      %795 = vmatmul.mubr.f32.gmra.mxu0 %v728
      %v796 = vpop.f32.mrf.mxu0
      %v797 = vadd.f32 0.0, %v796
      %v798 = vpop.f32.mrf.mxu0
      %799 = vdwg.mxu0
      %800 = vrot.lane.b32.xlu0 %v632, 124
      %v801 = vpop.permute.xlu0 %800
      %802 = vrot.lane.b32.xlu0 %v629, 92
      %v803 = vpop.permute.xlu0 %802
      %v804 = vsel %vm636, %v801, 0
      %v806 = vsel %vm636, %v803, 0
      %808 = vmatprep.subr.mxu0 0.0
      %809 = vmatpush1.xpose.msra.mxu0 0.0
      %810 = vmatprep.subr.mxu0 0.0
      %811 = vmatpush1.xpose.msra.mxu0 0.0
      %812 = vmatprep.subr.mxu0 0.0
      %813 = vmatpush1.xpose.msra.mxu0 0.0
      %814 = vmatprep.subr.mxu0 0.0
      %815 = vmatpush1.xpose.msra.mxu0 0.0
      %816 = vmatprep.subr.mxu0 0.0
      %817 = vmatpush1.xpose.msra.mxu0 0.0
      %818 = vmatprep.subr.mxu0 0.0
      %819 = vmatpush1.xpose.msra.mxu0 0.0
      %820 = vmatprep.subr.mxu0 0.0
      %821 = vmatpush1.xpose.msra.mxu0 0.0
      %822 = vmatprep.subr.mxu0 0.0
      %823 = vmatpush1.xpose.msra.mxu0 0.0
      %824 = vmatprep.subr.mxu0 0.0
      %825 = vmatpush1.xpose.msra.mxu0 0.0
      %826 = vmatprep.subr.mxu0 0.0
      %827 = vmatpush1.xpose.msra.mxu0 0.0
      %828 = vmatprep.subr.mxu0 0.0
      %829 = vmatpush1.xpose.msra.mxu0 0.0
      %830 = vmatprep.subr.mxu0 0.0
      %831 = vmatpush1.xpose.msra.mxu0 0.0
      %832 = vmatprep.subr.mxu0 0.0
      %833 = vmatpush1.xpose.msra.mxu0 0.0
      %834 = vmatprep.subr.mxu0 0.0
      %835 = vmatpush1.xpose.msra.mxu0 0.0
      %836 = vmatprep.subr.mxu0 0.0
      %837 = vmatpush1.xpose.msra.mxu0 0.0
      %838 = vmatprep.subr.mxu0 0.0
      %839 = vmatpush1.xpose.msra.mxu0 %v806
      %840 = vmatprep.subr.mxu0 0.0
      %841 = vmatpush2.xpose.msra.mxu0 0.0
      %842 = vmatprep.subr.mxu0 0.0
      %843 = vmatpush2.xpose.msra.mxu0 0.0
      %844 = vmatprep.subr.mxu0 0.0
      %845 = vmatpush2.xpose.msra.mxu0 0.0
      %846 = vmatprep.subr.mxu0 0.0
      %847 = vmatpush2.xpose.msra.mxu0 0.0
      %848 = vmatprep.subr.mxu0 0.0
      %849 = vmatpush2.xpose.msra.mxu0 0.0
      %850 = vmatprep.subr.mxu0 0.0
      %851 = vmatpush2.xpose.msra.mxu0 0.0
      %852 = vmatprep.subr.mxu0 0.0
      %853 = vmatpush2.xpose.msra.mxu0 0.0
      %854 = vmatprep.subr.mxu0 0.0
      %855 = vmatpush2.xpose.msra.mxu0 0.0
      %856 = vmatprep.subr.mxu0 0.0
      %857 = vmatpush2.xpose.msra.mxu0 0.0
      %858 = vmatprep.subr.mxu0 0.0
      %859 = vmatpush2.xpose.msra.mxu0 0.0
      %860 = vmatprep.subr.mxu0 0.0
      %861 = vmatpush2.xpose.msra.mxu0 0.0
      %862 = vmatprep.subr.mxu0 0.0
      %863 = vmatpush2.xpose.msra.mxu0 0.0
      %864 = vmatprep.subr.mxu0 0.0
      %865 = vmatpush2.xpose.msra.mxu0 0.0
      %866 = vmatprep.subr.mxu0 0.0
      %867 = vmatpush2.xpose.msra.mxu0 0.0
      %868 = vmatprep.subr.mxu0 0.0
      %869 = vmatpush2.xpose.msra.mxu0 0.0
      %870 = vmatprep.subr.mxu0 0.0
      %871 = vmatpush2.xpose.msra.mxu0 0.0
      %872 = vmatprep.mubr.f32.mxu0 0.0
      %873 = vmatmul.mubr.f32.gmra.mxu0 %v804
      %v874 = vpop.f32.mrf.mxu0
      %v875 = vadd.f32 0.0, %v874
      %v876 = vpop.f32.mrf.mxu0
      %877 = vdwg.mxu0
      %v878 = vsel %vm712, %v875, -inf
      %879 = vmax.xlane.f32.xlu0 %v878
      %v880 = vpop.xlane.xlu0 %879
      %v881 = vsub.f32 %v875, %v880
      %v882 = vmul.f32 %v881, 1.442695
      %v883 = vpow.pop %v882
      %v884 = vsel %vm712, %v883, 0.0
      %885 = vadd.xlane.f32.xlu0 %v884
      %v886 = vpop.xlane.xlu0 %885
      %v887 = vrcp.pop %v886
      %v888 = vmul.f32 %v883, %v887
      %v889 = vadd.f32 %v723, %v888
      %890 = vrot.lane.b32.xlu0 %v629, 60
      %v891 = vpop.permute.xlu0 %890
      %v894 = vsel %vm712, %v888, 0
      %896 = vmatprep.subr.mxu0 0.0
      %897 = vmatpush1.msra.mxu0 0.0
      %898 = vmatprep.subr.mxu0 0.0
      %899 = vmatpush1.msra.mxu0 0.0
      %900 = vmatprep.subr.mxu0 0.0
      %901 = vmatpush1.msra.mxu0 0.0
      %902 = vmatprep.subr.mxu0 0.0
      %903 = vmatpush1.msra.mxu0 0.0
      %904 = vmatprep.subr.mxu0 0.0
      %905 = vmatpush1.msra.mxu0 0.0
      %906 = vmatprep.subr.mxu0 0.0
      %907 = vmatpush1.msra.mxu0 0.0
      %908 = vmatprep.subr.mxu0 0.0
      %909 = vmatpush1.msra.mxu0 0.0
      %910 = vmatprep.subr.mxu0 0.0
      %911 = vmatpush1.msra.mxu0 0.0
      %912 = vmatprep.subr.mxu0 0.0
      %913 = vmatpush1.msra.mxu0 0.0
      %914 = vmatprep.subr.mxu0 0.0
      %915 = vmatpush1.msra.mxu0 0.0
      %916 = vmatprep.subr.mxu0 0.0
      %917 = vmatpush1.msra.mxu0 0.0
      %918 = vmatprep.subr.mxu0 0.0
      %919 = vmatpush1.msra.mxu0 0.0
      %920 = vmatprep.subr.mxu0 0.0
      %921 = vmatpush1.msra.mxu0 0.0
      %922 = vmatprep.subr.mxu0 0.0
      %923 = vmatpush1.msra.mxu0 0.0
      %924 = vmatprep.subr.mxu0 0.0
      %925 = vmatpush1.msra.mxu0 0.0
      %926 = vmatprep.subr.mxu0 0.0
      %927 = vmatpush1.msra.mxu0 %v891
      %928 = vmatprep.subr.mxu0 0.0
      %929 = vmatpush2.msra.mxu0 0.0
      %930 = vmatprep.subr.mxu0 0.0
      %931 = vmatpush2.msra.mxu0 0.0
      %932 = vmatprep.subr.mxu0 0.0
      %933 = vmatpush2.msra.mxu0 0.0
      %934 = vmatprep.subr.mxu0 0.0
      %935 = vmatpush2.msra.mxu0 0.0
      %936 = vmatprep.subr.mxu0 0.0
      %937 = vmatpush2.msra.mxu0 0.0
      %938 = vmatprep.subr.mxu0 0.0
      %939 = vmatpush2.msra.mxu0 0.0
      %940 = vmatprep.subr.mxu0 0.0
      %941 = vmatpush2.msra.mxu0 0.0
      %942 = vmatprep.subr.mxu0 0.0
      %943 = vmatpush2.msra.mxu0 0.0
      %944 = vmatprep.subr.mxu0 0.0
      %945 = vmatpush2.msra.mxu0 0.0
      %946 = vmatprep.subr.mxu0 0.0
      %947 = vmatpush2.msra.mxu0 0.0
      %948 = vmatprep.subr.mxu0 0.0
      %949 = vmatpush2.msra.mxu0 0.0
      %950 = vmatprep.subr.mxu0 0.0
      %951 = vmatpush2.msra.mxu0 0.0
      %952 = vmatprep.subr.mxu0 0.0
      %953 = vmatpush2.msra.mxu0 0.0
      %954 = vmatprep.subr.mxu0 0.0
      %955 = vmatpush2.msra.mxu0 0.0
      %956 = vmatprep.subr.mxu0 0.0
      %957 = vmatpush2.msra.mxu0 0.0
      %958 = vmatprep.subr.mxu0 0.0
      %959 = vmatpush2.msra.mxu0 0.0
      %960 = vmatprep.mubr.f32.mxu0 0.0
      %961 = vmatmul.mubr.f32.gmra.mxu0 %v894
      %v962 = vpop.f32.mrf.mxu0
      %v963 = vadd.f32 0.0, %v962
      %v964 = vpop.f32.mrf.mxu0
      %965 = vdwg.mxu0
      %966 = vrot.lane.b32.xlu0 %v632, 120
      %v967 = vpop.permute.xlu0 %966
      %968 = vrot.lane.b32.xlu0 %v629, 88
      %v969 = vpop.permute.xlu0 %968
      %v970 = vsel %vm636, %v967, 0
      %v972 = vsel %vm636, %v969, 0
      %974 = vmatprep.subr.mxu0 0.0
      %975 = vmatpush1.xpose.msra.mxu0 0.0
      %976 = vmatprep.subr.mxu0 0.0
      %977 = vmatpush1.xpose.msra.mxu0 0.0
      %978 = vmatprep.subr.mxu0 0.0
      %979 = vmatpush1.xpose.msra.mxu0 0.0
      %980 = vmatprep.subr.mxu0 0.0
      %981 = vmatpush1.xpose.msra.mxu0 0.0
      %982 = vmatprep.subr.mxu0 0.0
      %983 = vmatpush1.xpose.msra.mxu0 0.0
      %984 = vmatprep.subr.mxu0 0.0
      %985 = vmatpush1.xpose.msra.mxu0 0.0
      %986 = vmatprep.subr.mxu0 0.0
      %987 = vmatpush1.xpose.msra.mxu0 0.0
      %988 = vmatprep.subr.mxu0 0.0
      %989 = vmatpush1.xpose.msra.mxu0 0.0
      %990 = vmatprep.subr.mxu0 0.0
      %991 = vmatpush1.xpose.msra.mxu0 0.0
      %992 = vmatprep.subr.mxu0 0.0
      %993 = vmatpush1.xpose.msra.mxu0 0.0
      %994 = vmatprep.subr.mxu0 0.0
      %995 = vmatpush1.xpose.msra.mxu0 0.0
      %996 = vmatprep.subr.mxu0 0.0
      %997 = vmatpush1.xpose.msra.mxu0 0.0
      %998 = vmatprep.subr.mxu0 0.0
      %999 = vmatpush1.xpose.msra.mxu0 0.0
      %1000 = vmatprep.subr.mxu0 0.0
      %1001 = vmatpush1.xpose.msra.mxu0 0.0
      %1002 = vmatprep.subr.mxu0 0.0
      %1003 = vmatpush1.xpose.msra.mxu0 0.0
      %1004 = vmatprep.subr.mxu0 0.0
      %1005 = vmatpush1.xpose.msra.mxu0 %v972
      %1006 = vmatprep.subr.mxu0 0.0
      %1007 = vmatpush2.xpose.msra.mxu0 0.0
      %1008 = vmatprep.subr.mxu0 0.0
      %1009 = vmatpush2.xpose.msra.mxu0 0.0
      %1010 = vmatprep.subr.mxu0 0.0
      %1011 = vmatpush2.xpose.msra.mxu0 0.0
      %1012 = vmatprep.subr.mxu0 0.0
      %1013 = vmatpush2.xpose.msra.mxu0 0.0
      %1014 = vmatprep.subr.mxu0 0.0
      %1015 = vmatpush2.xpose.msra.mxu0 0.0
      %1016 = vmatprep.subr.mxu0 0.0
      %1017 = vmatpush2.xpose.msra.mxu0 0.0
      %1018 = vmatprep.subr.mxu0 0.0
      %1019 = vmatpush2.xpose.msra.mxu0 0.0
      %1020 = vmatprep.subr.mxu0 0.0
      %1021 = vmatpush2.xpose.msra.mxu0 0.0
      %1022 = vmatprep.subr.mxu0 0.0
      %1023 = vmatpush2.xpose.msra.mxu0 0.0
      %1024 = vmatprep.subr.mxu0 0.0
      %1025 = vmatpush2.xpose.msra.mxu0 0.0
      %1026 = vmatprep.subr.mxu0 0.0
      %1027 = vmatpush2.xpose.msra.mxu0 0.0
      %1028 = vmatprep.subr.mxu0 0.0
      %1029 = vmatpush2.xpose.msra.mxu0 0.0
      %1030 = vmatprep.subr.mxu0 0.0
      %1031 = vmatpush2.xpose.msra.mxu0 0.0
      %1032 = vmatprep.subr.mxu0 0.0
      %1033 = vmatpush2.xpose.msra.mxu0 0.0
      %1034 = vmatprep.subr.mxu0 0.0
      %1035 = vmatpush2.xpose.msra.mxu0 0.0
      %1036 = vmatprep.subr.mxu0 0.0
      %1037 = vmatpush2.xpose.msra.mxu0 0.0
      %1038 = vmatprep.mubr.f32.mxu0 0.0
      %1039 = vmatmul.mubr.f32.gmra.mxu0 %v970
      %v1040 = vpop.f32.mrf.mxu0
      %v1041 = vadd.f32 0.0, %v1040
      %v1042 = vpop.f32.mrf.mxu0
      %1043 = vdwg.mxu0
      %v1044 = vsel %vm712, %v1041, -inf
      %1045 = vmax.xlane.f32.xlu0 %v1044
      %v1046 = vpop.xlane.xlu0 %1045
      %v1047 = vsub.f32 %v1041, %v1046
      %v1048 = vmul.f32 %v1047, 1.442695
      %v1049 = vpow.pop %v1048
      %v1050 = vsel %vm712, %v1049, 0.0
      %1051 = vadd.xlane.f32.xlu0 %v1050
      %v1052 = vpop.xlane.xlu0 %1051
      %v1053 = vrcp.pop %v1052
      %v1054 = vmul.f32 %v1049, %v1053
      %v1055 = vadd.f32 %v889, %v1054
      %1056 = vrot.lane.b32.xlu0 %v629, 56
      %v1057 = vpop.permute.xlu0 %1056
      %v1060 = vsel %vm712, %v1054, 0
      %1062 = vmatprep.subr.mxu0 0.0
      %1063 = vmatpush1.msra.mxu0 0.0
      %1064 = vmatprep.subr.mxu0 0.0
      %1065 = vmatpush1.msra.mxu0 0.0
      %1066 = vmatprep.subr.mxu0 0.0
      %1067 = vmatpush1.msra.mxu0 0.0
      %1068 = vmatprep.subr.mxu0 0.0
      %1069 = vmatpush1.msra.mxu0 0.0
      %1070 = vmatprep.subr.mxu0 0.0
      %1071 = vmatpush1.msra.mxu0 0.0
      %1072 = vmatprep.subr.mxu0 0.0
      %1073 = vmatpush1.msra.mxu0 0.0
      %1074 = vmatprep.subr.mxu0 0.0
      %1075 = vmatpush1.msra.mxu0 0.0
      %1076 = vmatprep.subr.mxu0 0.0
      %1077 = vmatpush1.msra.mxu0 0.0
      %1078 = vmatprep.subr.mxu0 0.0
      %1079 = vmatpush1.msra.mxu0 0.0
      %1080 = vmatprep.subr.mxu0 0.0
      %1081 = vmatpush1.msra.mxu0 0.0
      %1082 = vmatprep.subr.mxu0 0.0
      %1083 = vmatpush1.msra.mxu0 0.0
      %1084 = vmatprep.subr.mxu0 0.0
      %1085 = vmatpush1.msra.mxu0 0.0
      %1086 = vmatprep.subr.mxu0 0.0
      %1087 = vmatpush1.msra.mxu0 0.0
      %1088 = vmatprep.subr.mxu0 0.0
      %1089 = vmatpush1.msra.mxu0 0.0
      %1090 = vmatprep.subr.mxu0 0.0
      %1091 = vmatpush1.msra.mxu0 0.0
      %1092 = vmatprep.subr.mxu0 0.0
      %1093 = vmatpush1.msra.mxu0 %v1057
      %1094 = vmatprep.subr.mxu0 0.0
      %1095 = vmatpush2.msra.mxu0 0.0
      %1096 = vmatprep.subr.mxu0 0.0
      %1097 = vmatpush2.msra.mxu0 0.0
      %1098 = vmatprep.subr.mxu0 0.0
      %1099 = vmatpush2.msra.mxu0 0.0
      %1100 = vmatprep.subr.mxu0 0.0
      %1101 = vmatpush2.msra.mxu0 0.0
      %1102 = vmatprep.subr.mxu0 0.0
      %1103 = vmatpush2.msra.mxu0 0.0
      %1104 = vmatprep.subr.mxu0 0.0
      %1105 = vmatpush2.msra.mxu0 0.0
      %1106 = vmatprep.subr.mxu0 0.0
      %1107 = vmatpush2.msra.mxu0 0.0
      %1108 = vmatprep.subr.mxu0 0.0
      %1109 = vmatpush2.msra.mxu0 0.0
      %1110 = vmatprep.subr.mxu0 0.0
      %1111 = vmatpush2.msra.mxu0 0.0
      %1112 = vmatprep.subr.mxu0 0.0
      %1113 = vmatpush2.msra.mxu0 0.0
      %1114 = vmatprep.subr.mxu0 0.0
      %1115 = vmatpush2.msra.mxu0 0.0
      %1116 = vmatprep.subr.mxu0 0.0
      %1117 = vmatpush2.msra.mxu0 0.0
      %1118 = vmatprep.subr.mxu0 0.0
      %1119 = vmatpush2.msra.mxu0 0.0
      %1120 = vmatprep.subr.mxu0 0.0
      %1121 = vmatpush2.msra.mxu0 0.0
      %1122 = vmatprep.subr.mxu0 0.0
      %1123 = vmatpush2.msra.mxu0 0.0
      %1124 = vmatprep.subr.mxu0 0.0
      %1125 = vmatpush2.msra.mxu0 0.0
      %1126 = vmatprep.mubr.f32.mxu0 0.0
      %1127 = vmatmul.mubr.f32.gmra.mxu0 %v1060
      %v1128 = vpop.f32.mrf.mxu0
      %v1129 = vadd.f32 0.0, %v1128
      %v1130 = vpop.f32.mrf.mxu0
      %1131 = vdwg.mxu0
      %1132 = vrot.lane.b32.xlu0 %v632, 116
      %v1133 = vpop.permute.xlu0 %1132
      %1134 = vrot.lane.b32.xlu0 %v629, 84
      %v1135 = vpop.permute.xlu0 %1134
      %v1136 = vsel %vm636, %v1133, 0
      %v1138 = vsel %vm636, %v1135, 0
      %1140 = vmatprep.subr.mxu0 0.0
      %1141 = vmatpush1.xpose.msra.mxu0 0.0
      %1142 = vmatprep.subr.mxu0 0.0
      %1143 = vmatpush1.xpose.msra.mxu0 0.0
      %1144 = vmatprep.subr.mxu0 0.0
      %1145 = vmatpush1.xpose.msra.mxu0 0.0
      %1146 = vmatprep.subr.mxu0 0.0
      %1147 = vmatpush1.xpose.msra.mxu0 0.0
      %1148 = vmatprep.subr.mxu0 0.0
      %1149 = vmatpush1.xpose.msra.mxu0 0.0
      %1150 = vmatprep.subr.mxu0 0.0
      %1151 = vmatpush1.xpose.msra.mxu0 0.0
      %1152 = vmatprep.subr.mxu0 0.0
      %1153 = vmatpush1.xpose.msra.mxu0 0.0
      %1154 = vmatprep.subr.mxu0 0.0
      %1155 = vmatpush1.xpose.msra.mxu0 0.0
      %1156 = vmatprep.subr.mxu0 0.0
      %1157 = vmatpush1.xpose.msra.mxu0 0.0
      %1158 = vmatprep.subr.mxu0 0.0
      %1159 = vmatpush1.xpose.msra.mxu0 0.0
      %1160 = vmatprep.subr.mxu0 0.0
      %1161 = vmatpush1.xpose.msra.mxu0 0.0
      %1162 = vmatprep.subr.mxu0 0.0
      %1163 = vmatpush1.xpose.msra.mxu0 0.0
      %1164 = vmatprep.subr.mxu0 0.0
      %1165 = vmatpush1.xpose.msra.mxu0 0.0
      %1166 = vmatprep.subr.mxu0 0.0
      %1167 = vmatpush1.xpose.msra.mxu0 0.0
      %1168 = vmatprep.subr.mxu0 0.0
      %1169 = vmatpush1.xpose.msra.mxu0 0.0
      %1170 = vmatprep.subr.mxu0 0.0
      %1171 = vmatpush1.xpose.msra.mxu0 %v1138
      %1172 = vmatprep.subr.mxu0 0.0
      %1173 = vmatpush2.xpose.msra.mxu0 0.0
      %1174 = vmatprep.subr.mxu0 0.0
      %1175 = vmatpush2.xpose.msra.mxu0 0.0
      %1176 = vmatprep.subr.mxu0 0.0
      %1177 = vmatpush2.xpose.msra.mxu0 0.0
      %1178 = vmatprep.subr.mxu0 0.0
      %1179 = vmatpush2.xpose.msra.mxu0 0.0
      %1180 = vmatprep.subr.mxu0 0.0
      %1181 = vmatpush2.xpose.msra.mxu0 0.0
      %1182 = vmatprep.subr.mxu0 0.0
      %1183 = vmatpush2.xpose.msra.mxu0 0.0
      %1184 = vmatprep.subr.mxu0 0.0
      %1185 = vmatpush2.xpose.msra.mxu0 0.0
      %1186 = vmatprep.subr.mxu0 0.0
      %1187 = vmatpush2.xpose.msra.mxu0 0.0
      %1188 = vmatprep.subr.mxu0 0.0
      %1189 = vmatpush2.xpose.msra.mxu0 0.0
      %1190 = vmatprep.subr.mxu0 0.0
      %1191 = vmatpush2.xpose.msra.mxu0 0.0
      %1192 = vmatprep.subr.mxu0 0.0
      %1193 = vmatpush2.xpose.msra.mxu0 0.0
      %1194 = vmatprep.subr.mxu0 0.0
      %1195 = vmatpush2.xpose.msra.mxu0 0.0
      %1196 = vmatprep.subr.mxu0 0.0
      %1197 = vmatpush2.xpose.msra.mxu0 0.0
      %1198 = vmatprep.subr.mxu0 0.0
      %1199 = vmatpush2.xpose.msra.mxu0 0.0
      %1200 = vmatprep.subr.mxu0 0.0
      %1201 = vmatpush2.xpose.msra.mxu0 0.0
      %1202 = vmatprep.subr.mxu0 0.0
      %1203 = vmatpush2.xpose.msra.mxu0 0.0
      %1204 = vmatprep.mubr.f32.mxu0 0.0
      %1205 = vmatmul.mubr.f32.gmra.mxu0 %v1136
      %v1206 = vpop.f32.mrf.mxu0
      %v1207 = vadd.f32 0.0, %v1206
      %v1208 = vpop.f32.mrf.mxu0
      %1209 = vdwg.mxu0
      %v1210 = vsel %vm712, %v1207, -inf
      %1211 = vmax.xlane.f32.xlu0 %v1210
      %v1212 = vpop.xlane.xlu0 %1211
      %v1213 = vsub.f32 %v1207, %v1212
      %v1214 = vmul.f32 %v1213, 1.442695
      %v1215 = vpow.pop %v1214
      %v1216 = vsel %vm712, %v1215, 0.0
      %1217 = vadd.xlane.f32.xlu0 %v1216
      %v1218 = vpop.xlane.xlu0 %1217
      %v1219 = vrcp.pop %v1218
      %v1220 = vmul.f32 %v1215, %v1219
      %v1221 = vadd.f32 %v1055, %v1220
      %1222 = vrot.lane.b32.xlu0 %v629, 52
      %v1223 = vpop.permute.xlu0 %1222
      %v1226 = vsel %vm712, %v1220, 0
      %1228 = vmatprep.subr.mxu0 0.0
      %1229 = vmatpush1.msra.mxu0 0.0
      %1230 = vmatprep.subr.mxu0 0.0
      %1231 = vmatpush1.msra.mxu0 0.0
      %1232 = vmatprep.subr.mxu0 0.0
      %1233 = vmatpush1.msra.mxu0 0.0
      %1234 = vmatprep.subr.mxu0 0.0
      %1235 = vmatpush1.msra.mxu0 0.0
      %1236 = vmatprep.subr.mxu0 0.0
      %1237 = vmatpush1.msra.mxu0 0.0
      %1238 = vmatprep.subr.mxu0 0.0
      %1239 = vmatpush1.msra.mxu0 0.0
      %1240 = vmatprep.subr.mxu0 0.0
      %1241 = vmatpush1.msra.mxu0 0.0
      %1242 = vmatprep.subr.mxu0 0.0
      %1243 = vmatpush1.msra.mxu0 0.0
      %1244 = vmatprep.subr.mxu0 0.0
      %1245 = vmatpush1.msra.mxu0 0.0
      %1246 = vmatprep.subr.mxu0 0.0
      %1247 = vmatpush1.msra.mxu0 0.0
      %1248 = vmatprep.subr.mxu0 0.0
      %1249 = vmatpush1.msra.mxu0 0.0
      %1250 = vmatprep.subr.mxu0 0.0
      %1251 = vmatpush1.msra.mxu0 0.0
      %1252 = vmatprep.subr.mxu0 0.0
      %1253 = vmatpush1.msra.mxu0 0.0
      %1254 = vmatprep.subr.mxu0 0.0
      %1255 = vmatpush1.msra.mxu0 0.0
      %1256 = vmatprep.subr.mxu0 0.0
      %1257 = vmatpush1.msra.mxu0 0.0
      %1258 = vmatprep.subr.mxu0 0.0
      %1259 = vmatpush1.msra.mxu0 %v1223
      %1260 = vmatprep.subr.mxu0 0.0
      %1261 = vmatpush2.msra.mxu0 0.0
      %1262 = vmatprep.subr.mxu0 0.0
      %1263 = vmatpush2.msra.mxu0 0.0
      %1264 = vmatprep.subr.mxu0 0.0
      %1265 = vmatpush2.msra.mxu0 0.0
      %1266 = vmatprep.subr.mxu0 0.0
      %1267 = vmatpush2.msra.mxu0 0.0
      %1268 = vmatprep.subr.mxu0 0.0
      %1269 = vmatpush2.msra.mxu0 0.0
      %1270 = vmatprep.subr.mxu0 0.0
      %1271 = vmatpush2.msra.mxu0 0.0
      %1272 = vmatprep.subr.mxu0 0.0
      %1273 = vmatpush2.msra.mxu0 0.0
      %1274 = vmatprep.subr.mxu0 0.0
      %1275 = vmatpush2.msra.mxu0 0.0
      %1276 = vmatprep.subr.mxu0 0.0
      %1277 = vmatpush2.msra.mxu0 0.0
      %1278 = vmatprep.subr.mxu0 0.0
      %1279 = vmatpush2.msra.mxu0 0.0
      %1280 = vmatprep.subr.mxu0 0.0
      %1281 = vmatpush2.msra.mxu0 0.0
      %1282 = vmatprep.subr.mxu0 0.0
      %1283 = vmatpush2.msra.mxu0 0.0
      %1284 = vmatprep.subr.mxu0 0.0
      %1285 = vmatpush2.msra.mxu0 0.0
      %1286 = vmatprep.subr.mxu0 0.0
      %1287 = vmatpush2.msra.mxu0 0.0
      %1288 = vmatprep.subr.mxu0 0.0
      %1289 = vmatpush2.msra.mxu0 0.0
      %1290 = vmatprep.subr.mxu0 0.0
      %1291 = vmatpush2.msra.mxu0 0.0
      %1292 = vmatprep.mubr.f32.mxu0 0.0
      %1293 = vmatmul.mubr.f32.gmra.mxu0 %v1226
      %v1294 = vpop.f32.mrf.mxu0
      %v1295 = vadd.f32 0.0, %v1294
      %v1296 = vpop.f32.mrf.mxu0
      %1297 = vdwg.mxu0
      %1298 = vrot.lane.b32.xlu0 %v632, 112
      %v1299 = vpop.permute.xlu0 %1298
      %1300 = vrot.lane.b32.xlu0 %v629, 80
      %v1301 = vpop.permute.xlu0 %1300
      %v1302 = vsel %vm636, %v1299, 0
      %v1304 = vsel %vm636, %v1301, 0
      %1306 = vmatprep.subr.mxu0 0.0
      %1307 = vmatpush1.xpose.msra.mxu0 0.0
      %1308 = vmatprep.subr.mxu0 0.0
      %1309 = vmatpush1.xpose.msra.mxu0 0.0
      %1310 = vmatprep.subr.mxu0 0.0
      %1311 = vmatpush1.xpose.msra.mxu0 0.0
      %1312 = vmatprep.subr.mxu0 0.0
      %1313 = vmatpush1.xpose.msra.mxu0 0.0
      %1314 = vmatprep.subr.mxu0 0.0
      %1315 = vmatpush1.xpose.msra.mxu0 0.0
      %1316 = vmatprep.subr.mxu0 0.0
      %1317 = vmatpush1.xpose.msra.mxu0 0.0
      %1318 = vmatprep.subr.mxu0 0.0
      %1319 = vmatpush1.xpose.msra.mxu0 0.0
      %1320 = vmatprep.subr.mxu0 0.0
      %1321 = vmatpush1.xpose.msra.mxu0 0.0
      %1322 = vmatprep.subr.mxu0 0.0
      %1323 = vmatpush1.xpose.msra.mxu0 0.0
      %1324 = vmatprep.subr.mxu0 0.0
      %1325 = vmatpush1.xpose.msra.mxu0 0.0
      %1326 = vmatprep.subr.mxu0 0.0
      %1327 = vmatpush1.xpose.msra.mxu0 0.0
      %1328 = vmatprep.subr.mxu0 0.0
      %1329 = vmatpush1.xpose.msra.mxu0 0.0
      %1330 = vmatprep.subr.mxu0 0.0
      %1331 = vmatpush1.xpose.msra.mxu0 0.0
      %1332 = vmatprep.subr.mxu0 0.0
      %1333 = vmatpush1.xpose.msra.mxu0 0.0
      %1334 = vmatprep.subr.mxu0 0.0
      %1335 = vmatpush1.xpose.msra.mxu0 0.0
      %1336 = vmatprep.subr.mxu0 0.0
      %1337 = vmatpush1.xpose.msra.mxu0 %v1304
      %1338 = vmatprep.subr.mxu0 0.0
      %1339 = vmatpush2.xpose.msra.mxu0 0.0
      %1340 = vmatprep.subr.mxu0 0.0
      %1341 = vmatpush2.xpose.msra.mxu0 0.0
      %1342 = vmatprep.subr.mxu0 0.0
      %1343 = vmatpush2.xpose.msra.mxu0 0.0
      %1344 = vmatprep.subr.mxu0 0.0
      %1345 = vmatpush2.xpose.msra.mxu0 0.0
      %1346 = vmatprep.subr.mxu0 0.0
      %1347 = vmatpush2.xpose.msra.mxu0 0.0
      %1348 = vmatprep.subr.mxu0 0.0
      %1349 = vmatpush2.xpose.msra.mxu0 0.0
      %1350 = vmatprep.subr.mxu0 0.0
      %1351 = vmatpush2.xpose.msra.mxu0 0.0
      %1352 = vmatprep.subr.mxu0 0.0
      %1353 = vmatpush2.xpose.msra.mxu0 0.0
      %1354 = vmatprep.subr.mxu0 0.0
      %1355 = vmatpush2.xpose.msra.mxu0 0.0
      %1356 = vmatprep.subr.mxu0 0.0
      %1357 = vmatpush2.xpose.msra.mxu0 0.0
      %1358 = vmatprep.subr.mxu0 0.0
      %1359 = vmatpush2.xpose.msra.mxu0 0.0
      %1360 = vmatprep.subr.mxu0 0.0
      %1361 = vmatpush2.xpose.msra.mxu0 0.0
      %1362 = vmatprep.subr.mxu0 0.0
      %1363 = vmatpush2.xpose.msra.mxu0 0.0
      %1364 = vmatprep.subr.mxu0 0.0
      %1365 = vmatpush2.xpose.msra.mxu0 0.0
      %1366 = vmatprep.subr.mxu0 0.0
      %1367 = vmatpush2.xpose.msra.mxu0 0.0
      %1368 = vmatprep.subr.mxu0 0.0
      %1369 = vmatpush2.xpose.msra.mxu0 0.0
      %1370 = vmatprep.mubr.f32.mxu0 0.0
      %1371 = vmatmul.mubr.f32.gmra.mxu0 %v1302
      %v1372 = vpop.f32.mrf.mxu0
      %v1373 = vadd.f32 0.0, %v1372
      %v1374 = vpop.f32.mrf.mxu0
      %1375 = vdwg.mxu0
      %v1376 = vsel %vm712, %v1373, -inf
      %1377 = vmax.xlane.f32.xlu0 %v1376
      %v1378 = vpop.xlane.xlu0 %1377
      %v1379 = vsub.f32 %v1373, %v1378
      %v1380 = vmul.f32 %v1379, 1.442695
      %v1381 = vpow.pop %v1380
      %v1382 = vsel %vm712, %v1381, 0.0
      %1383 = vadd.xlane.f32.xlu0 %v1382
      %v1384 = vpop.xlane.xlu0 %1383
      %v1385 = vrcp.pop %v1384
      %v1386 = vmul.f32 %v1381, %v1385
      %v1387 = vadd.f32 %v1221, %v1386
      %1388 = vrot.lane.b32.xlu0 %v629, 48
      %v1389 = vpop.permute.xlu0 %1388
      %v1392 = vsel %vm712, %v1386, 0
      %1394 = vmatprep.subr.mxu0 0.0
      %1395 = vmatpush1.msra.mxu0 0.0
      %1396 = vmatprep.subr.mxu0 0.0
      %1397 = vmatpush1.msra.mxu0 0.0
      %1398 = vmatprep.subr.mxu0 0.0
      %1399 = vmatpush1.msra.mxu0 0.0
      %1400 = vmatprep.subr.mxu0 0.0
      %1401 = vmatpush1.msra.mxu0 0.0
      %1402 = vmatprep.subr.mxu0 0.0
      %1403 = vmatpush1.msra.mxu0 0.0
      %1404 = vmatprep.subr.mxu0 0.0
      %1405 = vmatpush1.msra.mxu0 0.0
      %1406 = vmatprep.subr.mxu0 0.0
      %1407 = vmatpush1.msra.mxu0 0.0
      %1408 = vmatprep.subr.mxu0 0.0
      %1409 = vmatpush1.msra.mxu0 0.0
      %1410 = vmatprep.subr.mxu0 0.0
      %1411 = vmatpush1.msra.mxu0 0.0
      %1412 = vmatprep.subr.mxu0 0.0
      %1413 = vmatpush1.msra.mxu0 0.0
      %1414 = vmatprep.subr.mxu0 0.0
      %1415 = vmatpush1.msra.mxu0 0.0
      %1416 = vmatprep.subr.mxu0 0.0
      %1417 = vmatpush1.msra.mxu0 0.0
      %1418 = vmatprep.subr.mxu0 0.0
      %1419 = vmatpush1.msra.mxu0 0.0
      %1420 = vmatprep.subr.mxu0 0.0
      %1421 = vmatpush1.msra.mxu0 0.0
      %1422 = vmatprep.subr.mxu0 0.0
      %1423 = vmatpush1.msra.mxu0 0.0
      %1424 = vmatprep.subr.mxu0 0.0
      %1425 = vmatpush1.msra.mxu0 %v1389
      %1426 = vmatprep.subr.mxu0 0.0
      %1427 = vmatpush2.msra.mxu0 0.0
      %1428 = vmatprep.subr.mxu0 0.0
      %1429 = vmatpush2.msra.mxu0 0.0
      %1430 = vmatprep.subr.mxu0 0.0
      %1431 = vmatpush2.msra.mxu0 0.0
      %1432 = vmatprep.subr.mxu0 0.0
      %1433 = vmatpush2.msra.mxu0 0.0
      %1434 = vmatprep.subr.mxu0 0.0
      %1435 = vmatpush2.msra.mxu0 0.0
      %1436 = vmatprep.subr.mxu0 0.0
      %1437 = vmatpush2.msra.mxu0 0.0
      %1438 = vmatprep.subr.mxu0 0.0
      %1439 = vmatpush2.msra.mxu0 0.0
      %1440 = vmatprep.subr.mxu0 0.0
      %1441 = vmatpush2.msra.mxu0 0.0
      %1442 = vmatprep.subr.mxu0 0.0
      %1443 = vmatpush2.msra.mxu0 0.0
      %1444 = vmatprep.subr.mxu0 0.0
      %1445 = vmatpush2.msra.mxu0 0.0
      %1446 = vmatprep.subr.mxu0 0.0
      %1447 = vmatpush2.msra.mxu0 0.0
      %1448 = vmatprep.subr.mxu0 0.0
      %1449 = vmatpush2.msra.mxu0 0.0
      %1450 = vmatprep.subr.mxu0 0.0
      %1451 = vmatpush2.msra.mxu0 0.0
      %1452 = vmatprep.subr.mxu0 0.0
      %1453 = vmatpush2.msra.mxu0 0.0
      %1454 = vmatprep.subr.mxu0 0.0
      %1455 = vmatpush2.msra.mxu0 0.0
      %1456 = vmatprep.subr.mxu0 0.0
      %1457 = vmatpush2.msra.mxu0 0.0
      %1458 = vmatprep.mubr.f32.mxu0 0.0
      %1459 = vmatmul.mubr.f32.gmra.mxu0 %v1392
      %v1460 = vpop.f32.mrf.mxu0
      %v1461 = vadd.f32 0.0, %v1460
      %v1462 = vpop.f32.mrf.mxu0
      %1463 = vdwg.mxu0
      %1464 = vrot.lane.b32.xlu0 %v632, 108
      %v1465 = vpop.permute.xlu0 %1464
      %1466 = vrot.lane.b32.xlu0 %v629, 76
      %v1467 = vpop.permute.xlu0 %1466
      %v1468 = vsel %vm636, %v1465, 0
      %v1470 = vsel %vm636, %v1467, 0
      %1472 = vmatprep.subr.mxu0 0.0
      %1473 = vmatpush1.xpose.msra.mxu0 0.0
      %1474 = vmatprep.subr.mxu0 0.0
      %1475 = vmatpush1.xpose.msra.mxu0 0.0
      %1476 = vmatprep.subr.mxu0 0.0
      %1477 = vmatpush1.xpose.msra.mxu0 0.0
      %1478 = vmatprep.subr.mxu0 0.0
      %1479 = vmatpush1.xpose.msra.mxu0 0.0
      %1480 = vmatprep.subr.mxu0 0.0
      %1481 = vmatpush1.xpose.msra.mxu0 0.0
      %1482 = vmatprep.subr.mxu0 0.0
      %1483 = vmatpush1.xpose.msra.mxu0 0.0
      %1484 = vmatprep.subr.mxu0 0.0
      %1485 = vmatpush1.xpose.msra.mxu0 0.0
      %1486 = vmatprep.subr.mxu0 0.0
      %1487 = vmatpush1.xpose.msra.mxu0 0.0
      %1488 = vmatprep.subr.mxu0 0.0
      %1489 = vmatpush1.xpose.msra.mxu0 0.0
      %1490 = vmatprep.subr.mxu0 0.0
      %1491 = vmatpush1.xpose.msra.mxu0 0.0
      %1492 = vmatprep.subr.mxu0 0.0
      %1493 = vmatpush1.xpose.msra.mxu0 0.0
      %1494 = vmatprep.subr.mxu0 0.0
      %1495 = vmatpush1.xpose.msra.mxu0 0.0
      %1496 = vmatprep.subr.mxu0 0.0
      %1497 = vmatpush1.xpose.msra.mxu0 0.0
      %1498 = vmatprep.subr.mxu0 0.0
      %1499 = vmatpush1.xpose.msra.mxu0 0.0
      %1500 = vmatprep.subr.mxu0 0.0
      %1501 = vmatpush1.xpose.msra.mxu0 0.0
      %1502 = vmatprep.subr.mxu0 0.0
      %1503 = vmatpush1.xpose.msra.mxu0 %v1470
      %1504 = vmatprep.subr.mxu0 0.0
      %1505 = vmatpush2.xpose.msra.mxu0 0.0
      %1506 = vmatprep.subr.mxu0 0.0
      %1507 = vmatpush2.xpose.msra.mxu0 0.0
      %1508 = vmatprep.subr.mxu0 0.0
      %1509 = vmatpush2.xpose.msra.mxu0 0.0
      %1510 = vmatprep.subr.mxu0 0.0
      %1511 = vmatpush2.xpose.msra.mxu0 0.0
      %1512 = vmatprep.subr.mxu0 0.0
      %1513 = vmatpush2.xpose.msra.mxu0 0.0
      %1514 = vmatprep.subr.mxu0 0.0
      %1515 = vmatpush2.xpose.msra.mxu0 0.0
      %1516 = vmatprep.subr.mxu0 0.0
      %1517 = vmatpush2.xpose.msra.mxu0 0.0
      %1518 = vmatprep.subr.mxu0 0.0
      %1519 = vmatpush2.xpose.msra.mxu0 0.0
      %1520 = vmatprep.subr.mxu0 0.0
      %1521 = vmatpush2.xpose.msra.mxu0 0.0
      %1522 = vmatprep.subr.mxu0 0.0
      %1523 = vmatpush2.xpose.msra.mxu0 0.0
      %1524 = vmatprep.subr.mxu0 0.0
      %1525 = vmatpush2.xpose.msra.mxu0 0.0
      %1526 = vmatprep.subr.mxu0 0.0
      %1527 = vmatpush2.xpose.msra.mxu0 0.0
      %1528 = vmatprep.subr.mxu0 0.0
      %1529 = vmatpush2.xpose.msra.mxu0 0.0
      %1530 = vmatprep.subr.mxu0 0.0
      %1531 = vmatpush2.xpose.msra.mxu0 0.0
      %1532 = vmatprep.subr.mxu0 0.0
      %1533 = vmatpush2.xpose.msra.mxu0 0.0
      %1534 = vmatprep.subr.mxu0 0.0
      %1535 = vmatpush2.xpose.msra.mxu0 0.0
      %1536 = vmatprep.mubr.f32.mxu0 0.0
      %1537 = vmatmul.mubr.f32.gmra.mxu0 %v1468
      %v1538 = vpop.f32.mrf.mxu0
      %v1539 = vadd.f32 0.0, %v1538
      %v1540 = vpop.f32.mrf.mxu0
      %1541 = vdwg.mxu0
      %v1542 = vsel %vm712, %v1539, -inf
      %1543 = vmax.xlane.f32.xlu0 %v1542
      %v1544 = vpop.xlane.xlu0 %1543
      %v1545 = vsub.f32 %v1539, %v1544
      %v1546 = vmul.f32 %v1545, 1.442695
      %v1547 = vpow.pop %v1546
      %v1548 = vsel %vm712, %v1547, 0.0
      %1549 = vadd.xlane.f32.xlu0 %v1548
      %v1550 = vpop.xlane.xlu0 %1549
      %v1551 = vrcp.pop %v1550
      %v1552 = vmul.f32 %v1547, %v1551
      %v1553 = vadd.f32 %v1387, %v1552
      %1554 = vrot.lane.b32.xlu0 %v629, 44
      %v1555 = vpop.permute.xlu0 %1554
      %v1558 = vsel %vm712, %v1552, 0
      %1560 = vmatprep.subr.mxu0 0.0
      %1561 = vmatpush1.msra.mxu0 0.0
      %1562 = vmatprep.subr.mxu0 0.0
      %1563 = vmatpush1.msra.mxu0 0.0
      %1564 = vmatprep.subr.mxu0 0.0
      %1565 = vmatpush1.msra.mxu0 0.0
      %1566 = vmatprep.subr.mxu0 0.0
      %1567 = vmatpush1.msra.mxu0 0.0
      %1568 = vmatprep.subr.mxu0 0.0
      %1569 = vmatpush1.msra.mxu0 0.0
      %1570 = vmatprep.subr.mxu0 0.0
      %1571 = vmatpush1.msra.mxu0 0.0
      %1572 = vmatprep.subr.mxu0 0.0
      %1573 = vmatpush1.msra.mxu0 0.0
      %1574 = vmatprep.subr.mxu0 0.0
      %1575 = vmatpush1.msra.mxu0 0.0
      %1576 = vmatprep.subr.mxu0 0.0
      %1577 = vmatpush1.msra.mxu0 0.0
      %1578 = vmatprep.subr.mxu0 0.0
      %1579 = vmatpush1.msra.mxu0 0.0
      %1580 = vmatprep.subr.mxu0 0.0
      %1581 = vmatpush1.msra.mxu0 0.0
      %1582 = vmatprep.subr.mxu0 0.0
      %1583 = vmatpush1.msra.mxu0 0.0
      %1584 = vmatprep.subr.mxu0 0.0
      %1585 = vmatpush1.msra.mxu0 0.0
      %1586 = vmatprep.subr.mxu0 0.0
      %1587 = vmatpush1.msra.mxu0 0.0
      %1588 = vmatprep.subr.mxu0 0.0
      %1589 = vmatpush1.msra.mxu0 0.0
      %1590 = vmatprep.subr.mxu0 0.0
      %1591 = vmatpush1.msra.mxu0 %v1555
      %1592 = vmatprep.subr.mxu0 0.0
      %1593 = vmatpush2.msra.mxu0 0.0
      %1594 = vmatprep.subr.mxu0 0.0
      %1595 = vmatpush2.msra.mxu0 0.0
      %1596 = vmatprep.subr.mxu0 0.0
      %1597 = vmatpush2.msra.mxu0 0.0
      %1598 = vmatprep.subr.mxu0 0.0
      %1599 = vmatpush2.msra.mxu0 0.0
      %1600 = vmatprep.subr.mxu0 0.0
      %1601 = vmatpush2.msra.mxu0 0.0
      %1602 = vmatprep.subr.mxu0 0.0
      %1603 = vmatpush2.msra.mxu0 0.0
      %1604 = vmatprep.subr.mxu0 0.0
      %1605 = vmatpush2.msra.mxu0 0.0
      %1606 = vmatprep.subr.mxu0 0.0
      %1607 = vmatpush2.msra.mxu0 0.0
      %1608 = vmatprep.subr.mxu0 0.0
      %1609 = vmatpush2.msra.mxu0 0.0
      %1610 = vmatprep.subr.mxu0 0.0
      %1611 = vmatpush2.msra.mxu0 0.0
      %1612 = vmatprep.subr.mxu0 0.0
      %1613 = vmatpush2.msra.mxu0 0.0
      %1614 = vmatprep.subr.mxu0 0.0
      %1615 = vmatpush2.msra.mxu0 0.0
      %1616 = vmatprep.subr.mxu0 0.0
      %1617 = vmatpush2.msra.mxu0 0.0
      %1618 = vmatprep.subr.mxu0 0.0
      %1619 = vmatpush2.msra.mxu0 0.0
      %1620 = vmatprep.subr.mxu0 0.0
      %1621 = vmatpush2.msra.mxu0 0.0
      %1622 = vmatprep.subr.mxu0 0.0
      %1623 = vmatpush2.msra.mxu0 0.0
      %1624 = vmatprep.mubr.f32.mxu0 0.0
      %1625 = vmatmul.mubr.f32.gmra.mxu0 %v1558
      %v1626 = vpop.f32.mrf.mxu0
      %v1627 = vadd.f32 0.0, %v1626
      %v1628 = vpop.f32.mrf.mxu0
      %1629 = vdwg.mxu0
      %1630 = vrot.lane.b32.xlu0 %v632, 104
      %v1631 = vpop.permute.xlu0 %1630
      %1632 = vrot.lane.b32.xlu0 %v629, 72
      %v1633 = vpop.permute.xlu0 %1632
      %v1634 = vsel %vm636, %v1631, 0
      %v1636 = vsel %vm636, %v1633, 0
      %1638 = vmatprep.subr.mxu0 0.0
      %1639 = vmatpush1.xpose.msra.mxu0 0.0
      %1640 = vmatprep.subr.mxu0 0.0
      %1641 = vmatpush1.xpose.msra.mxu0 0.0
      %1642 = vmatprep.subr.mxu0 0.0
      %1643 = vmatpush1.xpose.msra.mxu0 0.0
      %1644 = vmatprep.subr.mxu0 0.0
      %1645 = vmatpush1.xpose.msra.mxu0 0.0
      %1646 = vmatprep.subr.mxu0 0.0
      %1647 = vmatpush1.xpose.msra.mxu0 0.0
      %1648 = vmatprep.subr.mxu0 0.0
      %1649 = vmatpush1.xpose.msra.mxu0 0.0
      %1650 = vmatprep.subr.mxu0 0.0
      %1651 = vmatpush1.xpose.msra.mxu0 0.0
      %1652 = vmatprep.subr.mxu0 0.0
      %1653 = vmatpush1.xpose.msra.mxu0 0.0
      %1654 = vmatprep.subr.mxu0 0.0
      %1655 = vmatpush1.xpose.msra.mxu0 0.0
      %1656 = vmatprep.subr.mxu0 0.0
      %1657 = vmatpush1.xpose.msra.mxu0 0.0
      %1658 = vmatprep.subr.mxu0 0.0
      %1659 = vmatpush1.xpose.msra.mxu0 0.0
      %1660 = vmatprep.subr.mxu0 0.0
      %1661 = vmatpush1.xpose.msra.mxu0 0.0
      %1662 = vmatprep.subr.mxu0 0.0
      %1663 = vmatpush1.xpose.msra.mxu0 0.0
      %1664 = vmatprep.subr.mxu0 0.0
      %1665 = vmatpush1.xpose.msra.mxu0 0.0
      %1666 = vmatprep.subr.mxu0 0.0
      %1667 = vmatpush1.xpose.msra.mxu0 0.0
      %1668 = vmatprep.subr.mxu0 0.0
      %1669 = vmatpush1.xpose.msra.mxu0 %v1636
      %1670 = vmatprep.subr.mxu0 0.0
      %1671 = vmatpush2.xpose.msra.mxu0 0.0
      %1672 = vmatprep.subr.mxu0 0.0
      %1673 = vmatpush2.xpose.msra.mxu0 0.0
      %1674 = vmatprep.subr.mxu0 0.0
      %1675 = vmatpush2.xpose.msra.mxu0 0.0
      %1676 = vmatprep.subr.mxu0 0.0
      %1677 = vmatpush2.xpose.msra.mxu0 0.0
      %1678 = vmatprep.subr.mxu0 0.0
      %1679 = vmatpush2.xpose.msra.mxu0 0.0
      %1680 = vmatprep.subr.mxu0 0.0
      %1681 = vmatpush2.xpose.msra.mxu0 0.0
      %1682 = vmatprep.subr.mxu0 0.0
      %1683 = vmatpush2.xpose.msra.mxu0 0.0
      %1684 = vmatprep.subr.mxu0 0.0
      %1685 = vmatpush2.xpose.msra.mxu0 0.0
      %1686 = vmatprep.subr.mxu0 0.0
      %1687 = vmatpush2.xpose.msra.mxu0 0.0
      %1688 = vmatprep.subr.mxu0 0.0
      %1689 = vmatpush2.xpose.msra.mxu0 0.0
      %1690 = vmatprep.subr.mxu0 0.0
      %1691 = vmatpush2.xpose.msra.mxu0 0.0
      %1692 = vmatprep.subr.mxu0 0.0
      %1693 = vmatpush2.xpose.msra.mxu0 0.0
      %1694 = vmatprep.subr.mxu0 0.0
      %1695 = vmatpush2.xpose.msra.mxu0 0.0
      %1696 = vmatprep.subr.mxu0 0.0
      %1697 = vmatpush2.xpose.msra.mxu0 0.0
      %1698 = vmatprep.subr.mxu0 0.0
      %1699 = vmatpush2.xpose.msra.mxu0 0.0
      %1700 = vmatprep.subr.mxu0 0.0
      %1701 = vmatpush2.xpose.msra.mxu0 0.0
      %1702 = vmatprep.mubr.f32.mxu0 0.0
      %1703 = vmatmul.mubr.f32.gmra.mxu0 %v1634
      %v1704 = vpop.f32.mrf.mxu0
      %v1705 = vadd.f32 0.0, %v1704
      %v1706 = vpop.f32.mrf.mxu0
      %1707 = vdwg.mxu0
      %v1708 = vsel %vm712, %v1705, -inf
      %1709 = vmax.xlane.f32.xlu0 %v1708
      %v1710 = vpop.xlane.xlu0 %1709
      %v1711 = vsub.f32 %v1705, %v1710
      %v1712 = vmul.f32 %v1711, 1.442695
      %v1713 = vpow.pop %v1712
      %v1714 = vsel %vm712, %v1713, 0.0
      %1715 = vadd.xlane.f32.xlu0 %v1714
      %v1716 = vpop.xlane.xlu0 %1715
      %v1717 = vrcp.pop %v1716
      %v1718 = vmul.f32 %v1713, %v1717
      %v1719 = vadd.f32 %v1553, %v1718
      %1720 = vrot.lane.b32.xlu0 %v629, 40
      %v1721 = vpop.permute.xlu0 %1720
      %v1724 = vsel %vm712, %v1718, 0
      %1726 = vmatprep.subr.mxu0 0.0
      %1727 = vmatpush1.msra.mxu0 0.0
      %1728 = vmatprep.subr.mxu0 0.0
      %1729 = vmatpush1.msra.mxu0 0.0
      %1730 = vmatprep.subr.mxu0 0.0
      %1731 = vmatpush1.msra.mxu0 0.0
      %1732 = vmatprep.subr.mxu0 0.0
      %1733 = vmatpush1.msra.mxu0 0.0
      %1734 = vmatprep.subr.mxu0 0.0
      %1735 = vmatpush1.msra.mxu0 0.0
      %1736 = vmatprep.subr.mxu0 0.0
      %1737 = vmatpush1.msra.mxu0 0.0
      %1738 = vmatprep.subr.mxu0 0.0
      %1739 = vmatpush1.msra.mxu0 0.0
      %1740 = vmatprep.subr.mxu0 0.0
      %1741 = vmatpush1.msra.mxu0 0.0
      %1742 = vmatprep.subr.mxu0 0.0
      %1743 = vmatpush1.msra.mxu0 0.0
      %1744 = vmatprep.subr.mxu0 0.0
      %1745 = vmatpush1.msra.mxu0 0.0
      %1746 = vmatprep.subr.mxu0 0.0
      %1747 = vmatpush1.msra.mxu0 0.0
      %1748 = vmatprep.subr.mxu0 0.0
      %1749 = vmatpush1.msra.mxu0 0.0
      %1750 = vmatprep.subr.mxu0 0.0
      %1751 = vmatpush1.msra.mxu0 0.0
      %1752 = vmatprep.subr.mxu0 0.0
      %1753 = vmatpush1.msra.mxu0 0.0
      %1754 = vmatprep.subr.mxu0 0.0
      %1755 = vmatpush1.msra.mxu0 0.0
      %1756 = vmatprep.subr.mxu0 0.0
      %1757 = vmatpush1.msra.mxu0 %v1721
      %1758 = vmatprep.subr.mxu0 0.0
      %1759 = vmatpush2.msra.mxu0 0.0
      %1760 = vmatprep.subr.mxu0 0.0
      %1761 = vmatpush2.msra.mxu0 0.0
      %1762 = vmatprep.subr.mxu0 0.0
      %1763 = vmatpush2.msra.mxu0 0.0
      %1764 = vmatprep.subr.mxu0 0.0
      %1765 = vmatpush2.msra.mxu0 0.0
      %1766 = vmatprep.subr.mxu0 0.0
      %1767 = vmatpush2.msra.mxu0 0.0
      %1768 = vmatprep.subr.mxu0 0.0
      %1769 = vmatpush2.msra.mxu0 0.0
      %1770 = vmatprep.subr.mxu0 0.0
      %1771 = vmatpush2.msra.mxu0 0.0
      %1772 = vmatprep.subr.mxu0 0.0
      %1773 = vmatpush2.msra.mxu0 0.0
      %1774 = vmatprep.subr.mxu0 0.0
      %1775 = vmatpush2.msra.mxu0 0.0
      %1776 = vmatprep.subr.mxu0 0.0
      %1777 = vmatpush2.msra.mxu0 0.0
      %1778 = vmatprep.subr.mxu0 0.0
      %1779 = vmatpush2.msra.mxu0 0.0
      %1780 = vmatprep.subr.mxu0 0.0
      %1781 = vmatpush2.msra.mxu0 0.0
      %1782 = vmatprep.subr.mxu0 0.0
      %1783 = vmatpush2.msra.mxu0 0.0
      %1784 = vmatprep.subr.mxu0 0.0
      %1785 = vmatpush2.msra.mxu0 0.0
      %1786 = vmatprep.subr.mxu0 0.0
      %1787 = vmatpush2.msra.mxu0 0.0
      %1788 = vmatprep.subr.mxu0 0.0
      %1789 = vmatpush2.msra.mxu0 0.0
      %1790 = vmatprep.mubr.f32.mxu0 0.0
      %1791 = vmatmul.mubr.f32.gmra.mxu0 %v1724
      %v1792 = vpop.f32.mrf.mxu0
      %v1793 = vadd.f32 0.0, %v1792
      %v1794 = vpop.f32.mrf.mxu0
      %1795 = vdwg.mxu0
      %1796 = vrot.lane.b32.xlu0 %v632, 100
      %v1797 = vpop.permute.xlu0 %1796
      %1798 = vrot.lane.b32.xlu0 %v629, 68
      %v1799 = vpop.permute.xlu0 %1798
      %v1800 = vsel %vm636, %v1797, 0
      %v1802 = vsel %vm636, %v1799, 0
      %1804 = vmatprep.subr.mxu0 0.0
      %1805 = vmatpush1.xpose.msra.mxu0 0.0
      %1806 = vmatprep.subr.mxu0 0.0
      %1807 = vmatpush1.xpose.msra.mxu0 0.0
      %1808 = vmatprep.subr.mxu0 0.0
      %1809 = vmatpush1.xpose.msra.mxu0 0.0
      %1810 = vmatprep.subr.mxu0 0.0
      %1811 = vmatpush1.xpose.msra.mxu0 0.0
      %1812 = vmatprep.subr.mxu0 0.0
      %1813 = vmatpush1.xpose.msra.mxu0 0.0
      %1814 = vmatprep.subr.mxu0 0.0
      %1815 = vmatpush1.xpose.msra.mxu0 0.0
      %1816 = vmatprep.subr.mxu0 0.0
      %1817 = vmatpush1.xpose.msra.mxu0 0.0
      %1818 = vmatprep.subr.mxu0 0.0
      %1819 = vmatpush1.xpose.msra.mxu0 0.0
      %1820 = vmatprep.subr.mxu0 0.0
      %1821 = vmatpush1.xpose.msra.mxu0 0.0
      %1822 = vmatprep.subr.mxu0 0.0
      %1823 = vmatpush1.xpose.msra.mxu0 0.0
      %1824 = vmatprep.subr.mxu0 0.0
      %1825 = vmatpush1.xpose.msra.mxu0 0.0
      %1826 = vmatprep.subr.mxu0 0.0
      %1827 = vmatpush1.xpose.msra.mxu0 0.0
      %1828 = vmatprep.subr.mxu0 0.0
      %1829 = vmatpush1.xpose.msra.mxu0 0.0
      %1830 = vmatprep.subr.mxu0 0.0
      %1831 = vmatpush1.xpose.msra.mxu0 0.0
      %1832 = vmatprep.subr.mxu0 0.0
      %1833 = vmatpush1.xpose.msra.mxu0 0.0
      %1834 = vmatprep.subr.mxu0 0.0
      %1835 = vmatpush1.xpose.msra.mxu0 %v1802
      %1836 = vmatprep.subr.mxu0 0.0
      %1837 = vmatpush2.xpose.msra.mxu0 0.0
      %1838 = vmatprep.subr.mxu0 0.0
      %1839 = vmatpush2.xpose.msra.mxu0 0.0
      %1840 = vmatprep.subr.mxu0 0.0
      %1841 = vmatpush2.xpose.msra.mxu0 0.0
      %1842 = vmatprep.subr.mxu0 0.0
      %1843 = vmatpush2.xpose.msra.mxu0 0.0
      %1844 = vmatprep.subr.mxu0 0.0
      %1845 = vmatpush2.xpose.msra.mxu0 0.0
      %1846 = vmatprep.subr.mxu0 0.0
      %1847 = vmatpush2.xpose.msra.mxu0 0.0
      %1848 = vmatprep.subr.mxu0 0.0
      %1849 = vmatpush2.xpose.msra.mxu0 0.0
      %1850 = vmatprep.subr.mxu0 0.0
      %1851 = vmatpush2.xpose.msra.mxu0 0.0
      %1852 = vmatprep.subr.mxu0 0.0
      %1853 = vmatpush2.xpose.msra.mxu0 0.0
      %1854 = vmatprep.subr.mxu0 0.0
      %1855 = vmatpush2.xpose.msra.mxu0 0.0
      %1856 = vmatprep.subr.mxu0 0.0
      %1857 = vmatpush2.xpose.msra.mxu0 0.0
      %1858 = vmatprep.subr.mxu0 0.0
      %1859 = vmatpush2.xpose.msra.mxu0 0.0
      %1860 = vmatprep.subr.mxu0 0.0
      %1861 = vmatpush2.xpose.msra.mxu0 0.0
      %1862 = vmatprep.subr.mxu0 0.0
      %1863 = vmatpush2.xpose.msra.mxu0 0.0
      %1864 = vmatprep.subr.mxu0 0.0
      %1865 = vmatpush2.xpose.msra.mxu0 0.0
      %1866 = vmatprep.subr.mxu0 0.0
      %1867 = vmatpush2.xpose.msra.mxu0 0.0
      %1868 = vmatprep.mubr.f32.mxu0 0.0
      %1869 = vmatmul.mubr.f32.gmra.mxu0 %v1800
      %v1870 = vpop.f32.mrf.mxu0
      %v1871 = vadd.f32 0.0, %v1870
      %v1872 = vpop.f32.mrf.mxu0
      %1873 = vdwg.mxu0
      %v1874 = vsel %vm712, %v1871, -inf
      %1875 = vmax.xlane.f32.xlu0 %v1874
      %v1876 = vpop.xlane.xlu0 %1875
      %v1877 = vsub.f32 %v1871, %v1876
      %v1878 = vmul.f32 %v1877, 1.442695
      %v1879 = vpow.pop %v1878
      %v1880 = vsel %vm712, %v1879, 0.0
      %1881 = vadd.xlane.f32.xlu0 %v1880
      %v1882 = vpop.xlane.xlu0 %1881
      %v1883 = vrcp.pop %v1882
      %v1884 = vmul.f32 %v1879, %v1883
      %v1885 = vadd.f32 %v1719, %v1884
      %1886 = vrot.lane.b32.xlu0 %v629, 36
      %v1887 = vpop.permute.xlu0 %1886
      %v1890 = vsel %vm712, %v1884, 0
      %1892 = vmatprep.subr.mxu0 0.0
      %1893 = vmatpush1.msra.mxu0 0.0
      %1894 = vmatprep.subr.mxu0 0.0
      %1895 = vmatpush1.msra.mxu0 0.0
      %1896 = vmatprep.subr.mxu0 0.0
      %1897 = vmatpush1.msra.mxu0 0.0
      %1898 = vmatprep.subr.mxu0 0.0
      %1899 = vmatpush1.msra.mxu0 0.0
      %1900 = vmatprep.subr.mxu0 0.0
      %1901 = vmatpush1.msra.mxu0 0.0
      %1902 = vmatprep.subr.mxu0 0.0
      %1903 = vmatpush1.msra.mxu0 0.0
      %1904 = vmatprep.subr.mxu0 0.0
      %1905 = vmatpush1.msra.mxu0 0.0
      %1906 = vmatprep.subr.mxu0 0.0
      %1907 = vmatpush1.msra.mxu0 0.0
      %1908 = vmatprep.subr.mxu0 0.0
      %1909 = vmatpush1.msra.mxu0 0.0
      %1910 = vmatprep.subr.mxu0 0.0
      %1911 = vmatpush1.msra.mxu0 0.0
      %1912 = vmatprep.subr.mxu0 0.0
      %1913 = vmatpush1.msra.mxu0 0.0
      %1914 = vmatprep.subr.mxu0 0.0
      %1915 = vmatpush1.msra.mxu0 0.0
      %1916 = vmatprep.subr.mxu0 0.0
      %1917 = vmatpush1.msra.mxu0 0.0
      %1918 = vmatprep.subr.mxu0 0.0
      %1919 = vmatpush1.msra.mxu0 0.0
      %1920 = vmatprep.subr.mxu0 0.0
      %1921 = vmatpush1.msra.mxu0 0.0
      %1922 = vmatprep.subr.mxu0 0.0
      %1923 = vmatpush1.msra.mxu0 %v1887
      %1924 = vmatprep.subr.mxu0 0.0
      %1925 = vmatpush2.msra.mxu0 0.0
      %1926 = vmatprep.subr.mxu0 0.0
      %1927 = vmatpush2.msra.mxu0 0.0
      %1928 = vmatprep.subr.mxu0 0.0
      %1929 = vmatpush2.msra.mxu0 0.0
      %1930 = vmatprep.subr.mxu0 0.0
      %1931 = vmatpush2.msra.mxu0 0.0
      %1932 = vmatprep.subr.mxu0 0.0
      %1933 = vmatpush2.msra.mxu0 0.0
      %1934 = vmatprep.subr.mxu0 0.0
      %1935 = vmatpush2.msra.mxu0 0.0
      %1936 = vmatprep.subr.mxu0 0.0
      %1937 = vmatpush2.msra.mxu0 0.0
      %1938 = vmatprep.subr.mxu0 0.0
      %1939 = vmatpush2.msra.mxu0 0.0
      %1940 = vmatprep.subr.mxu0 0.0
      %1941 = vmatpush2.msra.mxu0 0.0
      %1942 = vmatprep.subr.mxu0 0.0
      %1943 = vmatpush2.msra.mxu0 0.0
      %1944 = vmatprep.subr.mxu0 0.0
      %1945 = vmatpush2.msra.mxu0 0.0
      %1946 = vmatprep.subr.mxu0 0.0
      %1947 = vmatpush2.msra.mxu0 0.0
      %1948 = vmatprep.subr.mxu0 0.0
      %1949 = vmatpush2.msra.mxu0 0.0
      %1950 = vmatprep.subr.mxu0 0.0
      %1951 = vmatpush2.msra.mxu0 0.0
      %1952 = vmatprep.subr.mxu0 0.0
      %1953 = vmatpush2.msra.mxu0 0.0
      %1954 = vmatprep.subr.mxu0 0.0
      %1955 = vmatpush2.msra.mxu0 0.0
      %1956 = vmatprep.mubr.f32.mxu0 0.0
      %1957 = vmatmul.mubr.f32.gmra.mxu0 %v1890
      %v1958 = vpop.f32.mrf.mxu0
      %v1959 = vadd.f32 0.0, %v1958
      %v1960 = vpop.f32.mrf.mxu0
      %1961 = vdwg.mxu0
      %1963 = vrot.lane.b32.xlu0 %v963, 4
      %v1964 = vpop.permute.xlu0 %1963
      %1967 = vrot.lane.b32.xlu0 %v1129, 8
      %v1968 = vpop.permute.xlu0 %1967
      %1971 = vrot.lane.b32.xlu0 %v1295, 12
      %v1972 = vpop.permute.xlu0 %1971
      %1975 = vrot.lane.b32.xlu0 %v1461, 16
      %v1976 = vpop.permute.xlu0 %1975
      %1979 = vrot.lane.b32.xlu0 %v1627, 20
      %v1980 = vpop.permute.xlu0 %1979
      %1983 = vrot.lane.b32.xlu0 %v1793, 24
      %v1984 = vpop.permute.xlu0 %1983
      %1987 = vrot.lane.b32.xlu0 %v1959, 28
      %v1988 = vpop.permute.xlu0 %1987
      %v1990 = vsel %vm636, %v797, %v1964
      %v1991 = vsel %vm712, %v1990, %v1968
      %vm1992 = vcmask 97280
      %v1993 = vsel %vm1992, %v1991, %v1972
      %vm1994 = vcmask 130048
      %v1995 = vsel %vm1994, %v1993, %v1976
      %vm1996 = vcmask 162816
      %v1997 = vsel %vm1996, %v1995, %v1980
      %vm1998 = vcmask 195584
      %v1999 = vsel %vm1998, %v1997, %v1984
      %vm2000 = vcmask 228352
      %v2001 = vsel %vm2000, %v1999, %v1988
      %v2002 = vld [vmem:[%s6] sm:$0xff]
      %v2003 = vld [vmem:[%s6 + $0x8] sm:$0xff]
      %v2004 = vld [vmem:[%s6 + $0x10] sm:$0xff]
      %v2005 = vld [vmem:[%s6 + $0x18] sm:$0xff]
      %v2006 = vld [vmem:[%s7] sm:$0x1]
      %v2008 = vlaneseq
      %v2009 = vshrl.u32 %v2008, 7
      %v2010 = vsub.s32 0, %v2009
      %v2011 = vrot.slane %v2006, %v2010
      %v2014 = vsel %vm519, %v2001, 0
      %2016 = vmatprep.subr.mxu0 0.0
      %2017 = vmatpush1.msra.mxu0 0.0
      %2018 = vmatprep.subr.mxu0 0.0
      %2019 = vmatpush1.msra.mxu0 0.0
      %2020 = vmatprep.subr.mxu0 0.0
      %2021 = vmatpush1.msra.mxu0 0.0
      %2022 = vmatprep.subr.mxu0 0.0
      %2023 = vmatpush1.msra.mxu0 0.0
      %2024 = vmatprep.subr.mxu0 0.0
      %2025 = vmatpush1.msra.mxu0 0.0
      %2026 = vmatprep.subr.mxu0 0.0
      %2027 = vmatpush1.msra.mxu0 0.0
      %2028 = vmatprep.subr.mxu0 0.0
      %2029 = vmatpush1.msra.mxu0 0.0
      %2030 = vmatprep.subr.mxu0 0.0
      %2031 = vmatpush1.msra.mxu0 0.0
      %2032 = vmatprep.subr.mxu0 0.0
      %2033 = vmatpush1.msra.mxu0 0.0
      %2034 = vmatprep.subr.mxu0 0.0
      %2035 = vmatpush1.msra.mxu0 0.0
      %2036 = vmatprep.subr.mxu0 0.0
      %2037 = vmatpush1.msra.mxu0 0.0
      %2038 = vmatprep.subr.mxu0 0.0
      %2039 = vmatpush1.msra.mxu0 0.0
      %2040 = vmatprep.subr.mxu0 0.0
      %2041 = vmatpush1.msra.mxu0 %v2005
      %2042 = vmatprep.subr.mxu0 0.0
      %2043 = vmatpush1.msra.mxu0 %v2004
      %2044 = vmatprep.subr.mxu0 0.0
      %2045 = vmatpush1.msra.mxu0 %v2003
      %2046 = vmatprep.subr.mxu0 0.0
      %2047 = vmatpush1.msra.mxu0 %v2002
      %2048 = vmatprep.subr.mxu0 0.0
      %2049 = vmatpush2.msra.mxu0 0.0
      %2050 = vmatprep.subr.mxu0 0.0
      %2051 = vmatpush2.msra.mxu0 0.0
      %2052 = vmatprep.subr.mxu0 0.0
      %2053 = vmatpush2.msra.mxu0 0.0
      %2054 = vmatprep.subr.mxu0 0.0
      %2055 = vmatpush2.msra.mxu0 0.0
      %2056 = vmatprep.subr.mxu0 0.0
      %2057 = vmatpush2.msra.mxu0 0.0
      %2058 = vmatprep.subr.mxu0 0.0
      %2059 = vmatpush2.msra.mxu0 0.0
      %2060 = vmatprep.subr.mxu0 0.0
      %2061 = vmatpush2.msra.mxu0 0.0
      %2062 = vmatprep.subr.mxu0 0.0
      %2063 = vmatpush2.msra.mxu0 0.0
      %2064 = vmatprep.subr.mxu0 0.0
      %2065 = vmatpush2.msra.mxu0 0.0
      %2066 = vmatprep.subr.mxu0 0.0
      %2067 = vmatpush2.msra.mxu0 0.0
      %2068 = vmatprep.subr.mxu0 0.0
      %2069 = vmatpush2.msra.mxu0 0.0
      %2070 = vmatprep.subr.mxu0 0.0
      %2071 = vmatpush2.msra.mxu0 0.0
      %2072 = vmatprep.subr.mxu0 0.0
      %2073 = vmatpush2.msra.mxu0 0.0
      %2074 = vmatprep.subr.mxu0 0.0
      %2075 = vmatpush2.msra.mxu0 0.0
      %2076 = vmatprep.subr.mxu0 0.0
      %2077 = vmatpush2.msra.mxu0 0.0
      %2078 = vmatprep.subr.mxu0 0.0
      %2079 = vmatpush2.msra.mxu0 0.0
      %2080 = vmatprep.mubr.f32.mxu0 0.0
      %2081 = vmatmul.mubr.f32.gmra.mxu0 %v2014
      %v2082 = vpop.f32.mrf.mxu0
      %v2083 = vadd.f32 %v2011, %v2082
      %v2084 = vpop.f32.mrf.mxu0
      %2085 = vdwg.mxu0
      %v2086 = vadd.f32 %v516, %v2083
      %v2087 = vld [vmem:[%s8] sm:$0x1]
      %v2088 = vld [vmem:[%s9] sm:$0x1]
      %v2089 = vsel %vm519, %v2086, 0.0
      %2090 = vadd.xlane.f32.xlu0 %v2089
      %v2091 = vpop.xlane.xlu0 %2090
      %v2092 = vmul.f32 %v2091, %v523
      %v2093 = vsub.f32 %v2086, %v2092
      %v2094 = vmul.f32 %v2093, %v2093
      %v2095 = vsel %vm519, %v2094, 0.0
      %2096 = vadd.xlane.f32.xlu0 %v2095
      %v2097 = vpop.xlane.xlu0 %2096
      %v2098 = vmul.f32 %v2097, %v523
      %v2099 = vadd.f32 %v2098, 1e-05
      %v2100 = vrsqrt.pop %v2099
      %v2101 = vmul.f32 %v2093, %v2100
      %v2103 = vlaneseq
      %v2104 = vshrl.u32 %v2103, 7
      %v2105 = vsub.s32 0, %v2104
      %v2106 = vrot.slane %v2087, %v2105
      %v2108 = vmul.f32 %v2101, %v2106
      %v2110 = vlaneseq
      %v2111 = vshrl.u32 %v2110, 7
      %v2112 = vsub.s32 0, %v2111
      %v2113 = vrot.slane %v2088, %v2112
      %v2115 = vadd.f32 %v2108, %v2113
      %v2116 = vld [vmem:[%s10] sm:$0xff]
      %v2117 = vld [vmem:[%s10 + $0x8] sm:$0xff]
      %v2118 = vld [vmem:[%s10 + $0x10] sm:$0xff]
      %v2119 = vld [vmem:[%s10 + $0x18] sm:$0xff]
      %v2120 = vld [vmem:[%s11] sm:$0x1]
      %v2122 = vlaneseq
      %v2123 = vshrl.u32 %v2122, 7
      %v2124 = vsub.s32 0, %v2123
      %v2125 = vrot.slane %v2120, %v2124
      %v2128 = vsel %vm519, %v2115, 0
      %2130 = vmatprep.subr.mxu0 0.0
      %2131 = vmatpush1.msra.mxu0 0.0
      %2132 = vmatprep.subr.mxu0 0.0
      %2133 = vmatpush1.msra.mxu0 0.0
      %2134 = vmatprep.subr.mxu0 0.0
      %2135 = vmatpush1.msra.mxu0 0.0
      %2136 = vmatprep.subr.mxu0 0.0
      %2137 = vmatpush1.msra.mxu0 0.0
      %2138 = vmatprep.subr.mxu0 0.0
      %2139 = vmatpush1.msra.mxu0 0.0
      %2140 = vmatprep.subr.mxu0 0.0
      %2141 = vmatpush1.msra.mxu0 0.0
      %2142 = vmatprep.subr.mxu0 0.0
      %2143 = vmatpush1.msra.mxu0 0.0
      %2144 = vmatprep.subr.mxu0 0.0
      %2145 = vmatpush1.msra.mxu0 0.0
      %2146 = vmatprep.subr.mxu0 0.0
      %2147 = vmatpush1.msra.mxu0 0.0
      %2148 = vmatprep.subr.mxu0 0.0
      %2149 = vmatpush1.msra.mxu0 0.0
      %2150 = vmatprep.subr.mxu0 0.0
      %2151 = vmatpush1.msra.mxu0 0.0
      %2152 = vmatprep.subr.mxu0 0.0
      %2153 = vmatpush1.msra.mxu0 0.0
      %2154 = vmatprep.subr.mxu0 0.0
      %2155 = vmatpush1.msra.mxu0 %v2119
      %2156 = vmatprep.subr.mxu0 0.0
      %2157 = vmatpush1.msra.mxu0 %v2118
      %2158 = vmatprep.subr.mxu0 0.0
      %2159 = vmatpush1.msra.mxu0 %v2117
      %2160 = vmatprep.subr.mxu0 0.0
      %2161 = vmatpush1.msra.mxu0 %v2116
      %2162 = vmatprep.subr.mxu0 0.0
      %2163 = vmatpush2.msra.mxu0 0.0
      %2164 = vmatprep.subr.mxu0 0.0
      %2165 = vmatpush2.msra.mxu0 0.0
      %2166 = vmatprep.subr.mxu0 0.0
      %2167 = vmatpush2.msra.mxu0 0.0
      %2168 = vmatprep.subr.mxu0 0.0
      %2169 = vmatpush2.msra.mxu0 0.0
      %2170 = vmatprep.subr.mxu0 0.0
      %2171 = vmatpush2.msra.mxu0 0.0
      %2172 = vmatprep.subr.mxu0 0.0
      %2173 = vmatpush2.msra.mxu0 0.0
      %2174 = vmatprep.subr.mxu0 0.0
      %2175 = vmatpush2.msra.mxu0 0.0
      %2176 = vmatprep.subr.mxu0 0.0
      %2177 = vmatpush2.msra.mxu0 0.0
      %2178 = vmatprep.subr.mxu0 0.0
      %2179 = vmatpush2.msra.mxu0 0.0
      %2180 = vmatprep.subr.mxu0 0.0
      %2181 = vmatpush2.msra.mxu0 0.0
      %2182 = vmatprep.subr.mxu0 0.0
      %2183 = vmatpush2.msra.mxu0 0.0
      %2184 = vmatprep.subr.mxu0 0.0
      %2185 = vmatpush2.msra.mxu0 0.0
      %2186 = vmatprep.subr.mxu0 0.0
      %2187 = vmatpush2.msra.mxu0 0.0
      %2188 = vmatprep.subr.mxu0 0.0
      %2189 = vmatpush2.msra.mxu0 0.0
      %2190 = vmatprep.subr.mxu0 0.0
      %2191 = vmatpush2.msra.mxu0 0.0
      %2192 = vmatprep.subr.mxu0 0.0
      %2193 = vmatpush2.msra.mxu0 0.0
      %2194 = vmatprep.mubr.f32.mxu0 0.0
      %2195 = vmatmul.mubr.f32.gmra.mxu0 %v2128
      %v2196 = vpop.f32.mrf.mxu0
      %v2197 = vadd.f32 %v2125, %v2196
      %v2198 = vpop.f32.mrf.mxu0
      %2199 = vdwg.mxu0
      %v2200 = vmul.f32 %v2197, %v2197
      %v2201 = vmul.f32 %v2197, %v2200
      %v2202 = vmul.f32 %v2201, 0.044715
      %v2203 = vadd.f32 %v2197, %v2202
      %v2204 = vmul.f32 %v2203, 0.7978846
      %v2205 = vtanh.pop %v2204
      %v2206 = vadd.f32 %v2205, 1.0
      %v2207 = vmul.f32 %v2206, 0.5
      %v2208 = vmul.f32 %v2197, %v2207
      %v2209 = vld [vmem:[%s12] sm:$0xff]
      %v2210 = vld [vmem:[%s12 + $0x8] sm:$0xff]
      %v2211 = vld [vmem:[%s12 + $0x10] sm:$0xff]
      %v2212 = vld [vmem:[%s12 + $0x18] sm:$0xff]
      %v2213 = vld [vmem:[%s12 + $0x20] sm:$0xff]
      %v2214 = vld [vmem:[%s12 + $0x28] sm:$0xff]
      %v2215 = vld [vmem:[%s12 + $0x30] sm:$0xff]
      %v2216 = vld [vmem:[%s12 + $0x38] sm:$0xff]
      %v2217 = vld [vmem:[%s12 + $0x40] sm:$0xff]
      %v2218 = vld [vmem:[%s12 + $0x48] sm:$0xff]
      %v2219 = vld [vmem:[%s12 + $0x50] sm:$0xff]
      %v2220 = vld [vmem:[%s12 + $0x58] sm:$0xff]
      %v2221 = vld [vmem:[%s12 + $0x60] sm:$0xff]
      %v2222 = vld [vmem:[%s12 + $0x68] sm:$0xff]
      %v2223 = vld [vmem:[%s12 + $0x70] sm:$0xff]
      %v2224 = vld [vmem:[%s12 + $0x78] sm:$0xff]
      %v2225 = vld [vmem:[%s13] sm:$0x1]
      %v2227 = vlaneseq
      %v2228 = vshrl.u32 %v2227, 7
      %v2229 = vsub.s32 0, %v2228
      %v2230 = vrot.slane %v2225, %v2229
      %2232 = vmatprep.subr.mxu0 0.0
      %2233 = vmatpush1.msra.mxu0 %v2224
      %2234 = vmatprep.subr.mxu0 0.0
      %2235 = vmatpush1.msra.mxu0 %v2223
      %2236 = vmatprep.subr.mxu0 0.0
      %2237 = vmatpush1.msra.mxu0 %v2222
      %2238 = vmatprep.subr.mxu0 0.0
      %2239 = vmatpush1.msra.mxu0 %v2221
      %2240 = vmatprep.subr.mxu0 0.0
      %2241 = vmatpush1.msra.mxu0 %v2220
      %2242 = vmatprep.subr.mxu0 0.0
      %2243 = vmatpush1.msra.mxu0 %v2219
      %2244 = vmatprep.subr.mxu0 0.0
      %2245 = vmatpush1.msra.mxu0 %v2218
      %2246 = vmatprep.subr.mxu0 0.0
      %2247 = vmatpush1.msra.mxu0 %v2217
      %2248 = vmatprep.subr.mxu0 0.0
      %2249 = vmatpush1.msra.mxu0 %v2216
      %2250 = vmatprep.subr.mxu0 0.0
      %2251 = vmatpush1.msra.mxu0 %v2215
      %2252 = vmatprep.subr.mxu0 0.0
      %2253 = vmatpush1.msra.mxu0 %v2214
      %2254 = vmatprep.subr.mxu0 0.0
      %2255 = vmatpush1.msra.mxu0 %v2213
      %2256 = vmatprep.subr.mxu0 0.0
      %2257 = vmatpush1.msra.mxu0 %v2212
      %2258 = vmatprep.subr.mxu0 0.0
      %2259 = vmatpush1.msra.mxu0 %v2211
      %2260 = vmatprep.subr.mxu0 0.0
      %2261 = vmatpush1.msra.mxu0 %v2210
      %2262 = vmatprep.subr.mxu0 0.0
      %2263 = vmatpush1.msra.mxu0 %v2209
      %2264 = vmatprep.subr.mxu0 0.0
      %2265 = vmatpush2.msra.mxu0 0.0
      %2266 = vmatprep.subr.mxu0 0.0
      %2267 = vmatpush2.msra.mxu0 0.0
      %2268 = vmatprep.subr.mxu0 0.0
      %2269 = vmatpush2.msra.mxu0 0.0
      %2270 = vmatprep.subr.mxu0 0.0
      %2271 = vmatpush2.msra.mxu0 0.0
      %2272 = vmatprep.subr.mxu0 0.0
      %2273 = vmatpush2.msra.mxu0 0.0
      %2274 = vmatprep.subr.mxu0 0.0
      %2275 = vmatpush2.msra.mxu0 0.0
      %2276 = vmatprep.subr.mxu0 0.0
      %2277 = vmatpush2.msra.mxu0 0.0
      %2278 = vmatprep.subr.mxu0 0.0
      %2279 = vmatpush2.msra.mxu0 0.0
      %2280 = vmatprep.subr.mxu0 0.0
      %2281 = vmatpush2.msra.mxu0 0.0
      %2282 = vmatprep.subr.mxu0 0.0
      %2283 = vmatpush2.msra.mxu0 0.0
      %2284 = vmatprep.subr.mxu0 0.0
      %2285 = vmatpush2.msra.mxu0 0.0
      %2286 = vmatprep.subr.mxu0 0.0
      %2287 = vmatpush2.msra.mxu0 0.0
      %2288 = vmatprep.subr.mxu0 0.0
      %2289 = vmatpush2.msra.mxu0 0.0
      %2290 = vmatprep.subr.mxu0 0.0
      %2291 = vmatpush2.msra.mxu0 0.0
      %2292 = vmatprep.subr.mxu0 0.0
      %2293 = vmatpush2.msra.mxu0 0.0
      %2294 = vmatprep.subr.mxu0 0.0
      %2295 = vmatpush2.msra.mxu0 0.0
      %2296 = vmatprep.mubr.f32.mxu0 0.0
      %2297 = vmatmul.mubr.f32.gmra.mxu0 %v2208
      %v2298 = vpop.f32.mrf.mxu0
      %v2299 = vadd.f32 %v2230, %v2298
      %v2300 = vpop.f32.mrf.mxu0
      %2301 = vdwg.mxu0
      %v2302 = vadd.f32 %v2086, %v2299
      %2303 = vst.msk [vmem:[%s512] sm:$0xff] %vm519, %v2302
      %v2304 = vsel %vm712, %v1885, 0.0
      %v2305 = vrot.slane %v2304, 4
      %v2306 = vadd.f32 %v2304, %v2305
      %v2307 = vrot.slane %v2306, 2
      %v2308 = vadd.f32 %v2306, %v2307
      %v2309 = vrot.slane %v2308, 1
      %v2310 = vadd.f32 %v2308, %v2309
      %v2311 = vld [vmem:[%s508] sm:$0xff]
      %v2313 = vsel %vm712, %v2310, 0
      %2315 = vmatprep.subr.mxu0 0.0
      %2316 = vmatpush1.msra.mxu0 0.0
      %2317 = vmatprep.subr.mxu0 0.0
      %2318 = vmatpush1.msra.mxu0 0.0
      %2319 = vmatprep.subr.mxu0 0.0
      %2320 = vmatpush1.msra.mxu0 0.0
      %2321 = vmatprep.subr.mxu0 0.0
      %2322 = vmatpush1.msra.mxu0 0.0
      %2323 = vmatprep.subr.mxu0 0.0
      %2324 = vmatpush1.msra.mxu0 0.0
      %2325 = vmatprep.subr.mxu0 0.0
      %2326 = vmatpush1.msra.mxu0 0.0
      %2327 = vmatprep.subr.mxu0 0.0
      %2328 = vmatpush1.msra.mxu0 0.0
      %2329 = vmatprep.subr.mxu0 0.0
      %2330 = vmatpush1.msra.mxu0 0.0
      %2331 = vmatprep.subr.mxu0 0.0
      %2332 = vmatpush1.msra.mxu0 0.0
      %2333 = vmatprep.subr.mxu0 0.0
      %2334 = vmatpush1.msra.mxu0 0.0
      %2335 = vmatprep.subr.mxu0 0.0
      %2336 = vmatpush1.msra.mxu0 0.0
      %2337 = vmatprep.subr.mxu0 0.0
      %2338 = vmatpush1.msra.mxu0 0.0
      %2339 = vmatprep.subr.mxu0 0.0
      %2340 = vmatpush1.msra.mxu0 0.0
      %2341 = vmatprep.subr.mxu0 0.0
      %2342 = vmatpush1.msra.mxu0 0.0
      %2343 = vmatprep.subr.mxu0 0.0
      %2344 = vmatpush1.msra.mxu0 0.0
      %2345 = vmatprep.subr.mxu0 0.0
      %2346 = vmatpush1.msra.mxu0 %v2311
      %2347 = vmatprep.subr.mxu0 0.0
      %2348 = vmatpush2.msra.mxu0 0.0
      %2349 = vmatprep.subr.mxu0 0.0
      %2350 = vmatpush2.msra.mxu0 0.0
      %2351 = vmatprep.subr.mxu0 0.0
      %2352 = vmatpush2.msra.mxu0 0.0
      %2353 = vmatprep.subr.mxu0 0.0
      %2354 = vmatpush2.msra.mxu0 0.0
      %2355 = vmatprep.subr.mxu0 0.0
      %2356 = vmatpush2.msra.mxu0 0.0
      %2357 = vmatprep.subr.mxu0 0.0
      %2358 = vmatpush2.msra.mxu0 0.0
      %2359 = vmatprep.subr.mxu0 0.0
      %2360 = vmatpush2.msra.mxu0 0.0
      %2361 = vmatprep.subr.mxu0 0.0
      %2362 = vmatpush2.msra.mxu0 0.0
      %2363 = vmatprep.subr.mxu0 0.0
      %2364 = vmatpush2.msra.mxu0 0.0
      %2365 = vmatprep.subr.mxu0 0.0
      %2366 = vmatpush2.msra.mxu0 0.0
      %2367 = vmatprep.subr.mxu0 0.0
      %2368 = vmatpush2.msra.mxu0 0.0
      %2369 = vmatprep.subr.mxu0 0.0
      %2370 = vmatpush2.msra.mxu0 0.0
      %2371 = vmatprep.subr.mxu0 0.0
      %2372 = vmatpush2.msra.mxu0 0.0
      %2373 = vmatprep.subr.mxu0 0.0
      %2374 = vmatpush2.msra.mxu0 0.0
      %2375 = vmatprep.subr.mxu0 0.0
      %2376 = vmatpush2.msra.mxu0 0.0
      %2377 = vmatprep.subr.mxu0 0.0
      %2378 = vmatpush2.msra.mxu0 0.0
      %2379 = vmatprep.mubr.f32.mxu0 0.0
      %2380 = vmatmul.mubr.f32.gmra.mxu0 %v2313
      %v2381 = vpop.f32.mrf.mxu0
      %v2382 = vadd.f32 0.0, %v2381
      %v2383 = vpop.f32.mrf.mxu0
      %2384 = vdwg.mxu0
      %vm2385 = vcmask 122880
      %2386 = vst.msk [vmem:[%s515] sm:$0x1] %vm2385, %v2382
      %p2387 = scmp.lt.s32.totalorder %s27, 1
      %s2388 = scalar_select %p2387, %s27, 1
      %s2389 = smul.addr %s2388, 8
      %s2390 = scalar_lea.vmem %s14, %s2389
      %p2391 = scmp.lt.s32.totalorder %s27, 1
      %s2392 = scalar_select %p2391, %s27, 1
      %s2393 = scalar_lea.vmem %s15, %s2392
      // Predicated region
      $region77: #{perceiver_forward.7} parent=75 // pred_check
        %p2394 = pneg %p349
      $region78: #{perceiver_forward.7} parent=75 // pred_check_branch
        %2396 = sbr.rel (%p2394) target = $region80
      $region79: #{perceiver_forward.7} parent=75 // pred_region
        _
      $region80: #{perceiver_forward.7} parent=75 // pred_fallthru
        _
      // Predicated region
      $region81: #{perceiver_forward.7} parent=75 // pred_check
        %p2397 = pneg %p375
      $region82: #{perceiver_forward.7} parent=75 // pred_check_branch
        %2399 = sbr.rel (%p2397) target = $region84
      $region83: #{perceiver_forward.7} parent=75 // pred_region
        _
      $region84: #{perceiver_forward.7} parent=75 // pred_fallthru
        _
    $region76: #{perceiver_forward.7} parent=5 // pred_fallthru
      _
    %p2400 = scmp.le.s32.totalorder 2, %s22
    // Predicated region
    $region85: #{perceiver_forward.7} parent=5 // pred_check
      %p2401 = pneg %p2400
    $region86: #{perceiver_forward.7} parent=5 // pred_check_branch
      %2403 = sbr.rel (%p2401) target = $region88
    $region87: #{perceiver_forward.7} parent=5 // pred_region
      %s2404 = ssub.s32 %s22, 2
      // Predicated region
      $region89: #{perceiver_forward.7} parent=87 // pred_check
        %p2405 = pneg %p355
      $region90: #{perceiver_forward.7} parent=87 // pred_check_branch
        %2407 = sbr.rel (%p2405) target = $region92
      $region91: #{perceiver_forward.7} parent=87 // pred_region
        %p2408 = scmp.lt.s32.totalorder %s28, 1
        %s2409 = scalar_select %p2408, %s28, 1
        %s2410 = smul.addr %s2409, 8
        %s2411 = scalar_lea.vmem %s14, %s2410
      $region92: #{perceiver_forward.7} parent=87 // pred_fallthru
        _
      // Predicated region
      $region93: #{perceiver_forward.7} parent=87 // pred_check
        %p2412 = pneg %p381
      $region94: #{perceiver_forward.7} parent=87 // pred_check_branch
        %2414 = sbr.rel (%p2412) target = $region96
      $region95: #{perceiver_forward.7} parent=87 // pred_region
        %p2415 = scmp.lt.s32.totalorder %s28, 1
        %s2416 = scalar_select %p2415, %s28, 1
        %s2417 = scalar_lea.vmem %s15, %s2416
      $region96: #{perceiver_forward.7} parent=87 // pred_fallthru
        _
    $region88: #{perceiver_forward.7} parent=5 // pred_fallthru
      _
  $region6: #{perceiver_forward.7} parent=0 // loop_footer
    %s26 = sadd.s32 1, %s22
  $region7: #{perceiver_forward.7} parent=0 // loop_footer_branch
    %21 = sbr.rel target = $region3
  $region8: #{perceiver_forward.7} parent=0 // loop_exit
    _

// kernel: perceiver_forward.9
$region0: #{perceiver_forward.9}
  #allocation0 [shape = 'u32[]', space=smem, size = 0x4, offset = 0x4, fixed_abs, tag = 'smem constant byte address 0x4 - core index']
  #allocation1 [shape = 'u32[144,128]{1,0:T(1,128)}', space=vmem, size = 0x12000, scoped, tag = 'internal scratch']
  %s0 = inlined_call_operand.vmem [shape: f32[2,1,32], index: 0, kind: input, shape index: {}]
  %s1 = inlined_call_operand.vmem [shape: f32[2,8,32], index: 1, kind: input, shape index: {}]
  %s2 = inlined_call_operand.vmem [shape: f32[1,32], index: 2, kind: input, shape index: {}]
  %s3 = inlined_call_operand.vmem [shape: f32[1,32], index: 3, kind: input, shape index: {}]
  %s4 = inlined_call_operand.vmem [shape: f32[1,32], index: 4, kind: input, shape index: {}]
  %s5 = inlined_call_operand.vmem [shape: f32[1,32], index: 5, kind: input, shape index: {}]
  %s6 = inlined_call_operand.vmem [shape: f32[32,32], index: 6, kind: input, shape index: {}]
  %s7 = inlined_call_operand.vmem [shape: f32[1,32], index: 7, kind: input, shape index: {}]
  %s8 = inlined_call_operand.vmem [shape: f32[32,64], index: 8, kind: input, shape index: {}]
  %s9 = inlined_call_operand.vmem [shape: f32[1,64], index: 9, kind: input, shape index: {}]
  %s10 = inlined_call_operand.vmem [shape: f32[32,32], index: 10, kind: input, shape index: {}]
  %s11 = inlined_call_operand.vmem [shape: f32[1,32], index: 11, kind: input, shape index: {}]
  %s12 = inlined_call_operand.vmem [shape: f32[1,32], index: 12, kind: input, shape index: {}]
  %s13 = inlined_call_operand.vmem [shape: f32[1,32], index: 13, kind: input, shape index: {}]
  %s14 = inlined_call_operand.vmem [shape: f32[32,128], index: 14, kind: input, shape index: {}]
  %s15 = inlined_call_operand.vmem [shape: f32[1,128], index: 15, kind: input, shape index: {}]
  %s16 = inlined_call_operand.vmem [shape: f32[128,32], index: 16, kind: input, shape index: {}]
  %s17 = inlined_call_operand.vmem [shape: f32[1,32], index: 17, kind: input, shape index: {}]
  %s18 = inlined_call_operand.vmem [shape: f32[1,32], index: 18, kind: input, shape index: {}]
  %s19 = inlined_call_operand.vmem [shape: f32[1,32], index: 19, kind: input, shape index: {}]
  %s20 = inlined_call_operand.hbm [shape: f32[2,1,32], index: 20, kind: output, shape index: {}]
  %s21 = sld [smem:[#allocation0]]
  $region113: #{perceiver_forward.9} parent=0
    _
  %s23 = ssub.s32 1, %s21
  %s24 = scalar_select 0, %s23, %s21
  $region1: #{perceiver_forward.9} parent=0
    #allocation2 [shape = 'u8[1024]{0}', space=vmem, size = 0x400, scoped, tag = 'output window, operand 0']
    #allocation3 [shape = 's32[2]{0}', space=sflag, size = 0x8, scoped, tag = 'scoped memory for perceiver_forward.9']
    %25 = vsyncpa [#allocation3], 0
    %s26 = scalar_lea.sflag [#allocation3], 1
    %27 = vsyncpa %s26, 0
    loop: start=0, step=1, limit=4
    $region2: #{perceiver_forward.9} parent=1 // loop_pre_header
      _
    $region3: #{perceiver_forward.9} parent=1 // loop_header
      %s29 = sphi 0, %s33
      %p30 = scmp.ge.s32.totalorder %s29, 4
      %s39 = sphi 0, %s41
      %s42 = sphi 0, %s39
      %s43 = sphi 0, %s42
      %s59 = sphi 0, %s43
      %s65 = sphi 0, %s67
      %s68 = sphi 0, %s65
      %s69 = sphi 0, %s68
      %s85 = sphi 0, %s69
      %s89 = sphi 0, %s89
      %s91 = sphi 0, %s89
      %s92 = sphi 0, %s91
      %s106 = sphi 0, %s92
      %s110 = sphi 0, %s110
      %s112 = sphi 0, %s110
      %s113 = sphi 0, %s112
      %s127 = sphi 0, %s113
      %s131 = sphi 0, %s131
      %s133 = sphi 0, %s131
      %s134 = sphi 0, %s133
      %s148 = sphi 0, %s134
      %s152 = sphi 0, %s152
      %s154 = sphi 0, %s152
      %s155 = sphi 0, %s154
      %s169 = sphi 0, %s155
      %s173 = sphi 0, %s173
      %s175 = sphi 0, %s173
      %s176 = sphi 0, %s175
      %s190 = sphi 0, %s176
      %s194 = sphi 0, %s194
      %s196 = sphi 0, %s194
      %s197 = sphi 0, %s196
      %s211 = sphi 0, %s197
      %s215 = sphi 0, %s215
      %s217 = sphi 0, %s215
      %s218 = sphi 0, %s217
      %s232 = sphi 0, %s218
      %s236 = sphi 0, %s236
      %s238 = sphi 0, %s236
      %s239 = sphi 0, %s238
      %s253 = sphi 0, %s239
      %s257 = sphi 0, %s257
      %s259 = sphi 0, %s257
      %s260 = sphi 0, %s259
      %s274 = sphi 0, %s260
      %s278 = sphi 0, %s278
      %s280 = sphi 0, %s278
      %s281 = sphi 0, %s280
      %s295 = sphi 0, %s281
      %s299 = sphi 0, %s299
      %s301 = sphi 0, %s299
      %s302 = sphi 0, %s301
      %s316 = sphi 0, %s302
      %s320 = sphi 0, %s320
      %s322 = sphi 0, %s320
      %s323 = sphi 0, %s322
      %s337 = sphi 0, %s323
      %s341 = sphi 0, %s341
      %s343 = sphi 0, %s341
      %s344 = sphi 0, %s343
      %s358 = sphi 0, %s344
      %s362 = sphi 0, %s362
      %s364 = sphi 0, %s362
      %s365 = sphi 0, %s364
      %s379 = sphi 0, %s365
      %s383 = sphi 0, %s383
      %s385 = sphi 0, %s383
      %s386 = sphi 0, %s385
      %s400 = sphi 0, %s386
      %s404 = sphi 0, %s404
      %s406 = sphi 0, %s404
      %s407 = sphi 0, %s406
      %s421 = sphi 0, %s407
      %s425 = sphi 0, %s425
      %s427 = sphi 0, %s425
      %s428 = sphi 0, %s427
      %s442 = sphi 0, %s428
      %s446 = sphi 0, %s446
      %s448 = sphi 0, %s446
      %s449 = sphi 0, %s448
      %s463 = sphi 0, %s449
      %s469 = sphi 0, %s471
      %s472 = sphi 0, %s469
      %s473 = sphi 0, %s472
      %s489 = sphi 0, %s473
    $region4: #{perceiver_forward.9} parent=1 // loop_header_branch
      %32 = sbr.rel (%p30) target = $region8
    $region5: #{perceiver_forward.9} parent=1 // loop_body
      %s34 = ssub.s32 %s29, 1
      %s35 = ssub.s32 %s29, 2
      %s36 = sadd.s32 %s29, 1
      %s37 = ssub.s32 %s29, %s36
      %p38 = scmp.eq.s32.totalorder %s37, 0
      %s40 = sadd.s32 %s39, 1
      %s41 = scalar_select %p38, %s39, %s40
      %p44 = pneg %p38
      %p45 = scmp.eq.s32.totalorder %s29, 1
      %p46 = por %p44, %p45
      %p47 = scmp.ne.s32.totalorder %s39, %s42
      %p48 = scmp.eq.s32.totalorder %s29, 0
      %p49 = por %p47, %p48
      %p50 = scmp.ne.s32.totalorder %s39, %s42
      %p51 = scmp.eq.s32.totalorder %s34, 1
      %p52 = por %p50, %p51
      %p53 = scmp.ne.s32.totalorder %s42, %s43
      %p54 = scmp.eq.s32.totalorder %s34, 0
      %p55 = por %p53, %p54
      %p56 = scmp.ne.s32.totalorder %s42, %s43
      %p57 = scmp.eq.s32.totalorder %s35, 1
      %p58 = por %p56, %p57
      %p60 = scmp.ne.s32.totalorder %s43, %s59
      %p61 = scmp.eq.s32.totalorder %s35, 0
      %p62 = por %p60, %p61
      %s63 = ssub.s32 %s29, %s36
      %p64 = scmp.eq.s32.totalorder %s63, 0
      %s66 = sadd.s32 %s65, 1
      %s67 = scalar_select %p64, %s65, %s66
      %p70 = pneg %p64
      %p71 = scmp.eq.s32.totalorder %s29, 1
      %p72 = por %p70, %p71
      %p73 = scmp.ne.s32.totalorder %s65, %s68
      %p74 = scmp.eq.s32.totalorder %s29, 0
      %p75 = por %p73, %p74
      %p76 = scmp.ne.s32.totalorder %s65, %s68
      %p77 = scmp.eq.s32.totalorder %s34, 1
      %p78 = por %p76, %p77
      %p79 = scmp.ne.s32.totalorder %s68, %s69
      %p80 = scmp.eq.s32.totalorder %s34, 0
      %p81 = por %p79, %p80
      %p82 = scmp.ne.s32.totalorder %s68, %s69
      %p83 = scmp.eq.s32.totalorder %s35, 1
      %p84 = por %p82, %p83
      %p86 = scmp.ne.s32.totalorder %s69, %s85
      %p87 = scmp.eq.s32.totalorder %s35, 0
      %p88 = por %p86, %p87
      %s90 = sadd.s32 %s89, 1
      %p93 = scmp.eq.s32.totalorder %s29, 1
      %p94 = scmp.ne.s32.totalorder %s89, %s91
      %p95 = scmp.eq.s32.totalorder %s29, 0
      %p96 = por %p94, %p95
      %p97 = scmp.ne.s32.totalorder %s89, %s91
      %p98 = scmp.eq.s32.totalorder %s34, 1
      %p99 = por %p97, %p98
      %p100 = scmp.ne.s32.totalorder %s91, %s92
      %p101 = scmp.eq.s32.totalorder %s34, 0
      %p102 = por %p100, %p101
      %p103 = scmp.ne.s32.totalorder %s91, %s92
      %p104 = scmp.eq.s32.totalorder %s35, 1
      %p105 = por %p103, %p104
      %p107 = scmp.ne.s32.totalorder %s92, %s106
      %p108 = scmp.eq.s32.totalorder %s35, 0
      %p109 = por %p107, %p108
      %s111 = sadd.s32 %s110, 1
      %p114 = scmp.eq.s32.totalorder %s29, 1
      %p115 = scmp.ne.s32.totalorder %s110, %s112
      %p116 = scmp.eq.s32.totalorder %s29, 0
      %p117 = por %p115, %p116
      %p118 = scmp.ne.s32.totalorder %s110, %s112
      %p119 = scmp.eq.s32.totalorder %s34, 1
      %p120 = por %p118, %p119
      %p121 = scmp.ne.s32.totalorder %s112, %s113
      %p122 = scmp.eq.s32.totalorder %s34, 0
      %p123 = por %p121, %p122
      %p124 = scmp.ne.s32.totalorder %s112, %s113
      %p125 = scmp.eq.s32.totalorder %s35, 1
      %p126 = por %p124, %p125
      %p128 = scmp.ne.s32.totalorder %s113, %s127
      %p129 = scmp.eq.s32.totalorder %s35, 0
      %p130 = por %p128, %p129
      %s132 = sadd.s32 %s131, 1
      %p135 = scmp.eq.s32.totalorder %s29, 1
      %p136 = scmp.ne.s32.totalorder %s131, %s133
      %p137 = scmp.eq.s32.totalorder %s29, 0
      %p138 = por %p136, %p137
      %p139 = scmp.ne.s32.totalorder %s131, %s133
      %p140 = scmp.eq.s32.totalorder %s34, 1
      %p141 = por %p139, %p140
      %p142 = scmp.ne.s32.totalorder %s133, %s134
      %p143 = scmp.eq.s32.totalorder %s34, 0
      %p144 = por %p142, %p143
      %p145 = scmp.ne.s32.totalorder %s133, %s134
      %p146 = scmp.eq.s32.totalorder %s35, 1
      %p147 = por %p145, %p146
      %p149 = scmp.ne.s32.totalorder %s134, %s148
      %p150 = scmp.eq.s32.totalorder %s35, 0
      %p151 = por %p149, %p150
      %s153 = sadd.s32 %s152, 1
      %p156 = scmp.eq.s32.totalorder %s29, 1
      %p157 = scmp.ne.s32.totalorder %s152, %s154
      %p158 = scmp.eq.s32.totalorder %s29, 0
      %p159 = por %p157, %p158
      %p160 = scmp.ne.s32.totalorder %s152, %s154
      %p161 = scmp.eq.s32.totalorder %s34, 1
      %p162 = por %p160, %p161
      %p163 = scmp.ne.s32.totalorder %s154, %s155
      %p164 = scmp.eq.s32.totalorder %s34, 0
      %p165 = por %p163, %p164
      %p166 = scmp.ne.s32.totalorder %s154, %s155
      %p167 = scmp.eq.s32.totalorder %s35, 1
      %p168 = por %p166, %p167
      %p170 = scmp.ne.s32.totalorder %s155, %s169
      %p171 = scmp.eq.s32.totalorder %s35, 0
      %p172 = por %p170, %p171
      %s174 = sadd.s32 %s173, 1
      %p177 = scmp.eq.s32.totalorder %s29, 1
      %p178 = scmp.ne.s32.totalorder %s173, %s175
      %p179 = scmp.eq.s32.totalorder %s29, 0
      %p180 = por %p178, %p179
      %p181 = scmp.ne.s32.totalorder %s173, %s175
      %p182 = scmp.eq.s32.totalorder %s34, 1
      %p183 = por %p181, %p182
      %p184 = scmp.ne.s32.totalorder %s175, %s176
      %p185 = scmp.eq.s32.totalorder %s34, 0
      %p186 = por %p184, %p185
      %p187 = scmp.ne.s32.totalorder %s175, %s176
      %p188 = scmp.eq.s32.totalorder %s35, 1
      %p189 = por %p187, %p188
      %p191 = scmp.ne.s32.totalorder %s176, %s190
      %p192 = scmp.eq.s32.totalorder %s35, 0
      %p193 = por %p191, %p192
      %s195 = sadd.s32 %s194, 1
      %p198 = scmp.eq.s32.totalorder %s29, 1
      %p199 = scmp.ne.s32.totalorder %s194, %s196
      %p200 = scmp.eq.s32.totalorder %s29, 0
      %p201 = por %p199, %p200
      %p202 = scmp.ne.s32.totalorder %s194, %s196
      %p203 = scmp.eq.s32.totalorder %s34, 1
      %p204 = por %p202, %p203
      %p205 = scmp.ne.s32.totalorder %s196, %s197
      %p206 = scmp.eq.s32.totalorder %s34, 0
      %p207 = por %p205, %p206
      %p208 = scmp.ne.s32.totalorder %s196, %s197
      %p209 = scmp.eq.s32.totalorder %s35, 1
      %p210 = por %p208, %p209
      %p212 = scmp.ne.s32.totalorder %s197, %s211
      %p213 = scmp.eq.s32.totalorder %s35, 0
      %p214 = por %p212, %p213
      %s216 = sadd.s32 %s215, 1
      %p219 = scmp.eq.s32.totalorder %s29, 1
      %p220 = scmp.ne.s32.totalorder %s215, %s217
      %p221 = scmp.eq.s32.totalorder %s29, 0
      %p222 = por %p220, %p221
      %p223 = scmp.ne.s32.totalorder %s215, %s217
      %p224 = scmp.eq.s32.totalorder %s34, 1
      %p225 = por %p223, %p224
      %p226 = scmp.ne.s32.totalorder %s217, %s218
      %p227 = scmp.eq.s32.totalorder %s34, 0
      %p228 = por %p226, %p227
      %p229 = scmp.ne.s32.totalorder %s217, %s218
      %p230 = scmp.eq.s32.totalorder %s35, 1
      %p231 = por %p229, %p230
      %p233 = scmp.ne.s32.totalorder %s218, %s232
      %p234 = scmp.eq.s32.totalorder %s35, 0
      %p235 = por %p233, %p234
      %s237 = sadd.s32 %s236, 1
      %p240 = scmp.eq.s32.totalorder %s29, 1
      %p241 = scmp.ne.s32.totalorder %s236, %s238
      %p242 = scmp.eq.s32.totalorder %s29, 0
      %p243 = por %p241, %p242
      %p244 = scmp.ne.s32.totalorder %s236, %s238
      %p245 = scmp.eq.s32.totalorder %s34, 1
      %p246 = por %p244, %p245
      %p247 = scmp.ne.s32.totalorder %s238, %s239
      %p248 = scmp.eq.s32.totalorder %s34, 0
      %p249 = por %p247, %p248
      %p250 = scmp.ne.s32.totalorder %s238, %s239
      %p251 = scmp.eq.s32.totalorder %s35, 1
      %p252 = por %p250, %p251
      %p254 = scmp.ne.s32.totalorder %s239, %s253
      %p255 = scmp.eq.s32.totalorder %s35, 0
      %p256 = por %p254, %p255
      %s258 = sadd.s32 %s257, 1
      %p261 = scmp.eq.s32.totalorder %s29, 1
      %p262 = scmp.ne.s32.totalorder %s257, %s259
      %p263 = scmp.eq.s32.totalorder %s29, 0
      %p264 = por %p262, %p263
      %p265 = scmp.ne.s32.totalorder %s257, %s259
      %p266 = scmp.eq.s32.totalorder %s34, 1
      %p267 = por %p265, %p266
      %p268 = scmp.ne.s32.totalorder %s259, %s260
      %p269 = scmp.eq.s32.totalorder %s34, 0
      %p270 = por %p268, %p269
      %p271 = scmp.ne.s32.totalorder %s259, %s260
      %p272 = scmp.eq.s32.totalorder %s35, 1
      %p273 = por %p271, %p272
      %p275 = scmp.ne.s32.totalorder %s260, %s274
      %p276 = scmp.eq.s32.totalorder %s35, 0
      %p277 = por %p275, %p276
      %s279 = sadd.s32 %s278, 1
      %p282 = scmp.eq.s32.totalorder %s29, 1
      %p283 = scmp.ne.s32.totalorder %s278, %s280
      %p284 = scmp.eq.s32.totalorder %s29, 0
      %p285 = por %p283, %p284
      %p286 = scmp.ne.s32.totalorder %s278, %s280
      %p287 = scmp.eq.s32.totalorder %s34, 1
      %p288 = por %p286, %p287
      %p289 = scmp.ne.s32.totalorder %s280, %s281
      %p290 = scmp.eq.s32.totalorder %s34, 0
      %p291 = por %p289, %p290
      %p292 = scmp.ne.s32.totalorder %s280, %s281
      %p293 = scmp.eq.s32.totalorder %s35, 1
      %p294 = por %p292, %p293
      %p296 = scmp.ne.s32.totalorder %s281, %s295
      %p297 = scmp.eq.s32.totalorder %s35, 0
      %p298 = por %p296, %p297
      %s300 = sadd.s32 %s299, 1
      %p303 = scmp.eq.s32.totalorder %s29, 1
      %p304 = scmp.ne.s32.totalorder %s299, %s301
      %p305 = scmp.eq.s32.totalorder %s29, 0
      %p306 = por %p304, %p305
      %p307 = scmp.ne.s32.totalorder %s299, %s301
      %p308 = scmp.eq.s32.totalorder %s34, 1
      %p309 = por %p307, %p308
      %p310 = scmp.ne.s32.totalorder %s301, %s302
      %p311 = scmp.eq.s32.totalorder %s34, 0
      %p312 = por %p310, %p311
      %p313 = scmp.ne.s32.totalorder %s301, %s302
      %p314 = scmp.eq.s32.totalorder %s35, 1
      %p315 = por %p313, %p314
      %p317 = scmp.ne.s32.totalorder %s302, %s316
      %p318 = scmp.eq.s32.totalorder %s35, 0
      %p319 = por %p317, %p318
      %s321 = sadd.s32 %s320, 1
      %p324 = scmp.eq.s32.totalorder %s29, 1
      %p325 = scmp.ne.s32.totalorder %s320, %s322
      %p326 = scmp.eq.s32.totalorder %s29, 0
      %p327 = por %p325, %p326
      %p328 = scmp.ne.s32.totalorder %s320, %s322
      %p329 = scmp.eq.s32.totalorder %s34, 1
      %p330 = por %p328, %p329
      %p331 = scmp.ne.s32.totalorder %s322, %s323
      %p332 = scmp.eq.s32.totalorder %s34, 0
      %p333 = por %p331, %p332
      %p334 = scmp.ne.s32.totalorder %s322, %s323
      %p335 = scmp.eq.s32.totalorder %s35, 1
      %p336 = por %p334, %p335
      %p338 = scmp.ne.s32.totalorder %s323, %s337
      %p339 = scmp.eq.s32.totalorder %s35, 0
      %p340 = por %p338, %p339
      %s342 = sadd.s32 %s341, 1
      %p345 = scmp.eq.s32.totalorder %s29, 1
      %p346 = scmp.ne.s32.totalorder %s341, %s343
      %p347 = scmp.eq.s32.totalorder %s29, 0
      %p348 = por %p346, %p347
      %p349 = scmp.ne.s32.totalorder %s341, %s343
      %p350 = scmp.eq.s32.totalorder %s34, 1
      %p351 = por %p349, %p350
      %p352 = scmp.ne.s32.totalorder %s343, %s344
      %p353 = scmp.eq.s32.totalorder %s34, 0
      %p354 = por %p352, %p353
      %p355 = scmp.ne.s32.totalorder %s343, %s344
      %p356 = scmp.eq.s32.totalorder %s35, 1
      %p357 = por %p355, %p356
      %p359 = scmp.ne.s32.totalorder %s344, %s358
      %p360 = scmp.eq.s32.totalorder %s35, 0
      %p361 = por %p359, %p360
      %s363 = sadd.s32 %s362, 1
      %p366 = scmp.eq.s32.totalorder %s29, 1
      %p367 = scmp.ne.s32.totalorder %s362, %s364
      %p368 = scmp.eq.s32.totalorder %s29, 0
      %p369 = por %p367, %p368
      %p370 = scmp.ne.s32.totalorder %s362, %s364
      %p371 = scmp.eq.s32.totalorder %s34, 1
      %p372 = por %p370, %p371
      %p373 = scmp.ne.s32.totalorder %s364, %s365
      %p374 = scmp.eq.s32.totalorder %s34, 0
      %p375 = por %p373, %p374
      %p376 = scmp.ne.s32.totalorder %s364, %s365
      %p377 = scmp.eq.s32.totalorder %s35, 1
      %p378 = por %p376, %p377
      %p380 = scmp.ne.s32.totalorder %s365, %s379
      %p381 = scmp.eq.s32.totalorder %s35, 0
      %p382 = por %p380, %p381
      %s384 = sadd.s32 %s383, 1
      %p387 = scmp.eq.s32.totalorder %s29, 1
      %p388 = scmp.ne.s32.totalorder %s383, %s385
      %p389 = scmp.eq.s32.totalorder %s29, 0
      %p390 = por %p388, %p389
      %p391 = scmp.ne.s32.totalorder %s383, %s385
      %p392 = scmp.eq.s32.totalorder %s34, 1
      %p393 = por %p391, %p392
      %p394 = scmp.ne.s32.totalorder %s385, %s386
      %p395 = scmp.eq.s32.totalorder %s34, 0
      %p396 = por %p394, %p395
      %p397 = scmp.ne.s32.totalorder %s385, %s386
      %p398 = scmp.eq.s32.totalorder %s35, 1
      %p399 = por %p397, %p398
      %p401 = scmp.ne.s32.totalorder %s386, %s400
      %p402 = scmp.eq.s32.totalorder %s35, 0
      %p403 = por %p401, %p402
      %s405 = sadd.s32 %s404, 1
      %p408 = scmp.eq.s32.totalorder %s29, 1
      %p409 = scmp.ne.s32.totalorder %s404, %s406
      %p410 = scmp.eq.s32.totalorder %s29, 0
      %p411 = por %p409, %p410
      %p412 = scmp.ne.s32.totalorder %s404, %s406
      %p413 = scmp.eq.s32.totalorder %s34, 1
      %p414 = por %p412, %p413
      %p415 = scmp.ne.s32.totalorder %s406, %s407
      %p416 = scmp.eq.s32.totalorder %s34, 0
      %p417 = por %p415, %p416
      %p418 = scmp.ne.s32.totalorder %s406, %s407
      %p419 = scmp.eq.s32.totalorder %s35, 1
      %p420 = por %p418, %p419
      %p422 = scmp.ne.s32.totalorder %s407, %s421
      %p423 = scmp.eq.s32.totalorder %s35, 0
      %p424 = por %p422, %p423
      %s426 = sadd.s32 %s425, 1
      %p429 = scmp.eq.s32.totalorder %s29, 1
      %p430 = scmp.ne.s32.totalorder %s425, %s427
      %p431 = scmp.eq.s32.totalorder %s29, 0
      %p432 = por %p430, %p431
      %p433 = scmp.ne.s32.totalorder %s425, %s427
      %p434 = scmp.eq.s32.totalorder %s34, 1
      %p435 = por %p433, %p434
      %p436 = scmp.ne.s32.totalorder %s427, %s428
      %p437 = scmp.eq.s32.totalorder %s34, 0
      %p438 = por %p436, %p437
      %p439 = scmp.ne.s32.totalorder %s427, %s428
      %p440 = scmp.eq.s32.totalorder %s35, 1
      %p441 = por %p439, %p440
      %p443 = scmp.ne.s32.totalorder %s428, %s442
      %p444 = scmp.eq.s32.totalorder %s35, 0
      %p445 = por %p443, %p444
      %s447 = sadd.s32 %s446, 1
      %p450 = scmp.eq.s32.totalorder %s29, 1
      %p451 = scmp.ne.s32.totalorder %s446, %s448
      %p452 = scmp.eq.s32.totalorder %s29, 0
      %p453 = por %p451, %p452
      %p454 = scmp.ne.s32.totalorder %s446, %s448
      %p455 = scmp.eq.s32.totalorder %s34, 1
      %p456 = por %p454, %p455
      %p457 = scmp.ne.s32.totalorder %s448, %s449
      %p458 = scmp.eq.s32.totalorder %s34, 0
      %p459 = por %p457, %p458
      %p460 = scmp.ne.s32.totalorder %s448, %s449
      %p461 = scmp.eq.s32.totalorder %s35, 1
      %p462 = por %p460, %p461
      %p464 = scmp.ne.s32.totalorder %s449, %s463
      %p465 = scmp.eq.s32.totalorder %s35, 0
      %p466 = por %p464, %p465
      %s467 = ssub.s32 %s29, %s36
      %p468 = scmp.eq.s32.totalorder %s467, 0
      %s470 = sadd.s32 %s469, 1
      %s471 = scalar_select %p468, %s469, %s470
      %p474 = pneg %p468
      %p475 = scmp.eq.s32.totalorder %s29, 1
      %p476 = por %p474, %p475
      %p477 = scmp.ne.s32.totalorder %s469, %s472
      %p478 = scmp.eq.s32.totalorder %s29, 0
      %p479 = por %p477, %p478
      %p480 = scmp.ne.s32.totalorder %s469, %s472
      %p481 = scmp.eq.s32.totalorder %s34, 1
      %p482 = por %p480, %p481
      %p483 = scmp.ne.s32.totalorder %s472, %s473
      %p484 = scmp.eq.s32.totalorder %s34, 0
      %p485 = por %p483, %p484
      %p486 = scmp.ne.s32.totalorder %s472, %s473
      %p487 = scmp.eq.s32.totalorder %s35, 1
      %p488 = por %p486, %p487
      %p490 = scmp.ne.s32.totalorder %s473, %s489
      %p491 = scmp.eq.s32.totalorder %s35, 0
      %p492 = por %p490, %p491
      %p493 = scmp.le.s32.totalorder 1, %s29
      %p494 = scmp.lt.s32.totalorder %s29, 3
      %p495 = pnand %p493, %p494
      %p496 = pneg %p495
      // Predicated region
      $region9: #{perceiver_forward.9} parent=5 // pred_check
        _
      $region10: #{perceiver_forward.9} parent=5 // pred_check_branch
        %498 = sbr.rel (%p495) target = $region12
      $region11: #{perceiver_forward.9} parent=5 // pred_region
        %s499 = ssub.s32 %s29, 1
        // Predicated region
        $region13: #{perceiver_forward.9} parent=11 // pred_check
          %p500 = pneg %p102
        $region14: #{perceiver_forward.9} parent=11 // pred_check_branch
          %502 = sbr.rel (%p500) target = $region16
        $region15: #{perceiver_forward.9} parent=11 // pred_region
          _
        $region16: #{perceiver_forward.9} parent=11 // pred_fallthru
          _
        // Predicated region
        $region17: #{perceiver_forward.9} parent=11 // pred_check
          %p503 = pneg %p123
        $region18: #{perceiver_forward.9} parent=11 // pred_check_branch
          %505 = sbr.rel (%p503) target = $region20
        $region19: #{perceiver_forward.9} parent=11 // pred_region
          _
        $region20: #{perceiver_forward.9} parent=11 // pred_fallthru
          _
        // Predicated region
        $region21: #{perceiver_forward.9} parent=11 // pred_check
          %p506 = pneg %p144
        $region22: #{perceiver_forward.9} parent=11 // pred_check_branch
          %508 = sbr.rel (%p506) target = $region24
        $region23: #{perceiver_forward.9} parent=11 // pred_region
          _
        $region24: #{perceiver_forward.9} parent=11 // pred_fallthru
          _
        // Predicated region
        $region25: #{perceiver_forward.9} parent=11 // pred_check
          %p509 = pneg %p165
        $region26: #{perceiver_forward.9} parent=11 // pred_check_branch
          %511 = sbr.rel (%p509) target = $region28
        $region27: #{perceiver_forward.9} parent=11 // pred_region
          _
        $region28: #{perceiver_forward.9} parent=11 // pred_fallthru
          _
        // Predicated region
        $region29: #{perceiver_forward.9} parent=11 // pred_check
          %p512 = pneg %p186
        $region30: #{perceiver_forward.9} parent=11 // pred_check_branch
          %514 = sbr.rel (%p512) target = $region32
        $region31: #{perceiver_forward.9} parent=11 // pred_region
          _
        $region32: #{perceiver_forward.9} parent=11 // pred_fallthru
          _
        // Predicated region
        $region33: #{perceiver_forward.9} parent=11 // pred_check
          %p515 = pneg %p207
        $region34: #{perceiver_forward.9} parent=11 // pred_check_branch
          %517 = sbr.rel (%p515) target = $region36
        $region35: #{perceiver_forward.9} parent=11 // pred_region
          _
        $region36: #{perceiver_forward.9} parent=11 // pred_fallthru
          _
        // Predicated region
        $region37: #{perceiver_forward.9} parent=11 // pred_check
          %p518 = pneg %p228
        $region38: #{perceiver_forward.9} parent=11 // pred_check_branch
          %520 = sbr.rel (%p518) target = $region40
        $region39: #{perceiver_forward.9} parent=11 // pred_region
          _
        $region40: #{perceiver_forward.9} parent=11 // pred_fallthru
          _
        // Predicated region
        $region41: #{perceiver_forward.9} parent=11 // pred_check
          %p521 = pneg %p249
        $region42: #{perceiver_forward.9} parent=11 // pred_check_branch
          %523 = sbr.rel (%p521) target = $region44
        $region43: #{perceiver_forward.9} parent=11 // pred_region
          _
        $region44: #{perceiver_forward.9} parent=11 // pred_fallthru
          _
        // Predicated region
        $region45: #{perceiver_forward.9} parent=11 // pred_check
          %p524 = pneg %p270
        $region46: #{perceiver_forward.9} parent=11 // pred_check_branch
          %526 = sbr.rel (%p524) target = $region48
        $region47: #{perceiver_forward.9} parent=11 // pred_region
          _
        $region48: #{perceiver_forward.9} parent=11 // pred_fallthru
          _
        // Predicated region
        $region49: #{perceiver_forward.9} parent=11 // pred_check
          %p527 = pneg %p291
        $region50: #{perceiver_forward.9} parent=11 // pred_check_branch
          %529 = sbr.rel (%p527) target = $region52
        $region51: #{perceiver_forward.9} parent=11 // pred_region
          _
        $region52: #{perceiver_forward.9} parent=11 // pred_fallthru
          _
        // Predicated region
        $region53: #{perceiver_forward.9} parent=11 // pred_check
          %p530 = pneg %p312
        $region54: #{perceiver_forward.9} parent=11 // pred_check_branch
          %532 = sbr.rel (%p530) target = $region56
        $region55: #{perceiver_forward.9} parent=11 // pred_region
          _
        $region56: #{perceiver_forward.9} parent=11 // pred_fallthru
          _
        // Predicated region
        $region57: #{perceiver_forward.9} parent=11 // pred_check
          %p533 = pneg %p333
        $region58: #{perceiver_forward.9} parent=11 // pred_check_branch
          %535 = sbr.rel (%p533) target = $region60
        $region59: #{perceiver_forward.9} parent=11 // pred_region
          _
        $region60: #{perceiver_forward.9} parent=11 // pred_fallthru
          _
        // Predicated region
        $region61: #{perceiver_forward.9} parent=11 // pred_check
          %p536 = pneg %p354
        $region62: #{perceiver_forward.9} parent=11 // pred_check_branch
          %538 = sbr.rel (%p536) target = $region64
        $region63: #{perceiver_forward.9} parent=11 // pred_region
          _
        $region64: #{perceiver_forward.9} parent=11 // pred_fallthru
          _
        // Predicated region
        $region65: #{perceiver_forward.9} parent=11 // pred_check
          %p539 = pneg %p375
        $region66: #{perceiver_forward.9} parent=11 // pred_check_branch
          %541 = sbr.rel (%p539) target = $region68
        $region67: #{perceiver_forward.9} parent=11 // pred_region
          _
        $region68: #{perceiver_forward.9} parent=11 // pred_fallthru
          _
        // Predicated region
        $region69: #{perceiver_forward.9} parent=11 // pred_check
          %p542 = pneg %p396
        $region70: #{perceiver_forward.9} parent=11 // pred_check_branch
          %544 = sbr.rel (%p542) target = $region72
        $region71: #{perceiver_forward.9} parent=11 // pred_region
          _
        $region72: #{perceiver_forward.9} parent=11 // pred_fallthru
          _
        // Predicated region
        $region73: #{perceiver_forward.9} parent=11 // pred_check
          %p545 = pneg %p417
        $region74: #{perceiver_forward.9} parent=11 // pred_check_branch
          %547 = sbr.rel (%p545) target = $region76
        $region75: #{perceiver_forward.9} parent=11 // pred_region
          _
        $region76: #{perceiver_forward.9} parent=11 // pred_fallthru
          _
        // Predicated region
        $region77: #{perceiver_forward.9} parent=11 // pred_check
          %p548 = pneg %p438
        $region78: #{perceiver_forward.9} parent=11 // pred_check_branch
          %550 = sbr.rel (%p548) target = $region80
        $region79: #{perceiver_forward.9} parent=11 // pred_region
          _
        $region80: #{perceiver_forward.9} parent=11 // pred_fallthru
          _
        // Predicated region
        $region81: #{perceiver_forward.9} parent=11 // pred_check
          %p551 = pneg %p459
        $region82: #{perceiver_forward.9} parent=11 // pred_check_branch
          %553 = sbr.rel (%p551) target = $region84
        $region83: #{perceiver_forward.9} parent=11 // pred_region
          _
        $region84: #{perceiver_forward.9} parent=11 // pred_fallthru
          _
      $region12: #{perceiver_forward.9} parent=5 // pred_fallthru
        _
      %p554 = scmp.lt.s32.totalorder %s29, 2
      // Predicated region
      $region85: #{perceiver_forward.9} parent=5 // pred_check
        %p555 = pneg %p554
      $region86: #{perceiver_forward.9} parent=5 // pred_check_branch
        %557 = sbr.rel (%p555) target = $region88
      $region87: #{perceiver_forward.9} parent=5 // pred_region
        // Predicated region
        $region89: #{perceiver_forward.9} parent=87 // pred_check
          %p558 = pneg %p49
        $region90: #{perceiver_forward.9} parent=87 // pred_check_branch
          %560 = sbr.rel (%p558) target = $region92
        $region91: #{perceiver_forward.9} parent=87 // pred_region
          %p561 = scmp.lt.s32.totalorder %s29, 1
          %s562 = scalar_select %p561, %s29, 1
          %s563 = scalar_lea.vmem %s0, %s562
        $region92: #{perceiver_forward.9} parent=87 // pred_fallthru
          _
        // Predicated region
        $region93: #{perceiver_forward.9} parent=87 // pred_check
          %p564 = pneg %p75
        $region94: #{perceiver_forward.9} parent=87 // pred_check_branch
          %566 = sbr.rel (%p564) target = $region96
        $region95: #{perceiver_forward.9} parent=87 // pred_region
          %p567 = scmp.lt.s32.totalorder %s29, 1
          %s568 = scalar_select %p567, %s29, 1
          %s569 = smul.addr %s568, 8
          %s570 = scalar_lea.vmem %s1, %s569
        $region96: #{perceiver_forward.9} parent=87 // pred_fallthru
          _
      $region88: #{perceiver_forward.9} parent=5 // pred_fallthru
        _
      %p571 = scmp.le.s32.totalorder 1, %s29
      %p572 = scmp.lt.s32.totalorder %s29, 3
      %p573 = pnand %p571, %p572
      %p574 = pneg %p573
      // Predicated region
      $region97: #{perceiver_forward.9} parent=5 // pred_check
        _
      $region98: #{perceiver_forward.9} parent=5 // pred_check_branch
        %576 = sbr.rel (%p573) target = $region100
      $region99: #{perceiver_forward.9} parent=5 // pred_region
        %s577 = ssub.s32 %s29, 1
        %p578 = scmp.lt.s32.totalorder %s34, 1
        %s579 = scalar_select %p578, %s34, 1
        %s580 = scalar_lea.vmem %s0, %s579
        %p581 = pneg %p55
        %p582 = pneg %p52
        %p583 = scmp.lt.s32.totalorder %s34, 1
        %s584 = scalar_select %p583, %s34, 1
        %s585 = smul.addr %s584, 8
        %s586 = scalar_lea.vmem %s1, %s585
        %p587 = pneg %p81
        %p588 = pneg %p78
        %p589 = pneg %p102
        %p590 = pneg %p99
        %p591 = pneg %p123
        %p592 = pneg %p120
        %p593 = pneg %p144
        %p594 = pneg %p141
        %p595 = pneg %p165
        %p596 = pneg %p162
        %p597 = pneg %p186
        %p598 = pneg %p183
        %p599 = pneg %p207
        %p600 = pneg %p204
        %p601 = pneg %p228
        %p602 = pneg %p225
        %p603 = pneg %p249
        %p604 = pneg %p246
        %p605 = pneg %p270
        %p606 = pneg %p267
        %p607 = pneg %p291
        %p608 = pneg %p288
        %p609 = pneg %p312
        %p610 = pneg %p309
        %p611 = pneg %p333
        %p612 = pneg %p330
        %p613 = pneg %p354
        %p614 = pneg %p351
        %p615 = pneg %p375
        %p616 = pneg %p372
        %p617 = pneg %p396
        %p618 = pneg %p393
        %p619 = pneg %p417
        %p620 = pneg %p414
        %p621 = pneg %p438
        %p622 = pneg %p435
        %p623 = pneg %p459
        %p624 = pneg %p456
        %p625 = pneg %p485
        %p626 = pneg %p482
        %s627 = sand.u32 %s472, 1
        %s628 = scalar_lea.sflag [#allocation3], %s627
        %s629 = sand.u32 %s472, 1
        %s630 = scalar_lea.vmem [#allocation2], %s629
        %p631 = scmp.lt.s32.totalorder %s34, 1
        %s632 = scalar_select %p631, %s34, 1
        %s633 = scalar_lea.vmem %s0, %s632
        %p634 = scmp.lt.s32.totalorder %s34, 1
        %s635 = scalar_select %p634, %s34, 1
        %s636 = smul.addr %s635, 8
        %s637 = scalar_lea.vmem %s1, %s636
        %v638 = vld [vmem:[%s633] sm:$0x1]
        %v639 = vld [vmem:[%s2] sm:$0x1]
        %v640 = vld [vmem:[%s3] sm:$0x1]
        %vm641 = vcmask 253952
        %v642 = vsel %vm641, %v638, 0.0
        %643 = vadd.xlane.f32.xlu0 %v642
        %v644 = vpop.xlane.xlu0 %643
        %v645 = vrcp.pop 32.0
        %v646 = vmul.f32 %v644, %v645
        %v647 = vsub.f32 %v638, %v646
        %v648 = vmul.f32 %v647, %v647
        %v649 = vsel %vm641, %v648, 0.0
        %650 = vadd.xlane.f32.xlu0 %v649
        %v651 = vpop.xlane.xlu0 %650
        %v652 = vmul.f32 %v651, %v645
        %v653 = vadd.f32 %v652, 1e-05
        %v654 = vrsqrt.pop %v653
        %v655 = vmul.f32 %v647, %v654
        %v656 = vmul.f32 %v655, %v639
        %v657 = vadd.f32 %v656, %v640
        %v658 = vld [vmem:[%s637] sm:$0xff]
        %v659 = vld [vmem:[%s4] sm:$0x1]
        %v660 = vld [vmem:[%s5] sm:$0x1]
        %vm661 = vcmask 261120
        %v662 = vsel %vm661, %v658, 0.0
        %663 = vadd.xlane.f32.xlu0 %v662
        %v664 = vpop.xlane.xlu0 %663
        %v665 = vmul.f32 %v664, %v645
        %v666 = vsub.f32 %v658, %v665
        %v667 = vmul.f32 %v666, %v666
        %v668 = vsel %vm661, %v667, 0.0
        %669 = vadd.xlane.f32.xlu0 %v668
        %v670 = vpop.xlane.xlu0 %669
        %v671 = vmul.f32 %v670, %v645
        %v672 = vadd.f32 %v671, 1e-05
        %v673 = vrsqrt.pop %v672
        %v674 = vmul.f32 %v666, %v673
        %v676 = vlaneseq
        %v677 = vshrl.u32 %v676, 7
        %v678 = vsub.s32 0, %v677
        %v679 = vrot.slane %v659, %v678
        %v681 = vmul.f32 %v674, %v679
        %v683 = vlaneseq
        %v684 = vshrl.u32 %v683, 7
        %v685 = vsub.s32 0, %v684
        %v686 = vrot.slane %v660, %v685
        %v688 = vadd.f32 %v681, %v686
        %v689 = vld [vmem:[%s6] sm:$0xff]
        %v690 = vld [vmem:[%s6 + $0x8] sm:$0xff]
        %v691 = vld [vmem:[%s6 + $0x10] sm:$0xff]
        %v692 = vld [vmem:[%s6 + $0x18] sm:$0xff]
        %v693 = vld [vmem:[%s7] sm:$0x1]
        %v695 = vsel %vm661, %v657, 0
        %697 = vmatprep.subr.mxu0 0.0
        %698 = vmatpush1.msra.mxu0 0.0
        %699 = vmatprep.subr.mxu0 0.0
        %700 = vmatpush1.msra.mxu0 0.0
        %701 = vmatprep.subr.mxu0 0.0
        %702 = vmatpush1.msra.mxu0 0.0
        %703 = vmatprep.subr.mxu0 0.0
        %704 = vmatpush1.msra.mxu0 0.0
        %705 = vmatprep.subr.mxu0 0.0
        %706 = vmatpush1.msra.mxu0 0.0
        %707 = vmatprep.subr.mxu0 0.0
        %708 = vmatpush1.msra.mxu0 0.0
        %709 = vmatprep.subr.mxu0 0.0
        %710 = vmatpush1.msra.mxu0 0.0
        %711 = vmatprep.subr.mxu0 0.0
        %712 = vmatpush1.msra.mxu0 0.0
        %713 = vmatprep.subr.mxu0 0.0
        %714 = vmatpush1.msra.mxu0 0.0
        %715 = vmatprep.subr.mxu0 0.0
        %716 = vmatpush1.msra.mxu0 0.0
        %717 = vmatprep.subr.mxu0 0.0
        %718 = vmatpush1.msra.mxu0 0.0
        %719 = vmatprep.subr.mxu0 0.0
        %720 = vmatpush1.msra.mxu0 0.0
        %721 = vmatprep.subr.mxu0 0.0
        %722 = vmatpush1.msra.mxu0 %v692
        %723 = vmatprep.subr.mxu0 0.0
        %724 = vmatpush1.msra.mxu0 %v691
        %725 = vmatprep.subr.mxu0 0.0
        %726 = vmatpush1.msra.mxu0 %v690
        %727 = vmatprep.subr.mxu0 0.0
        %728 = vmatpush1.msra.mxu0 %v689
        %729 = vmatprep.subr.mxu0 0.0
        %730 = vmatpush2.msra.mxu0 0.0
        %731 = vmatprep.subr.mxu0 0.0
        %732 = vmatpush2.msra.mxu0 0.0
        %733 = vmatprep.subr.mxu0 0.0
        %734 = vmatpush2.msra.mxu0 0.0
        %735 = vmatprep.subr.mxu0 0.0
        %736 = vmatpush2.msra.mxu0 0.0
        %737 = vmatprep.subr.mxu0 0.0
        %738 = vmatpush2.msra.mxu0 0.0
        %739 = vmatprep.subr.mxu0 0.0
        %740 = vmatpush2.msra.mxu0 0.0
        %741 = vmatprep.subr.mxu0 0.0
        %742 = vmatpush2.msra.mxu0 0.0
        %743 = vmatprep.subr.mxu0 0.0
        %744 = vmatpush2.msra.mxu0 0.0
        %745 = vmatprep.subr.mxu0 0.0
        %746 = vmatpush2.msra.mxu0 0.0
        %747 = vmatprep.subr.mxu0 0.0
        %748 = vmatpush2.msra.mxu0 0.0
        %749 = vmatprep.subr.mxu0 0.0
        %750 = vmatpush2.msra.mxu0 0.0
        %751 = vmatprep.subr.mxu0 0.0
        %752 = vmatpush2.msra.mxu0 0.0
        %753 = vmatprep.subr.mxu0 0.0
        %754 = vmatpush2.msra.mxu0 0.0
        %755 = vmatprep.subr.mxu0 0.0
        %756 = vmatpush2.msra.mxu0 0.0
        %757 = vmatprep.subr.mxu0 0.0
        %758 = vmatpush2.msra.mxu0 0.0
        %759 = vmatprep.subr.mxu0 0.0
        %760 = vmatpush2.msra.mxu0 0.0
        %761 = vmatprep.mubr.f32.mxu0 0.0
        %762 = vmatmul.mubr.f32.gmra.mxu0 %v695
        %v763 = vpop.f32.mrf.mxu0
        %v764 = vadd.f32 %v693, %v763
        %v765 = vpop.f32.mrf.mxu0
        %766 = vdwg.mxu0
        %v767 = vmul.f32 %v764, 0.17677669
        %v768 = vld [vmem:[%s8] sm:$0xff]
        %v769 = vld [vmem:[%s8 + $0x8] sm:$0xff]
        %v770 = vld [vmem:[%s8 + $0x10] sm:$0xff]
        %v771 = vld [vmem:[%s8 + $0x18] sm:$0xff]
        %v772 = vld [vmem:[%s9] sm:$0x1]
        %v774 = vlaneseq
        %v775 = vshrl.u32 %v774, 7
        %v776 = vsub.s32 0, %v775
        %v777 = vrot.slane %v772, %v776
        %v780 = vsel %vm661, %v688, 0
        %782 = vmatprep.subr.mxu0 0.0
        %783 = vmatpush1.msra.mxu0 0.0
        %784 = vmatprep.subr.mxu0 0.0
        %785 = vmatpush1.msra.mxu0 0.0
        %786 = vmatprep.subr.mxu0 0.0
        %787 = vmatpush1.msra.mxu0 0.0
        %788 = vmatprep.subr.mxu0 0.0
        %789 = vmatpush1.msra.mxu0 0.0
        %790 = vmatprep.subr.mxu0 0.0
        %791 = vmatpush1.msra.mxu0 0.0
        %792 = vmatprep.subr.mxu0 0.0
        %793 = vmatpush1.msra.mxu0 0.0
        %794 = vmatprep.subr.mxu0 0.0
        %795 = vmatpush1.msra.mxu0 0.0
        %796 = vmatprep.subr.mxu0 0.0
        %797 = vmatpush1.msra.mxu0 0.0
        %798 = vmatprep.subr.mxu0 0.0
        %799 = vmatpush1.msra.mxu0 0.0
        %800 = vmatprep.subr.mxu0 0.0
        %801 = vmatpush1.msra.mxu0 0.0
        %802 = vmatprep.subr.mxu0 0.0
        %803 = vmatpush1.msra.mxu0 0.0
        %804 = vmatprep.subr.mxu0 0.0
        %805 = vmatpush1.msra.mxu0 0.0
        %806 = vmatprep.subr.mxu0 0.0
        %807 = vmatpush1.msra.mxu0 %v771
        %808 = vmatprep.subr.mxu0 0.0
        %809 = vmatpush1.msra.mxu0 %v770
        %810 = vmatprep.subr.mxu0 0.0
        %811 = vmatpush1.msra.mxu0 %v769
        %812 = vmatprep.subr.mxu0 0.0
        %813 = vmatpush1.msra.mxu0 %v768
        %814 = vmatprep.subr.mxu0 0.0
        %815 = vmatpush2.msra.mxu0 0.0
        %816 = vmatprep.subr.mxu0 0.0
        %817 = vmatpush2.msra.mxu0 0.0
        %818 = vmatprep.subr.mxu0 0.0
        %819 = vmatpush2.msra.mxu0 0.0
        %820 = vmatprep.subr.mxu0 0.0
        %821 = vmatpush2.msra.mxu0 0.0
        %822 = vmatprep.subr.mxu0 0.0
        %823 = vmatpush2.msra.mxu0 0.0
        %824 = vmatprep.subr.mxu0 0.0
        %825 = vmatpush2.msra.mxu0 0.0
        %826 = vmatprep.subr.mxu0 0.0
        %827 = vmatpush2.msra.mxu0 0.0
        %828 = vmatprep.subr.mxu0 0.0
        %829 = vmatpush2.msra.mxu0 0.0
        %830 = vmatprep.subr.mxu0 0.0
        %831 = vmatpush2.msra.mxu0 0.0
        %832 = vmatprep.subr.mxu0 0.0
        %833 = vmatpush2.msra.mxu0 0.0
        %834 = vmatprep.subr.mxu0 0.0
        %835 = vmatpush2.msra.mxu0 0.0
        %836 = vmatprep.subr.mxu0 0.0
        %837 = vmatpush2.msra.mxu0 0.0
        %838 = vmatprep.subr.mxu0 0.0
        %839 = vmatpush2.msra.mxu0 0.0
        %840 = vmatprep.subr.mxu0 0.0
        %841 = vmatpush2.msra.mxu0 0.0
        %842 = vmatprep.subr.mxu0 0.0
        %843 = vmatpush2.msra.mxu0 0.0
        %844 = vmatprep.subr.mxu0 0.0
        %845 = vmatpush2.msra.mxu0 0.0
        %846 = vmatprep.mubr.f32.mxu0 0.0
        %847 = vmatmul.mubr.f32.gmra.mxu0 %v780
        %v848 = vpop.f32.mrf.mxu0
        %v849 = vadd.f32 %v777, %v848
        %v850 = vpop.f32.mrf.mxu0
        %851 = vdwg.mxu0
        %v853 = vsel %vm661, %v767, 0
        %v856 = vsel %vm661, %v849, 0
        %858 = vmatprep.subr.mxu0 0.0
        %859 = vmatpush1.xpose.msra.mxu0 0.0
        %860 = vmatprep.subr.mxu0 0.0
        %861 = vmatpush1.xpose.msra.mxu0 0.0
        %862 = vmatprep.subr.mxu0 0.0
        %863 = vmatpush1.xpose.msra.mxu0 0.0
        %864 = vmatprep.subr.mxu0 0.0
        %865 = vmatpush1.xpose.msra.mxu0 0.0
        %866 = vmatprep.subr.mxu0 0.0
        %867 = vmatpush1.xpose.msra.mxu0 0.0
        %868 = vmatprep.subr.mxu0 0.0
        %869 = vmatpush1.xpose.msra.mxu0 0.0
        %870 = vmatprep.subr.mxu0 0.0
        %871 = vmatpush1.xpose.msra.mxu0 0.0
        %872 = vmatprep.subr.mxu0 0.0
        %873 = vmatpush1.xpose.msra.mxu0 0.0
        %874 = vmatprep.subr.mxu0 0.0
        %875 = vmatpush1.xpose.msra.mxu0 0.0
        %876 = vmatprep.subr.mxu0 0.0
        %877 = vmatpush1.xpose.msra.mxu0 0.0
        %878 = vmatprep.subr.mxu0 0.0
        %879 = vmatpush1.xpose.msra.mxu0 0.0
        %880 = vmatprep.subr.mxu0 0.0
        %881 = vmatpush1.xpose.msra.mxu0 0.0
        %882 = vmatprep.subr.mxu0 0.0
        %883 = vmatpush1.xpose.msra.mxu0 0.0
        %884 = vmatprep.subr.mxu0 0.0
        %885 = vmatpush1.xpose.msra.mxu0 0.0
        %886 = vmatprep.subr.mxu0 0.0
        %887 = vmatpush1.xpose.msra.mxu0 0.0
        %888 = vmatprep.subr.mxu0 0.0
        %889 = vmatpush1.xpose.msra.mxu0 %v856
        %890 = vmatprep.subr.mxu0 0.0
        %891 = vmatpush2.xpose.msra.mxu0 0.0
        %892 = vmatprep.subr.mxu0 0.0
        %893 = vmatpush2.xpose.msra.mxu0 0.0
        %894 = vmatprep.subr.mxu0 0.0
        %895 = vmatpush2.xpose.msra.mxu0 0.0
        %896 = vmatprep.subr.mxu0 0.0
        %897 = vmatpush2.xpose.msra.mxu0 0.0
        %898 = vmatprep.subr.mxu0 0.0
        %899 = vmatpush2.xpose.msra.mxu0 0.0
        %900 = vmatprep.subr.mxu0 0.0
        %901 = vmatpush2.xpose.msra.mxu0 0.0
        %902 = vmatprep.subr.mxu0 0.0
        %903 = vmatpush2.xpose.msra.mxu0 0.0
        %904 = vmatprep.subr.mxu0 0.0
        %905 = vmatpush2.xpose.msra.mxu0 0.0
        %906 = vmatprep.subr.mxu0 0.0
        %907 = vmatpush2.xpose.msra.mxu0 0.0
        %908 = vmatprep.subr.mxu0 0.0
        %909 = vmatpush2.xpose.msra.mxu0 0.0
        %910 = vmatprep.subr.mxu0 0.0
        %911 = vmatpush2.xpose.msra.mxu0 0.0
        %912 = vmatprep.subr.mxu0 0.0
        %913 = vmatpush2.xpose.msra.mxu0 0.0
        %914 = vmatprep.subr.mxu0 0.0
        %915 = vmatpush2.xpose.msra.mxu0 0.0
        %916 = vmatprep.subr.mxu0 0.0
        %917 = vmatpush2.xpose.msra.mxu0 0.0
        %918 = vmatprep.subr.mxu0 0.0
        %919 = vmatpush2.xpose.msra.mxu0 0.0
        %920 = vmatprep.subr.mxu0 0.0
        %921 = vmatpush2.xpose.msra.mxu0 0.0
        %922 = vmatprep.mubr.f32.mxu0 0.0
        %923 = vmatmul.mubr.f32.gmra.mxu0 %v853
        %v924 = vpop.f32.mrf.mxu0
        %v925 = vadd.f32 0.0, %v924
        %v926 = vpop.f32.mrf.mxu0
        %927 = vdwg.mxu0
        %vm928 = vcmask 57344
        %v929 = vsel %vm928, %v925, -inf
        %930 = vmax.xlane.f32.xlu0 %v929
        %v931 = vpop.xlane.xlu0 %930
        %v932 = vsub.f32 %v925, %v931
        %v933 = vmul.f32 %v932, 1.442695
        %v934 = vpow.pop %v933
        %v935 = vsel %vm928, %v934, 0.0
        %936 = vadd.xlane.f32.xlu0 %v935
        %v937 = vpop.xlane.xlu0 %936
        %v938 = vrcp.pop %v937
        %v939 = vmul.f32 %v934, %v938
        %940 = vrot.lane.b32.xlu0 %v849, 96
        %v941 = vpop.permute.xlu0 %940
        %vm943 = vcmask 64512
        %v945 = vsel %vm943, %v939, 0
        %947 = vmatprep.subr.mxu0 0.0
        %948 = vmatpush1.msra.mxu0 0.0
        %949 = vmatprep.subr.mxu0 0.0
        %950 = vmatpush1.msra.mxu0 0.0
        %951 = vmatprep.subr.mxu0 0.0
        %952 = vmatpush1.msra.mxu0 0.0
        %953 = vmatprep.subr.mxu0 0.0
        %954 = vmatpush1.msra.mxu0 0.0
        %955 = vmatprep.subr.mxu0 0.0
        %956 = vmatpush1.msra.mxu0 0.0
        %957 = vmatprep.subr.mxu0 0.0
        %958 = vmatpush1.msra.mxu0 0.0
        %959 = vmatprep.subr.mxu0 0.0
        %960 = vmatpush1.msra.mxu0 0.0
        %961 = vmatprep.subr.mxu0 0.0
        %962 = vmatpush1.msra.mxu0 0.0
        %963 = vmatprep.subr.mxu0 0.0
        %964 = vmatpush1.msra.mxu0 0.0
        %965 = vmatprep.subr.mxu0 0.0
        %966 = vmatpush1.msra.mxu0 0.0
        %967 = vmatprep.subr.mxu0 0.0
        %968 = vmatpush1.msra.mxu0 0.0
        %969 = vmatprep.subr.mxu0 0.0
        %970 = vmatpush1.msra.mxu0 0.0
        %971 = vmatprep.subr.mxu0 0.0
        %972 = vmatpush1.msra.mxu0 0.0
        %973 = vmatprep.subr.mxu0 0.0
        %974 = vmatpush1.msra.mxu0 0.0
        %975 = vmatprep.subr.mxu0 0.0
        %976 = vmatpush1.msra.mxu0 0.0
        %977 = vmatprep.subr.mxu0 0.0
        %978 = vmatpush1.msra.mxu0 %v941
        %979 = vmatprep.subr.mxu0 0.0
        %980 = vmatpush2.msra.mxu0 0.0
        %981 = vmatprep.subr.mxu0 0.0
        %982 = vmatpush2.msra.mxu0 0.0
        %983 = vmatprep.subr.mxu0 0.0
        %984 = vmatpush2.msra.mxu0 0.0
        %985 = vmatprep.subr.mxu0 0.0
        %986 = vmatpush2.msra.mxu0 0.0
        %987 = vmatprep.subr.mxu0 0.0
        %988 = vmatpush2.msra.mxu0 0.0
        %989 = vmatprep.subr.mxu0 0.0
        %990 = vmatpush2.msra.mxu0 0.0
        %991 = vmatprep.subr.mxu0 0.0
        %992 = vmatpush2.msra.mxu0 0.0
        %993 = vmatprep.subr.mxu0 0.0
        %994 = vmatpush2.msra.mxu0 0.0
        %995 = vmatprep.subr.mxu0 0.0
        %996 = vmatpush2.msra.mxu0 0.0
        %997 = vmatprep.subr.mxu0 0.0
        %998 = vmatpush2.msra.mxu0 0.0
        %999 = vmatprep.subr.mxu0 0.0
        %1000 = vmatpush2.msra.mxu0 0.0
        %1001 = vmatprep.subr.mxu0 0.0
        %1002 = vmatpush2.msra.mxu0 0.0
        %1003 = vmatprep.subr.mxu0 0.0
        %1004 = vmatpush2.msra.mxu0 0.0
        %1005 = vmatprep.subr.mxu0 0.0
        %1006 = vmatpush2.msra.mxu0 0.0
        %1007 = vmatprep.subr.mxu0 0.0
        %1008 = vmatpush2.msra.mxu0 0.0
        %1009 = vmatprep.subr.mxu0 0.0
        %1010 = vmatpush2.msra.mxu0 0.0
        %1011 = vmatprep.mubr.f32.mxu0 0.0
        %1012 = vmatmul.mubr.f32.gmra.mxu0 %v945
        %v1013 = vpop.f32.mrf.mxu0
        %v1014 = vadd.f32 0.0, %v1013
        %v1015 = vpop.f32.mrf.mxu0
        %1016 = vdwg.mxu0
        %v1017 = vld [vmem:[%s10] sm:$0xff]
        %v1018 = vld [vmem:[%s10 + $0x8] sm:$0xff]
        %v1019 = vld [vmem:[%s10 + $0x10] sm:$0xff]
        %v1020 = vld [vmem:[%s10 + $0x18] sm:$0xff]
        %v1021 = vld [vmem:[%s11] sm:$0x1]
        %v1023 = vsel %vm661, %v1014, 0
        %1025 = vmatprep.subr.mxu0 0.0
        %1026 = vmatpush1.msra.mxu0 0.0
        %1027 = vmatprep.subr.mxu0 0.0
        %1028 = vmatpush1.msra.mxu0 0.0
        %1029 = vmatprep.subr.mxu0 0.0
        %1030 = vmatpush1.msra.mxu0 0.0
        %1031 = vmatprep.subr.mxu0 0.0
        %1032 = vmatpush1.msra.mxu0 0.0
        %1033 = vmatprep.subr.mxu0 0.0
        %1034 = vmatpush1.msra.mxu0 0.0
        %1035 = vmatprep.subr.mxu0 0.0
        %1036 = vmatpush1.msra.mxu0 0.0
        %1037 = vmatprep.subr.mxu0 0.0
        %1038 = vmatpush1.msra.mxu0 0.0
        %1039 = vmatprep.subr.mxu0 0.0
        %1040 = vmatpush1.msra.mxu0 0.0
        %1041 = vmatprep.subr.mxu0 0.0
        %1042 = vmatpush1.msra.mxu0 0.0
        %1043 = vmatprep.subr.mxu0 0.0
        %1044 = vmatpush1.msra.mxu0 0.0
        %1045 = vmatprep.subr.mxu0 0.0
        %1046 = vmatpush1.msra.mxu0 0.0
        %1047 = vmatprep.subr.mxu0 0.0
        %1048 = vmatpush1.msra.mxu0 0.0
        %1049 = vmatprep.subr.mxu0 0.0
        %1050 = vmatpush1.msra.mxu0 %v1020
        %1051 = vmatprep.subr.mxu0 0.0
        %1052 = vmatpush1.msra.mxu0 %v1019
        %1053 = vmatprep.subr.mxu0 0.0
        %1054 = vmatpush1.msra.mxu0 %v1018
        %1055 = vmatprep.subr.mxu0 0.0
        %1056 = vmatpush1.msra.mxu0 %v1017
        %1057 = vmatprep.subr.mxu0 0.0
        %1058 = vmatpush2.msra.mxu0 0.0
        %1059 = vmatprep.subr.mxu0 0.0
        %1060 = vmatpush2.msra.mxu0 0.0
        %1061 = vmatprep.subr.mxu0 0.0
        %1062 = vmatpush2.msra.mxu0 0.0
        %1063 = vmatprep.subr.mxu0 0.0
        %1064 = vmatpush2.msra.mxu0 0.0
        %1065 = vmatprep.subr.mxu0 0.0
        %1066 = vmatpush2.msra.mxu0 0.0
        %1067 = vmatprep.subr.mxu0 0.0
        %1068 = vmatpush2.msra.mxu0 0.0
        %1069 = vmatprep.subr.mxu0 0.0
        %1070 = vmatpush2.msra.mxu0 0.0
        %1071 = vmatprep.subr.mxu0 0.0
        %1072 = vmatpush2.msra.mxu0 0.0
        %1073 = vmatprep.subr.mxu0 0.0
        %1074 = vmatpush2.msra.mxu0 0.0
        %1075 = vmatprep.subr.mxu0 0.0
        %1076 = vmatpush2.msra.mxu0 0.0
        %1077 = vmatprep.subr.mxu0 0.0
        %1078 = vmatpush2.msra.mxu0 0.0
        %1079 = vmatprep.subr.mxu0 0.0
        %1080 = vmatpush2.msra.mxu0 0.0
        %1081 = vmatprep.subr.mxu0 0.0
        %1082 = vmatpush2.msra.mxu0 0.0
        %1083 = vmatprep.subr.mxu0 0.0
        %1084 = vmatpush2.msra.mxu0 0.0
        %1085 = vmatprep.subr.mxu0 0.0
        %1086 = vmatpush2.msra.mxu0 0.0
        %1087 = vmatprep.subr.mxu0 0.0
        %1088 = vmatpush2.msra.mxu0 0.0
        %1089 = vmatprep.mubr.f32.mxu0 0.0
        %1090 = vmatmul.mubr.f32.gmra.mxu0 %v1023
        %v1091 = vpop.f32.mrf.mxu0
        %v1092 = vadd.f32 %v1021, %v1091
        %v1093 = vpop.f32.mrf.mxu0
        %1094 = vdwg.mxu0
        %v1095 = vadd.f32 %v638, %v1092
        %v1096 = vld [vmem:[%s12] sm:$0x1]
        %v1097 = vld [vmem:[%s13] sm:$0x1]
        %v1098 = vsel %vm641, %v1095, 0.0
        %1099 = vadd.xlane.f32.xlu0 %v1098
        %v1100 = vpop.xlane.xlu0 %1099
        %v1101 = vmul.f32 %v1100, %v645
        %v1102 = vsub.f32 %v1095, %v1101
        %v1103 = vmul.f32 %v1102, %v1102
        %v1104 = vsel %vm641, %v1103, 0.0
        %1105 = vadd.xlane.f32.xlu0 %v1104
        %v1106 = vpop.xlane.xlu0 %1105
        %v1107 = vmul.f32 %v1106, %v645
        %v1108 = vadd.f32 %v1107, 1e-05
        %v1109 = vrsqrt.pop %v1108
        %v1110 = vmul.f32 %v1102, %v1109
        %v1111 = vmul.f32 %v1110, %v1096
        %v1112 = vadd.f32 %v1111, %v1097
        %v1113 = vld [vmem:[%s14] sm:$0xff]
        %v1114 = vld [vmem:[%s14 + $0x8] sm:$0xff]
        %v1115 = vld [vmem:[%s14 + $0x10] sm:$0xff]
        %v1116 = vld [vmem:[%s14 + $0x18] sm:$0xff]
        %v1117 = vld [vmem:[%s15] sm:$0x1]
        %v1119 = vsel %vm661, %v1112, 0
        %1121 = vmatprep.subr.mxu0 0.0
        %1122 = vmatpush1.msra.mxu0 0.0
        %1123 = vmatprep.subr.mxu0 0.0
        %1124 = vmatpush1.msra.mxu0 0.0
        %1125 = vmatprep.subr.mxu0 0.0
        %1126 = vmatpush1.msra.mxu0 0.0
        %1127 = vmatprep.subr.mxu0 0.0
        %1128 = vmatpush1.msra.mxu0 0.0
        %1129 = vmatprep.subr.mxu0 0.0
        %1130 = vmatpush1.msra.mxu0 0.0
        %1131 = vmatprep.subr.mxu0 0.0
        %1132 = vmatpush1.msra.mxu0 0.0
        %1133 = vmatprep.subr.mxu0 0.0
        %1134 = vmatpush1.msra.mxu0 0.0
        %1135 = vmatprep.subr.mxu0 0.0
        %1136 = vmatpush1.msra.mxu0 0.0
        %1137 = vmatprep.subr.mxu0 0.0
        %1138 = vmatpush1.msra.mxu0 0.0
        %1139 = vmatprep.subr.mxu0 0.0
        %1140 = vmatpush1.msra.mxu0 0.0
        %1141 = vmatprep.subr.mxu0 0.0
        %1142 = vmatpush1.msra.mxu0 0.0
        %1143 = vmatprep.subr.mxu0 0.0
        %1144 = vmatpush1.msra.mxu0 0.0
        %1145 = vmatprep.subr.mxu0 0.0
        %1146 = vmatpush1.msra.mxu0 %v1116
        %1147 = vmatprep.subr.mxu0 0.0
        %1148 = vmatpush1.msra.mxu0 %v1115
        %1149 = vmatprep.subr.mxu0 0.0
        %1150 = vmatpush1.msra.mxu0 %v1114
        %1151 = vmatprep.subr.mxu0 0.0
        %1152 = vmatpush1.msra.mxu0 %v1113
        %1153 = vmatprep.subr.mxu0 0.0
        %1154 = vmatpush2.msra.mxu0 0.0
        %1155 = vmatprep.subr.mxu0 0.0
        %1156 = vmatpush2.msra.mxu0 0.0
        %1157 = vmatprep.subr.mxu0 0.0
        %1158 = vmatpush2.msra.mxu0 0.0
        %1159 = vmatprep.subr.mxu0 0.0
        %1160 = vmatpush2.msra.mxu0 0.0
        %1161 = vmatprep.subr.mxu0 0.0
        %1162 = vmatpush2.msra.mxu0 0.0
        %1163 = vmatprep.subr.mxu0 0.0
        %1164 = vmatpush2.msra.mxu0 0.0
        %1165 = vmatprep.subr.mxu0 0.0
        %1166 = vmatpush2.msra.mxu0 0.0
        %1167 = vmatprep.subr.mxu0 0.0
        %1168 = vmatpush2.msra.mxu0 0.0
        %1169 = vmatprep.subr.mxu0 0.0
        %1170 = vmatpush2.msra.mxu0 0.0
        %1171 = vmatprep.subr.mxu0 0.0
        %1172 = vmatpush2.msra.mxu0 0.0
        %1173 = vmatprep.subr.mxu0 0.0
        %1174 = vmatpush2.msra.mxu0 0.0
        %1175 = vmatprep.subr.mxu0 0.0
        %1176 = vmatpush2.msra.mxu0 0.0
        %1177 = vmatprep.subr.mxu0 0.0
        %1178 = vmatpush2.msra.mxu0 0.0
        %1179 = vmatprep.subr.mxu0 0.0
        %1180 = vmatpush2.msra.mxu0 0.0
        %1181 = vmatprep.subr.mxu0 0.0
        %1182 = vmatpush2.msra.mxu0 0.0
        %1183 = vmatprep.subr.mxu0 0.0
        %1184 = vmatpush2.msra.mxu0 0.0
        %1185 = vmatprep.mubr.f32.mxu0 0.0
        %1186 = vmatmul.mubr.f32.gmra.mxu0 %v1119
        %v1187 = vpop.f32.mrf.mxu0
        %v1188 = vadd.f32 %v1117, %v1187
        %v1189 = vpop.f32.mrf.mxu0
        %1190 = vdwg.mxu0
        %v1191 = vmul.f32 %v1188, %v1188
        %v1192 = vmul.f32 %v1188, %v1191
        %v1193 = vmul.f32 %v1192, 0.044715
        %v1194 = vadd.f32 %v1188, %v1193
        %v1195 = vmul.f32 %v1194, 0.7978846
        %v1196 = vtanh.pop %v1195
        %v1197 = vadd.f32 %v1196, 1.0
        %v1198 = vmul.f32 %v1197, 0.5
        %v1199 = vmul.f32 %v1188, %v1198
        %v1200 = vld [vmem:[%s16] sm:$0xff]
        %v1201 = vld [vmem:[%s16 + $0x8] sm:$0xff]
        %v1202 = vld [vmem:[%s16 + $0x10] sm:$0xff]
        %v1203 = vld [vmem:[%s16 + $0x18] sm:$0xff]
        %v1204 = vld [vmem:[%s16 + $0x20] sm:$0xff]
        %v1205 = vld [vmem:[%s16 + $0x28] sm:$0xff]
        %v1206 = vld [vmem:[%s16 + $0x30] sm:$0xff]
        %v1207 = vld [vmem:[%s16 + $0x38] sm:$0xff]
        %v1208 = vld [vmem:[%s16 + $0x40] sm:$0xff]
        %v1209 = vld [vmem:[%s16 + $0x48] sm:$0xff]
        %v1210 = vld [vmem:[%s16 + $0x50] sm:$0xff]
        %v1211 = vld [vmem:[%s16 + $0x58] sm:$0xff]
        %v1212 = vld [vmem:[%s16 + $0x60] sm:$0xff]
        %v1213 = vld [vmem:[%s16 + $0x68] sm:$0xff]
        %v1214 = vld [vmem:[%s16 + $0x70] sm:$0xff]
        %v1215 = vld [vmem:[%s16 + $0x78] sm:$0xff]
        %v1216 = vld [vmem:[%s17] sm:$0x1]
        %1217 = vmatprep.subr.mxu0 0.0
        %1218 = vmatpush1.msra.mxu0 %v1215
        %1219 = vmatprep.subr.mxu0 0.0
        %1220 = vmatpush1.msra.mxu0 %v1214
        %1221 = vmatprep.subr.mxu0 0.0
        %1222 = vmatpush1.msra.mxu0 %v1213
        %1223 = vmatprep.subr.mxu0 0.0
        %1224 = vmatpush1.msra.mxu0 %v1212
        %1225 = vmatprep.subr.mxu0 0.0
        %1226 = vmatpush1.msra.mxu0 %v1211
        %1227 = vmatprep.subr.mxu0 0.0
        %1228 = vmatpush1.msra.mxu0 %v1210
        %1229 = vmatprep.subr.mxu0 0.0
        %1230 = vmatpush1.msra.mxu0 %v1209
        %1231 = vmatprep.subr.mxu0 0.0
        %1232 = vmatpush1.msra.mxu0 %v1208
        %1233 = vmatprep.subr.mxu0 0.0
        %1234 = vmatpush1.msra.mxu0 %v1207
        %1235 = vmatprep.subr.mxu0 0.0
        %1236 = vmatpush1.msra.mxu0 %v1206
        %1237 = vmatprep.subr.mxu0 0.0
        %1238 = vmatpush1.msra.mxu0 %v1205
        %1239 = vmatprep.subr.mxu0 0.0
        %1240 = vmatpush1.msra.mxu0 %v1204
        %1241 = vmatprep.subr.mxu0 0.0
        %1242 = vmatpush1.msra.mxu0 %v1203
        %1243 = vmatprep.subr.mxu0 0.0
        %1244 = vmatpush1.msra.mxu0 %v1202
        %1245 = vmatprep.subr.mxu0 0.0
        %1246 = vmatpush1.msra.mxu0 %v1201
        %1247 = vmatprep.subr.mxu0 0.0
        %1248 = vmatpush1.msra.mxu0 %v1200
        %1249 = vmatprep.subr.mxu0 0.0
        %1250 = vmatpush2.msra.mxu0 0.0
        %1251 = vmatprep.subr.mxu0 0.0
        %1252 = vmatpush2.msra.mxu0 0.0
        %1253 = vmatprep.subr.mxu0 0.0
        %1254 = vmatpush2.msra.mxu0 0.0
        %1255 = vmatprep.subr.mxu0 0.0
        %1256 = vmatpush2.msra.mxu0 0.0
        %1257 = vmatprep.subr.mxu0 0.0
        %1258 = vmatpush2.msra.mxu0 0.0
        %1259 = vmatprep.subr.mxu0 0.0
        %1260 = vmatpush2.msra.mxu0 0.0
        %1261 = vmatprep.subr.mxu0 0.0
        %1262 = vmatpush2.msra.mxu0 0.0
        %1263 = vmatprep.subr.mxu0 0.0
        %1264 = vmatpush2.msra.mxu0 0.0
        %1265 = vmatprep.subr.mxu0 0.0
        %1266 = vmatpush2.msra.mxu0 0.0
        %1267 = vmatprep.subr.mxu0 0.0
        %1268 = vmatpush2.msra.mxu0 0.0
        %1269 = vmatprep.subr.mxu0 0.0
        %1270 = vmatpush2.msra.mxu0 0.0
        %1271 = vmatprep.subr.mxu0 0.0
        %1272 = vmatpush2.msra.mxu0 0.0
        %1273 = vmatprep.subr.mxu0 0.0
        %1274 = vmatpush2.msra.mxu0 0.0
        %1275 = vmatprep.subr.mxu0 0.0
        %1276 = vmatpush2.msra.mxu0 0.0
        %1277 = vmatprep.subr.mxu0 0.0
        %1278 = vmatpush2.msra.mxu0 0.0
        %1279 = vmatprep.subr.mxu0 0.0
        %1280 = vmatpush2.msra.mxu0 0.0
        %1281 = vmatprep.mubr.f32.mxu0 0.0
        %1282 = vmatmul.mubr.f32.gmra.mxu0 %v1199
        %v1283 = vpop.f32.mrf.mxu0
        %v1284 = vadd.f32 %v1216, %v1283
        %v1285 = vpop.f32.mrf.mxu0
        %1286 = vdwg.mxu0
        %v1287 = vadd.f32 %v1095, %v1284
        %v1288 = vld [vmem:[%s18] sm:$0x1]
        %v1289 = vld [vmem:[%s19] sm:$0x1]
        %v1290 = vsel %vm641, %v1287, 0.0
        %1291 = vadd.xlane.f32.xlu0 %v1290
        %v1292 = vpop.xlane.xlu0 %1291
        %v1293 = vmul.f32 %v1292, %v645
        %v1294 = vsub.f32 %v1287, %v1293
        %v1295 = vmul.f32 %v1294, %v1294
        %v1296 = vsel %vm641, %v1295, 0.0
        %1297 = vadd.xlane.f32.xlu0 %v1296
        %v1298 = vpop.xlane.xlu0 %1297
        %v1299 = vmul.f32 %v1298, %v645
        %v1300 = vadd.f32 %v1299, 1e-05
        %v1301 = vrsqrt.pop %v1300
        %v1302 = vmul.f32 %v1294, %v1301
        %v1303 = vmul.f32 %v1302, %v1288
        %v1304 = vadd.f32 %v1303, %v1289
        %1305 = vst.msk [vmem:[%s630] sm:$0x1] %vm641, %v1304
        %s1306 = sand.u32 %s472, 1
        %s1307 = scalar_lea.sflag [#allocation3], %s1306
        %s1308 = sand.u32 %s472, 1
        %s1309 = scalar_lea.vmem [#allocation2], %s1308
        // Predicated region
        $region101: #{perceiver_forward.9} parent=99 // pred_check
          %p1310 = pneg %p482
        $region102: #{perceiver_forward.9} parent=99 // pred_check_branch
          %1312 = sbr.rel (%p1310) target = $region104
        $region103: #{perceiver_forward.9} parent=99 // pred_region
          %s1314 = ssub.s32 16, 16
          %1315 = vsyncadd %s1307, %s1314
          %s1316 = smul.addr %s34, 16
          %s1317 = scalar_lea.hbm %s20, %s1316
          %s1319 = sshll.u32 %s1309, 4
          %s1320 = int_to_ptr.vmem [resolvable:$true] %s1319
          %1322 = dma.vmem_to_hbm [thread:$0]  %s1320, 16, %s1317, %s1307
        $region104: #{perceiver_forward.9} parent=99 // pred_fallthru
          _
      $region100: #{perceiver_forward.9} parent=5 // pred_fallthru
        _
      %p1323 = scmp.le.s32.totalorder 2, %s29
      // Predicated region
      $region105: #{perceiver_forward.9} parent=5 // pred_check
        %p1324 = pneg %p1323
      $region106: #{perceiver_forward.9} parent=5 // pred_check_branch
        %1326 = sbr.rel (%p1324) target = $region108
      $region107: #{perceiver_forward.9} parent=5 // pred_region
        %s1327 = ssub.s32 %s29, 2
        // Predicated region
        $region109: #{perceiver_forward.9} parent=107 // pred_check
          %p1328 = pneg %p488
        $region110: #{perceiver_forward.9} parent=107 // pred_check_branch
          %1330 = sbr.rel (%p1328) target = $region112
        $region111: #{perceiver_forward.9} parent=107 // pred_region
          %s1331 = sand.u32 %s473, 1
          %s1332 = scalar_lea.sflag [#allocation3], %s1331
          %s1333 = sand.u32 %s473, 1
          %s1334 = scalar_lea.vmem [#allocation2], %s1333
          %1335 = dma.done %s1332, 16
        $region112: #{perceiver_forward.9} parent=107 // pred_fallthru
          _
      $region108: #{perceiver_forward.9} parent=5 // pred_fallthru
        _
    $region6: #{perceiver_forward.9} parent=1 // loop_footer
      %s33 = sadd.s32 1, %s29
    $region7: #{perceiver_forward.9} parent=1 // loop_footer_branch
      %28 = sbr.rel target = $region3
    $region8: #{perceiver_forward.9} parent=1 // loop_exit
      _
    %1336 = vsyncpa [#allocation3], 1
    %s1337 = scalar_lea.sflag [#allocation3], 1
    %1338 = vsyncpa %s1337, 1

</llo_original>
